<compile_context>
chip_gen: v6e
topology: v6e:2x2x1
jax: 0.10.0
libtpu: 0.0.40
codegen_flags: <defaults>
</compile_context>

<pallas_src>
from functools import partial

import jax
import jax.numpy as jnp
from jax import lax
from jax.experimental import pallas as pl
from jax.experimental.pallas import tpu as pltpu

K = 7      # kernel size
PAD = 3    # "same" padding
C = 16     # channels (fixed by the convs)


def _fused_kernel(x1p_ref, x2p_ref, x3p_ref, w_ref, b_ref, mask_ref,
                  out_ref, xp_ref, xs_ref, y_ref, *, H, W):
    """One batch element; everything stays in VMEM.

    x1p_ref : (C, LW)     x1 in width-padded row layout (i*Wp + j, j<W valid)
    x2p_ref : (C, LW)     x2, same layout
    x3p_ref : (C, LW)     x3, same layout
    w_ref   : (3, K*C, K*C) bf16; per stage: rows = kh*C+cout, cols = kw*C+cin
    b_ref   : (3, C, 1)   f32 biases
    mask_ref: (1, LW)     1.0 where j < W else 0.0
    out_ref : (C, LW)     v8 in width-padded row layout
    xp_ref  : (C, LSRC)   bf16 scratch: fully padded activation (flat Hp*Wp + tail)
    xs_ref  : (K*C, LXS)  bf16 scratch: kw-stacked conv operand
    y_ref   : (K*C, LXS)  f32 scratch: landing buffer for the fat matmul
    """
    Wp = W + 2 * PAD
    LW = H * Wp
    LXS = xs_ref.shape[1]
    LSRC = xp_ref.shape[1]
    OFF = PAD * Wp + PAD                 # flat offset of interior pixel (0,0)

    # Zero only the halo / tail regions once per image; the interior
    # [OFF, OFF+LW) is fully (mask-)overwritten by every stage below.
    xp_ref[:, 0:OFF] = jnp.zeros((C, OFF), jnp.bfloat16)
    xp_ref[:, OFF + LW:LSRC] = jnp.zeros((C, LSRC - OFF - LW), jnp.bfloat16)

    def repad(v):
        # masked (valid columns only) f32 activation -> padded bf16 interior
        xp_ref[:, OFF:OFF + LW] = (v * mask_ref[...]).astype(jnp.bfloat16)

    def build_xs():
        # XS[kw*C + c, m] = xp[c, m + kw]   (7 uniform lane-shifted slab copies)
        for kw in range(K):
            xs_ref[kw * C:(kw + 1) * C, :] = xp_ref[:, kw:kw + LXS]

    def conv_relu(stage):
        # ONE fat MXU matmul per conv: (112,112) x (112,LXS), f32 accumulate,
        # landed in VMEM; then 7 shifted slice-adds pick out the kh taps.
        y_ref[...] = jnp.dot(w_ref[stage], xs_ref[...],
                             preferred_element_type=jnp.float32)
        acc = y_ref[0:C, 0:LW]
        for kh in range(1, K):
            acc = acc + y_ref[kh * C:(kh + 1) * C, kh * Wp:kh * Wp + LW]
        return jnp.maximum(acc + b_ref[stage], 0.0)

    # stage 1: v2 = relu(conv1(x1))           (no residual)
    repad(x1p_ref[...])
    build_xs()
    v2 = conv_relu(0)

    # stage 2: v5 = x2 + relu(conv2(v2))
    repad(v2)
    build_xs()
    v5 = x2p_ref[...] + conv_relu(1)

    # stage 3: v8 = x3 + relu(conv3(v5))
    repad(v5)
    build_xs()
    out_ref[...] = x3p_ref[...] + conv_relu(2)


def model_forward(x1, x2, x3, params):
    """Inputs/outputs in PyTorch NCHW layout."""
    N, Cn, H, W = x1.shape
    assert Cn == C
    Hp, Wp = H + 2 * PAD, W + 2 * PAD
    NPAD = Hp * Wp
    LW = H * Wp
    LXS = ((NPAD + 127) // 128) * 128    # matmul operand length (lane-aligned)
    LSRC = LXS + 128                     # padded source length (kw-shift overrun)

    # All three inputs in the kernel's width-padded row layout (cols j >= W are 0).
    def row_pad(x):
        return jnp.pad(x, ((0, 0), (0, 0), (0, 0), (0, 2 * PAD))).reshape(N, C, LW)

    x1p, x2p, x3p = row_pad(x1), row_pad(x2), row_pad(x3)

    # Valid-column mask (1.0 where j < W).
    mask = jnp.tile((jnp.arange(Wp) < W).astype(jnp.float32), H).reshape(1, LW)

    # Weights: (3, K*C, K*C) bf16; rows = kh*C + cout, cols = kw*C + cin.
    wstack = jnp.stack(
        [jnp.transpose(params[f"w{i}"], (0, 3, 1, 2)).reshape(K * C, K * C)
         for i in (1, 2, 3)], axis=0).astype(jnp.bfloat16)
    bstack = jnp.stack([params[f"b{i}"].reshape(C, 1) for i in (1, 2, 3)])

    # Explicit VMEM budget (double-buffered I/O + scratch), clamped for v7x.
    vmem_est = (2 * 4 * C * LW * 4                       # x1p/x2p/x3p/out, 2 bufs
                + 2 * (3 * (K * C) * (K * C) * 2 + 3 * C * 4 + LW * 4)
                + C * LSRC * 2                           # xp (bf16)
                + (K * C) * LXS * 2                      # xs (bf16)
                + (K * C) * LXS * 4)                     # y  (f32)
    vmem_limit = int(min(64 * 2**20, max(16 * 2**20, 2 * vmem_est)))

    out_flat = pl.pallas_call(
        partial(_fused_kernel, H=H, W=W),
        out_shape=jax.ShapeDtypeStruct((N, C, LW), jnp.float32),
        grid=(N,),
        in_specs=[
            pl.BlockSpec((None, C, LW), lambda n: (n, 0, 0)),
            pl.BlockSpec((None, C, LW), lambda n: (n, 0, 0)),
            pl.BlockSpec((None, C, LW), lambda n: (n, 0, 0)),
            pl.BlockSpec((3, K * C, K * C), lambda n: (0, 0, 0)),
            pl.BlockSpec((3, C, 1), lambda n: (0, 0, 0)),
            pl.BlockSpec((1, LW), lambda n: (0, 0)),
        ],
        out_specs=pl.BlockSpec((None, C, LW), lambda n: (n, 0, 0)),
        scratch_shapes=[pltpu.VMEM((C, LSRC), jnp.bfloat16),
                        pltpu.VMEM((K * C, LXS), jnp.bfloat16),
                        pltpu.VMEM((K * C, LXS), jnp.float32)],
        compiler_params=pltpu.CompilerParams(
            dimension_semantics=("parallel",),
            vmem_limit_bytes=vmem_limit),
    )(x1p, x2p, x3p, wstack, bstack, mask)

    # (N, C, H*Wp) -> (N, C, H, W)  : drop the width-halo garbage columns.
    return out_flat.reshape(N, C, H, Wp)[..., :W]


def init_params(key):
    """Deterministic params matching nn.Conv2d(16,16,7) default-init scale."""
    fan_in = C * K * K
    bound = 1.0 / (fan_in ** 0.5)
    ks = jax.random.split(key, 6)
    p = {}
    for i in range(3):
        p[f"w{i+1}"] = jax.random.uniform(
            ks[2 * i], (K, K, C, C), jnp.float32, -bound, bound)   # HWIO
        p[f"b{i+1}"] = jax.random.uniform(
            ks[2 * i + 1], (C,), jnp.float32, -bound, bound)
    return p


def ref_forward(x1, x2, x3, p):
    """Pure-JAX reference (XLA conv, f32) in NCHW, for correctness checking."""
    def conv(x, w, b):
        y = lax.conv_general_dilated(
            x, w, window_strides=(1, 1),
            padding=((PAD, PAD), (PAD, PAD)),
            dimension_numbers=("NCHW", "HWIO", "NCHW"))
        return y + b.reshape(1, C, 1, 1)
    v2 = jax.nn.relu(conv(x1, p["w1"], p["b1"]))
    v5 = x2 + jax.nn.relu(conv(v2, p["w2"], p["b2"]))
    v8 = x3 + jax.nn.relu(conv(v5, p["w3"], p["b3"]))
    return v8


if __name__ == "__main__":
    key = jax.random.PRNGKey(0)
    kp, k1, k2, k3 = jax.random.split(key, 4)

    # Small shapes consistent with the module (channels fixed at 16 by the convs).
    N, H, W = 2, 32, 32
    x1 = jax.random.normal(k1, (N, C, H, W), jnp.float32)
    x2 = jax.random.normal(k2, (N, C, H, W), jnp.float32)
    x3 = jax.random.normal(k3, (N, C, H, W), jnp.float32)

    params = init_params(kp)

    out = jax.block_until_ready(jax.jit(model_forward)(x1, x2, x3, params))
    ref = jax.block_until_ready(ref_forward(x1, x2, x3, params))

    assert out.shape == (N, C, H, W) and out.dtype == jnp.float32
    # bf16 MXU operands with f32 accumulation over three chained 784-term
    # contractions: typical max abs error ~5e-3 vs. the f32 reference.
    err = float(jnp.max(jnp.abs(out - ref)))
    assert jnp.allclose(out, ref, atol=2e-2, rtol=2e-2), err

    print("KERNEL_OK")
</pallas_src>

<mosaic_0001>
module attributes {stable_mosaic.version = 11 : i64} {
  func.func @_fused_kernel(%arg0: i32, %arg1: memref<1x16x1216xf32, #tpu.memory_space<vmem>>, %arg2: memref<1x16x1216xf32, #tpu.memory_space<vmem>>, %arg3: memref<1x16x1216xf32, #tpu.memory_space<vmem>>, %arg4: memref<3x112x112xbf16, #tpu.memory_space<vmem>>, %arg5: memref<3x16x1xf32, #tpu.memory_space<vmem>>, %arg6: memref<1x1216xf32, #tpu.memory_space<vmem>>, %arg7: memref<1x16x1216xf32, #tpu.memory_space<vmem>>, %arg8: memref<16x1664xbf16, #tpu.memory_space<vmem>>, %arg9: memref<112x1536xbf16, #tpu.memory_space<vmem>>, %arg10: memref<112x1536xf32, #tpu.memory_space<vmem>>) attributes {dimension_semantics = [#tpu.dimension_semantics<parallel>], iteration_bounds = array<i64: 2>, scalar_prefetch = 0 : i64, scratch_operands = 3 : i64, tpu.core_type = #tpu.core_type<tc>, window_params = [{transform_indices = @transform_0, window_bounds = array<i64: 1, 16, 1216>}, {transform_indices = @transform_1, window_bounds = array<i64: 1, 16, 1216>}, {transform_indices = @transform_2, window_bounds = array<i64: 1, 16, 1216>}, {pipeline_mode = #tpu.pipeline_mode<synchronous>, transform_indices = @transform_3, window_bounds = array<i64: 3, 112, 112>}, {pipeline_mode = #tpu.pipeline_mode<synchronous>, transform_indices = @transform_4, window_bounds = array<i64: 3, 16, 1>}, {pipeline_mode = #tpu.pipeline_mode<synchronous>, transform_indices = @transform_5, window_bounds = array<i64: 1, 1216>}, {transform_indices = @transform_6, window_bounds = array<i64: 1, 16, 1216>}]} {
    %cst = arith.constant 0.000000e+00 : bf16
    %0 = vector.broadcast %cst : bf16 to vector<16x117xbf16>
    %c0 = arith.constant 0 : index
    %c0_0 = arith.constant 0 : index
    %1 = vector.load %arg8[%c0, %c0_0] : memref<16x1664xbf16, #tpu.memory_space<vmem>>, vector<16x117xbf16>
    tpu.vector_store %arg8[%c0, %c0_0], %0 {strides = array<i32>} : memref<16x1664xbf16, #tpu.memory_space<vmem>>, vector<16x117xbf16>,
    %cst_1 = arith.constant 0.000000e+00 : bf16
    %2 = vector.broadcast %cst_1 : bf16 to vector<16x331xbf16>
    %c0_2 = arith.constant 0 : index
    %c1333 = arith.constant 1333 : index
    %3 = vector.load %arg8[%c0_2, %c1333] : memref<16x1664xbf16, #tpu.memory_space<vmem>>, vector<16x331xbf16>
    tpu.vector_store %arg8[%c0_2, %c1333], %2 {strides = array<i32>} : memref<16x1664xbf16, #tpu.memory_space<vmem>>, vector<16x331xbf16>,
    %c0_3 = arith.constant 0 : index
    %c0_4 = arith.constant 0 : index
    %c0_5 = arith.constant 0 : index
    %4 = vector.load %arg1[%c0_3, %c0_4, %c0_5] : memref<1x16x1216xf32, #tpu.memory_space<vmem>>, vector<1x16x1216xf32>
    %5 = vector.shape_cast %4 : vector<1x16x1216xf32> to vector<16x1216xf32>
    %c0_6 = arith.constant 0 : index
    %c0_7 = arith.constant 0 : index
    %6 = vector.load %arg6[%c0_6, %c0_7] : memref<1x1216xf32, #tpu.memory_space<vmem>>, vector<1x1216xf32>
    %7 = vector.broadcast %6 : vector<1x1216xf32> to vector<16x1216xf32>
    %8 = arith.mulf %5, %7 : vector<16x1216xf32>
    %9 = arith.truncf %8 : vector<16x1216xf32> to vector<16x1216xbf16>
    %c0_8 = arith.constant 0 : index
    %c117 = arith.constant 117 : index
    %10 = vector.load %arg8[%c0_8, %c117] : memref<16x1664xbf16, #tpu.memory_space<vmem>>, vector<16x1216xbf16>
    tpu.vector_store %arg8[%c0_8, %c117], %9 {strides = array<i32>} : memref<16x1664xbf16, #tpu.memory_space<vmem>>, vector<16x1216xbf16>,
    %c0_9 = arith.constant 0 : index
    %c0_10 = arith.constant 0 : index
    %11 = vector.load %arg8[%c0_9, %c0_10] : memref<16x1664xbf16, #tpu.memory_space<vmem>>, vector<16x1536xbf16>
    %c0_11 = arith.constant 0 : index
    %c0_12 = arith.constant 0 : index
    %12 = vector.load %arg9[%c0_11, %c0_12] : memref<112x1536xbf16, #tpu.memory_space<vmem>>, vector<16x1536xbf16>
    tpu.vector_store %arg9[%c0_11, %c0_12], %11 {strides = array<i32>} : memref<112x1536xbf16, #tpu.memory_space<vmem>>, vector<16x1536xbf16>,
    %c0_13 = arith.constant 0 : index
    %c1 = arith.constant 1 : index
    %13 = vector.load %arg8[%c0_13, %c1] : memref<16x1664xbf16, #tpu.memory_space<vmem>>, vector<16x1536xbf16>
    %c16 = arith.constant 16 : index
    %c0_14 = arith.constant 0 : index
    %14 = vector.load %arg9[%c16, %c0_14] : memref<112x1536xbf16, #tpu.memory_space<vmem>>, vector<16x1536xbf16>
    tpu.vector_store %arg9[%c16, %c0_14], %13 {strides = array<i32>} : memref<112x1536xbf16, #tpu.memory_space<vmem>>, vector<16x1536xbf16>,
    %c0_15 = arith.constant 0 : index
    %c2 = arith.constant 2 : index
    %15 = vector.load %arg8[%c0_15, %c2] : memref<16x1664xbf16, #tpu.memory_space<vmem>>, vector<16x1536xbf16>
    %c32 = arith.constant 32 : index
    %c0_16 = arith.constant 0 : index
    %16 = vector.load %arg9[%c32, %c0_16] : memref<112x1536xbf16, #tpu.memory_space<vmem>>, vector<16x1536xbf16>
    tpu.vector_store %arg9[%c32, %c0_16], %15 {strides = array<i32>} : memref<112x1536xbf16, #tpu.memory_space<vmem>>, vector<16x1536xbf16>,
    %c0_17 = arith.constant 0 : index
    %c3 = arith.constant 3 : index
    %17 = vector.load %arg8[%c0_17, %c3] : memref<16x1664xbf16, #tpu.memory_space<vmem>>, vector<16x1536xbf16>
    %c48 = arith.constant 48 : index
    %c0_18 = arith.constant 0 : index
    %18 = vector.load %arg9[%c48, %c0_18] : memref<112x1536xbf16, #tpu.memory_space<vmem>>, vector<16x1536xbf16>
    tpu.vector_store %arg9[%c48, %c0_18], %17 {strides = array<i32>} : memref<112x1536xbf16, #tpu.memory_space<vmem>>, vector<16x1536xbf16>,
    %c0_19 = arith.constant 0 : index
    %c4 = arith.constant 4 : index
    %19 = vector.load %arg8[%c0_19, %c4] : memref<16x1664xbf16, #tpu.memory_space<vmem>>, vector<16x1536xbf16>
    %c64 = arith.constant 64 : index
    %c0_20 = arith.constant 0 : index
    %20 = vector.load %arg9[%c64, %c0_20] : memref<112x1536xbf16, #tpu.memory_space<vmem>>, vector<16x1536xbf16>
    tpu.vector_store %arg9[%c64, %c0_20], %19 {strides = array<i32>} : memref<112x1536xbf16, #tpu.memory_space<vmem>>, vector<16x1536xbf16>,
    %c0_21 = arith.constant 0 : index
    %c5 = arith.constant 5 : index
    %21 = vector.load %arg8[%c0_21, %c5] : memref<16x1664xbf16, #tpu.memory_space<vmem>>, vector<16x1536xbf16>
    %c80 = arith.constant 80 : index
    %c0_22 = arith.constant 0 : index
    %22 = vector.load %arg9[%c80, %c0_22] : memref<112x1536xbf16, #tpu.memory_space<vmem>>, vector<16x1536xbf16>
    tpu.vector_store %arg9[%c80, %c0_22], %21 {strides = array<i32>} : memref<112x1536xbf16, #tpu.memory_space<vmem>>, vector<16x1536xbf16>,
    %c0_23 = arith.constant 0 : index
    %c6 = arith.constant 6 : index
    %23 = vector.load %arg8[%c0_23, %c6] : memref<16x1664xbf16, #tpu.memory_space<vmem>>, vector<16x1536xbf16>
    %c96 = arith.constant 96 : index
    %c0_24 = arith.constant 0 : index
    %24 = vector.load %arg9[%c96, %c0_24] : memref<112x1536xbf16, #tpu.memory_space<vmem>>, vector<16x1536xbf16>
    tpu.vector_store %arg9[%c96, %c0_24], %23 {strides = array<i32>} : memref<112x1536xbf16, #tpu.memory_space<vmem>>, vector<16x1536xbf16>,
    %c0_25 = arith.constant 0 : index
    %c0_26 = arith.constant 0 : index
    %c0_27 = arith.constant 0 : index
    %25 = vector.load %arg4[%c0_25, %c0_26, %c0_27] : memref<3x112x112xbf16, #tpu.memory_space<vmem>>, vector<1x112x112xbf16>
    %26 = vector.shape_cast %25 : vector<1x112x112xbf16> to vector<112x112xbf16>
    %c0_28 = arith.constant 0 : index
    %c0_29 = arith.constant 0 : index
    %27 = vector.load %arg9[%c0_28, %c0_29] : memref<112x1536xbf16, #tpu.memory_space<vmem>>, vector<112x1536xbf16>
    %cst_30 = arith.constant dense<0.000000e+00> : vector<112x1536xf32>
    %28 = tpu.matmul %26, %27, %cst_30 {dimension_numbers = #tpu.dot_dimension_numbers<[1], [0], [0], [1], [0, 0, 1, 1], [], []>} : vector<112x112xbf16>, vector<112x1536xbf16>, vector<112x1536xf32> -> vector<112x1536xf32>
    %c0_31 = arith.constant 0 : index
    %c0_32 = arith.constant 0 : index
    %29 = vector.load %arg10[%c0_31, %c0_32] : memref<112x1536xf32, #tpu.memory_space<vmem>>, vector<112x1536xf32>
    tpu.vector_store %arg10[%c0_31, %c0_32], %28 {strides = array<i32>} : memref<112x1536xf32, #tpu.memory_space<vmem>>, vector<112x1536xf32>,
    %c0_33 = arith.constant 0 : index
    %c0_34 = arith.constant 0 : index
    %30 = vector.load %arg10[%c0_33, %c0_34] : memref<112x1536xf32, #tpu.memory_space<vmem>>, vector<16x1216xf32>
    %c16_35 = arith.constant 16 : index
    %c38 = arith.constant 38 : index
    %31 = vector.load %arg10[%c16_35, %c38] : memref<112x1536xf32, #tpu.memory_space<vmem>>, vector<16x1216xf32>
    %32 = arith.addf %30, %31 : vector<16x1216xf32>
    %c32_36 = arith.constant 32 : index
    %c76 = arith.constant 76 : index
    %33 = vector.load %arg10[%c32_36, %c76] : memref<112x1536xf32, #tpu.memory_space<vmem>>, vector<16x1216xf32>
    %34 = arith.addf %32, %33 : vector<16x1216xf32>
    %c48_37 = arith.constant 48 : index
    %c114 = arith.constant 114 : index
    %35 = vector.load %arg10[%c48_37, %c114] : memref<112x1536xf32, #tpu.memory_space<vmem>>, vector<16x1216xf32>
    %36 = arith.addf %34, %35 : vector<16x1216xf32>
    %c64_38 = arith.constant 64 : index
    %c152 = arith.constant 152 : index
    %37 = vector.load %arg10[%c64_38, %c152] : memref<112x1536xf32, #tpu.memory_space<vmem>>, vector<16x1216xf32>
    %38 = arith.addf %36, %37 : vector<16x1216xf32>
    %c80_39 = arith.constant 80 : index
    %c190 = arith.constant 190 : index
    %39 = vector.load %arg10[%c80_39, %c190] : memref<112x1536xf32, #tpu.memory_space<vmem>>, vector<16x1216xf32>
    %40 = arith.addf %38, %39 : vector<16x1216xf32>
    %c96_40 = arith.constant 96 : index
    %c228 = arith.constant 228 : index
    %41 = vector.load %arg10[%c96_40, %c228] : memref<112x1536xf32, #tpu.memory_space<vmem>>, vector<16x1216xf32>
    %42 = arith.addf %40, %41 : vector<16x1216xf32>
    %c0_41 = arith.constant 0 : index
    %c0_42 = arith.constant 0 : index
    %c0_43 = arith.constant 0 : index
    %43 = vector.load %arg5[%c0_41, %c0_42, %c0_43] : memref<3x16x1xf32, #tpu.memory_space<vmem>>, vector<1x16x1xf32>
    %44 = vector.shape_cast %43 : vector<1x16x1xf32> to vector<16x1xf32>
    %45 = vector.broadcast %44 : vector<16x1xf32> to vector<16x1216xf32>
    %46 = arith.addf %42, %45 : vector<16x1216xf32>
    %cst_44 = arith.constant 0.000000e+00 : f32
    %47 = vector.broadcast %cst_44 : f32 to vector<16x1216xf32>
    %48 = arith.maximumf %46, %47 : vector<16x1216xf32>
    %c0_45 = arith.constant 0 : index
    %c0_46 = arith.constant 0 : index
    %49 = vector.load %arg6[%c0_45, %c0_46] : memref<1x1216xf32, #tpu.memory_space<vmem>>, vector<1x1216xf32>
    %50 = vector.broadcast %49 : vector<1x1216xf32> to vector<16x1216xf32>
    %51 = arith.mulf %48, %50 : vector<16x1216xf32>
    %52 = arith.truncf %51 : vector<16x1216xf32> to vector<16x1216xbf16>
    %c0_47 = arith.constant 0 : index
    %c117_48 = arith.constant 117 : index
    %53 = vector.load %arg8[%c0_47, %c117_48] : memref<16x1664xbf16, #tpu.memory_space<vmem>>, vector<16x1216xbf16>
    tpu.vector_store %arg8[%c0_47, %c117_48], %52 {strides = array<i32>} : memref<16x1664xbf16, #tpu.memory_space<vmem>>, vector<16x1216xbf16>,
    %c0_49 = arith.constant 0 : index
    %c0_50 = arith.constant 0 : index
    %54 = vector.load %arg8[%c0_49, %c0_50] : memref<16x1664xbf16, #tpu.memory_space<vmem>>, vector<16x1536xbf16>
    %c0_51 = arith.constant 0 : index
    %c0_52 = arith.constant 0 : index
    %55 = vector.load %arg9[%c0_51, %c0_52] : memref<112x1536xbf16, #tpu.memory_space<vmem>>, vector<16x1536xbf16>
    tpu.vector_store %arg9[%c0_51, %c0_52], %54 {strides = array<i32>} : memref<112x1536xbf16, #tpu.memory_space<vmem>>, vector<16x1536xbf16>,
    %c0_53 = arith.constant 0 : index
    %c1_54 = arith.constant 1 : index
    %56 = vector.load %arg8[%c0_53, %c1_54] : memref<16x1664xbf16, #tpu.memory_space<vmem>>, vector<16x1536xbf16>
    %c16_55 = arith.constant 16 : index
    %c0_56 = arith.constant 0 : index
    %57 = vector.load %arg9[%c16_55, %c0_56] : memref<112x1536xbf16, #tpu.memory_space<vmem>>, vector<16x1536xbf16>
    tpu.vector_store %arg9[%c16_55, %c0_56], %56 {strides = array<i32>} : memref<112x1536xbf16, #tpu.memory_space<vmem>>, vector<16x1536xbf16>,
    %c0_57 = arith.constant 0 : index
    %c2_58 = arith.constant 2 : index
    %58 = vector.load %arg8[%c0_57, %c2_58] : memref<16x1664xbf16, #tpu.memory_space<vmem>>, vector<16x1536xbf16>
    %c32_59 = arith.constant 32 : index
    %c0_60 = arith.constant 0 : index
    %59 = vector.load %arg9[%c32_59, %c0_60] : memref<112x1536xbf16, #tpu.memory_space<vmem>>, vector<16x1536xbf16>
    tpu.vector_store %arg9[%c32_59, %c0_60], %58 {strides = array<i32>} : memref<112x1536xbf16, #tpu.memory_space<vmem>>, vector<16x1536xbf16>,
    %c0_61 = arith.constant 0 : index
    %c3_62 = arith.constant 3 : index
    %60 = vector.load %arg8[%c0_61, %c3_62] : memref<16x1664xbf16, #tpu.memory_space<vmem>>, vector<16x1536xbf16>
    %c48_63 = arith.constant 48 : index
    %c0_64 = arith.constant 0 : index
    %61 = vector.load %arg9[%c48_63, %c0_64] : memref<112x1536xbf16, #tpu.memory_space<vmem>>, vector<16x1536xbf16>
    tpu.vector_store %arg9[%c48_63, %c0_64], %60 {strides = array<i32>} : memref<112x1536xbf16, #tpu.memory_space<vmem>>, vector<16x1536xbf16>,
    %c0_65 = arith.constant 0 : index
    %c4_66 = arith.constant 4 : index
    %62 = vector.load %arg8[%c0_65, %c4_66] : memref<16x1664xbf16, #tpu.memory_space<vmem>>, vector<16x1536xbf16>
    %c64_67 = arith.constant 64 : index
    %c0_68 = arith.constant 0 : index
    %63 = vector.load %arg9[%c64_67, %c0_68] : memref<112x1536xbf16, #tpu.memory_space<vmem>>, vector<16x1536xbf16>
    tpu.vector_store %arg9[%c64_67, %c0_68], %62 {strides = array<i32>} : memref<112x1536xbf16, #tpu.memory_space<vmem>>, vector<16x1536xbf16>,
    %c0_69 = arith.constant 0 : index
    %c5_70 = arith.constant 5 : index
    %64 = vector.load %arg8[%c0_69, %c5_70] : memref<16x1664xbf16, #tpu.memory_space<vmem>>, vector<16x1536xbf16>
    %c80_71 = arith.constant 80 : index
    %c0_72 = arith.constant 0 : index
    %65 = vector.load %arg9[%c80_71, %c0_72] : memref<112x1536xbf16, #tpu.memory_space<vmem>>, vector<16x1536xbf16>
    tpu.vector_store %arg9[%c80_71, %c0_72], %64 {strides = array<i32>} : memref<112x1536xbf16, #tpu.memory_space<vmem>>, vector<16x1536xbf16>,
    %c0_73 = arith.constant 0 : index
    %c6_74 = arith.constant 6 : index
    %66 = vector.load %arg8[%c0_73, %c6_74] : memref<16x1664xbf16, #tpu.memory_space<vmem>>, vector<16x1536xbf16>
    %c96_75 = arith.constant 96 : index
    %c0_76 = arith.constant 0 : index
    %67 = vector.load %arg9[%c96_75, %c0_76] : memref<112x1536xbf16, #tpu.memory_space<vmem>>, vector<16x1536xbf16>
    tpu.vector_store %arg9[%c96_75, %c0_76], %66 {strides = array<i32>} : memref<112x1536xbf16, #tpu.memory_space<vmem>>, vector<16x1536xbf16>,
    %c0_77 = arith.constant 0 : index
    %c0_78 = arith.constant 0 : index
    %c0_79 = arith.constant 0 : index
    %68 = vector.load %arg2[%c0_77, %c0_78, %c0_79] : memref<1x16x1216xf32, #tpu.memory_space<vmem>>, vector<1x16x1216xf32>
    %69 = vector.shape_cast %68 : vector<1x16x1216xf32> to vector<16x1216xf32>
    %c1_80 = arith.constant 1 : index
    %c0_81 = arith.constant 0 : index
    %c0_82 = arith.constant 0 : index
    %70 = vector.load %arg4[%c1_80, %c0_81, %c0_82] : memref<3x112x112xbf16, #tpu.memory_space<vmem>>, vector<1x112x112xbf16>
    %71 = vector.shape_cast %70 : vector<1x112x112xbf16> to vector<112x112xbf16>
    %c0_83 = arith.constant 0 : index
    %c0_84 = arith.constant 0 : index
    %72 = vector.load %arg9[%c0_83, %c0_84] : memref<112x1536xbf16, #tpu.memory_space<vmem>>, vector<112x1536xbf16>
    %cst_85 = arith.constant dense<0.000000e+00> : vector<112x1536xf32>
    %73 = tpu.matmul %71, %72, %cst_85 {dimension_numbers = #tpu.dot_dimension_numbers<[1], [0], [0], [1], [0, 0, 1, 1], [], []>} : vector<112x112xbf16>, vector<112x1536xbf16>, vector<112x1536xf32> -> vector<112x1536xf32>
    %c0_86 = arith.constant 0 : index
    %c0_87 = arith.constant 0 : index
    %74 = vector.load %arg10[%c0_86, %c0_87] : memref<112x1536xf32, #tpu.memory_space<vmem>>, vector<112x1536xf32>
    tpu.vector_store %arg10[%c0_86, %c0_87], %73 {strides = array<i32>} : memref<112x1536xf32, #tpu.memory_space<vmem>>, vector<112x1536xf32>,
    %c0_88 = arith.constant 0 : index
    %c0_89 = arith.constant 0 : index
    %75 = vector.load %arg10[%c0_88, %c0_89] : memref<112x1536xf32, #tpu.memory_space<vmem>>, vector<16x1216xf32>
    %c16_90 = arith.constant 16 : index
    %c38_91 = arith.constant 38 : index
    %76 = vector.load %arg10[%c16_90, %c38_91] : memref<112x1536xf32, #tpu.memory_space<vmem>>, vector<16x1216xf32>
    %77 = arith.addf %75, %76 : vector<16x1216xf32>
    %c32_92 = arith.constant 32 : index
    %c76_93 = arith.constant 76 : index
    %78 = vector.load %arg10[%c32_92, %c76_93] : memref<112x1536xf32, #tpu.memory_space<vmem>>, vector<16x1216xf32>
    %79 = arith.addf %77, %78 : vector<16x1216xf32>
    %c48_94 = arith.constant 48 : index
    %c114_95 = arith.constant 114 : index
    %80 = vector.load %arg10[%c48_94, %c114_95] : memref<112x1536xf32, #tpu.memory_space<vmem>>, vector<16x1216xf32>
    %81 = arith.addf %79, %80 : vector<16x1216xf32>
    %c64_96 = arith.constant 64 : index
    %c152_97 = arith.constant 152 : index
    %82 = vector.load %arg10[%c64_96, %c152_97] : memref<112x1536xf32, #tpu.memory_space<vmem>>, vector<16x1216xf32>
    %83 = arith.addf %81, %82 : vector<16x1216xf32>
    %c80_98 = arith.constant 80 : index
    %c190_99 = arith.constant 190 : index
    %84 = vector.load %arg10[%c80_98, %c190_99] : memref<112x1536xf32, #tpu.memory_space<vmem>>, vector<16x1216xf32>
    %85 = arith.addf %83, %84 : vector<16x1216xf32>
    %c96_100 = arith.constant 96 : index
    %c228_101 = arith.constant 228 : index
    %86 = vector.load %arg10[%c96_100, %c228_101] : memref<112x1536xf32, #tpu.memory_space<vmem>>, vector<16x1216xf32>
    %87 = arith.addf %85, %86 : vector<16x1216xf32>
    %c1_102 = arith.constant 1 : index
    %c0_103 = arith.constant 0 : index
    %c0_104 = arith.constant 0 : index
    %88 = vector.load %arg5[%c1_102, %c0_103, %c0_104] : memref<3x16x1xf32, #tpu.memory_space<vmem>>, vector<1x16x1xf32>
    %89 = vector.shape_cast %88 : vector<1x16x1xf32> to vector<16x1xf32>
    %90 = vector.broadcast %89 : vector<16x1xf32> to vector<16x1216xf32>
    %91 = arith.addf %87, %90 : vector<16x1216xf32>
    %cst_105 = arith.constant 0.000000e+00 : f32
    %92 = vector.broadcast %cst_105 : f32 to vector<16x1216xf32>
    %93 = arith.maximumf %91, %92 : vector<16x1216xf32>
    %94 = arith.addf %69, %93 : vector<16x1216xf32>
    %c0_106 = arith.constant 0 : index
    %c0_107 = arith.constant 0 : index
    %95 = vector.load %arg6[%c0_106, %c0_107] : memref<1x1216xf32, #tpu.memory_space<vmem>>, vector<1x1216xf32>
    %96 = vector.broadcast %95 : vector<1x1216xf32> to vector<16x1216xf32>
    %97 = arith.mulf %94, %96 : vector<16x1216xf32>
    %98 = arith.truncf %97 : vector<16x1216xf32> to vector<16x1216xbf16>
    %c0_108 = arith.constant 0 : index
    %c117_109 = arith.constant 117 : index
    %99 = vector.load %arg8[%c0_108, %c117_109] : memref<16x1664xbf16, #tpu.memory_space<vmem>>, vector<16x1216xbf16>
    tpu.vector_store %arg8[%c0_108, %c117_109], %98 {strides = array<i32>} : memref<16x1664xbf16, #tpu.memory_space<vmem>>, vector<16x1216xbf16>,
    %c0_110 = arith.constant 0 : index
    %c0_111 = arith.constant 0 : index
    %100 = vector.load %arg8[%c0_110, %c0_111] : memref<16x1664xbf16, #tpu.memory_space<vmem>>, vector<16x1536xbf16>
    %c0_112 = arith.constant 0 : index
    %c0_113 = arith.constant 0 : index
    %101 = vector.load %arg9[%c0_112, %c0_113] : memref<112x1536xbf16, #tpu.memory_space<vmem>>, vector<16x1536xbf16>
    tpu.vector_store %arg9[%c0_112, %c0_113], %100 {strides = array<i32>} : memref<112x1536xbf16, #tpu.memory_space<vmem>>, vector<16x1536xbf16>,
    %c0_114 = arith.constant 0 : index
    %c1_115 = arith.constant 1 : index
    %102 = vector.load %arg8[%c0_114, %c1_115] : memref<16x1664xbf16, #tpu.memory_space<vmem>>, vector<16x1536xbf16>
    %c16_116 = arith.constant 16 : index
    %c0_117 = arith.constant 0 : index
    %103 = vector.load %arg9[%c16_116, %c0_117] : memref<112x1536xbf16, #tpu.memory_space<vmem>>, vector<16x1536xbf16>
    tpu.vector_store %arg9[%c16_116, %c0_117], %102 {strides = array<i32>} : memref<112x1536xbf16, #tpu.memory_space<vmem>>, vector<16x1536xbf16>,
    %c0_118 = arith.constant 0 : index
    %c2_119 = arith.constant 2 : index
    %104 = vector.load %arg8[%c0_118, %c2_119] : memref<16x1664xbf16, #tpu.memory_space<vmem>>, vector<16x1536xbf16>
    %c32_120 = arith.constant 32 : index
    %c0_121 = arith.constant 0 : index
    %105 = vector.load %arg9[%c32_120, %c0_121] : memref<112x1536xbf16, #tpu.memory_space<vmem>>, vector<16x1536xbf16>
    tpu.vector_store %arg9[%c32_120, %c0_121], %104 {strides = array<i32>} : memref<112x1536xbf16, #tpu.memory_space<vmem>>, vector<16x1536xbf16>,
    %c0_122 = arith.constant 0 : index
    %c3_123 = arith.constant 3 : index
    %106 = vector.load %arg8[%c0_122, %c3_123] : memref<16x1664xbf16, #tpu.memory_space<vmem>>, vector<16x1536xbf16>
    %c48_124 = arith.constant 48 : index
    %c0_125 = arith.constant 0 : index
    %107 = vector.load %arg9[%c48_124, %c0_125] : memref<112x1536xbf16, #tpu.memory_space<vmem>>, vector<16x1536xbf16>
    tpu.vector_store %arg9[%c48_124, %c0_125], %106 {strides = array<i32>} : memref<112x1536xbf16, #tpu.memory_space<vmem>>, vector<16x1536xbf16>,
    %c0_126 = arith.constant 0 : index
    %c4_127 = arith.constant 4 : index
    %108 = vector.load %arg8[%c0_126, %c4_127] : memref<16x1664xbf16, #tpu.memory_space<vmem>>, vector<16x1536xbf16>
    %c64_128 = arith.constant 64 : index
    %c0_129 = arith.constant 0 : index
    %109 = vector.load %arg9[%c64_128, %c0_129] : memref<112x1536xbf16, #tpu.memory_space<vmem>>, vector<16x1536xbf16>
    tpu.vector_store %arg9[%c64_128, %c0_129], %108 {strides = array<i32>} : memref<112x1536xbf16, #tpu.memory_space<vmem>>, vector<16x1536xbf16>,
    %c0_130 = arith.constant 0 : index
    %c5_131 = arith.constant 5 : index
    %110 = vector.load %arg8[%c0_130, %c5_131] : memref<16x1664xbf16, #tpu.memory_space<vmem>>, vector<16x1536xbf16>
    %c80_132 = arith.constant 80 : index
    %c0_133 = arith.constant 0 : index
    %111 = vector.load %arg9[%c80_132, %c0_133] : memref<112x1536xbf16, #tpu.memory_space<vmem>>, vector<16x1536xbf16>
    tpu.vector_store %arg9[%c80_132, %c0_133], %110 {strides = array<i32>} : memref<112x1536xbf16, #tpu.memory_space<vmem>>, vector<16x1536xbf16>,
    %c0_134 = arith.constant 0 : index
    %c6_135 = arith.constant 6 : index
    %112 = vector.load %arg8[%c0_134, %c6_135] : memref<16x1664xbf16, #tpu.memory_space<vmem>>, vector<16x1536xbf16>
    %c96_136 = arith.constant 96 : index
    %c0_137 = arith.constant 0 : index
    %113 = vector.load %arg9[%c96_136, %c0_137] : memref<112x1536xbf16, #tpu.memory_space<vmem>>, vector<16x1536xbf16>
    tpu.vector_store %arg9[%c96_136, %c0_137], %112 {strides = array<i32>} : memref<112x1536xbf16, #tpu.memory_space<vmem>>, vector<16x1536xbf16>,
    %c0_138 = arith.constant 0 : index
    %c0_139 = arith.constant 0 : index
    %c0_140 = arith.constant 0 : index
    %114 = vector.load %arg3[%c0_138, %c0_139, %c0_140] : memref<1x16x1216xf32, #tpu.memory_space<vmem>>, vector<1x16x1216xf32>
    %115 = vector.shape_cast %114 : vector<1x16x1216xf32> to vector<16x1216xf32>
    %c2_141 = arith.constant 2 : index
    %c0_142 = arith.constant 0 : index
    %c0_143 = arith.constant 0 : index
    %116 = vector.load %arg4[%c2_141, %c0_142, %c0_143] : memref<3x112x112xbf16, #tpu.memory_space<vmem>>, vector<1x112x112xbf16>
    %117 = vector.shape_cast %116 : vector<1x112x112xbf16> to vector<112x112xbf16>
    %c0_144 = arith.constant 0 : index
    %c0_145 = arith.constant 0 : index
    %118 = vector.load %arg9[%c0_144, %c0_145] : memref<112x1536xbf16, #tpu.memory_space<vmem>>, vector<112x1536xbf16>
    %cst_146 = arith.constant dense<0.000000e+00> : vector<112x1536xf32>
    %119 = tpu.matmul %117, %118, %cst_146 {dimension_numbers = #tpu.dot_dimension_numbers<[1], [0], [0], [1], [0, 0, 1, 1], [], []>} : vector<112x112xbf16>, vector<112x1536xbf16>, vector<112x1536xf32> -> vector<112x1536xf32>
    %c0_147 = arith.constant 0 : index
    %c0_148 = arith.constant 0 : index
    %120 = vector.load %arg10[%c0_147, %c0_148] : memref<112x1536xf32, #tpu.memory_space<vmem>>, vector<112x1536xf32>
    tpu.vector_store %arg10[%c0_147, %c0_148], %119 {strides = array<i32>} : memref<112x1536xf32, #tpu.memory_space<vmem>>, vector<112x1536xf32>,
    %c0_149 = arith.constant 0 : index
    %c0_150 = arith.constant 0 : index
    %121 = vector.load %arg10[%c0_149, %c0_150] : memref<112x1536xf32, #tpu.memory_space<vmem>>, vector<16x1216xf32>
    %c16_151 = arith.constant 16 : index
    %c38_152 = arith.constant 38 : index
    %122 = vector.load %arg10[%c16_151, %c38_152] : memref<112x1536xf32, #tpu.memory_space<vmem>>, vector<16x1216xf32>
    %123 = arith.addf %121, %122 : vector<16x1216xf32>
    %c32_153 = arith.constant 32 : index
    %c76_154 = arith.constant 76 : index
    %124 = vector.load %arg10[%c32_153, %c76_154] : memref<112x1536xf32, #tpu.memory_space<vmem>>, vector<16x1216xf32>
    %125 = arith.addf %123, %124 : vector<16x1216xf32>
    %c48_155 = arith.constant 48 : index
    %c114_156 = arith.constant 114 : index
    %126 = vector.load %arg10[%c48_155, %c114_156] : memref<112x1536xf32, #tpu.memory_space<vmem>>, vector<16x1216xf32>
    %127 = arith.addf %125, %126 : vector<16x1216xf32>
    %c64_157 = arith.constant 64 : index
    %c152_158 = arith.constant 152 : index
    %128 = vector.load %arg10[%c64_157, %c152_158] : memref<112x1536xf32, #tpu.memory_space<vmem>>, vector<16x1216xf32>
    %129 = arith.addf %127, %128 : vector<16x1216xf32>
    %c80_159 = arith.constant 80 : index
    %c190_160 = arith.constant 190 : index
    %130 = vector.load %arg10[%c80_159, %c190_160] : memref<112x1536xf32, #tpu.memory_space<vmem>>, vector<16x1216xf32>
    %131 = arith.addf %129, %130 : vector<16x1216xf32>
    %c96_161 = arith.constant 96 : index
    %c228_162 = arith.constant 228 : index
    %132 = vector.load %arg10[%c96_161, %c228_162] : memref<112x1536xf32, #tpu.memory_space<vmem>>, vector<16x1216xf32>
    %133 = arith.addf %131, %132 : vector<16x1216xf32>
    %c2_163 = arith.constant 2 : index
    %c0_164 = arith.constant 0 : index
    %c0_165 = arith.constant 0 : index
    %134 = vector.load %arg5[%c2_163, %c0_164, %c0_165] : memref<3x16x1xf32, #tpu.memory_space<vmem>>, vector<1x16x1xf32>
    %135 = vector.shape_cast %134 : vector<1x16x1xf32> to vector<16x1xf32>
    %136 = vector.broadcast %135 : vector<16x1xf32> to vector<16x1216xf32>
    %137 = arith.addf %133, %136 : vector<16x1216xf32>
    %cst_166 = arith.constant 0.000000e+00 : f32
    %138 = vector.broadcast %cst_166 : f32 to vector<16x1216xf32>
    %139 = arith.maximumf %137, %138 : vector<16x1216xf32>
    %140 = arith.addf %115, %139 : vector<16x1216xf32>
    %c0_167 = arith.constant 0 : index
    %c0_168 = arith.constant 0 : index
    %c0_169 = arith.constant 0 : index
    %141 = vector.load %arg7[%c0_167, %c0_168, %c0_169] : memref<1x16x1216xf32, #tpu.memory_space<vmem>>, vector<1x16x1216xf32>
    %142 = vector.shape_cast %141 : vector<1x16x1216xf32> to vector<16x1216xf32>
    %143 = vector.shape_cast %140 : vector<16x1216xf32> to vector<1x16x1216xf32>
    tpu.vector_store %arg7[%c0_167, %c0_168, %c0_169], %143 {strides = array<i32>} : memref<1x16x1216xf32, #tpu.memory_space<vmem>>, vector<1x16x1216xf32>,
    return
  }
  func.func @transform_0(%arg0: i32) -> (i32, i32, i32) {
    %c0_i32 = arith.constant 0 : i32
    %c0_i32_0 = arith.constant 0 : i32
    %c0_i32_1 = arith.constant 0 : i32
    return %arg0, %c0_i32, %c0_i32_0 : i32, i32, i32
  }
  func.func @transform_1(%arg0: i32) -> (i32, i32, i32) {
    %c0_i32 = arith.constant 0 : i32
    %c0_i32_0 = arith.constant 0 : i32
    %c0_i32_1 = arith.constant 0 : i32
    return %arg0, %c0_i32, %c0_i32_0 : i32, i32, i32
  }
  func.func @transform_2(%arg0: i32) -> (i32, i32, i32) {
    %c0_i32 = arith.constant 0 : i32
    %c0_i32_0 = arith.constant 0 : i32
    %c0_i32_1 = arith.constant 0 : i32
    return %arg0, %c0_i32, %c0_i32_0 : i32, i32, i32
  }
  func.func @transform_3(%arg0: i32) -> (i32, i32, i32) {
    %c0_i32 = arith.constant 0 : i32
    %c0_i32_0 = arith.constant 0 : i32
    %c0_i32_1 = arith.constant 0 : i32
    %c0_i32_2 = arith.constant 0 : i32
    return %c0_i32, %c0_i32_0, %c0_i32_1 : i32, i32, i32
  }
  func.func @transform_4(%arg0: i32) -> (i32, i32, i32) {
    %c0_i32 = arith.constant 0 : i32
    %c0_i32_0 = arith.constant 0 : i32
    %c0_i32_1 = arith.constant 0 : i32
    %c0_i32_2 = arith.constant 0 : i32
    return %c0_i32, %c0_i32_0, %c0_i32_1 : i32, i32, i32
  }
  func.func @transform_5(%arg0: i32) -> (i32, i32) {
    %c0_i32 = arith.constant 0 : i32
    %c0_i32_0 = arith.constant 0 : i32
    %c0_i32_1 = arith.constant 0 : i32
    return %c0_i32, %c0_i32_0 : i32, i32
  }
  func.func @transform_6(%arg0: i32) -> (i32, i32, i32) {
    %c0_i32 = arith.constant 0 : i32
    %c0_i32_0 = arith.constant 0 : i32
    %c0_i32_1 = arith.constant 0 : i32
    return %arg0, %c0_i32, %c0_i32_0 : i32, i32, i32
  }
}

</mosaic_0001>

<llo_original>
// kernel: tile.8
$region0: #{tile.8}
  #allocation0 [shape = 's32[1]{0}', space=sflag, size = 0x4, scoped, tag = 'scoped memory for tile.8']
  %s0 = inlined_call_operand.vmem [shape: f32[38], index: 0, kind: input, shape index: {}]
  %s1 = inlined_call_operand.vmem [shape: f32[32,38], index: 1, kind: output, shape index: {}]
  // Predicated region
  $region2: #{tile.8} parent=0 // pred_check
    _
  $region3: #{tile.8} parent=0 // pred_check_branch
    %3 = sbr.rel (0) target = $region5
  $region4: #{tile.8} parent=0 // pred_region
    _
  $region5: #{tile.8} parent=0 // pred_fallthru
    _
  %v4 = vld [vmem:[%s0] ss:$0 sm:$0xff]
  %5 = vst [vmem:[%s1] sm:$0xff] %v4
  %s6 = scalar_lea.vmem %s1, 8
  %7 = vst [vmem:[%s6] sm:$0xff] %v4
  %s8 = scalar_lea.vmem %s1, 16
  %9 = vst [vmem:[%s8] sm:$0xff] %v4
  %s10 = scalar_lea.vmem %s1, 24
  %11 = vst [vmem:[%s10] sm:$0xff] %v4

// kernel: tile.9
$region0: #{tile.9}
  %s0 = inlined_call_operand.vmem [shape: f32[32,38], index: 0, kind: input, shape index: {}]
  %s1 = inlined_call_operand.vmem [shape: f32[1,1216], index: 1, kind: output, shape index: {}]
  $region1: #{tile.9} parent=0
    #allocation0 [shape = 'u8[40960]{0}', space=vmem, size = 0xa000, scoped, tag = 'scoped mem for output reshape']
    %v2 = vld [vmem:[%s0] sm:$0x1]
    %vm3 = vcmask 310272
    %4 = vst.msk [vmem:[#allocation0] sm:$0x1] %vm3, %v2
    %s5 = scalar_lea.vmem %s0, 10
    %v6 = vld [vmem:[%s5] sm:$0x1]
    %s7 = scalar_lea.vmem %s0, 10
    %v8 = vld [vmem:[%s7] sm:$0x1]
    %vm9 = vcmask 31744
    %v10 = vsel %vm9, %v8, %v6
    %11 = vrot.lane.b32.xlu0 %v10, 124
    %v12 = vpop.permute.xlu0 %11
    %vm13 = vcmask 277504
    %s14 = scalar_lea.vmem [#allocation0], 24
    %15 = vst.msk [vmem:[%s14] sm:$0x1] %vm13, %v12
    %vm16 = vcmask 1048544
    %s17 = scalar_lea.vmem [#allocation0], 16
    %18 = vst.msk [vmem:[%s17] sm:$0x1] %vm16, %v12
    %s19 = scalar_lea.vmem %s0, 20
    %v20 = vld [vmem:[%s19] sm:$0x1]
    %s21 = scalar_lea.vmem %s0, 20
    %v22 = vld [vmem:[%s21] sm:$0x1]
    %vm23 = vcmask 64512
    %v24 = vsel %vm23, %v22, %v20
    %25 = vrot.lane.b32.xlu0 %v24, 120
    %v26 = vpop.permute.xlu0 %25
    %vm27 = vcmask 244736
    %s28 = scalar_lea.vmem [#allocation0], 48
    %29 = vst.msk [vmem:[%s28] sm:$0x1] %vm27, %v26
    %vm30 = vcmask 1048512
    %s31 = scalar_lea.vmem [#allocation0], 40
    %32 = vst.msk [vmem:[%s31] sm:$0x1] %vm30, %v26
    %s33 = scalar_lea.vmem %s0, 30
    %v34 = vld [vmem:[%s33] sm:$0x1]
    %s35 = scalar_lea.vmem %s0, 30
    %v36 = vld [vmem:[%s35] sm:$0x1]
    %vm37 = vcmask 97280
    %v38 = vsel %vm37, %v36, %v34
    %39 = vrot.lane.b32.xlu0 %v38, 116
    %v40 = vpop.permute.xlu0 %39
    %vm41 = vcmask 211968
    %s42 = scalar_lea.vmem [#allocation0], 72
    %43 = vst.msk [vmem:[%s42] sm:$0x1] %vm41, %v40
    %vm44 = vcmask 1048480
    %s45 = scalar_lea.vmem [#allocation0], 64
    %46 = vst.msk [vmem:[%s45] sm:$0x1] %vm44, %v40
    %s47 = scalar_lea.vmem %s0, 3
    %v48 = vld [vmem:[%s47] sm:$0x1]
    %s49 = scalar_lea.vmem %s0, 3
    %v50 = vld [vmem:[%s49] sm:$0x1]
    %vm51 = vcmask 113664
    %v52 = vsel %vm51, %v50, %v48
    %53 = vrot.lane.b32.xlu0 %v52, 114
    %v54 = vpop.permute.xlu0 %53
    %vm55 = vcmask 195584
    %s56 = scalar_lea.vmem [#allocation0], 8
    %57 = vst.msk [vmem:[%s56] sm:$0x1] %vm55, %v54
    %vm58 = vcmask 1048464
    %59 = vst.msk [vmem:[#allocation0] sm:$0x1] %vm58, %v54
    %s60 = scalar_lea.vmem %s0, 13
    %v61 = vld [vmem:[%s60] sm:$0x1]
    %s62 = scalar_lea.vmem %s0, 13
    %v63 = vld [vmem:[%s62] sm:$0x1]
    %vm64 = vcmask 146432
    %v65 = vsel %vm64, %v63, %v61
    %66 = vrot.lane.b32.xlu0 %v65, 110
    %v67 = vpop.permute.xlu0 %66
    %vm68 = vcmask 162816
    %s69 = scalar_lea.vmem [#allocation0], 32
    %70 = vst.msk [vmem:[%s69] sm:$0x1] %vm68, %v67
    %vm71 = vcmask 1048432
    %s72 = scalar_lea.vmem [#allocation0], 24
    %73 = vst.msk [vmem:[%s72] sm:$0x1] %vm71, %v67
    %s74 = scalar_lea.vmem %s0, 23
    %v75 = vld [vmem:[%s74] sm:$0x1]
    %s76 = scalar_lea.vmem %s0, 23
    %v77 = vld [vmem:[%s76] sm:$0x1]
    %vm78 = vcmask 179200
    %v79 = vsel %vm78, %v77, %v75
    %80 = vrot.lane.b32.xlu0 %v79, 106
    %v81 = vpop.permute.xlu0 %80
    %vm82 = vcmask 130048
    %s83 = scalar_lea.vmem [#allocation0], 56
    %84 = vst.msk [vmem:[%s83] sm:$0x1] %vm82, %v81
    %vm85 = vcmask 1048400
    %s86 = scalar_lea.vmem [#allocation0], 48
    %87 = vst.msk [vmem:[%s86] sm:$0x1] %vm85, %v81
    %s88 = scalar_lea.vmem %s0, 6
    %v89 = vld [vmem:[%s88] sm:$0x1]
    %s90 = scalar_lea.vmem %s0, 6
    %v91 = vld [vmem:[%s90] sm:$0x1]
    %vm92 = vcmask 228352
    %v93 = vsel %vm92, %v91, %v89
    %94 = vrot.lane.b32.xlu0 %v93, 100
    %v95 = vpop.permute.xlu0 %94
    %vm96 = vcmask 80896
    %s97 = scalar_lea.vmem [#allocation0], 16
    %98 = vst.msk [vmem:[%s97] sm:$0x1] %vm96, %v95
    %vm99 = vcmask 1048352
    %s100 = scalar_lea.vmem [#allocation0], 8
    %101 = vst.msk [vmem:[%s100] sm:$0x1] %vm99, %v95
    %s102 = scalar_lea.vmem %s0, 16
    %v103 = vld [vmem:[%s102] sm:$0x1]
    %s104 = scalar_lea.vmem %s0, 16
    %v105 = vld [vmem:[%s104] sm:$0x1]
    %vm106 = vcmask 261120
    %v107 = vsel %vm106, %v105, %v103
    %108 = vrot.lane.b32.xlu0 %v107, 96
    %v109 = vpop.permute.xlu0 %108
    %vm110 = vcmask 48128
    %s111 = scalar_lea.vmem [#allocation0], 40
    %112 = vst.msk [vmem:[%s111] sm:$0x1] %vm110, %v109
    %vm113 = vcmask 1048320
    %s114 = scalar_lea.vmem [#allocation0], 32
    %115 = vst.msk [vmem:[%s114] sm:$0x1] %vm113, %v109
    %s116 = scalar_lea.vmem %s0, 26
    %v117 = vld [vmem:[%s116] sm:$0x1]
    %s118 = scalar_lea.vmem %s0, 26
    %v119 = vld [vmem:[%s118] sm:$0x1]
    %vm120 = vcmask 293888
    %v121 = vsel %vm120, %v119, %v117
    %122 = vrot.lane.b32.xlu0 %v121, 92
    %v123 = vpop.permute.xlu0 %122
    %vm124 = vcmask 15360
    %s125 = scalar_lea.vmem [#allocation0], 64
    %126 = vst.msk [vmem:[%s125] sm:$0x1] %vm124, %v123
    %vm127 = vcmask 1048288
    %s128 = scalar_lea.vmem [#allocation0], 56
    %129 = vst.msk [vmem:[%s128] sm:$0x1] %vm127, %v123
    %s130 = scalar_lea.vmem %s0, 9
    %v131 = vld [vmem:[%s130] sm:$0x1]
    %132 = vrot.lane.b32.xlu0 %v131, 86
    %v133 = vpop.permute.xlu0 %132
    %vm134 = vcmask 1015472
    %s135 = scalar_lea.vmem [#allocation0], 16
    %136 = vst.msk [vmem:[%s135] sm:$0x1] %vm134, %v133
    %s137 = scalar_lea.vmem %s0, 19
    %v138 = vld [vmem:[%s137] sm:$0x1]
    %139 = vrot.lane.b32.xlu0 %v138, 82
    %v140 = vpop.permute.xlu0 %139
    %vm141 = vcmask 982672
    %s142 = scalar_lea.vmem [#allocation0], 40
    %143 = vst.msk [vmem:[%s142] sm:$0x1] %vm141, %v140
    %s144 = scalar_lea.vmem %s0, 29
    %v145 = vld [vmem:[%s144] sm:$0x1]
    %146 = vrot.lane.b32.xlu0 %v145, 78
    %v147 = vpop.permute.xlu0 %146
    %vm148 = vcmask 949872
    %s149 = scalar_lea.vmem [#allocation0], 64
    %150 = vst.msk [vmem:[%s149] sm:$0x1] %vm148, %v147
    %s151 = scalar_lea.vmem %s0, 2
    %v152 = vld [vmem:[%s151] sm:$0x1]
    %153 = vrot.lane.b32.xlu0 %v152, 76
    %v154 = vpop.permute.xlu0 %153
    %vm155 = vcmask 933472
    %156 = vst.msk [vmem:[#allocation0] sm:$0x1] %vm155, %v154
    %s157 = scalar_lea.vmem %s0, 12
    %v158 = vld [vmem:[%s157] sm:$0x1]
    %159 = vrot.lane.b32.xlu0 %v158, 72
    %v160 = vpop.permute.xlu0 %159
    %vm161 = vcmask 900672
    %s162 = scalar_lea.vmem [#allocation0], 24
    %163 = vst.msk [vmem:[%s162] sm:$0x1] %vm161, %v160
    %s164 = scalar_lea.vmem %s0, 22
    %v165 = vld [vmem:[%s164] sm:$0x1]
    %166 = vrot.lane.b32.xlu0 %v165, 68
    %v167 = vpop.permute.xlu0 %166
    %vm168 = vcmask 867872
    %s169 = scalar_lea.vmem [#allocation0], 48
    %170 = vst.msk [vmem:[%s169] sm:$0x1] %vm168, %v167
    %s171 = scalar_lea.vmem %s0, 5
    %v172 = vld [vmem:[%s171] sm:$0x1]
    %173 = vrot.lane.b32.xlu0 %v172, 62
    %v174 = vpop.permute.xlu0 %173
    %vm175 = vcmask 818672
    %s176 = scalar_lea.vmem [#allocation0], 8
    %177 = vst.msk [vmem:[%s176] sm:$0x1] %vm175, %v174
    %s178 = scalar_lea.vmem %s0, 15
    %v179 = vld [vmem:[%s178] sm:$0x1]
    %180 = vrot.lane.b32.xlu0 %v179, 58
    %v181 = vpop.permute.xlu0 %180
    %vm182 = vcmask 785872
    %s183 = scalar_lea.vmem [#allocation0], 32
    %184 = vst.msk [vmem:[%s183] sm:$0x1] %vm182, %v181
    %s185 = scalar_lea.vmem %s0, 25
    %v186 = vld [vmem:[%s185] sm:$0x1]
    %187 = vrot.lane.b32.xlu0 %v186, 54
    %v188 = vpop.permute.xlu0 %187
    %vm189 = vcmask 753072
    %s190 = scalar_lea.vmem [#allocation0], 56
    %191 = vst.msk [vmem:[%s190] sm:$0x1] %vm189, %v188
    %s192 = scalar_lea.vmem %s0, 8
    %v193 = vld [vmem:[%s192] sm:$0x1]
    %194 = vrot.lane.b32.xlu0 %v193, 48
    %v195 = vpop.permute.xlu0 %194
    %vm196 = vcmask 703872
    %s197 = scalar_lea.vmem [#allocation0], 16
    %198 = vst.msk [vmem:[%s197] sm:$0x1] %vm196, %v195
    %s199 = scalar_lea.vmem %s0, 18
    %v200 = vld [vmem:[%s199] sm:$0x1]
    %201 = vrot.lane.b32.xlu0 %v200, 44
    %v202 = vpop.permute.xlu0 %201
    %vm203 = vcmask 671072
    %s204 = scalar_lea.vmem [#allocation0], 40
    %205 = vst.msk [vmem:[%s204] sm:$0x1] %vm203, %v202
    %s206 = scalar_lea.vmem %s0, 28
    %v207 = vld [vmem:[%s206] sm:$0x1]
    %208 = vrot.lane.b32.xlu0 %v207, 40
    %v209 = vpop.permute.xlu0 %208
    %vm210 = vcmask 638272
    %s211 = scalar_lea.vmem [#allocation0], 64
    %212 = vst.msk [vmem:[%s211] sm:$0x1] %vm210, %v209
    %s213 = scalar_lea.vmem %s0, 1
    %v214 = vld [vmem:[%s213] sm:$0x1]
    %215 = vrot.lane.b32.xlu0 %v214, 38
    %v216 = vpop.permute.xlu0 %215
    %vm217 = vcmask 621872
    %218 = vst.msk [vmem:[#allocation0] sm:$0x1] %vm217, %v216
    %s219 = scalar_lea.vmem %s0, 11
    %v220 = vld [vmem:[%s219] sm:$0x1]
    %221 = vrot.lane.b32.xlu0 %v220, 34
    %v222 = vpop.permute.xlu0 %221
    %vm223 = vcmask 589072
    %s224 = scalar_lea.vmem [#allocation0], 24
    %225 = vst.msk [vmem:[%s224] sm:$0x1] %vm223, %v222
    %s226 = scalar_lea.vmem %s0, 21
    %v227 = vld [vmem:[%s226] sm:$0x1]
    %228 = vrot.lane.b32.xlu0 %v227, 30
    %v229 = vpop.permute.xlu0 %228
    %vm230 = vcmask 556272
    %s231 = scalar_lea.vmem [#allocation0], 48
    %232 = vst.msk [vmem:[%s231] sm:$0x1] %vm230, %v229
    %s233 = scalar_lea.vmem %s0, 31
    %v234 = vld [vmem:[%s233] sm:$0x1]
    %235 = vrot.lane.b32.xlu0 %v234, 26
    %v236 = vpop.permute.xlu0 %235
    %vm237 = vcmask 523472
    %s238 = scalar_lea.vmem [#allocation0], 72
    %239 = vst.msk [vmem:[%s238] sm:$0x1] %vm237, %v236
    %s240 = scalar_lea.vmem %s0, 4
    %v241 = vld [vmem:[%s240] sm:$0x1]
    %242 = vrot.lane.b32.xlu0 %v241, 24
    %v243 = vpop.permute.xlu0 %242
    %vm244 = vcmask 507072
    %s245 = scalar_lea.vmem [#allocation0], 8
    %246 = vst.msk [vmem:[%s245] sm:$0x1] %vm244, %v243
    %s247 = scalar_lea.vmem %s0, 14
    %v248 = vld [vmem:[%s247] sm:$0x1]
    %249 = vrot.lane.b32.xlu0 %v248, 20
    %v250 = vpop.permute.xlu0 %249
    %vm251 = vcmask 474272
    %s252 = scalar_lea.vmem [#allocation0], 32
    %253 = vst.msk [vmem:[%s252] sm:$0x1] %vm251, %v250
    %s254 = scalar_lea.vmem %s0, 24
    %v255 = vld [vmem:[%s254] sm:$0x1]
    %256 = vrot.lane.b32.xlu0 %v255, 16
    %v257 = vpop.permute.xlu0 %256
    %vm258 = vcmask 441472
    %s259 = scalar_lea.vmem [#allocation0], 56
    %260 = vst.msk [vmem:[%s259] sm:$0x1] %vm258, %v257
    %s261 = scalar_lea.vmem %s0, 7
    %v262 = vld [vmem:[%s261] sm:$0x1]
    %263 = vrot.lane.b32.xlu0 %v262, 10
    %v264 = vpop.permute.xlu0 %263
    %vm265 = vcmask 392272
    %s266 = scalar_lea.vmem [#allocation0], 16
    %267 = vst.msk [vmem:[%s266] sm:$0x1] %vm265, %v264
    %s268 = scalar_lea.vmem %s0, 17
    %v269 = vld [vmem:[%s268] sm:$0x1]
    %270 = vrot.lane.b32.xlu0 %v269, 6
    %v271 = vpop.permute.xlu0 %270
    %vm272 = vcmask 359472
    %s273 = scalar_lea.vmem [#allocation0], 40
    %274 = vst.msk [vmem:[%s273] sm:$0x1] %vm272, %v271
    %s275 = scalar_lea.vmem %s0, 27
    %v276 = vld [vmem:[%s275] sm:$0x1]
    %277 = vrot.lane.b32.xlu0 %v276, 2
    %v278 = vpop.permute.xlu0 %277
    %vm279 = vcmask 326672
    %s280 = scalar_lea.vmem [#allocation0], 64
    %281 = vst.msk [vmem:[%s280] sm:$0x1] %vm279, %v278
    %s283 = sshll.u32 1, 1
    %s284 = ssub.s32 %s283, 1
    %v286 = vld [vmem:[#allocation0] sm:%s284]
    %s287 = sshll.u32 1, 1
    %s288 = ssub.s32 %s287, 1
    %289 = vst [vmem:[%s1] sm:%s288] %v286
    %s290 = scalar_lea.vmem [#allocation0], 8
    %v291 = vld [vmem:[%s290] sm:%s284]
    %s292 = sshll.u32 1, 1
    %s293 = ssub.s32 %s292, 1
    %s294 = scalar_lea.vmem %s1, 1
    %295 = vst [vmem:[%s294] sm:%s293] %v291
    %s296 = scalar_lea.vmem [#allocation0], 16
    %v297 = vld [vmem:[%s296] sm:%s284]
    %s298 = sshll.u32 1, 1
    %s299 = ssub.s32 %s298, 1
    %s300 = smul.addr 1, 2
    %s301 = scalar_lea.vmem %s1, %s300
    %302 = vst [vmem:[%s301] sm:%s299] %v297
    %s303 = scalar_lea.vmem [#allocation0], 24
    %v304 = vld [vmem:[%s303] sm:%s284]
    %s305 = sshll.u32 1, 1
    %s306 = ssub.s32 %s305, 1
    %s307 = smul.addr 1, 3
    %s308 = scalar_lea.vmem %s1, %s307
    %309 = vst [vmem:[%s308] sm:%s306] %v304
    %s310 = scalar_lea.vmem [#allocation0], 32
    %v311 = vld [vmem:[%s310] sm:%s284]
    %s312 = sshll.u32 1, 1
    %s313 = ssub.s32 %s312, 1
    %s314 = smul.addr 1, 4
    %s315 = scalar_lea.vmem %s1, %s314
    %316 = vst [vmem:[%s315] sm:%s313] %v311
    %s317 = scalar_lea.vmem [#allocation0], 40
    %v318 = vld [vmem:[%s317] sm:%s284]
    %s319 = sshll.u32 1, 1
    %s320 = ssub.s32 %s319, 1
    %s321 = smul.addr 1, 5
    %s322 = scalar_lea.vmem %s1, %s321
    %323 = vst [vmem:[%s322] sm:%s320] %v318
    %s324 = scalar_lea.vmem [#allocation0], 48
    %v325 = vld [vmem:[%s324] sm:%s284]
    %s326 = sshll.u32 1, 1
    %s327 = ssub.s32 %s326, 1
    %s328 = smul.addr 1, 6
    %s329 = scalar_lea.vmem %s1, %s328
    %330 = vst [vmem:[%s329] sm:%s327] %v325
    %s331 = scalar_lea.vmem [#allocation0], 56
    %v332 = vld [vmem:[%s331] sm:%s284]
    %s333 = sshll.u32 1, 1
    %s334 = ssub.s32 %s333, 1
    %s335 = smul.addr 1, 7
    %s336 = scalar_lea.vmem %s1, %s335
    %337 = vst [vmem:[%s336] sm:%s334] %v332
    %s338 = scalar_lea.vmem [#allocation0], 64
    %v339 = vld [vmem:[%s338] sm:%s284]
    %s340 = sshll.u32 1, 1
    %s341 = ssub.s32 %s340, 1
    %s342 = smul.addr 1, 8
    %s343 = scalar_lea.vmem %s1, %s342
    %344 = vst [vmem:[%s343] sm:%s341] %v339
    %s345 = scalar_lea.vmem [#allocation0], 72
    %v346 = vld [vmem:[%s345] sm:%s284]
    %s347 = sshll.u32 1, 1
    %s348 = ssub.s32 %s347, 1
    %s349 = smul.addr 1, 9
    %s350 = scalar_lea.vmem %s1, %s349
    %351 = vst [vmem:[%s350] sm:%s348] %v346

// kernel: model_forward.1
$region0: #{model_forward.1}
  #allocation0 [shape = 'u32[]', space=smem, size = 0x4, offset = 0x4, fixed_abs, tag = 'smem constant byte address 0x4 - core index']
  #allocation1 [shape = 'u32[144,128]{1,0:T(1,128)}', space=vmem, size = 0x12000, scoped, tag = 'internal scratch']
  #allocation2 [shape = 'bf16[16,1664]{1,0:T(8,128)(2,1)}', space=vmem, size = 0xd000, scoped, tag = 'scratch operand']
  #allocation3 [shape = 'bf16[112,1536]{1,0:T(8,128)(2,1)}', space=vmem, size = 0x54000, scoped, tag = 'scratch operand']
  #allocation4 [shape = 'f32[112,1536]{1,0:T(8,128)}', space=vmem, size = 0xa8000, scoped, tag = 'scratch operand']
  %s0 = inlined_call_operand.vmem [shape: f32[2,16,1216], index: 0, kind: input, shape index: {}]
  %s1 = inlined_call_operand.vmem [shape: f32[2,16,1216], index: 1, kind: input, shape index: {}]
  %s2 = inlined_call_operand.vmem [shape: f32[2,16,1216], index: 2, kind: input, shape index: {}]
  %s3 = inlined_call_operand.vmem [shape: bf16[3,112,112], index: 3, kind: input, shape index: {}]
  %s4 = inlined_call_operand.vmem [shape: f32[3,16,1], index: 4, kind: input, shape index: {}]
  %s5 = inlined_call_operand.vmem [shape: f32[1,1216], index: 5, kind: input, shape index: {}]
  %s6 = inlined_call_operand.vmem [shape: f32[2,16,1216], index: 6, kind: output, shape index: {}]
  %s7 = sld [smem:[#allocation0]]
  $region57: #{model_forward.1} parent=0
    _
  %s9 = ssub.s32 1, %s7
  %s10 = scalar_select 0, %s9, %s7
  loop: start=0, step=1, limit=4
  $region2: #{model_forward.1} parent=0 // loop_pre_header
    _
  $region3: #{model_forward.1} parent=0 // loop_header
    %s12 = sphi 0, %s16
    %p13 = scmp.ge.s32.totalorder %s12, 4
    %s22 = sphi 0, %s24
    %s25 = sphi 0, %s22
    %s26 = sphi 0, %s25
    %s42 = sphi 0, %s26
    %s48 = sphi 0, %s50
    %s51 = sphi 0, %s48
    %s52 = sphi 0, %s51
    %s68 = sphi 0, %s52
    %s74 = sphi 0, %s76
    %s77 = sphi 0, %s74
    %s78 = sphi 0, %s77
    %s94 = sphi 0, %s78
    %s98 = sphi 0, %s98
    %s100 = sphi 0, %s98
    %s101 = sphi 0, %s100
    %s115 = sphi 0, %s101
    %s119 = sphi 0, %s119
    %s121 = sphi 0, %s119
    %s122 = sphi 0, %s121
    %s136 = sphi 0, %s122
    %s140 = sphi 0, %s140
    %s142 = sphi 0, %s140
    %s143 = sphi 0, %s142
    %s157 = sphi 0, %s143
    %s163 = sphi 0, %s165
    %s166 = sphi 0, %s163
    %s167 = sphi 0, %s166
    %s183 = sphi 0, %s167
  $region4: #{model_forward.1} parent=0 // loop_header_branch
    %15 = sbr.rel (%p13) target = $region8
  $region5: #{model_forward.1} parent=0 // loop_body
    %s17 = ssub.s32 %s12, 1
    %s18 = ssub.s32 %s12, 2
    %s19 = sadd.s32 %s12, 1
    %s20 = ssub.s32 %s12, %s19
    %p21 = scmp.eq.s32.totalorder %s20, 0
    %s23 = sadd.s32 %s22, 1
    %s24 = scalar_select %p21, %s22, %s23
    %p27 = pneg %p21
    %p28 = scmp.eq.s32.totalorder %s12, 1
    %p29 = por %p27, %p28
    %p30 = scmp.ne.s32.totalorder %s22, %s25
    %p31 = scmp.eq.s32.totalorder %s12, 0
    %p32 = por %p30, %p31
    %p33 = scmp.ne.s32.totalorder %s22, %s25
    %p34 = scmp.eq.s32.totalorder %s17, 1
    %p35 = por %p33, %p34
    %p36 = scmp.ne.s32.totalorder %s25, %s26
    %p37 = scmp.eq.s32.totalorder %s17, 0
    %p38 = por %p36, %p37
    %p39 = scmp.ne.s32.totalorder %s25, %s26
    %p40 = scmp.eq.s32.totalorder %s18, 1
    %p41 = por %p39, %p40
    %p43 = scmp.ne.s32.totalorder %s26, %s42
    %p44 = scmp.eq.s32.totalorder %s18, 0
    %p45 = por %p43, %p44
    %s46 = ssub.s32 %s12, %s19
    %p47 = scmp.eq.s32.totalorder %s46, 0
    %s49 = sadd.s32 %s48, 1
    %s50 = scalar_select %p47, %s48, %s49
    %p53 = pneg %p47
    %p54 = scmp.eq.s32.totalorder %s12, 1
    %p55 = por %p53, %p54
    %p56 = scmp.ne.s32.totalorder %s48, %s51
    %p57 = scmp.eq.s32.totalorder %s12, 0
    %p58 = por %p56, %p57
    %p59 = scmp.ne.s32.totalorder %s48, %s51
    %p60 = scmp.eq.s32.totalorder %s17, 1
    %p61 = por %p59, %p60
    %p62 = scmp.ne.s32.totalorder %s51, %s52
    %p63 = scmp.eq.s32.totalorder %s17, 0
    %p64 = por %p62, %p63
    %p65 = scmp.ne.s32.totalorder %s51, %s52
    %p66 = scmp.eq.s32.totalorder %s18, 1
    %p67 = por %p65, %p66
    %p69 = scmp.ne.s32.totalorder %s52, %s68
    %p70 = scmp.eq.s32.totalorder %s18, 0
    %p71 = por %p69, %p70
    %s72 = ssub.s32 %s12, %s19
    %p73 = scmp.eq.s32.totalorder %s72, 0
    %s75 = sadd.s32 %s74, 1
    %s76 = scalar_select %p73, %s74, %s75
    %p79 = pneg %p73
    %p80 = scmp.eq.s32.totalorder %s12, 1
    %p81 = por %p79, %p80
    %p82 = scmp.ne.s32.totalorder %s74, %s77
    %p83 = scmp.eq.s32.totalorder %s12, 0
    %p84 = por %p82, %p83
    %p85 = scmp.ne.s32.totalorder %s74, %s77
    %p86 = scmp.eq.s32.totalorder %s17, 1
    %p87 = por %p85, %p86
    %p88 = scmp.ne.s32.totalorder %s77, %s78
    %p89 = scmp.eq.s32.totalorder %s17, 0
    %p90 = por %p88, %p89
    %p91 = scmp.ne.s32.totalorder %s77, %s78
    %p92 = scmp.eq.s32.totalorder %s18, 1
    %p93 = por %p91, %p92
    %p95 = scmp.ne.s32.totalorder %s78, %s94
    %p96 = scmp.eq.s32.totalorder %s18, 0
    %p97 = por %p95, %p96
    %s99 = sadd.s32 %s98, 1
    %p102 = scmp.eq.s32.totalorder %s12, 1
    %p103 = scmp.ne.s32.totalorder %s98, %s100
    %p104 = scmp.eq.s32.totalorder %s12, 0
    %p105 = por %p103, %p104
    %p106 = scmp.ne.s32.totalorder %s98, %s100
    %p107 = scmp.eq.s32.totalorder %s17, 1
    %p108 = por %p106, %p107
    %p109 = scmp.ne.s32.totalorder %s100, %s101
    %p110 = scmp.eq.s32.totalorder %s17, 0
    %p111 = por %p109, %p110
    %p112 = scmp.ne.s32.totalorder %s100, %s101
    %p113 = scmp.eq.s32.totalorder %s18, 1
    %p114 = por %p112, %p113
    %p116 = scmp.ne.s32.totalorder %s101, %s115
    %p117 = scmp.eq.s32.totalorder %s18, 0
    %p118 = por %p116, %p117
    %s120 = sadd.s32 %s119, 1
    %p123 = scmp.eq.s32.totalorder %s12, 1
    %p124 = scmp.ne.s32.totalorder %s119, %s121
    %p125 = scmp.eq.s32.totalorder %s12, 0
    %p126 = por %p124, %p125
    %p127 = scmp.ne.s32.totalorder %s119, %s121
    %p128 = scmp.eq.s32.totalorder %s17, 1
    %p129 = por %p127, %p128
    %p130 = scmp.ne.s32.totalorder %s121, %s122
    %p131 = scmp.eq.s32.totalorder %s17, 0
    %p132 = por %p130, %p131
    %p133 = scmp.ne.s32.totalorder %s121, %s122
    %p134 = scmp.eq.s32.totalorder %s18, 1
    %p135 = por %p133, %p134
    %p137 = scmp.ne.s32.totalorder %s122, %s136
    %p138 = scmp.eq.s32.totalorder %s18, 0
    %p139 = por %p137, %p138
    %s141 = sadd.s32 %s140, 1
    %p144 = scmp.eq.s32.totalorder %s12, 1
    %p145 = scmp.ne.s32.totalorder %s140, %s142
    %p146 = scmp.eq.s32.totalorder %s12, 0
    %p147 = por %p145, %p146
    %p148 = scmp.ne.s32.totalorder %s140, %s142
    %p149 = scmp.eq.s32.totalorder %s17, 1
    %p150 = por %p148, %p149
    %p151 = scmp.ne.s32.totalorder %s142, %s143
    %p152 = scmp.eq.s32.totalorder %s17, 0
    %p153 = por %p151, %p152
    %p154 = scmp.ne.s32.totalorder %s142, %s143
    %p155 = scmp.eq.s32.totalorder %s18, 1
    %p156 = por %p154, %p155
    %p158 = scmp.ne.s32.totalorder %s143, %s157
    %p159 = scmp.eq.s32.totalorder %s18, 0
    %p160 = por %p158, %p159
    %s161 = ssub.s32 %s12, %s19
    %p162 = scmp.eq.s32.totalorder %s161, 0
    %s164 = sadd.s32 %s163, 1
    %s165 = scalar_select %p162, %s163, %s164
    %p168 = pneg %p162
    %p169 = scmp.eq.s32.totalorder %s12, 1
    %p170 = por %p168, %p169
    %p171 = scmp.ne.s32.totalorder %s163, %s166
    %p172 = scmp.eq.s32.totalorder %s12, 0
    %p173 = por %p171, %p172
    %p174 = scmp.ne.s32.totalorder %s163, %s166
    %p175 = scmp.eq.s32.totalorder %s17, 1
    %p176 = por %p174, %p175
    %p177 = scmp.ne.s32.totalorder %s166, %s167
    %p178 = scmp.eq.s32.totalorder %s17, 0
    %p179 = por %p177, %p178
    %p180 = scmp.ne.s32.totalorder %s166, %s167
    %p181 = scmp.eq.s32.totalorder %s18, 1
    %p182 = por %p180, %p181
    %p184 = scmp.ne.s32.totalorder %s167, %s183
    %p185 = scmp.eq.s32.totalorder %s18, 0
    %p186 = por %p184, %p185
    %p187 = scmp.le.s32.totalorder 1, %s12
    %p188 = scmp.lt.s32.totalorder %s12, 3
    %p189 = pnand %p187, %p188
    %p190 = pneg %p189
    // Predicated region
    $region9: #{model_forward.1} parent=5 // pred_check
      _
    $region10: #{model_forward.1} parent=5 // pred_check_branch
      %192 = sbr.rel (%p189) target = $region12
    $region11: #{model_forward.1} parent=5 // pred_region
      %s193 = ssub.s32 %s12, 1
      // Predicated region
      $region13: #{model_forward.1} parent=11 // pred_check
        %p194 = pneg %p111
      $region14: #{model_forward.1} parent=11 // pred_check_branch
        %196 = sbr.rel (%p194) target = $region16
      $region15: #{model_forward.1} parent=11 // pred_region
        _
      $region16: #{model_forward.1} parent=11 // pred_fallthru
        _
      // Predicated region
      $region17: #{model_forward.1} parent=11 // pred_check
        %p197 = pneg %p132
      $region18: #{model_forward.1} parent=11 // pred_check_branch
        %199 = sbr.rel (%p197) target = $region20
      $region19: #{model_forward.1} parent=11 // pred_region
        _
      $region20: #{model_forward.1} parent=11 // pred_fallthru
        _
      // Predicated region
      $region21: #{model_forward.1} parent=11 // pred_check
        %p200 = pneg %p153
      $region22: #{model_forward.1} parent=11 // pred_check_branch
        %202 = sbr.rel (%p200) target = $region24
      $region23: #{model_forward.1} parent=11 // pred_region
        _
      $region24: #{model_forward.1} parent=11 // pred_fallthru
        _
    $region12: #{model_forward.1} parent=5 // pred_fallthru
      _
    %p203 = scmp.lt.s32.totalorder %s12, 2
    // Predicated region
    $region25: #{model_forward.1} parent=5 // pred_check
      %p204 = pneg %p203
    $region26: #{model_forward.1} parent=5 // pred_check_branch
      %206 = sbr.rel (%p204) target = $region28
    $region27: #{model_forward.1} parent=5 // pred_region
      // Predicated region
      $region29: #{model_forward.1} parent=27 // pred_check
        %p207 = pneg %p32
      $region30: #{model_forward.1} parent=27 // pred_check_branch
        %209 = sbr.rel (%p207) target = $region32
      $region31: #{model_forward.1} parent=27 // pred_region
        %p210 = scmp.lt.s32.totalorder %s12, 1
        %s211 = scalar_select %p210, %s12, 1
        %s212 = smul.addr %s211, 20
        %s213 = smul.addr %s212, 8
        %s214 = scalar_lea.vmem %s0, %s213
      $region32: #{model_forward.1} parent=27 // pred_fallthru
        _
      // Predicated region
      $region33: #{model_forward.1} parent=27 // pred_check
        %p215 = pneg %p58
      $region34: #{model_forward.1} parent=27 // pred_check_branch
        %217 = sbr.rel (%p215) target = $region36
      $region35: #{model_forward.1} parent=27 // pred_region
        %p218 = scmp.lt.s32.totalorder %s12, 1
        %s219 = scalar_select %p218, %s12, 1
        %s220 = smul.addr %s219, 20
        %s221 = smul.addr %s220, 8
        %s222 = scalar_lea.vmem %s1, %s221
      $region36: #{model_forward.1} parent=27 // pred_fallthru
        _
      // Predicated region
      $region37: #{model_forward.1} parent=27 // pred_check
        %p223 = pneg %p84
      $region38: #{model_forward.1} parent=27 // pred_check_branch
        %225 = sbr.rel (%p223) target = $region40
      $region39: #{model_forward.1} parent=27 // pred_region
        %p226 = scmp.lt.s32.totalorder %s12, 1
        %s227 = scalar_select %p226, %s12, 1
        %s228 = smul.addr %s227, 20
        %s229 = smul.addr %s228, 8
        %s230 = scalar_lea.vmem %s2, %s229
      $region40: #{model_forward.1} parent=27 // pred_fallthru
        _
    $region28: #{model_forward.1} parent=5 // pred_fallthru
      _
    %p231 = scmp.le.s32.totalorder 1, %s12
    %p232 = scmp.lt.s32.totalorder %s12, 3
    %p233 = pnand %p231, %p232
    %p234 = pneg %p233
    // Predicated region
    $region41: #{model_forward.1} parent=5 // pred_check
      _
    $region42: #{model_forward.1} parent=5 // pred_check_branch
      %236 = sbr.rel (%p233) target = $region44
    $region43: #{model_forward.1} parent=5 // pred_region
      %s237 = ssub.s32 %s12, 1
      %p238 = scmp.lt.s32.totalorder %s17, 1
      %s239 = scalar_select %p238, %s17, 1
      %s240 = smul.addr %s239, 20
      %s241 = smul.addr %s240, 8
      %s242 = scalar_lea.vmem %s0, %s241
      %p243 = pneg %p38
      %p244 = pneg %p35
      %p245 = scmp.lt.s32.totalorder %s17, 1
      %s246 = scalar_select %p245, %s17, 1
      %s247 = smul.addr %s246, 20
      %s248 = smul.addr %s247, 8
      %s249 = scalar_lea.vmem %s1, %s248
      %p250 = pneg %p64
      %p251 = pneg %p61
      %p252 = scmp.lt.s32.totalorder %s17, 1
      %s253 = scalar_select %p252, %s17, 1
      %s254 = smul.addr %s253, 20
      %s255 = smul.addr %s254, 8
      %s256 = scalar_lea.vmem %s2, %s255
      %p257 = pneg %p90
      %p258 = pneg %p87
      %p259 = pneg %p111
      %p260 = pneg %p108
      %p261 = pneg %p132
      %p262 = pneg %p129
      %p263 = pneg %p153
      %p264 = pneg %p150
      %p265 = pneg %p179
      %p266 = pneg %p176
      %p267 = scmp.lt.s32.totalorder %s17, 1
      %s268 = scalar_select %p267, %s17, 1
      %s269 = smul.addr %s268, 20
      %s270 = smul.addr %s269, 8
      %s271 = scalar_lea.vmem %s6, %s270
      %p272 = scmp.lt.s32.totalorder %s17, 1
      %s273 = scalar_select %p272, %s17, 1
      %s274 = smul.addr %s273, 20
      %s275 = smul.addr %s274, 8
      %s276 = scalar_lea.vmem %s0, %s275
      %p277 = scmp.lt.s32.totalorder %s17, 1
      %s278 = scalar_select %p277, %s17, 1
      %s279 = smul.addr %s278, 20
      %s280 = smul.addr %s279, 8
      %s281 = scalar_lea.vmem %s1, %s280
      %p282 = scmp.lt.s32.totalorder %s17, 1
      %s283 = scalar_select %p282, %s17, 1
      %s284 = smul.addr %s283, 20
      %s285 = smul.addr %s284, 8
      %s286 = scalar_lea.vmem %s2, %s285
      %p287 = scmp.lt.s32.totalorder %s17, 1
      %s288 = scalar_select %p287, %s17, 1
      %s289 = smul.addr %s288, 20
      %s290 = smul.addr %s289, 8
      %s291 = scalar_lea.vmem %s6, %s290
      %vm293 = vcmask 953344
      %294 = vst.msk [vmem:[#allocation2] sm:$0xf] %vm293, 0
      %295 = vst.msk [vmem:[#allocation2 + $0x34] sm:$0xf] %vm293, 0
      %vm296 = vcmask 1043880
      %vm297 = vcmask 1047556
      %vm298 = vmor %vm297, %vm296
      %299 = vst.msk [vmem:[#allocation2 + $0x28] sm:$0xff] %vm298, 0
      %300 = vst [vmem:[#allocation2 + $0x30] sm:$0xf] 0
      %301 = vst.msk [vmem:[#allocation2 + $0x5c] sm:$0xff] %vm298, 0
      %302 = vst [vmem:[#allocation2 + $0x64] sm:$0xf] 0
      %v303 = vld [vmem:[%s276] sm:$0xff]
      %v304 = vld [vmem:[%s276 + $0x8] sm:$0xff]
      %v305 = vld [vmem:[%s276 + $0x10] sm:$0xff]
      %v306 = vld [vmem:[%s276 + $0x18] sm:$0xff]
      %v307 = vld [vmem:[%s276 + $0x20] sm:$0xff]
      %v308 = vld [vmem:[%s276 + $0x28] sm:$0xff]
      %v309 = vld [vmem:[%s276 + $0x30] sm:$0xff]
      %v310 = vld [vmem:[%s276 + $0x38] sm:$0xff]
      %v311 = vld [vmem:[%s276 + $0x40] sm:$0xff]
      %v312 = vld [vmem:[%s276 + $0x48] sm:$0xff]
      %v313 = vld [vmem:[%s276 + $0x50] sm:$0xff]
      %v314 = vld [vmem:[%s276 + $0x58] sm:$0xff]
      %v315 = vld [vmem:[%s276 + $0x60] sm:$0xff]
      %v316 = vld [vmem:[%s276 + $0x68] sm:$0xff]
      %v317 = vld [vmem:[%s276 + $0x70] sm:$0xff]
      %v318 = vld [vmem:[%s276 + $0x78] sm:$0xff]
      %v319 = vld [vmem:[%s276 + $0x80] sm:$0xff]
      %v320 = vld [vmem:[%s276 + $0x88] sm:$0xff]
      %v321 = vld [vmem:[%s276 + $0x90] sm:$0xff]
      %v322 = vld [vmem:[%s276 + $0x98] sm:$0xff]
      %v323 = vld [vmem:[%s5] sm:$0xff]
      %v324 = vld [vmem:[%s5 + $0x8] sm:$0x3]
      %v327 = vlaneseq
      %v328 = vshrl.u32 %v327, 7
      %v329 = vsub.s32 0, %v328
      %v330 = vrot.slane %v323, %v329
      %v331 = vlaneseq
      %v332 = vshrl.u32 %v331, 7
      %v333 = vsub.s32 1, %v332
      %v334 = vrot.slane %v323, %v333
      %v335 = vlaneseq
      %v336 = vshrl.u32 %v335, 7
      %v337 = vsub.s32 2, %v336
      %v338 = vrot.slane %v323, %v337
      %v339 = vlaneseq
      %v340 = vshrl.u32 %v339, 7
      %v341 = vsub.s32 3, %v340
      %v342 = vrot.slane %v323, %v341
      %v343 = vlaneseq
      %v344 = vshrl.u32 %v343, 7
      %v345 = vsub.s32 4, %v344
      %v346 = vrot.slane %v323, %v345
      %v347 = vlaneseq
      %v348 = vshrl.u32 %v347, 7
      %v349 = vsub.s32 5, %v348
      %v350 = vrot.slane %v323, %v349
      %v351 = vlaneseq
      %v352 = vshrl.u32 %v351, 7
      %v353 = vsub.s32 6, %v352
      %v354 = vrot.slane %v323, %v353
      %v355 = vlaneseq
      %v356 = vshrl.u32 %v355, 7
      %v357 = vsub.s32 7, %v356
      %v358 = vrot.slane %v323, %v357
      %v359 = vlaneseq
      %v360 = vshrl.u32 %v359, 7
      %v361 = vsub.s32 0, %v360
      %v362 = vrot.slane %v324, %v361
      %v363 = vlaneseq
      %v364 = vshrl.u32 %v363, 7
      %v365 = vsub.s32 1, %v364
      %v366 = vrot.slane %v324, %v365
      %v377 = vmul.f32 %v303, %v330
      %v378 = vmul.f32 %v304, %v334
      %v379 = vmul.f32 %v305, %v338
      %v380 = vmul.f32 %v306, %v342
      %v381 = vmul.f32 %v307, %v346
      %v382 = vmul.f32 %v308, %v350
      %v383 = vmul.f32 %v309, %v354
      %v384 = vmul.f32 %v310, %v358
      %v385 = vmul.f32 %v311, %v362
      %v386 = vmul.f32 %v312, %v366
      %v387 = vmul.f32 %v313, %v330
      %v388 = vmul.f32 %v314, %v334
      %v389 = vmul.f32 %v315, %v338
      %v390 = vmul.f32 %v316, %v342
      %v391 = vmul.f32 %v317, %v346
      %v392 = vmul.f32 %v318, %v350
      %v393 = vmul.f32 %v319, %v354
      %v394 = vmul.f32 %v320, %v358
      %v395 = vmul.f32 %v321, %v362
      %v396 = vmul.f32 %v322, %v366
      %v397 = vpack.c.bf16 %v387, %v377
      %v398 = vpack.c.bf16 %v388, %v378
      %v399 = vpack.c.bf16 %v389, %v379
      %v400 = vpack.c.bf16 %v390, %v380
      %v401 = vpack.c.bf16 %v391, %v381
      %v402 = vpack.c.bf16 %v392, %v382
      %v403 = vpack.c.bf16 %v393, %v383
      %v404 = vpack.c.bf16 %v394, %v384
      %v405 = vpack.c.bf16 %v395, %v385
      %v406 = vpack.c.bf16 %v396, %v386
      %v417 = vunpack.c.l.b16 %v397
      %v418 = vunpack.c.l.b16 %v398
      %v419 = vunpack.c.l.b16 %v399
      %v420 = vunpack.c.l.b16 %v400
      %v421 = vunpack.c.l.b16 %v401
      %v422 = vunpack.c.l.b16 %v402
      %v423 = vunpack.c.l.b16 %v403
      %v424 = vunpack.c.l.b16 %v404
      %v425 = vunpack.c.l.b16 %v405
      %v426 = vunpack.c.l.b16 %v406
      %v427 = vunpack.c.h.b16 %v397
      %v428 = vunpack.c.h.b16 %v398
      %v429 = vunpack.c.h.b16 %v399
      %v430 = vunpack.c.h.b16 %v400
      %v431 = vunpack.c.h.b16 %v401
      %v432 = vunpack.c.h.b16 %v402
      %v433 = vunpack.c.h.b16 %v403
      %v434 = vunpack.c.h.b16 %v404
      %v435 = vunpack.c.h.b16 %v405
      %v436 = vunpack.c.h.b16 %v406
      %v437 = vpack.c.b16 %v418, %v417
      %v438 = vpack.c.b16 %v420, %v419
      %v439 = vpack.c.b16 %v422, %v421
      %v440 = vpack.c.b16 %v424, %v423
      %v441 = vpack.c.b16 %v426, %v425
      %v442 = vpack.c.b16 %v428, %v427
      %v443 = vpack.c.b16 %v430, %v429
      %v444 = vpack.c.b16 %v432, %v431
      %v445 = vpack.c.b16 %v434, %v433
      %v446 = vpack.c.b16 %v436, %v435
      %447 = vrot.lane.b32.xlu0 %v437, 117
      %v448 = vpop.permute.xlu0 %447
      %449 = vrot.lane.b32.xlu0 %v438, 117
      %v450 = vpop.permute.xlu0 %449
      %451 = vrot.lane.b32.xlu0 %v439, 117
      %v452 = vpop.permute.xlu0 %451
      %453 = vrot.lane.b32.xlu0 %v440, 117
      %v454 = vpop.permute.xlu0 %453
      %455 = vrot.lane.b32.xlu0 %v441, 117
      %v456 = vpop.permute.xlu0 %455
      %457 = vrot.lane.b32.xlu0 %v442, 117
      %v458 = vpop.permute.xlu0 %457
      %459 = vrot.lane.b32.xlu0 %v443, 117
      %v460 = vpop.permute.xlu0 %459
      %461 = vrot.lane.b32.xlu0 %v444, 117
      %v462 = vpop.permute.xlu0 %461
      %463 = vrot.lane.b32.xlu0 %v445, 117
      %v464 = vpop.permute.xlu0 %463
      %465 = vrot.lane.b32.xlu0 %v446, 117
      %v466 = vpop.permute.xlu0 %465
      %v467 = vrot.slane %v448, 4
      %v468 = vrot.slane %v450, 4
      %v469 = vrot.slane %v452, 4
      %v470 = vrot.slane %v454, 4
      %v471 = vrot.slane %v456, 4
      %v472 = vrot.slane %v458, 4
      %v473 = vrot.slane %v460, 4
      %v474 = vrot.slane %v462, 4
      %v475 = vrot.slane %v464, 4
      %v476 = vrot.slane %v466, 4
      %vm477 = vcmask 957440
      %v478 = vsel %vm477, %v467, %v448
      %vm479 = vcmask 1043456
      %v480 = vsel %vm479, %v467, %v468
      %v481 = vsel %vm477, %v480, %v450
      %v482 = vsel %vm479, %v468, %v469
      %v483 = vsel %vm477, %v482, %v452
      %v484 = vsel %vm479, %v469, %v470
      %v485 = vsel %vm477, %v484, %v454
      %v486 = vsel %vm479, %v470, %v471
      %v487 = vsel %vm477, %v486, %v456
      %v488 = vsel %vm477, %v472, %v458
      %v489 = vsel %vm479, %v472, %v473
      %v490 = vsel %vm477, %v489, %v460
      %v491 = vsel %vm479, %v473, %v474
      %v492 = vsel %vm477, %v491, %v462
      %v493 = vsel %vm479, %v474, %v475
      %v494 = vsel %vm477, %v493, %v464
      %v495 = vsel %vm479, %v475, %v476
      %v496 = vsel %vm477, %v495, %v466
      %vm509 = vcmask 1044392
      %vm510 = vmor %vm297, %vm509
      %511 = vst.msk [vmem:[#allocation2] sm:$0xff] %vm510, %v478
      %512 = vst [vmem:[#allocation2 + $0x8] sm:$0xff] %v481
      %513 = vst [vmem:[#allocation2 + $0x10] sm:$0xff] %v483
      %514 = vst [vmem:[#allocation2 + $0x18] sm:$0xff] %v485
      %515 = vst [vmem:[#allocation2 + $0x20] sm:$0xff] %v487
      %vm516 = vcmask 429056
      %517 = vst.msk [vmem:[#allocation2 + $0x28] sm:$0xf] %vm516, %v471
      %518 = vst.msk [vmem:[#allocation2 + $0x34] sm:$0xff] %vm510, %v488
      %519 = vst [vmem:[#allocation2 + $0x3c] sm:$0xff] %v490
      %520 = vst [vmem:[#allocation2 + $0x44] sm:$0xff] %v492
      %521 = vst [vmem:[#allocation2 + $0x4c] sm:$0xff] %v494
      %522 = vst [vmem:[#allocation2 + $0x54] sm:$0xff] %v496
      %523 = vst.msk [vmem:[#allocation2 + $0x5c] sm:$0xf] %vm516, %v476
      %v524 = vld [vmem:[#allocation2] sm:$0xff]
      %v525 = vld [vmem:[#allocation2 + $0x8] sm:$0xff]
      %v526 = vld [vmem:[#allocation2 + $0x10] sm:$0xff]
      %v527 = vld [vmem:[#allocation2 + $0x18] sm:$0xff]
      %v528 = vld [vmem:[#allocation2 + $0x20] sm:$0xff]
      %v529 = vld [vmem:[#allocation2 + $0x28] sm:$0xff]
      %v530 = vld [vmem:[#allocation2 + $0x34] sm:$0xff]
      %v531 = vld [vmem:[#allocation2 + $0x3c] sm:$0xff]
      %v532 = vld [vmem:[#allocation2 + $0x44] sm:$0xff]
      %v533 = vld [vmem:[#allocation2 + $0x4c] sm:$0xff]
      %v534 = vld [vmem:[#allocation2 + $0x54] sm:$0xff]
      %v535 = vld [vmem:[#allocation2 + $0x5c] sm:$0xff]
      %536 = vst [vmem:[#allocation3] sm:$0xff] %v524
      %537 = vst [vmem:[#allocation3 + $0x8] sm:$0xff] %v525
      %538 = vst [vmem:[#allocation3 + $0x10] sm:$0xff] %v526
      %539 = vst [vmem:[#allocation3 + $0x18] sm:$0xff] %v527
      %540 = vst [vmem:[#allocation3 + $0x20] sm:$0xff] %v528
      %541 = vst [vmem:[#allocation3 + $0x28] sm:$0xff] %v529
      %542 = vst [vmem:[#allocation3 + $0x30] sm:$0xff] %v530
      %543 = vst [vmem:[#allocation3 + $0x38] sm:$0xff] %v531
      %544 = vst [vmem:[#allocation3 + $0x40] sm:$0xff] %v532
      %545 = vst [vmem:[#allocation3 + $0x48] sm:$0xff] %v533
      %546 = vst [vmem:[#allocation3 + $0x50] sm:$0xff] %v534
      %547 = vst [vmem:[#allocation3 + $0x58] sm:$0xff] %v535
      %v548 = vld [vmem:[#allocation2] sm:$0xff]
      %v549 = vld [vmem:[#allocation2 + $0x8] sm:$0xff]
      %v550 = vld [vmem:[#allocation2 + $0x10] sm:$0xff]
      %v551 = vld [vmem:[#allocation2 + $0x18] sm:$0xff]
      %v552 = vld [vmem:[#allocation2 + $0x20] sm:$0xff]
      %v553 = vld [vmem:[#allocation2 + $0x28] sm:$0xff]
      %v554 = vld [vmem:[#allocation2 + $0x30] sm:$0xf]
      %v555 = vld [vmem:[#allocation2 + $0x34] sm:$0xff]
      %v556 = vld [vmem:[#allocation2 + $0x3c] sm:$0xff]
      %v557 = vld [vmem:[#allocation2 + $0x44] sm:$0xff]
      %v558 = vld [vmem:[#allocation2 + $0x4c] sm:$0xff]
      %v559 = vld [vmem:[#allocation2 + $0x54] sm:$0xff]
      %v560 = vld [vmem:[#allocation2 + $0x5c] sm:$0xff]
      %v561 = vld [vmem:[#allocation2 + $0x64] sm:$0xf]
      %576 = vrot.lane.b32.xlu0 %v548, 127
      %v577 = vpop.permute.xlu0 %576
      %578 = vrot.lane.b32.xlu0 %v549, 127
      %v579 = vpop.permute.xlu0 %578
      %580 = vrot.lane.b32.xlu0 %v550, 127
      %v581 = vpop.permute.xlu0 %580
      %582 = vrot.lane.b32.xlu0 %v551, 127
      %v583 = vpop.permute.xlu0 %582
      %584 = vrot.lane.b32.xlu0 %v552, 127
      %v585 = vpop.permute.xlu0 %584
      %586 = vrot.lane.b32.xlu0 %v553, 127
      %v587 = vpop.permute.xlu0 %586
      %588 = vrot.lane.b32.xlu0 %v554, 127
      %v589 = vpop.permute.xlu0 %588
      %590 = vrot.lane.b32.xlu0 %v555, 127
      %v591 = vpop.permute.xlu0 %590
      %592 = vrot.lane.b32.xlu0 %v556, 127
      %v593 = vpop.permute.xlu0 %592
      %594 = vrot.lane.b32.xlu0 %v557, 127
      %v595 = vpop.permute.xlu0 %594
      %596 = vrot.lane.b32.xlu0 %v558, 127
      %v597 = vpop.permute.xlu0 %596
      %598 = vrot.lane.b32.xlu0 %v559, 127
      %v599 = vpop.permute.xlu0 %598
      %600 = vrot.lane.b32.xlu0 %v560, 127
      %v601 = vpop.permute.xlu0 %600
      %602 = vrot.lane.b32.xlu0 %v561, 127
      %v603 = vpop.permute.xlu0 %602
      %v604 = vrot.slane %v577, 4
      %v605 = vrot.slane %v579, 4
      %v606 = vrot.slane %v581, 4
      %v607 = vrot.slane %v583, 4
      %v608 = vrot.slane %v585, 4
      %v609 = vrot.slane %v587, 4
      %v610 = vrot.slane %v589, 4
      %v611 = vrot.slane %v591, 4
      %v612 = vrot.slane %v593, 4
      %v613 = vrot.slane %v595, 4
      %v614 = vrot.slane %v597, 4
      %v615 = vrot.slane %v599, 4
      %v616 = vrot.slane %v601, 4
      %v617 = vrot.slane %v603, 4
      %v618 = vsel %vm479, %v604, %v605
      %vm619 = vcmask 1039360
      %v620 = vsel %vm619, %v577, %v618
      %v621 = vsel %vm479, %v605, %v606
      %v622 = vsel %vm619, %v579, %v621
      %v623 = vsel %vm479, %v606, %v607
      %v624 = vsel %vm619, %v581, %v623
      %v625 = vsel %vm479, %v607, %v608
      %v626 = vsel %vm619, %v583, %v625
      %v627 = vsel %vm479, %v608, %v609
      %v628 = vsel %vm619, %v585, %v627
      %v629 = vsel %vm479, %v609, %v610
      %v630 = vsel %vm619, %v587, %v629
      %v631 = vsel %vm479, %v611, %v612
      %v632 = vsel %vm619, %v591, %v631
      %v633 = vsel %vm479, %v612, %v613
      %v634 = vsel %vm619, %v593, %v633
      %v635 = vsel %vm479, %v613, %v614
      %v636 = vsel %vm619, %v595, %v635
      %v637 = vsel %vm479, %v614, %v615
      %v638 = vsel %vm619, %v597, %v637
      %v639 = vsel %vm479, %v615, %v616
      %v640 = vsel %vm619, %v599, %v639
      %v641 = vsel %vm479, %v616, %v617
      %v642 = vsel %vm619, %v601, %v641
      %655 = vst [vmem:[#allocation3 + $0x60] sm:$0xff] %v620
      %656 = vst [vmem:[#allocation3 + $0x68] sm:$0xff] %v622
      %657 = vst [vmem:[#allocation3 + $0x70] sm:$0xff] %v624
      %658 = vst [vmem:[#allocation3 + $0x78] sm:$0xff] %v626
      %659 = vst [vmem:[#allocation3 + $0x80] sm:$0xff] %v628
      %660 = vst [vmem:[#allocation3 + $0x88] sm:$0xff] %v630
      %661 = vst [vmem:[#allocation3 + $0x90] sm:$0xff] %v632
      %662 = vst [vmem:[#allocation3 + $0x98] sm:$0xff] %v634
      %663 = vst [vmem:[#allocation3 + $0xa0] sm:$0xff] %v636
      %664 = vst [vmem:[#allocation3 + $0xa8] sm:$0xff] %v638
      %665 = vst [vmem:[#allocation3 + $0xb0] sm:$0xff] %v640
      %666 = vst [vmem:[#allocation3 + $0xb8] sm:$0xff] %v642
      %v667 = vld [vmem:[#allocation2] sm:$0xff]
      %v668 = vld [vmem:[#allocation2 + $0x8] sm:$0xff]
      %v669 = vld [vmem:[#allocation2 + $0x10] sm:$0xff]
      %v670 = vld [vmem:[#allocation2 + $0x18] sm:$0xff]
      %v671 = vld [vmem:[#allocation2 + $0x20] sm:$0xff]
      %v672 = vld [vmem:[#allocation2 + $0x28] sm:$0xff]
      %v673 = vld [vmem:[#allocation2 + $0x30] sm:$0xf]
      %v674 = vld [vmem:[#allocation2 + $0x34] sm:$0xff]
      %v675 = vld [vmem:[#allocation2 + $0x3c] sm:$0xff]
      %v676 = vld [vmem:[#allocation2 + $0x44] sm:$0xff]
      %v677 = vld [vmem:[#allocation2 + $0x4c] sm:$0xff]
      %v678 = vld [vmem:[#allocation2 + $0x54] sm:$0xff]
      %v679 = vld [vmem:[#allocation2 + $0x5c] sm:$0xff]
      %v680 = vld [vmem:[#allocation2 + $0x64] sm:$0xf]
      %695 = vrot.lane.b32.xlu0 %v667, 126
      %v696 = vpop.permute.xlu0 %695
      %697 = vrot.lane.b32.xlu0 %v668, 126
      %v698 = vpop.permute.xlu0 %697
      %699 = vrot.lane.b32.xlu0 %v669, 126
      %v700 = vpop.permute.xlu0 %699
      %701 = vrot.lane.b32.xlu0 %v670, 126
      %v702 = vpop.permute.xlu0 %701
      %703 = vrot.lane.b32.xlu0 %v671, 126
      %v704 = vpop.permute.xlu0 %703
      %705 = vrot.lane.b32.xlu0 %v672, 126
      %v706 = vpop.permute.xlu0 %705
      %707 = vrot.lane.b32.xlu0 %v673, 126
      %v708 = vpop.permute.xlu0 %707
      %709 = vrot.lane.b32.xlu0 %v674, 126
      %v710 = vpop.permute.xlu0 %709
      %711 = vrot.lane.b32.xlu0 %v675, 126
      %v712 = vpop.permute.xlu0 %711
      %713 = vrot.lane.b32.xlu0 %v676, 126
      %v714 = vpop.permute.xlu0 %713
      %715 = vrot.lane.b32.xlu0 %v677, 126
      %v716 = vpop.permute.xlu0 %715
      %717 = vrot.lane.b32.xlu0 %v678, 126
      %v718 = vpop.permute.xlu0 %717
      %719 = vrot.lane.b32.xlu0 %v679, 126
      %v720 = vpop.permute.xlu0 %719
      %721 = vrot.lane.b32.xlu0 %v680, 126
      %v722 = vpop.permute.xlu0 %721
      %v723 = vrot.slane %v696, 4
      %v724 = vrot.slane %v698, 4
      %v725 = vrot.slane %v700, 4
      %v726 = vrot.slane %v702, 4
      %v727 = vrot.slane %v704, 4
      %v728 = vrot.slane %v706, 4
      %v729 = vrot.slane %v708, 4
      %v730 = vrot.slane %v710, 4
      %v731 = vrot.slane %v712, 4
      %v732 = vrot.slane %v714, 4
      %v733 = vrot.slane %v716, 4
      %v734 = vrot.slane %v718, 4
      %v735 = vrot.slane %v720, 4
      %v736 = vrot.slane %v722, 4
      %v737 = vsel %vm479, %v723, %v724
      %vm738 = vcmask 1031168
      %v739 = vsel %vm738, %v696, %v737
      %v740 = vsel %vm479, %v724, %v725
      %v741 = vsel %vm738, %v698, %v740
      %v742 = vsel %vm479, %v725, %v726
      %v743 = vsel %vm738, %v700, %v742
      %v744 = vsel %vm479, %v726, %v727
      %v745 = vsel %vm738, %v702, %v744
      %v746 = vsel %vm479, %v727, %v728
      %v747 = vsel %vm738, %v704, %v746
      %v748 = vsel %vm479, %v728, %v729
      %v749 = vsel %vm738, %v706, %v748
      %v750 = vsel %vm479, %v730, %v731
      %v751 = vsel %vm738, %v710, %v750
      %v752 = vsel %vm479, %v731, %v732
      %v753 = vsel %vm738, %v712, %v752
      %v754 = vsel %vm479, %v732, %v733
      %v755 = vsel %vm738, %v714, %v754
      %v756 = vsel %vm479, %v733, %v734
      %v757 = vsel %vm738, %v716, %v756
      %v758 = vsel %vm479, %v734, %v735
      %v759 = vsel %vm738, %v718, %v758
      %v760 = vsel %vm479, %v735, %v736
      %v761 = vsel %vm738, %v720, %v760
      %774 = vst [vmem:[#allocation3 + $0xc0] sm:$0xff] %v739
      %775 = vst [vmem:[#allocation3 + $0xc8] sm:$0xff] %v741
      %776 = vst [vmem:[#allocation3 + $0xd0] sm:$0xff] %v743
      %777 = vst [vmem:[#allocation3 + $0xd8] sm:$0xff] %v745
      %778 = vst [vmem:[#allocation3 + $0xe0] sm:$0xff] %v747
      %779 = vst [vmem:[#allocation3 + $0xe8] sm:$0xff] %v749
      %780 = vst [vmem:[#allocation3 + $0xf0] sm:$0xff] %v751
      %781 = vst [vmem:[#allocation3 + $0xf8] sm:$0xff] %v753
      %782 = vst [vmem:[#allocation3 + $0x100] sm:$0xff] %v755
      %783 = vst [vmem:[#allocation3 + $0x108] sm:$0xff] %v757
      %784 = vst [vmem:[#allocation3 + $0x110] sm:$0xff] %v759
      %785 = vst [vmem:[#allocation3 + $0x118] sm:$0xff] %v761
      %v786 = vld [vmem:[#allocation2] sm:$0xff]
      %v787 = vld [vmem:[#allocation2 + $0x8] sm:$0xff]
      %v788 = vld [vmem:[#allocation2 + $0x10] sm:$0xff]
      %v789 = vld [vmem:[#allocation2 + $0x18] sm:$0xff]
      %v790 = vld [vmem:[#allocation2 + $0x20] sm:$0xff]
      %v791 = vld [vmem:[#allocation2 + $0x28] sm:$0xff]
      %v792 = vld [vmem:[#allocation2 + $0x30] sm:$0xf]
      %v793 = vld [vmem:[#allocation2 + $0x34] sm:$0xff]
      %v794 = vld [vmem:[#allocation2 + $0x3c] sm:$0xff]
      %v795 = vld [vmem:[#allocation2 + $0x44] sm:$0xff]
      %v796 = vld [vmem:[#allocation2 + $0x4c] sm:$0xff]
      %v797 = vld [vmem:[#allocation2 + $0x54] sm:$0xff]
      %v798 = vld [vmem:[#allocation2 + $0x5c] sm:$0xff]
      %v799 = vld [vmem:[#allocation2 + $0x64] sm:$0xf]
      %814 = vrot.lane.b32.xlu0 %v786, 125
      %v815 = vpop.permute.xlu0 %814
      %816 = vrot.lane.b32.xlu0 %v787, 125
      %v817 = vpop.permute.xlu0 %816
      %818 = vrot.lane.b32.xlu0 %v788, 125
      %v819 = vpop.permute.xlu0 %818
      %820 = vrot.lane.b32.xlu0 %v789, 125
      %v821 = vpop.permute.xlu0 %820
      %822 = vrot.lane.b32.xlu0 %v790, 125
      %v823 = vpop.permute.xlu0 %822
      %824 = vrot.lane.b32.xlu0 %v791, 125
      %v825 = vpop.permute.xlu0 %824
      %826 = vrot.lane.b32.xlu0 %v792, 125
      %v827 = vpop.permute.xlu0 %826
      %828 = vrot.lane.b32.xlu0 %v793, 125
      %v829 = vpop.permute.xlu0 %828
      %830 = vrot.lane.b32.xlu0 %v794, 125
      %v831 = vpop.permute.xlu0 %830
      %832 = vrot.lane.b32.xlu0 %v795, 125
      %v833 = vpop.permute.xlu0 %832
      %834 = vrot.lane.b32.xlu0 %v796, 125
      %v835 = vpop.permute.xlu0 %834
      %836 = vrot.lane.b32.xlu0 %v797, 125
      %v837 = vpop.permute.xlu0 %836
      %838 = vrot.lane.b32.xlu0 %v798, 125
      %v839 = vpop.permute.xlu0 %838
      %840 = vrot.lane.b32.xlu0 %v799, 125
      %v841 = vpop.permute.xlu0 %840
      %v842 = vrot.slane %v815, 4
      %v843 = vrot.slane %v817, 4
      %v844 = vrot.slane %v819, 4
      %v845 = vrot.slane %v821, 4
      %v846 = vrot.slane %v823, 4
      %v847 = vrot.slane %v825, 4
      %v848 = vrot.slane %v827, 4
      %v849 = vrot.slane %v829, 4
      %v850 = vrot.slane %v831, 4
      %v851 = vrot.slane %v833, 4
      %v852 = vrot.slane %v835, 4
      %v853 = vrot.slane %v837, 4
      %v854 = vrot.slane %v839, 4
      %v855 = vrot.slane %v841, 4
      %v856 = vsel %vm479, %v842, %v843
      %vm857 = vcmask 1022976
      %v858 = vsel %vm857, %v815, %v856
      %v859 = vsel %vm479, %v843, %v844
      %v860 = vsel %vm857, %v817, %v859
      %v861 = vsel %vm479, %v844, %v845
      %v862 = vsel %vm857, %v819, %v861
      %v863 = vsel %vm479, %v845, %v846
      %v864 = vsel %vm857, %v821, %v863
      %v865 = vsel %vm479, %v846, %v847
      %v866 = vsel %vm857, %v823, %v865
      %v867 = vsel %vm479, %v847, %v848
      %v868 = vsel %vm857, %v825, %v867
      %v869 = vsel %vm479, %v849, %v850
      %v870 = vsel %vm857, %v829, %v869
      %v871 = vsel %vm479, %v850, %v851
      %v872 = vsel %vm857, %v831, %v871
      %v873 = vsel %vm479, %v851, %v852
      %v874 = vsel %vm857, %v833, %v873
      %v875 = vsel %vm479, %v852, %v853
      %v876 = vsel %vm857, %v835, %v875
      %v877 = vsel %vm479, %v853, %v854
      %v878 = vsel %vm857, %v837, %v877
      %v879 = vsel %vm479, %v854, %v855
      %v880 = vsel %vm857, %v839, %v879
      %893 = vst [vmem:[#allocation3 + $0x120] sm:$0xff] %v858
      %894 = vst [vmem:[#allocation3 + $0x128] sm:$0xff] %v860
      %895 = vst [vmem:[#allocation3 + $0x130] sm:$0xff] %v862
      %896 = vst [vmem:[#allocation3 + $0x138] sm:$0xff] %v864
      %897 = vst [vmem:[#allocation3 + $0x140] sm:$0xff] %v866
      %898 = vst [vmem:[#allocation3 + $0x148] sm:$0xff] %v868
      %899 = vst [vmem:[#allocation3 + $0x150] sm:$0xff] %v870
      %900 = vst [vmem:[#allocation3 + $0x158] sm:$0xff] %v872
      %901 = vst [vmem:[#allocation3 + $0x160] sm:$0xff] %v874
      %902 = vst [vmem:[#allocation3 + $0x168] sm:$0xff] %v876
      %903 = vst [vmem:[#allocation3 + $0x170] sm:$0xff] %v878
      %904 = vst [vmem:[#allocation3 + $0x178] sm:$0xff] %v880
      %v905 = vld [vmem:[#allocation2] sm:$0xff]
      %v906 = vld [vmem:[#allocation2 + $0x8] sm:$0xff]
      %v907 = vld [vmem:[#allocation2 + $0x10] sm:$0xff]
      %v908 = vld [vmem:[#allocation2 + $0x18] sm:$0xff]
      %v909 = vld [vmem:[#allocation2 + $0x20] sm:$0xff]
      %v910 = vld [vmem:[#allocation2 + $0x28] sm:$0xff]
      %v911 = vld [vmem:[#allocation2 + $0x30] sm:$0xf]
      %v912 = vld [vmem:[#allocation2 + $0x34] sm:$0xff]
      %v913 = vld [vmem:[#allocation2 + $0x3c] sm:$0xff]
      %v914 = vld [vmem:[#allocation2 + $0x44] sm:$0xff]
      %v915 = vld [vmem:[#allocation2 + $0x4c] sm:$0xff]
      %v916 = vld [vmem:[#allocation2 + $0x54] sm:$0xff]
      %v917 = vld [vmem:[#allocation2 + $0x5c] sm:$0xff]
      %v918 = vld [vmem:[#allocation2 + $0x64] sm:$0xf]
      %933 = vrot.lane.b32.xlu0 %v905, 124
      %v934 = vpop.permute.xlu0 %933
      %935 = vrot.lane.b32.xlu0 %v906, 124
      %v936 = vpop.permute.xlu0 %935
      %937 = vrot.lane.b32.xlu0 %v907, 124
      %v938 = vpop.permute.xlu0 %937
      %939 = vrot.lane.b32.xlu0 %v908, 124
      %v940 = vpop.permute.xlu0 %939
      %941 = vrot.lane.b32.xlu0 %v909, 124
      %v942 = vpop.permute.xlu0 %941
      %943 = vrot.lane.b32.xlu0 %v910, 124
      %v944 = vpop.permute.xlu0 %943
      %945 = vrot.lane.b32.xlu0 %v911, 124
      %v946 = vpop.permute.xlu0 %945
      %947 = vrot.lane.b32.xlu0 %v912, 124
      %v948 = vpop.permute.xlu0 %947
      %949 = vrot.lane.b32.xlu0 %v913, 124
      %v950 = vpop.permute.xlu0 %949
      %951 = vrot.lane.b32.xlu0 %v914, 124
      %v952 = vpop.permute.xlu0 %951
      %953 = vrot.lane.b32.xlu0 %v915, 124
      %v954 = vpop.permute.xlu0 %953
      %955 = vrot.lane.b32.xlu0 %v916, 124
      %v956 = vpop.permute.xlu0 %955
      %957 = vrot.lane.b32.xlu0 %v917, 124
      %v958 = vpop.permute.xlu0 %957
      %959 = vrot.lane.b32.xlu0 %v918, 124
      %v960 = vpop.permute.xlu0 %959
      %v961 = vrot.slane %v934, 4
      %v962 = vrot.slane %v936, 4
      %v963 = vrot.slane %v938, 4
      %v964 = vrot.slane %v940, 4
      %v965 = vrot.slane %v942, 4
      %v966 = vrot.slane %v944, 4
      %v967 = vrot.slane %v946, 4
      %v968 = vrot.slane %v948, 4
      %v969 = vrot.slane %v950, 4
      %v970 = vrot.slane %v952, 4
      %v971 = vrot.slane %v954, 4
      %v972 = vrot.slane %v956, 4
      %v973 = vrot.slane %v958, 4
      %v974 = vrot.slane %v960, 4
      %v975 = vsel %vm479, %v961, %v962
      %vm976 = vcmask 1014784
      %v977 = vsel %vm976, %v934, %v975
      %v978 = vsel %vm479, %v962, %v963
      %v979 = vsel %vm976, %v936, %v978
      %v980 = vsel %vm479, %v963, %v964
      %v981 = vsel %vm976, %v938, %v980
      %v982 = vsel %vm479, %v964, %v965
      %v983 = vsel %vm976, %v940, %v982
      %v984 = vsel %vm479, %v965, %v966
      %v985 = vsel %vm976, %v942, %v984
      %v986 = vsel %vm479, %v966, %v967
      %v987 = vsel %vm976, %v944, %v986
      %v988 = vsel %vm479, %v968, %v969
      %v989 = vsel %vm976, %v948, %v988
      %v990 = vsel %vm479, %v969, %v970
      %v991 = vsel %vm976, %v950, %v990
      %v992 = vsel %vm479, %v970, %v971
      %v993 = vsel %vm976, %v952, %v992
      %v994 = vsel %vm479, %v971, %v972
      %v995 = vsel %vm976, %v954, %v994
      %v996 = vsel %vm479, %v972, %v973
      %v997 = vsel %vm976, %v956, %v996
      %v998 = vsel %vm479, %v973, %v974
      %v999 = vsel %vm976, %v958, %v998
      %1012 = vst [vmem:[#allocation3 + $0x180] sm:$0xff] %v977
      %1013 = vst [vmem:[#allocation3 + $0x188] sm:$0xff] %v979
      %1014 = vst [vmem:[#allocation3 + $0x190] sm:$0xff] %v981
      %1015 = vst [vmem:[#allocation3 + $0x198] sm:$0xff] %v983
      %1016 = vst [vmem:[#allocation3 + $0x1a0] sm:$0xff] %v985
      %1017 = vst [vmem:[#allocation3 + $0x1a8] sm:$0xff] %v987
      %1018 = vst [vmem:[#allocation3 + $0x1b0] sm:$0xff] %v989
      %1019 = vst [vmem:[#allocation3 + $0x1b8] sm:$0xff] %v991
      %1020 = vst [vmem:[#allocation3 + $0x1c0] sm:$0xff] %v993
      %1021 = vst [vmem:[#allocation3 + $0x1c8] sm:$0xff] %v995
      %1022 = vst [vmem:[#allocation3 + $0x1d0] sm:$0xff] %v997
      %1023 = vst [vmem:[#allocation3 + $0x1d8] sm:$0xff] %v999
      %v1024 = vld [vmem:[#allocation2] sm:$0xff]
      %v1025 = vld [vmem:[#allocation2 + $0x8] sm:$0xff]
      %v1026 = vld [vmem:[#allocation2 + $0x10] sm:$0xff]
      %v1027 = vld [vmem:[#allocation2 + $0x18] sm:$0xff]
      %v1028 = vld [vmem:[#allocation2 + $0x20] sm:$0xff]
      %v1029 = vld [vmem:[#allocation2 + $0x28] sm:$0xff]
      %v1030 = vld [vmem:[#allocation2 + $0x30] sm:$0xf]
      %v1031 = vld [vmem:[#allocation2 + $0x34] sm:$0xff]
      %v1032 = vld [vmem:[#allocation2 + $0x3c] sm:$0xff]
      %v1033 = vld [vmem:[#allocation2 + $0x44] sm:$0xff]
      %v1034 = vld [vmem:[#allocation2 + $0x4c] sm:$0xff]
      %v1035 = vld [vmem:[#allocation2 + $0x54] sm:$0xff]
      %v1036 = vld [vmem:[#allocation2 + $0x5c] sm:$0xff]
      %v1037 = vld [vmem:[#allocation2 + $0x64] sm:$0xf]
      %1052 = vrot.lane.b32.xlu0 %v1024, 123
      %v1053 = vpop.permute.xlu0 %1052
      %1054 = vrot.lane.b32.xlu0 %v1025, 123
      %v1055 = vpop.permute.xlu0 %1054
      %1056 = vrot.lane.b32.xlu0 %v1026, 123
      %v1057 = vpop.permute.xlu0 %1056
      %1058 = vrot.lane.b32.xlu0 %v1027, 123
      %v1059 = vpop.permute.xlu0 %1058
      %1060 = vrot.lane.b32.xlu0 %v1028, 123
      %v1061 = vpop.permute.xlu0 %1060
      %1062 = vrot.lane.b32.xlu0 %v1029, 123
      %v1063 = vpop.permute.xlu0 %1062
      %1064 = vrot.lane.b32.xlu0 %v1030, 123
      %v1065 = vpop.permute.xlu0 %1064
      %1066 = vrot.lane.b32.xlu0 %v1031, 123
      %v1067 = vpop.permute.xlu0 %1066
      %1068 = vrot.lane.b32.xlu0 %v1032, 123
      %v1069 = vpop.permute.xlu0 %1068
      %1070 = vrot.lane.b32.xlu0 %v1033, 123
      %v1071 = vpop.permute.xlu0 %1070
      %1072 = vrot.lane.b32.xlu0 %v1034, 123
      %v1073 = vpop.permute.xlu0 %1072
      %1074 = vrot.lane.b32.xlu0 %v1035, 123
      %v1075 = vpop.permute.xlu0 %1074
      %1076 = vrot.lane.b32.xlu0 %v1036, 123
      %v1077 = vpop.permute.xlu0 %1076
      %1078 = vrot.lane.b32.xlu0 %v1037, 123
      %v1079 = vpop.permute.xlu0 %1078
      %v1080 = vrot.slane %v1053, 4
      %v1081 = vrot.slane %v1055, 4
      %v1082 = vrot.slane %v1057, 4
      %v1083 = vrot.slane %v1059, 4
      %v1084 = vrot.slane %v1061, 4
      %v1085 = vrot.slane %v1063, 4
      %v1086 = vrot.slane %v1065, 4
      %v1087 = vrot.slane %v1067, 4
      %v1088 = vrot.slane %v1069, 4
      %v1089 = vrot.slane %v1071, 4
      %v1090 = vrot.slane %v1073, 4
      %v1091 = vrot.slane %v1075, 4
      %v1092 = vrot.slane %v1077, 4
      %v1093 = vrot.slane %v1079, 4
      %v1094 = vsel %vm479, %v1080, %v1081
      %vm1095 = vcmask 1006592
      %v1096 = vsel %vm1095, %v1053, %v1094
      %v1097 = vsel %vm479, %v1081, %v1082
      %v1098 = vsel %vm1095, %v1055, %v1097
      %v1099 = vsel %vm479, %v1082, %v1083
      %v1100 = vsel %vm1095, %v1057, %v1099
      %v1101 = vsel %vm479, %v1083, %v1084
      %v1102 = vsel %vm1095, %v1059, %v1101
      %v1103 = vsel %vm479, %v1084, %v1085
      %v1104 = vsel %vm1095, %v1061, %v1103
      %v1105 = vsel %vm479, %v1085, %v1086
      %v1106 = vsel %vm1095, %v1063, %v1105
      %v1107 = vsel %vm479, %v1087, %v1088
      %v1108 = vsel %vm1095, %v1067, %v1107
      %v1109 = vsel %vm479, %v1088, %v1089
      %v1110 = vsel %vm1095, %v1069, %v1109
      %v1111 = vsel %vm479, %v1089, %v1090
      %v1112 = vsel %vm1095, %v1071, %v1111
      %v1113 = vsel %vm479, %v1090, %v1091
      %v1114 = vsel %vm1095, %v1073, %v1113
      %v1115 = vsel %vm479, %v1091, %v1092
      %v1116 = vsel %vm1095, %v1075, %v1115
      %v1117 = vsel %vm479, %v1092, %v1093
      %v1118 = vsel %vm1095, %v1077, %v1117
      %1131 = vst [vmem:[#allocation3 + $0x1e0] sm:$0xff] %v1096
      %1132 = vst [vmem:[#allocation3 + $0x1e8] sm:$0xff] %v1098
      %1133 = vst [vmem:[#allocation3 + $0x1f0] sm:$0xff] %v1100
      %1134 = vst [vmem:[#allocation3 + $0x1f8] sm:$0xff] %v1102
      %1135 = vst [vmem:[#allocation3 + $0x200] sm:$0xff] %v1104
      %1136 = vst [vmem:[#allocation3 + $0x208] sm:$0xff] %v1106
      %1137 = vst [vmem:[#allocation3 + $0x210] sm:$0xff] %v1108
      %1138 = vst [vmem:[#allocation3 + $0x218] sm:$0xff] %v1110
      %1139 = vst [vmem:[#allocation3 + $0x220] sm:$0xff] %v1112
      %1140 = vst [vmem:[#allocation3 + $0x228] sm:$0xff] %v1114
      %1141 = vst [vmem:[#allocation3 + $0x230] sm:$0xff] %v1116
      %1142 = vst [vmem:[#allocation3 + $0x238] sm:$0xff] %v1118
      %v1143 = vld [vmem:[#allocation2] sm:$0xff]
      %v1144 = vld [vmem:[#allocation2 + $0x8] sm:$0xff]
      %v1145 = vld [vmem:[#allocation2 + $0x10] sm:$0xff]
      %v1146 = vld [vmem:[#allocation2 + $0x18] sm:$0xff]
      %v1147 = vld [vmem:[#allocation2 + $0x20] sm:$0xff]
      %v1148 = vld [vmem:[#allocation2 + $0x28] sm:$0xff]
      %v1149 = vld [vmem:[#allocation2 + $0x30] sm:$0xf]
      %v1150 = vld [vmem:[#allocation2 + $0x34] sm:$0xff]
      %v1151 = vld [vmem:[#allocation2 + $0x3c] sm:$0xff]
      %v1152 = vld [vmem:[#allocation2 + $0x44] sm:$0xff]
      %v1153 = vld [vmem:[#allocation2 + $0x4c] sm:$0xff]
      %v1154 = vld [vmem:[#allocation2 + $0x54] sm:$0xff]
      %v1155 = vld [vmem:[#allocation2 + $0x5c] sm:$0xff]
      %v1156 = vld [vmem:[#allocation2 + $0x64] sm:$0xf]
      %1171 = vrot.lane.b32.xlu0 %v1143, 122
      %v1172 = vpop.permute.xlu0 %1171
      %1173 = vrot.lane.b32.xlu0 %v1144, 122
      %v1174 = vpop.permute.xlu0 %1173
      %1175 = vrot.lane.b32.xlu0 %v1145, 122
      %v1176 = vpop.permute.xlu0 %1175
      %1177 = vrot.lane.b32.xlu0 %v1146, 122
      %v1178 = vpop.permute.xlu0 %1177
      %1179 = vrot.lane.b32.xlu0 %v1147, 122
      %v1180 = vpop.permute.xlu0 %1179
      %1181 = vrot.lane.b32.xlu0 %v1148, 122
      %v1182 = vpop.permute.xlu0 %1181
      %1183 = vrot.lane.b32.xlu0 %v1149, 122
      %v1184 = vpop.permute.xlu0 %1183
      %1185 = vrot.lane.b32.xlu0 %v1150, 122
      %v1186 = vpop.permute.xlu0 %1185
      %1187 = vrot.lane.b32.xlu0 %v1151, 122
      %v1188 = vpop.permute.xlu0 %1187
      %1189 = vrot.lane.b32.xlu0 %v1152, 122
      %v1190 = vpop.permute.xlu0 %1189
      %1191 = vrot.lane.b32.xlu0 %v1153, 122
      %v1192 = vpop.permute.xlu0 %1191
      %1193 = vrot.lane.b32.xlu0 %v1154, 122
      %v1194 = vpop.permute.xlu0 %1193
      %1195 = vrot.lane.b32.xlu0 %v1155, 122
      %v1196 = vpop.permute.xlu0 %1195
      %1197 = vrot.lane.b32.xlu0 %v1156, 122
      %v1198 = vpop.permute.xlu0 %1197
      %v1199 = vrot.slane %v1172, 4
      %v1200 = vrot.slane %v1174, 4
      %v1201 = vrot.slane %v1176, 4
      %v1202 = vrot.slane %v1178, 4
      %v1203 = vrot.slane %v1180, 4
      %v1204 = vrot.slane %v1182, 4
      %v1205 = vrot.slane %v1184, 4
      %v1206 = vrot.slane %v1186, 4
      %v1207 = vrot.slane %v1188, 4
      %v1208 = vrot.slane %v1190, 4
      %v1209 = vrot.slane %v1192, 4
      %v1210 = vrot.slane %v1194, 4
      %v1211 = vrot.slane %v1196, 4
      %v1212 = vrot.slane %v1198, 4
      %v1213 = vsel %vm479, %v1199, %v1200
      %vm1214 = vcmask 998400
      %v1215 = vsel %vm1214, %v1172, %v1213
      %v1216 = vsel %vm479, %v1200, %v1201
      %v1217 = vsel %vm1214, %v1174, %v1216
      %v1218 = vsel %vm479, %v1201, %v1202
      %v1219 = vsel %vm1214, %v1176, %v1218
      %v1220 = vsel %vm479, %v1202, %v1203
      %v1221 = vsel %vm1214, %v1178, %v1220
      %v1222 = vsel %vm479, %v1203, %v1204
      %v1223 = vsel %vm1214, %v1180, %v1222
      %v1224 = vsel %vm479, %v1204, %v1205
      %v1225 = vsel %vm1214, %v1182, %v1224
      %v1226 = vsel %vm479, %v1206, %v1207
      %v1227 = vsel %vm1214, %v1186, %v1226
      %v1228 = vsel %vm479, %v1207, %v1208
      %v1229 = vsel %vm1214, %v1188, %v1228
      %v1230 = vsel %vm479, %v1208, %v1209
      %v1231 = vsel %vm1214, %v1190, %v1230
      %v1232 = vsel %vm479, %v1209, %v1210
      %v1233 = vsel %vm1214, %v1192, %v1232
      %v1234 = vsel %vm479, %v1210, %v1211
      %v1235 = vsel %vm1214, %v1194, %v1234
      %v1236 = vsel %vm479, %v1211, %v1212
      %v1237 = vsel %vm1214, %v1196, %v1236
      %1250 = vst [vmem:[#allocation3 + $0x240] sm:$0xff] %v1215
      %1251 = vst [vmem:[#allocation3 + $0x248] sm:$0xff] %v1217
      %1252 = vst [vmem:[#allocation3 + $0x250] sm:$0xff] %v1219
      %1253 = vst [vmem:[#allocation3 + $0x258] sm:$0xff] %v1221
      %1254 = vst [vmem:[#allocation3 + $0x260] sm:$0xff] %v1223
      %1255 = vst [vmem:[#allocation3 + $0x268] sm:$0xff] %v1225
      %1256 = vst [vmem:[#allocation3 + $0x270] sm:$0xff] %v1227
      %1257 = vst [vmem:[#allocation3 + $0x278] sm:$0xff] %v1229
      %1258 = vst [vmem:[#allocation3 + $0x280] sm:$0xff] %v1231
      %1259 = vst [vmem:[#allocation3 + $0x288] sm:$0xff] %v1233
      %1260 = vst [vmem:[#allocation3 + $0x290] sm:$0xff] %v1235
      %1261 = vst [vmem:[#allocation3 + $0x298] sm:$0xff] %v1237
      %v1262 = vld [vmem:[%s3] sm:$0xf]
      %v1263 = vld [vmem:[%s3 + $0x4] sm:$0xf]
      %v1264 = vld [vmem:[%s3 + $0x8] sm:$0xf]
      %v1265 = vld [vmem:[%s3 + $0xc] sm:$0xf]
      %v1266 = vld [vmem:[%s3 + $0x10] sm:$0xf]
      %v1267 = vld [vmem:[%s3 + $0x14] sm:$0xf]
      %v1268 = vld [vmem:[%s3 + $0x18] sm:$0xf]
      %v1269 = vld [vmem:[%s3 + $0x1c] sm:$0xf]
      %v1270 = vld [vmem:[%s3 + $0x20] sm:$0xf]
      %v1271 = vld [vmem:[%s3 + $0x24] sm:$0xf]
      %v1272 = vld [vmem:[%s3 + $0x28] sm:$0xf]
      %v1273 = vld [vmem:[%s3 + $0x2c] sm:$0xf]
      %v1274 = vld [vmem:[%s3 + $0x30] sm:$0xf]
      %v1275 = vld [vmem:[%s3 + $0x34] sm:$0xf]
      %v1276 = vld [vmem:[#allocation3] sm:$0xff]
      %v1277 = vld [vmem:[#allocation3 + $0x8] sm:$0xff]
      %v1278 = vld [vmem:[#allocation3 + $0x10] sm:$0xff]
      %v1279 = vld [vmem:[#allocation3 + $0x18] sm:$0xff]
      %v1280 = vld [vmem:[#allocation3 + $0x20] sm:$0xff]
      %v1281 = vld [vmem:[#allocation3 + $0x28] sm:$0xff]
      %v1282 = vld [vmem:[#allocation3 + $0x30] sm:$0xff]
      %v1283 = vld [vmem:[#allocation3 + $0x38] sm:$0xff]
      %v1284 = vld [vmem:[#allocation3 + $0x40] sm:$0xff]
      %v1285 = vld [vmem:[#allocation3 + $0x48] sm:$0xff]
      %v1286 = vld [vmem:[#allocation3 + $0x50] sm:$0xff]
      %v1287 = vld [vmem:[#allocation3 + $0x58] sm:$0xff]
      %v1288 = vld [vmem:[#allocation3 + $0x60] sm:$0xff]
      %v1289 = vld [vmem:[#allocation3 + $0x68] sm:$0xff]
      %v1290 = vld [vmem:[#allocation3 + $0x70] sm:$0xff]
      %v1291 = vld [vmem:[#allocation3 + $0x78] sm:$0xff]
      %v1292 = vld [vmem:[#allocation3 + $0x80] sm:$0xff]
      %v1293 = vld [vmem:[#allocation3 + $0x88] sm:$0xff]
      %v1294 = vld [vmem:[#allocation3 + $0x90] sm:$0xff]
      %v1295 = vld [vmem:[#allocation3 + $0x98] sm:$0xff]
      %v1296 = vld [vmem:[#allocation3 + $0xa0] sm:$0xff]
      %v1297 = vld [vmem:[#allocation3 + $0xa8] sm:$0xff]
      %v1298 = vld [vmem:[#allocation3 + $0xb0] sm:$0xff]
      %v1299 = vld [vmem:[#allocation3 + $0xb8] sm:$0xff]
      %v1300 = vld [vmem:[#allocation3 + $0xc0] sm:$0xff]
      %v1301 = vld [vmem:[#allocation3 + $0xc8] sm:$0xff]
      %v1302 = vld [vmem:[#allocation3 + $0xd0] sm:$0xff]
      %v1303 = vld [vmem:[#allocation3 + $0xd8] sm:$0xff]
      %v1304 = vld [vmem:[#allocation3 + $0xe0] sm:$0xff]
      %v1305 = vld [vmem:[#allocation3 + $0xe8] sm:$0xff]
      %v1306 = vld [vmem:[#allocation3 + $0xf0] sm:$0xff]
      %v1307 = vld [vmem:[#allocation3 + $0xf8] sm:$0xff]
      %v1308 = vld [vmem:[#allocation3 + $0x100] sm:$0xff]
      %v1309 = vld [vmem:[#allocation3 + $0x108] sm:$0xff]
      %v1310 = vld [vmem:[#allocation3 + $0x110] sm:$0xff]
      %v1311 = vld [vmem:[#allocation3 + $0x118] sm:$0xff]
      %v1312 = vld [vmem:[#allocation3 + $0x120] sm:$0xff]
      %v1313 = vld [vmem:[#allocation3 + $0x128] sm:$0xff]
      %v1314 = vld [vmem:[#allocation3 + $0x130] sm:$0xff]
      %v1315 = vld [vmem:[#allocation3 + $0x138] sm:$0xff]
      %v1316 = vld [vmem:[#allocation3 + $0x140] sm:$0xff]
      %v1317 = vld [vmem:[#allocation3 + $0x148] sm:$0xff]
      %v1318 = vld [vmem:[#allocation3 + $0x150] sm:$0xff]
      %v1319 = vld [vmem:[#allocation3 + $0x158] sm:$0xff]
      %v1320 = vld [vmem:[#allocation3 + $0x160] sm:$0xff]
      %v1321 = vld [vmem:[#allocation3 + $0x168] sm:$0xff]
      %v1322 = vld [vmem:[#allocation3 + $0x170] sm:$0xff]
      %v1323 = vld [vmem:[#allocation3 + $0x178] sm:$0xff]
      %v1324 = vld [vmem:[#allocation3 + $0x180] sm:$0xff]
      %v1325 = vld [vmem:[#allocation3 + $0x188] sm:$0xff]
      %v1326 = vld [vmem:[#allocation3 + $0x190] sm:$0xff]
      %v1327 = vld [vmem:[#allocation3 + $0x198] sm:$0xff]
      %v1328 = vld [vmem:[#allocation3 + $0x1a0] sm:$0xff]
      %v1329 = vld [vmem:[#allocation3 + $0x1a8] sm:$0xff]
      %v1330 = vld [vmem:[#allocation3 + $0x1b0] sm:$0xff]
      %v1331 = vld [vmem:[#allocation3 + $0x1b8] sm:$0xff]
      %v1332 = vld [vmem:[#allocation3 + $0x1c0] sm:$0xff]
      %v1333 = vld [vmem:[#allocation3 + $0x1c8] sm:$0xff]
      %v1334 = vld [vmem:[#allocation3 + $0x1d0] sm:$0xff]
      %v1335 = vld [vmem:[#allocation3 + $0x1d8] sm:$0xff]
      %v1336 = vld [vmem:[#allocation3 + $0x1e0] sm:$0xff]
      %v1337 = vld [vmem:[#allocation3 + $0x1e8] sm:$0xff]
      %v1338 = vld [vmem:[#allocation3 + $0x1f0] sm:$0xff]
      %v1339 = vld [vmem:[#allocation3 + $0x1f8] sm:$0xff]
      %v1340 = vld [vmem:[#allocation3 + $0x200] sm:$0xff]
      %v1341 = vld [vmem:[#allocation3 + $0x208] sm:$0xff]
      %v1342 = vld [vmem:[#allocation3 + $0x210] sm:$0xff]
      %v1343 = vld [vmem:[#allocation3 + $0x218] sm:$0xff]
      %v1344 = vld [vmem:[#allocation3 + $0x220] sm:$0xff]
      %v1345 = vld [vmem:[#allocation3 + $0x228] sm:$0xff]
      %v1346 = vld [vmem:[#allocation3 + $0x230] sm:$0xff]
      %v1347 = vld [vmem:[#allocation3 + $0x238] sm:$0xff]
      %v1348 = vld [vmem:[#allocation3 + $0x240] sm:$0xff]
      %v1349 = vld [vmem:[#allocation3 + $0x248] sm:$0xff]
      %v1350 = vld [vmem:[#allocation3 + $0x250] sm:$0xff]
      %v1351 = vld [vmem:[#allocation3 + $0x258] sm:$0xff]
      %v1352 = vld [vmem:[#allocation3 + $0x260] sm:$0xff]
      %v1353 = vld [vmem:[#allocation3 + $0x268] sm:$0xff]
      %v1354 = vld [vmem:[#allocation3 + $0x270] sm:$0xff]
      %v1355 = vld [vmem:[#allocation3 + $0x278] sm:$0xff]
      %v1356 = vld [vmem:[#allocation3 + $0x280] sm:$0xff]
      %v1357 = vld [vmem:[#allocation3 + $0x288] sm:$0xff]
      %v1358 = vld [vmem:[#allocation3 + $0x290] sm:$0xff]
      %v1359 = vld [vmem:[#allocation3 + $0x298] sm:$0xff]
      %v1374 = vunpack.c.l.b16 %v1262
      %v1375 = vunpack.c.l.b16 %v1263
      %v1376 = vunpack.c.l.b16 %v1264
      %v1377 = vunpack.c.l.b16 %v1265
      %v1378 = vunpack.c.l.b16 %v1266
      %v1379 = vunpack.c.l.b16 %v1267
      %v1380 = vunpack.c.l.b16 %v1268
      %v1381 = vunpack.c.l.b16 %v1269
      %v1382 = vunpack.c.l.b16 %v1270
      %v1383 = vunpack.c.l.b16 %v1271
      %v1384 = vunpack.c.l.b16 %v1272
      %v1385 = vunpack.c.l.b16 %v1273
      %v1386 = vunpack.c.l.b16 %v1274
      %v1387 = vunpack.c.l.b16 %v1275
      %v1388 = vpack.c.b16 %v1375, %v1374
      %v1389 = vpack.c.b16 %v1377, %v1376
      %v1390 = vpack.c.b16 %v1379, %v1378
      %v1391 = vpack.c.b16 %v1381, %v1380
      %v1392 = vpack.c.b16 %v1383, %v1382
      %v1393 = vpack.c.b16 %v1385, %v1384
      %v1394 = vpack.c.b16 %v1387, %v1386
      %v1479 = vunpack.c.l.b16 %v1276
      %v1480 = vunpack.c.h.b16 %v1276
      %v1481 = vunpack.c.l.b16 %v1277
      %v1482 = vunpack.c.h.b16 %v1277
      %v1483 = vunpack.c.l.b16 %v1278
      %v1484 = vunpack.c.h.b16 %v1278
      %v1485 = vunpack.c.l.b16 %v1279
      %v1486 = vunpack.c.h.b16 %v1279
      %v1487 = vunpack.c.l.b16 %v1280
      %v1488 = vunpack.c.h.b16 %v1280
      %v1489 = vunpack.c.l.b16 %v1281
      %v1490 = vunpack.c.h.b16 %v1281
      %v1491 = vunpack.c.l.b16 %v1282
      %v1492 = vunpack.c.h.b16 %v1282
      %v1493 = vunpack.c.l.b16 %v1283
      %v1494 = vunpack.c.h.b16 %v1283
      %v1495 = vunpack.c.l.b16 %v1284
      %v1496 = vunpack.c.h.b16 %v1284
      %v1497 = vunpack.c.l.b16 %v1285
      %v1498 = vunpack.c.h.b16 %v1285
      %v1499 = vunpack.c.l.b16 %v1286
      %v1500 = vunpack.c.h.b16 %v1286
      %v1501 = vunpack.c.l.b16 %v1287
      %v1502 = vunpack.c.h.b16 %v1287
      %v1503 = vunpack.c.l.b16 %v1288
      %v1504 = vunpack.c.h.b16 %v1288
      %v1505 = vunpack.c.l.b16 %v1289
      %v1506 = vunpack.c.h.b16 %v1289
      %v1507 = vunpack.c.l.b16 %v1290
      %v1508 = vunpack.c.h.b16 %v1290
      %v1509 = vunpack.c.l.b16 %v1291
      %v1510 = vunpack.c.h.b16 %v1291
      %v1511 = vunpack.c.l.b16 %v1292
      %v1512 = vunpack.c.h.b16 %v1292
      %v1513 = vunpack.c.l.b16 %v1293
      %v1514 = vunpack.c.h.b16 %v1293
      %v1515 = vunpack.c.l.b16 %v1294
      %v1516 = vunpack.c.h.b16 %v1294
      %v1517 = vunpack.c.l.b16 %v1295
      %v1518 = vunpack.c.h.b16 %v1295
      %v1519 = vunpack.c.l.b16 %v1296
      %v1520 = vunpack.c.h.b16 %v1296
      %v1521 = vunpack.c.l.b16 %v1297
      %v1522 = vunpack.c.h.b16 %v1297
      %v1523 = vunpack.c.l.b16 %v1298
      %v1524 = vunpack.c.h.b16 %v1298
      %v1525 = vunpack.c.l.b16 %v1299
      %v1526 = vunpack.c.h.b16 %v1299
      %v1527 = vunpack.c.l.b16 %v1300
      %v1528 = vunpack.c.h.b16 %v1300
      %v1529 = vunpack.c.l.b16 %v1301
      %v1530 = vunpack.c.h.b16 %v1301
      %v1531 = vunpack.c.l.b16 %v1302
      %v1532 = vunpack.c.h.b16 %v1302
      %v1533 = vunpack.c.l.b16 %v1303
      %v1534 = vunpack.c.h.b16 %v1303
      %v1535 = vunpack.c.l.b16 %v1304
      %v1536 = vunpack.c.h.b16 %v1304
      %v1537 = vunpack.c.l.b16 %v1305
      %v1538 = vunpack.c.h.b16 %v1305
      %v1539 = vunpack.c.l.b16 %v1306
      %v1540 = vunpack.c.h.b16 %v1306
      %v1541 = vunpack.c.l.b16 %v1307
      %v1542 = vunpack.c.h.b16 %v1307
      %v1543 = vunpack.c.l.b16 %v1308
      %v1544 = vunpack.c.h.b16 %v1308
      %v1545 = vunpack.c.l.b16 %v1309
      %v1546 = vunpack.c.h.b16 %v1309
      %v1547 = vunpack.c.l.b16 %v1310
      %v1548 = vunpack.c.h.b16 %v1310
      %v1549 = vunpack.c.l.b16 %v1311
      %v1550 = vunpack.c.h.b16 %v1311
      %v1551 = vunpack.c.l.b16 %v1312
      %v1552 = vunpack.c.h.b16 %v1312
      %v1553 = vunpack.c.l.b16 %v1313
      %v1554 = vunpack.c.h.b16 %v1313
      %v1555 = vunpack.c.l.b16 %v1314
      %v1556 = vunpack.c.h.b16 %v1314
      %v1557 = vunpack.c.l.b16 %v1315
      %v1558 = vunpack.c.h.b16 %v1315
      %v1559 = vunpack.c.l.b16 %v1316
      %v1560 = vunpack.c.h.b16 %v1316
      %v1561 = vunpack.c.l.b16 %v1317
      %v1562 = vunpack.c.h.b16 %v1317
      %v1563 = vunpack.c.l.b16 %v1318
      %v1564 = vunpack.c.h.b16 %v1318
      %v1565 = vunpack.c.l.b16 %v1319
      %v1566 = vunpack.c.h.b16 %v1319
      %v1567 = vunpack.c.l.b16 %v1320
      %v1568 = vunpack.c.h.b16 %v1320
      %v1569 = vunpack.c.l.b16 %v1321
      %v1570 = vunpack.c.h.b16 %v1321
      %v1571 = vunpack.c.l.b16 %v1322
      %v1572 = vunpack.c.h.b16 %v1322
      %v1573 = vunpack.c.l.b16 %v1323
      %v1574 = vunpack.c.h.b16 %v1323
      %v1575 = vunpack.c.l.b16 %v1324
      %v1576 = vunpack.c.h.b16 %v1324
      %v1577 = vunpack.c.l.b16 %v1325
      %v1578 = vunpack.c.h.b16 %v1325
      %v1579 = vunpack.c.l.b16 %v1326
      %v1580 = vunpack.c.h.b16 %v1326
      %v1581 = vunpack.c.l.b16 %v1327
      %v1582 = vunpack.c.h.b16 %v1327
      %v1583 = vunpack.c.l.b16 %v1328
      %v1584 = vunpack.c.h.b16 %v1328
      %v1585 = vunpack.c.l.b16 %v1329
      %v1586 = vunpack.c.h.b16 %v1329
      %v1587 = vunpack.c.l.b16 %v1330
      %v1588 = vunpack.c.h.b16 %v1330
      %v1589 = vunpack.c.l.b16 %v1331
      %v1590 = vunpack.c.h.b16 %v1331
      %v1591 = vunpack.c.l.b16 %v1332
      %v1592 = vunpack.c.h.b16 %v1332
      %v1593 = vunpack.c.l.b16 %v1333
      %v1594 = vunpack.c.h.b16 %v1333
      %v1595 = vunpack.c.l.b16 %v1334
      %v1596 = vunpack.c.h.b16 %v1334
      %v1597 = vunpack.c.l.b16 %v1335
      %v1598 = vunpack.c.h.b16 %v1335
      %v1599 = vunpack.c.l.b16 %v1336
      %v1600 = vunpack.c.h.b16 %v1336
      %v1601 = vunpack.c.l.b16 %v1337
      %v1602 = vunpack.c.h.b16 %v1337
      %v1603 = vunpack.c.l.b16 %v1338
      %v1604 = vunpack.c.h.b16 %v1338
      %v1605 = vunpack.c.l.b16 %v1339
      %v1606 = vunpack.c.h.b16 %v1339
      %v1607 = vunpack.c.l.b16 %v1340
      %v1608 = vunpack.c.h.b16 %v1340
      %v1609 = vunpack.c.l.b16 %v1341
      %v1610 = vunpack.c.h.b16 %v1341
      %v1611 = vunpack.c.l.b16 %v1342
      %v1612 = vunpack.c.h.b16 %v1342
      %v1613 = vunpack.c.l.b16 %v1343
      %v1614 = vunpack.c.h.b16 %v1343
      %v1615 = vunpack.c.l.b16 %v1344
      %v1616 = vunpack.c.h.b16 %v1344
      %v1617 = vunpack.c.l.b16 %v1345
      %v1618 = vunpack.c.h.b16 %v1345
      %v1619 = vunpack.c.l.b16 %v1346
      %v1620 = vunpack.c.h.b16 %v1346
      %v1621 = vunpack.c.l.b16 %v1347
      %v1622 = vunpack.c.h.b16 %v1347
      %v1623 = vunpack.c.l.b16 %v1348
      %v1624 = vunpack.c.h.b16 %v1348
      %v1625 = vunpack.c.l.b16 %v1349
      %v1626 = vunpack.c.h.b16 %v1349
      %v1627 = vunpack.c.l.b16 %v1350
      %v1628 = vunpack.c.h.b16 %v1350
      %v1629 = vunpack.c.l.b16 %v1351
      %v1630 = vunpack.c.h.b16 %v1351
      %v1631 = vunpack.c.l.b16 %v1352
      %v1632 = vunpack.c.h.b16 %v1352
      %v1633 = vunpack.c.l.b16 %v1353
      %v1634 = vunpack.c.h.b16 %v1353
      %v1635 = vunpack.c.l.b16 %v1354
      %v1636 = vunpack.c.h.b16 %v1354
      %v1637 = vunpack.c.l.b16 %v1355
      %v1638 = vunpack.c.h.b16 %v1355
      %v1639 = vunpack.c.l.b16 %v1356
      %v1640 = vunpack.c.h.b16 %v1356
      %v1641 = vunpack.c.l.b16 %v1357
      %v1642 = vunpack.c.h.b16 %v1357
      %v1643 = vunpack.c.l.b16 %v1358
      %v1644 = vunpack.c.h.b16 %v1358
      %v1645 = vunpack.c.l.b16 %v1359
      %v1646 = vunpack.c.h.b16 %v1359
      %v1647 = vpack.c.b16 %v1491, %v1479
      %v1648 = vpack.c.b16 %v1492, %v1480
      %v1649 = vpack.c.b16 %v1493, %v1481
      %v1650 = vpack.c.b16 %v1494, %v1482
      %v1651 = vpack.c.b16 %v1495, %v1483
      %v1652 = vpack.c.b16 %v1496, %v1484
      %v1653 = vpack.c.b16 %v1497, %v1485
      %v1654 = vpack.c.b16 %v1498, %v1486
      %v1655 = vpack.c.b16 %v1499, %v1487
      %v1656 = vpack.c.b16 %v1500, %v1488
      %v1657 = vpack.c.b16 %v1501, %v1489
      %v1658 = vpack.c.b16 %v1502, %v1490
      %v1659 = vpack.c.b16 %v1515, %v1503
      %v1660 = vpack.c.b16 %v1516, %v1504
      %v1661 = vpack.c.b16 %v1517, %v1505
      %v1662 = vpack.c.b16 %v1518, %v1506
      %v1663 = vpack.c.b16 %v1519, %v1507
      %v1664 = vpack.c.b16 %v1520, %v1508
      %v1665 = vpack.c.b16 %v1521, %v1509
      %v1666 = vpack.c.b16 %v1522, %v1510
      %v1667 = vpack.c.b16 %v1523, %v1511
      %v1668 = vpack.c.b16 %v1524, %v1512
      %v1669 = vpack.c.b16 %v1525, %v1513
      %v1670 = vpack.c.b16 %v1526, %v1514
      %v1671 = vpack.c.b16 %v1539, %v1527
      %v1672 = vpack.c.b16 %v1540, %v1528
      %v1673 = vpack.c.b16 %v1541, %v1529
      %v1674 = vpack.c.b16 %v1542, %v1530
      %v1675 = vpack.c.b16 %v1543, %v1531
      %v1676 = vpack.c.b16 %v1544, %v1532
      %v1677 = vpack.c.b16 %v1545, %v1533
      %v1678 = vpack.c.b16 %v1546, %v1534
      %v1679 = vpack.c.b16 %v1547, %v1535
      %v1680 = vpack.c.b16 %v1548, %v1536
      %v1681 = vpack.c.b16 %v1549, %v1537
      %v1682 = vpack.c.b16 %v1550, %v1538
      %v1683 = vpack.c.b16 %v1563, %v1551
      %v1684 = vpack.c.b16 %v1564, %v1552
      %v1685 = vpack.c.b16 %v1565, %v1553
      %v1686 = vpack.c.b16 %v1566, %v1554
      %v1687 = vpack.c.b16 %v1567, %v1555
      %v1688 = vpack.c.b16 %v1568, %v1556
      %v1689 = vpack.c.b16 %v1569, %v1557
      %v1690 = vpack.c.b16 %v1570, %v1558
      %v1691 = vpack.c.b16 %v1571, %v1559
      %v1692 = vpack.c.b16 %v1572, %v1560
      %v1693 = vpack.c.b16 %v1573, %v1561
      %v1694 = vpack.c.b16 %v1574, %v1562
      %v1695 = vpack.c.b16 %v1587, %v1575
      %v1696 = vpack.c.b16 %v1588, %v1576
      %v1697 = vpack.c.b16 %v1589, %v1577
      %v1698 = vpack.c.b16 %v1590, %v1578
      %v1699 = vpack.c.b16 %v1591, %v1579
      %v1700 = vpack.c.b16 %v1592, %v1580
      %v1701 = vpack.c.b16 %v1593, %v1581
      %v1702 = vpack.c.b16 %v1594, %v1582
      %v1703 = vpack.c.b16 %v1595, %v1583
      %v1704 = vpack.c.b16 %v1596, %v1584
      %v1705 = vpack.c.b16 %v1597, %v1585
      %v1706 = vpack.c.b16 %v1598, %v1586
      %v1707 = vpack.c.b16 %v1611, %v1599
      %v1708 = vpack.c.b16 %v1612, %v1600
      %v1709 = vpack.c.b16 %v1613, %v1601
      %v1710 = vpack.c.b16 %v1614, %v1602
      %v1711 = vpack.c.b16 %v1615, %v1603
      %v1712 = vpack.c.b16 %v1616, %v1604
      %v1713 = vpack.c.b16 %v1617, %v1605
      %v1714 = vpack.c.b16 %v1618, %v1606
      %v1715 = vpack.c.b16 %v1619, %v1607
      %v1716 = vpack.c.b16 %v1620, %v1608
      %v1717 = vpack.c.b16 %v1621, %v1609
      %v1718 = vpack.c.b16 %v1622, %v1610
      %v1719 = vpack.c.b16 %v1635, %v1623
      %v1720 = vpack.c.b16 %v1636, %v1624
      %v1721 = vpack.c.b16 %v1637, %v1625
      %v1722 = vpack.c.b16 %v1638, %v1626
      %v1723 = vpack.c.b16 %v1639, %v1627
      %v1724 = vpack.c.b16 %v1640, %v1628
      %v1725 = vpack.c.b16 %v1641, %v1629
      %v1726 = vpack.c.b16 %v1642, %v1630
      %v1727 = vpack.c.b16 %v1643, %v1631
      %v1728 = vpack.c.b16 %v1644, %v1632
      %v1729 = vpack.c.b16 %v1645, %v1633
      %v1730 = vpack.c.b16 %v1646, %v1634
      %vm1815 = vcmask 916480
      %v1817 = vsel %vm1815, %v1388, 0
      %v1820 = vsel %vm1815, %v1389, 0
      %v1823 = vsel %vm1815, %v1390, 0
      %v1826 = vsel %vm1815, %v1391, 0
      %v1829 = vsel %vm1815, %v1392, 0
      %v1832 = vsel %vm1815, %v1393, 0
      %v1835 = vsel %vm1815, %v1394, 0
      %1837 = vmatprep.subr.bf16.mxu0 0
      %1838 = vmatpush1.bf16.msra.mxu0 0
      %1839 = vmatprep.subr.bf16.mxu0 %v1720
      %1840 = vmatpush1.bf16.msra.mxu0 %v1719
      %1841 = vmatprep.subr.bf16.mxu0 %v1708
      %1842 = vmatpush1.bf16.msra.mxu0 %v1707
      %1843 = vmatprep.subr.bf16.mxu0 %v1696
      %1844 = vmatpush1.bf16.msra.mxu0 %v1695
      %1845 = vmatprep.subr.bf16.mxu0 %v1684
      %1846 = vmatpush1.bf16.msra.mxu0 %v1683
      %1847 = vmatprep.subr.bf16.mxu0 %v1672
      %1848 = vmatpush1.bf16.msra.mxu0 %v1671
      %1849 = vmatprep.subr.bf16.mxu0 %v1660
      %1850 = vmatpush1.bf16.msra.mxu0 %v1659
      %1851 = vmatprep.subr.bf16.mxu0 %v1648
      %1852 = vmatpush1.bf16.msra.mxu0 %v1647
      %1853 = vmatprep.subr.bf16.mxu0 0
      %1854 = vmatpush2.bf16.msra.mxu0 0
      %1855 = vmatprep.subr.bf16.mxu0 0
      %1856 = vmatpush2.bf16.msra.mxu0 0
      %1857 = vmatprep.subr.bf16.mxu0 0
      %1858 = vmatpush2.bf16.msra.mxu0 0
      %1859 = vmatprep.subr.bf16.mxu0 0
      %1860 = vmatpush2.bf16.msra.mxu0 0
      %1861 = vmatprep.subr.bf16.mxu0 0
      %1862 = vmatpush2.bf16.msra.mxu0 0
      %1863 = vmatprep.subr.bf16.mxu0 0
      %1864 = vmatpush2.bf16.msra.mxu0 0
      %1865 = vmatprep.subr.bf16.mxu0 0
      %1866 = vmatpush2.bf16.msra.mxu0 0
      %1867 = vmatprep.subr.bf16.mxu0 0
      %1868 = vmatpush2.bf16.msra.mxu0 0
      %1869 = vmatprep.mubr.bf16.mxu0 0
      %1870 = vmatmul.mubr.bf16.gmra.mxu0 %v1817
      %v1871 = vpop.f32.mrf.mxu0
      %v1872 = vadd.f32 0.0, %v1871
      %v1873 = vpop.f32.mrf.mxu0
      %v1874 = vadd.f32 0.0, %v1873
      %v1875 = vpop.f32.mrf.mxu0
      %v1876 = vadd.f32 0.0, %v1875
      %v1877 = vpop.f32.mrf.mxu0
      %v1878 = vadd.f32 0.0, %v1877
      %1879 = vmatprep.mubr.bf16.mxu0 0
      %1880 = vmatmul.mubr.bf16.gmra.mxu0 %v1820
      %v1881 = vpop.f32.mrf.mxu0
      %v1882 = vadd.f32 0.0, %v1881
      %v1883 = vpop.f32.mrf.mxu0
      %v1884 = vadd.f32 0.0, %v1883
      %v1885 = vpop.f32.mrf.mxu0
      %v1886 = vadd.f32 0.0, %v1885
      %v1887 = vpop.f32.mrf.mxu0
      %v1888 = vadd.f32 0.0, %v1887
      %1889 = vmatprep.mubr.bf16.mxu0 0
      %1890 = vmatmul.mubr.bf16.gmra.mxu0 %v1823
      %v1891 = vpop.f32.mrf.mxu0
      %v1892 = vadd.f32 0.0, %v1891
      %v1893 = vpop.f32.mrf.mxu0
      %v1894 = vadd.f32 0.0, %v1893
      %v1895 = vpop.f32.mrf.mxu0
      %v1896 = vadd.f32 0.0, %v1895
      %v1897 = vpop.f32.mrf.mxu0
      %v1898 = vadd.f32 0.0, %v1897
      %1899 = vmatprep.mubr.bf16.mxu0 0
      %1900 = vmatmul.mubr.bf16.gmra.mxu0 %v1826
      %v1901 = vpop.f32.mrf.mxu0
      %v1902 = vadd.f32 0.0, %v1901
      %v1903 = vpop.f32.mrf.mxu0
      %v1904 = vadd.f32 0.0, %v1903
      %v1905 = vpop.f32.mrf.mxu0
      %v1906 = vadd.f32 0.0, %v1905
      %v1907 = vpop.f32.mrf.mxu0
      %v1908 = vadd.f32 0.0, %v1907
      %1909 = vmatprep.mubr.bf16.mxu0 0
      %1910 = vmatmul.mubr.bf16.gmra.mxu0 %v1829
      %v1911 = vpop.f32.mrf.mxu0
      %v1912 = vadd.f32 0.0, %v1911
      %v1913 = vpop.f32.mrf.mxu0
      %v1914 = vadd.f32 0.0, %v1913
      %v1915 = vpop.f32.mrf.mxu0
      %v1916 = vadd.f32 0.0, %v1915
      %v1917 = vpop.f32.mrf.mxu0
      %v1918 = vadd.f32 0.0, %v1917
      %1919 = vmatprep.mubr.bf16.mxu0 0
      %1920 = vmatmul.mubr.bf16.gmra.mxu0 %v1832
      %v1921 = vpop.f32.mrf.mxu0
      %v1922 = vadd.f32 0.0, %v1921
      %v1923 = vpop.f32.mrf.mxu0
      %v1924 = vadd.f32 0.0, %v1923
      %v1925 = vpop.f32.mrf.mxu0
      %v1926 = vadd.f32 0.0, %v1925
      %v1927 = vpop.f32.mrf.mxu0
      %v1928 = vadd.f32 0.0, %v1927
      %1929 = vmatprep.mubr.bf16.mxu0 0
      %1930 = vmatmul.mubr.bf16.gmra.mxu0 %v1835
      %v1931 = vpop.f32.mrf.mxu0
      %v1932 = vadd.f32 0.0, %v1931
      %v1933 = vpop.f32.mrf.mxu0
      %v1934 = vadd.f32 0.0, %v1933
      %v1935 = vpop.f32.mrf.mxu0
      %v1936 = vadd.f32 0.0, %v1935
      %v1937 = vpop.f32.mrf.mxu0
      %v1938 = vadd.f32 0.0, %v1937
      %1939 = vdwg.mxu0
      %1940 = vmatprep.subr.bf16.mxu0 0
      %1941 = vmatpush1.bf16.msra.mxu0 0
      %1942 = vmatprep.subr.bf16.mxu0 %v1722
      %1943 = vmatpush1.bf16.msra.mxu0 %v1721
      %1944 = vmatprep.subr.bf16.mxu0 %v1710
      %1945 = vmatpush1.bf16.msra.mxu0 %v1709
      %1946 = vmatprep.subr.bf16.mxu0 %v1698
      %1947 = vmatpush1.bf16.msra.mxu0 %v1697
      %1948 = vmatprep.subr.bf16.mxu0 %v1686
      %1949 = vmatpush1.bf16.msra.mxu0 %v1685
      %1950 = vmatprep.subr.bf16.mxu0 %v1674
      %1951 = vmatpush1.bf16.msra.mxu0 %v1673
      %1952 = vmatprep.subr.bf16.mxu0 %v1662
      %1953 = vmatpush1.bf16.msra.mxu0 %v1661
      %1954 = vmatprep.subr.bf16.mxu0 %v1650
      %1955 = vmatpush1.bf16.msra.mxu0 %v1649
      %1956 = vmatprep.subr.bf16.mxu0 0
      %1957 = vmatpush2.bf16.msra.mxu0 0
      %1958 = vmatprep.subr.bf16.mxu0 0
      %1959 = vmatpush2.bf16.msra.mxu0 0
      %1960 = vmatprep.subr.bf16.mxu0 0
      %1961 = vmatpush2.bf16.msra.mxu0 0
      %1962 = vmatprep.subr.bf16.mxu0 0
      %1963 = vmatpush2.bf16.msra.mxu0 0
      %1964 = vmatprep.subr.bf16.mxu0 0
      %1965 = vmatpush2.bf16.msra.mxu0 0
      %1966 = vmatprep.subr.bf16.mxu0 0
      %1967 = vmatpush2.bf16.msra.mxu0 0
      %1968 = vmatprep.subr.bf16.mxu0 0
      %1969 = vmatpush2.bf16.msra.mxu0 0
      %1970 = vmatprep.subr.bf16.mxu0 0
      %1971 = vmatpush2.bf16.msra.mxu0 0
      %1972 = vmatprep.mubr.bf16.mxu0 0
      %1973 = vmatmul.mubr.bf16.gmra.mxu0 %v1817
      %v1974 = vpop.f32.mrf.mxu0
      %v1975 = vadd.f32 0.0, %v1974
      %v1976 = vpop.f32.mrf.mxu0
      %v1977 = vadd.f32 0.0, %v1976
      %v1978 = vpop.f32.mrf.mxu0
      %v1979 = vadd.f32 0.0, %v1978
      %v1980 = vpop.f32.mrf.mxu0
      %v1981 = vadd.f32 0.0, %v1980
      %1982 = vmatprep.mubr.bf16.mxu0 0
      %1983 = vmatmul.mubr.bf16.gmra.mxu0 %v1820
      %v1984 = vpop.f32.mrf.mxu0
      %v1985 = vadd.f32 0.0, %v1984
      %v1986 = vpop.f32.mrf.mxu0
      %v1987 = vadd.f32 0.0, %v1986
      %v1988 = vpop.f32.mrf.mxu0
      %v1989 = vadd.f32 0.0, %v1988
      %v1990 = vpop.f32.mrf.mxu0
      %v1991 = vadd.f32 0.0, %v1990
      %1992 = vmatprep.mubr.bf16.mxu0 0
      %1993 = vmatmul.mubr.bf16.gmra.mxu0 %v1823
      %v1994 = vpop.f32.mrf.mxu0
      %v1995 = vadd.f32 0.0, %v1994
      %v1996 = vpop.f32.mrf.mxu0
      %v1997 = vadd.f32 0.0, %v1996
      %v1998 = vpop.f32.mrf.mxu0
      %v1999 = vadd.f32 0.0, %v1998
      %v2000 = vpop.f32.mrf.mxu0
      %v2001 = vadd.f32 0.0, %v2000
      %2002 = vmatprep.mubr.bf16.mxu0 0
      %2003 = vmatmul.mubr.bf16.gmra.mxu0 %v1826
      %v2004 = vpop.f32.mrf.mxu0
      %v2005 = vadd.f32 0.0, %v2004
      %v2006 = vpop.f32.mrf.mxu0
      %v2007 = vadd.f32 0.0, %v2006
      %v2008 = vpop.f32.mrf.mxu0
      %v2009 = vadd.f32 0.0, %v2008
      %v2010 = vpop.f32.mrf.mxu0
      %v2011 = vadd.f32 0.0, %v2010
      %2012 = vmatprep.mubr.bf16.mxu0 0
      %2013 = vmatmul.mubr.bf16.gmra.mxu0 %v1829
      %v2014 = vpop.f32.mrf.mxu0
      %v2015 = vadd.f32 0.0, %v2014
      %v2016 = vpop.f32.mrf.mxu0
      %v2017 = vadd.f32 0.0, %v2016
      %v2018 = vpop.f32.mrf.mxu0
      %v2019 = vadd.f32 0.0, %v2018
      %v2020 = vpop.f32.mrf.mxu0
      %v2021 = vadd.f32 0.0, %v2020
      %2022 = vmatprep.mubr.bf16.mxu0 0
      %2023 = vmatmul.mubr.bf16.gmra.mxu0 %v1832
      %v2024 = vpop.f32.mrf.mxu0
      %v2025 = vadd.f32 0.0, %v2024
      %v2026 = vpop.f32.mrf.mxu0
      %v2027 = vadd.f32 0.0, %v2026
      %v2028 = vpop.f32.mrf.mxu0
      %v2029 = vadd.f32 0.0, %v2028
      %v2030 = vpop.f32.mrf.mxu0
      %v2031 = vadd.f32 0.0, %v2030
      %2032 = vmatprep.mubr.bf16.mxu0 0
      %2033 = vmatmul.mubr.bf16.gmra.mxu0 %v1835
      %v2034 = vpop.f32.mrf.mxu0
      %v2035 = vadd.f32 0.0, %v2034
      %v2036 = vpop.f32.mrf.mxu0
      %v2037 = vadd.f32 0.0, %v2036
      %v2038 = vpop.f32.mrf.mxu0
      %v2039 = vadd.f32 0.0, %v2038
      %v2040 = vpop.f32.mrf.mxu0
      %v2041 = vadd.f32 0.0, %v2040
      %2042 = vdwg.mxu0
      %2043 = vmatprep.subr.bf16.mxu0 0
      %2044 = vmatpush1.bf16.msra.mxu0 0
      %2045 = vmatprep.subr.bf16.mxu0 %v1724
      %2046 = vmatpush1.bf16.msra.mxu0 %v1723
      %2047 = vmatprep.subr.bf16.mxu0 %v1712
      %2048 = vmatpush1.bf16.msra.mxu0 %v1711
      %2049 = vmatprep.subr.bf16.mxu0 %v1700
      %2050 = vmatpush1.bf16.msra.mxu0 %v1699
      %2051 = vmatprep.subr.bf16.mxu0 %v1688
      %2052 = vmatpush1.bf16.msra.mxu0 %v1687
      %2053 = vmatprep.subr.bf16.mxu0 %v1676
      %2054 = vmatpush1.bf16.msra.mxu0 %v1675
      %2055 = vmatprep.subr.bf16.mxu0 %v1664
      %2056 = vmatpush1.bf16.msra.mxu0 %v1663
      %2057 = vmatprep.subr.bf16.mxu0 %v1652
      %2058 = vmatpush1.bf16.msra.mxu0 %v1651
      %2059 = vmatprep.subr.bf16.mxu0 0
      %2060 = vmatpush2.bf16.msra.mxu0 0
      %2061 = vmatprep.subr.bf16.mxu0 0
      %2062 = vmatpush2.bf16.msra.mxu0 0
      %2063 = vmatprep.subr.bf16.mxu0 0
      %2064 = vmatpush2.bf16.msra.mxu0 0
      %2065 = vmatprep.subr.bf16.mxu0 0
      %2066 = vmatpush2.bf16.msra.mxu0 0
      %2067 = vmatprep.subr.bf16.mxu0 0
      %2068 = vmatpush2.bf16.msra.mxu0 0
      %2069 = vmatprep.subr.bf16.mxu0 0
      %2070 = vmatpush2.bf16.msra.mxu0 0
      %2071 = vmatprep.subr.bf16.mxu0 0
      %2072 = vmatpush2.bf16.msra.mxu0 0
      %2073 = vmatprep.subr.bf16.mxu0 0
      %2074 = vmatpush2.bf16.msra.mxu0 0
      %2075 = vmatprep.mubr.bf16.mxu0 0
      %2076 = vmatmul.mubr.bf16.gmra.mxu0 %v1817
      %v2077 = vpop.f32.mrf.mxu0
      %v2078 = vadd.f32 0.0, %v2077
      %v2079 = vpop.f32.mrf.mxu0
      %v2080 = vadd.f32 0.0, %v2079
      %v2081 = vpop.f32.mrf.mxu0
      %v2082 = vadd.f32 0.0, %v2081
      %v2083 = vpop.f32.mrf.mxu0
      %v2084 = vadd.f32 0.0, %v2083
      %2085 = vmatprep.mubr.bf16.mxu0 0
      %2086 = vmatmul.mubr.bf16.gmra.mxu0 %v1820
      %v2087 = vpop.f32.mrf.mxu0
      %v2088 = vadd.f32 0.0, %v2087
      %v2089 = vpop.f32.mrf.mxu0
      %v2090 = vadd.f32 0.0, %v2089
      %v2091 = vpop.f32.mrf.mxu0
      %v2092 = vadd.f32 0.0, %v2091
      %v2093 = vpop.f32.mrf.mxu0
      %v2094 = vadd.f32 0.0, %v2093
      %2095 = vmatprep.mubr.bf16.mxu0 0
      %2096 = vmatmul.mubr.bf16.gmra.mxu0 %v1823
      %v2097 = vpop.f32.mrf.mxu0
      %v2098 = vadd.f32 0.0, %v2097
      %v2099 = vpop.f32.mrf.mxu0
      %v2100 = vadd.f32 0.0, %v2099
      %v2101 = vpop.f32.mrf.mxu0
      %v2102 = vadd.f32 0.0, %v2101
      %v2103 = vpop.f32.mrf.mxu0
      %v2104 = vadd.f32 0.0, %v2103
      %2105 = vmatprep.mubr.bf16.mxu0 0
      %2106 = vmatmul.mubr.bf16.gmra.mxu0 %v1826
      %v2107 = vpop.f32.mrf.mxu0
      %v2108 = vadd.f32 0.0, %v2107
      %v2109 = vpop.f32.mrf.mxu0
      %v2110 = vadd.f32 0.0, %v2109
      %v2111 = vpop.f32.mrf.mxu0
      %v2112 = vadd.f32 0.0, %v2111
      %v2113 = vpop.f32.mrf.mxu0
      %v2114 = vadd.f32 0.0, %v2113
      %2115 = vmatprep.mubr.bf16.mxu0 0
      %2116 = vmatmul.mubr.bf16.gmra.mxu0 %v1829
      %v2117 = vpop.f32.mrf.mxu0
      %v2118 = vadd.f32 0.0, %v2117
      %v2119 = vpop.f32.mrf.mxu0
      %v2120 = vadd.f32 0.0, %v2119
      %v2121 = vpop.f32.mrf.mxu0
      %v2122 = vadd.f32 0.0, %v2121
      %v2123 = vpop.f32.mrf.mxu0
      %v2124 = vadd.f32 0.0, %v2123
      %2125 = vmatprep.mubr.bf16.mxu0 0
      %2126 = vmatmul.mubr.bf16.gmra.mxu0 %v1832
      %v2127 = vpop.f32.mrf.mxu0
      %v2128 = vadd.f32 0.0, %v2127
      %v2129 = vpop.f32.mrf.mxu0
      %v2130 = vadd.f32 0.0, %v2129
      %v2131 = vpop.f32.mrf.mxu0
      %v2132 = vadd.f32 0.0, %v2131
      %v2133 = vpop.f32.mrf.mxu0
      %v2134 = vadd.f32 0.0, %v2133
      %2135 = vmatprep.mubr.bf16.mxu0 0
      %2136 = vmatmul.mubr.bf16.gmra.mxu0 %v1835
      %v2137 = vpop.f32.mrf.mxu0
      %v2138 = vadd.f32 0.0, %v2137
      %v2139 = vpop.f32.mrf.mxu0
      %v2140 = vadd.f32 0.0, %v2139
      %v2141 = vpop.f32.mrf.mxu0
      %v2142 = vadd.f32 0.0, %v2141
      %v2143 = vpop.f32.mrf.mxu0
      %v2144 = vadd.f32 0.0, %v2143
      %2145 = vdwg.mxu0
      %2146 = vmatprep.subr.bf16.mxu0 0
      %2147 = vmatpush1.bf16.msra.mxu0 0
      %2148 = vmatprep.subr.bf16.mxu0 %v1726
      %2149 = vmatpush1.bf16.msra.mxu0 %v1725
      %2150 = vmatprep.subr.bf16.mxu0 %v1714
      %2151 = vmatpush1.bf16.msra.mxu0 %v1713
      %2152 = vmatprep.subr.bf16.mxu0 %v1702
      %2153 = vmatpush1.bf16.msra.mxu0 %v1701
      %2154 = vmatprep.subr.bf16.mxu0 %v1690
      %2155 = vmatpush1.bf16.msra.mxu0 %v1689
      %2156 = vmatprep.subr.bf16.mxu0 %v1678
      %2157 = vmatpush1.bf16.msra.mxu0 %v1677
      %2158 = vmatprep.subr.bf16.mxu0 %v1666
      %2159 = vmatpush1.bf16.msra.mxu0 %v1665
      %2160 = vmatprep.subr.bf16.mxu0 %v1654
      %2161 = vmatpush1.bf16.msra.mxu0 %v1653
      %2162 = vmatprep.subr.bf16.mxu0 0
      %2163 = vmatpush2.bf16.msra.mxu0 0
      %2164 = vmatprep.subr.bf16.mxu0 0
      %2165 = vmatpush2.bf16.msra.mxu0 0
      %2166 = vmatprep.subr.bf16.mxu0 0
      %2167 = vmatpush2.bf16.msra.mxu0 0
      %2168 = vmatprep.subr.bf16.mxu0 0
      %2169 = vmatpush2.bf16.msra.mxu0 0
      %2170 = vmatprep.subr.bf16.mxu0 0
      %2171 = vmatpush2.bf16.msra.mxu0 0
      %2172 = vmatprep.subr.bf16.mxu0 0
      %2173 = vmatpush2.bf16.msra.mxu0 0
      %2174 = vmatprep.subr.bf16.mxu0 0
      %2175 = vmatpush2.bf16.msra.mxu0 0
      %2176 = vmatprep.subr.bf16.mxu0 0
      %2177 = vmatpush2.bf16.msra.mxu0 0
      %2178 = vmatprep.mubr.bf16.mxu0 0
      %2179 = vmatmul.mubr.bf16.gmra.mxu0 %v1817
      %v2180 = vpop.f32.mrf.mxu0
      %v2181 = vadd.f32 0.0, %v2180
      %v2182 = vpop.f32.mrf.mxu0
      %v2183 = vadd.f32 0.0, %v2182
      %v2184 = vpop.f32.mrf.mxu0
      %v2185 = vadd.f32 0.0, %v2184
      %v2186 = vpop.f32.mrf.mxu0
      %v2187 = vadd.f32 0.0, %v2186
      %2188 = vmatprep.mubr.bf16.mxu0 0
      %2189 = vmatmul.mubr.bf16.gmra.mxu0 %v1820
      %v2190 = vpop.f32.mrf.mxu0
      %v2191 = vadd.f32 0.0, %v2190
      %v2192 = vpop.f32.mrf.mxu0
      %v2193 = vadd.f32 0.0, %v2192
      %v2194 = vpop.f32.mrf.mxu0
      %v2195 = vadd.f32 0.0, %v2194
      %v2196 = vpop.f32.mrf.mxu0
      %v2197 = vadd.f32 0.0, %v2196
      %2198 = vmatprep.mubr.bf16.mxu0 0
      %2199 = vmatmul.mubr.bf16.gmra.mxu0 %v1823
      %v2200 = vpop.f32.mrf.mxu0
      %v2201 = vadd.f32 0.0, %v2200
      %v2202 = vpop.f32.mrf.mxu0
      %v2203 = vadd.f32 0.0, %v2202
      %v2204 = vpop.f32.mrf.mxu0
      %v2205 = vadd.f32 0.0, %v2204
      %v2206 = vpop.f32.mrf.mxu0
      %v2207 = vadd.f32 0.0, %v2206
      %2208 = vmatprep.mubr.bf16.mxu0 0
      %2209 = vmatmul.mubr.bf16.gmra.mxu0 %v1826
      %v2210 = vpop.f32.mrf.mxu0
      %v2211 = vadd.f32 0.0, %v2210
      %v2212 = vpop.f32.mrf.mxu0
      %v2213 = vadd.f32 0.0, %v2212
      %v2214 = vpop.f32.mrf.mxu0
      %v2215 = vadd.f32 0.0, %v2214
      %v2216 = vpop.f32.mrf.mxu0
      %v2217 = vadd.f32 0.0, %v2216
      %2218 = vmatprep.mubr.bf16.mxu0 0
      %2219 = vmatmul.mubr.bf16.gmra.mxu0 %v1829
      %v2220 = vpop.f32.mrf.mxu0
      %v2221 = vadd.f32 0.0, %v2220
      %v2222 = vpop.f32.mrf.mxu0
      %v2223 = vadd.f32 0.0, %v2222
      %v2224 = vpop.f32.mrf.mxu0
      %v2225 = vadd.f32 0.0, %v2224
      %v2226 = vpop.f32.mrf.mxu0
      %v2227 = vadd.f32 0.0, %v2226
      %2228 = vmatprep.mubr.bf16.mxu0 0
      %2229 = vmatmul.mubr.bf16.gmra.mxu0 %v1832
      %v2230 = vpop.f32.mrf.mxu0
      %v2231 = vadd.f32 0.0, %v2230
      %v2232 = vpop.f32.mrf.mxu0
      %v2233 = vadd.f32 0.0, %v2232
      %v2234 = vpop.f32.mrf.mxu0
      %v2235 = vadd.f32 0.0, %v2234
      %v2236 = vpop.f32.mrf.mxu0
      %v2237 = vadd.f32 0.0, %v2236
      %2238 = vmatprep.mubr.bf16.mxu0 0
      %2239 = vmatmul.mubr.bf16.gmra.mxu0 %v1835
      %v2240 = vpop.f32.mrf.mxu0
      %v2241 = vadd.f32 0.0, %v2240
      %v2242 = vpop.f32.mrf.mxu0
      %v2243 = vadd.f32 0.0, %v2242
      %v2244 = vpop.f32.mrf.mxu0
      %v2245 = vadd.f32 0.0, %v2244
      %v2246 = vpop.f32.mrf.mxu0
      %v2247 = vadd.f32 0.0, %v2246
      %2248 = vdwg.mxu0
      %2249 = vmatprep.subr.bf16.mxu0 0
      %2250 = vmatpush1.bf16.msra.mxu0 0
      %2251 = vmatprep.subr.bf16.mxu0 %v1728
      %2252 = vmatpush1.bf16.msra.mxu0 %v1727
      %2253 = vmatprep.subr.bf16.mxu0 %v1716
      %2254 = vmatpush1.bf16.msra.mxu0 %v1715
      %2255 = vmatprep.subr.bf16.mxu0 %v1704
      %2256 = vmatpush1.bf16.msra.mxu0 %v1703
      %2257 = vmatprep.subr.bf16.mxu0 %v1692
      %2258 = vmatpush1.bf16.msra.mxu0 %v1691
      %2259 = vmatprep.subr.bf16.mxu0 %v1680
      %2260 = vmatpush1.bf16.msra.mxu0 %v1679
      %2261 = vmatprep.subr.bf16.mxu0 %v1668
      %2262 = vmatpush1.bf16.msra.mxu0 %v1667
      %2263 = vmatprep.subr.bf16.mxu0 %v1656
      %2264 = vmatpush1.bf16.msra.mxu0 %v1655
      %2265 = vmatprep.subr.bf16.mxu0 0
      %2266 = vmatpush2.bf16.msra.mxu0 0
      %2267 = vmatprep.subr.bf16.mxu0 0
      %2268 = vmatpush2.bf16.msra.mxu0 0
      %2269 = vmatprep.subr.bf16.mxu0 0
      %2270 = vmatpush2.bf16.msra.mxu0 0
      %2271 = vmatprep.subr.bf16.mxu0 0
      %2272 = vmatpush2.bf16.msra.mxu0 0
      %2273 = vmatprep.subr.bf16.mxu0 0
      %2274 = vmatpush2.bf16.msra.mxu0 0
      %2275 = vmatprep.subr.bf16.mxu0 0
      %2276 = vmatpush2.bf16.msra.mxu0 0
      %2277 = vmatprep.subr.bf16.mxu0 0
      %2278 = vmatpush2.bf16.msra.mxu0 0
      %2279 = vmatprep.subr.bf16.mxu0 0
      %2280 = vmatpush2.bf16.msra.mxu0 0
      %2281 = vmatprep.mubr.bf16.mxu0 0
      %2282 = vmatmul.mubr.bf16.gmra.mxu0 %v1817
      %v2283 = vpop.f32.mrf.mxu0
      %v2284 = vadd.f32 0.0, %v2283
      %v2285 = vpop.f32.mrf.mxu0
      %v2286 = vadd.f32 0.0, %v2285
      %v2287 = vpop.f32.mrf.mxu0
      %v2288 = vadd.f32 0.0, %v2287
      %v2289 = vpop.f32.mrf.mxu0
      %v2290 = vadd.f32 0.0, %v2289
      %2291 = vmatprep.mubr.bf16.mxu0 0
      %2292 = vmatmul.mubr.bf16.gmra.mxu0 %v1820
      %v2293 = vpop.f32.mrf.mxu0
      %v2294 = vadd.f32 0.0, %v2293
      %v2295 = vpop.f32.mrf.mxu0
      %v2296 = vadd.f32 0.0, %v2295
      %v2297 = vpop.f32.mrf.mxu0
      %v2298 = vadd.f32 0.0, %v2297
      %v2299 = vpop.f32.mrf.mxu0
      %v2300 = vadd.f32 0.0, %v2299
      %2301 = vmatprep.mubr.bf16.mxu0 0
      %2302 = vmatmul.mubr.bf16.gmra.mxu0 %v1823
      %v2303 = vpop.f32.mrf.mxu0
      %v2304 = vadd.f32 0.0, %v2303
      %v2305 = vpop.f32.mrf.mxu0
      %v2306 = vadd.f32 0.0, %v2305
      %v2307 = vpop.f32.mrf.mxu0
      %v2308 = vadd.f32 0.0, %v2307
      %v2309 = vpop.f32.mrf.mxu0
      %v2310 = vadd.f32 0.0, %v2309
      %2311 = vmatprep.mubr.bf16.mxu0 0
      %2312 = vmatmul.mubr.bf16.gmra.mxu0 %v1826
      %v2313 = vpop.f32.mrf.mxu0
      %v2314 = vadd.f32 0.0, %v2313
      %v2315 = vpop.f32.mrf.mxu0
      %v2316 = vadd.f32 0.0, %v2315
      %v2317 = vpop.f32.mrf.mxu0
      %v2318 = vadd.f32 0.0, %v2317
      %v2319 = vpop.f32.mrf.mxu0
      %v2320 = vadd.f32 0.0, %v2319
      %2321 = vmatprep.mubr.bf16.mxu0 0
      %2322 = vmatmul.mubr.bf16.gmra.mxu0 %v1829
      %v2323 = vpop.f32.mrf.mxu0
      %v2324 = vadd.f32 0.0, %v2323
      %v2325 = vpop.f32.mrf.mxu0
      %v2326 = vadd.f32 0.0, %v2325
      %v2327 = vpop.f32.mrf.mxu0
      %v2328 = vadd.f32 0.0, %v2327
      %v2329 = vpop.f32.mrf.mxu0
      %v2330 = vadd.f32 0.0, %v2329
      %2331 = vmatprep.mubr.bf16.mxu0 0
      %2332 = vmatmul.mubr.bf16.gmra.mxu0 %v1832
      %v2333 = vpop.f32.mrf.mxu0
      %v2334 = vadd.f32 0.0, %v2333
      %v2335 = vpop.f32.mrf.mxu0
      %v2336 = vadd.f32 0.0, %v2335
      %v2337 = vpop.f32.mrf.mxu0
      %v2338 = vadd.f32 0.0, %v2337
      %v2339 = vpop.f32.mrf.mxu0
      %v2340 = vadd.f32 0.0, %v2339
      %2341 = vmatprep.mubr.bf16.mxu0 0
      %2342 = vmatmul.mubr.bf16.gmra.mxu0 %v1835
      %v2343 = vpop.f32.mrf.mxu0
      %v2344 = vadd.f32 0.0, %v2343
      %v2345 = vpop.f32.mrf.mxu0
      %v2346 = vadd.f32 0.0, %v2345
      %v2347 = vpop.f32.mrf.mxu0
      %v2348 = vadd.f32 0.0, %v2347
      %v2349 = vpop.f32.mrf.mxu0
      %v2350 = vadd.f32 0.0, %v2349
      %2351 = vdwg.mxu0
      %2352 = vmatprep.subr.bf16.mxu0 0
      %2353 = vmatpush1.bf16.msra.mxu0 0
      %2354 = vmatprep.subr.bf16.mxu0 %v1730
      %2355 = vmatpush1.bf16.msra.mxu0 %v1729
      %2356 = vmatprep.subr.bf16.mxu0 %v1718
      %2357 = vmatpush1.bf16.msra.mxu0 %v1717
      %2358 = vmatprep.subr.bf16.mxu0 %v1706
      %2359 = vmatpush1.bf16.msra.mxu0 %v1705
      %2360 = vmatprep.subr.bf16.mxu0 %v1694
      %2361 = vmatpush1.bf16.msra.mxu0 %v1693
      %2362 = vmatprep.subr.bf16.mxu0 %v1682
      %2363 = vmatpush1.bf16.msra.mxu0 %v1681
      %2364 = vmatprep.subr.bf16.mxu0 %v1670
      %2365 = vmatpush1.bf16.msra.mxu0 %v1669
      %2366 = vmatprep.subr.bf16.mxu0 %v1658
      %2367 = vmatpush1.bf16.msra.mxu0 %v1657
      %2368 = vmatprep.subr.bf16.mxu0 0
      %2369 = vmatpush2.bf16.msra.mxu0 0
      %2370 = vmatprep.subr.bf16.mxu0 0
      %2371 = vmatpush2.bf16.msra.mxu0 0
      %2372 = vmatprep.subr.bf16.mxu0 0
      %2373 = vmatpush2.bf16.msra.mxu0 0
      %2374 = vmatprep.subr.bf16.mxu0 0
      %2375 = vmatpush2.bf16.msra.mxu0 0
      %2376 = vmatprep.subr.bf16.mxu0 0
      %2377 = vmatpush2.bf16.msra.mxu0 0
      %2378 = vmatprep.subr.bf16.mxu0 0
      %2379 = vmatpush2.bf16.msra.mxu0 0
      %2380 = vmatprep.subr.bf16.mxu0 0
      %2381 = vmatpush2.bf16.msra.mxu0 0
      %2382 = vmatprep.subr.bf16.mxu0 0
      %2383 = vmatpush2.bf16.msra.mxu0 0
      %2384 = vmatprep.mubr.bf16.mxu0 0
      %2385 = vmatmul.mubr.bf16.gmra.mxu0 %v1817
      %v2386 = vpop.f32.mrf.mxu0
      %v2387 = vadd.f32 0.0, %v2386
      %v2388 = vpop.f32.mrf.mxu0
      %v2389 = vadd.f32 0.0, %v2388
      %v2390 = vpop.f32.mrf.mxu0
      %v2391 = vadd.f32 0.0, %v2390
      %v2392 = vpop.f32.mrf.mxu0
      %v2393 = vadd.f32 0.0, %v2392
      %2394 = vmatprep.mubr.bf16.mxu0 0
      %2395 = vmatmul.mubr.bf16.gmra.mxu0 %v1820
      %v2396 = vpop.f32.mrf.mxu0
      %v2397 = vadd.f32 0.0, %v2396
      %v2398 = vpop.f32.mrf.mxu0
      %v2399 = vadd.f32 0.0, %v2398
      %v2400 = vpop.f32.mrf.mxu0
      %v2401 = vadd.f32 0.0, %v2400
      %v2402 = vpop.f32.mrf.mxu0
      %v2403 = vadd.f32 0.0, %v2402
      %2404 = vmatprep.mubr.bf16.mxu0 0
      %2405 = vmatmul.mubr.bf16.gmra.mxu0 %v1823
      %v2406 = vpop.f32.mrf.mxu0
      %v2407 = vadd.f32 0.0, %v2406
      %v2408 = vpop.f32.mrf.mxu0
      %v2409 = vadd.f32 0.0, %v2408
      %v2410 = vpop.f32.mrf.mxu0
      %v2411 = vadd.f32 0.0, %v2410
      %v2412 = vpop.f32.mrf.mxu0
      %v2413 = vadd.f32 0.0, %v2412
      %2414 = vmatprep.mubr.bf16.mxu0 0
      %2415 = vmatmul.mubr.bf16.gmra.mxu0 %v1826
      %v2416 = vpop.f32.mrf.mxu0
      %v2417 = vadd.f32 0.0, %v2416
      %v2418 = vpop.f32.mrf.mxu0
      %v2419 = vadd.f32 0.0, %v2418
      %v2420 = vpop.f32.mrf.mxu0
      %v2421 = vadd.f32 0.0, %v2420
      %v2422 = vpop.f32.mrf.mxu0
      %v2423 = vadd.f32 0.0, %v2422
      %2424 = vmatprep.mubr.bf16.mxu0 0
      %2425 = vmatmul.mubr.bf16.gmra.mxu0 %v1829
      %v2426 = vpop.f32.mrf.mxu0
      %v2427 = vadd.f32 0.0, %v2426
      %v2428 = vpop.f32.mrf.mxu0
      %v2429 = vadd.f32 0.0, %v2428
      %v2430 = vpop.f32.mrf.mxu0
      %v2431 = vadd.f32 0.0, %v2430
      %v2432 = vpop.f32.mrf.mxu0
      %v2433 = vadd.f32 0.0, %v2432
      %2434 = vmatprep.mubr.bf16.mxu0 0
      %2435 = vmatmul.mubr.bf16.gmra.mxu0 %v1832
      %v2436 = vpop.f32.mrf.mxu0
      %v2437 = vadd.f32 0.0, %v2436
      %v2438 = vpop.f32.mrf.mxu0
      %v2439 = vadd.f32 0.0, %v2438
      %v2440 = vpop.f32.mrf.mxu0
      %v2441 = vadd.f32 0.0, %v2440
      %v2442 = vpop.f32.mrf.mxu0
      %v2443 = vadd.f32 0.0, %v2442
      %2444 = vmatprep.mubr.bf16.mxu0 0
      %2445 = vmatmul.mubr.bf16.gmra.mxu0 %v1835
      %v2446 = vpop.f32.mrf.mxu0
      %v2447 = vadd.f32 0.0, %v2446
      %v2448 = vpop.f32.mrf.mxu0
      %v2449 = vadd.f32 0.0, %v2448
      %v2450 = vpop.f32.mrf.mxu0
      %v2451 = vadd.f32 0.0, %v2450
      %v2452 = vpop.f32.mrf.mxu0
      %v2453 = vadd.f32 0.0, %v2452
      %2454 = vdwg.mxu0
      %2455 = vst [vmem:[#allocation4] sm:$0xff] %v1872
      %2456 = vst [vmem:[#allocation4 + $0x8] sm:$0xff] %v1874
      %2457 = vst [vmem:[#allocation4 + $0x10] sm:$0xff] %v1975
      %2458 = vst [vmem:[#allocation4 + $0x18] sm:$0xff] %v1977
      %2459 = vst [vmem:[#allocation4 + $0x20] sm:$0xff] %v2078
      %2460 = vst [vmem:[#allocation4 + $0x28] sm:$0xff] %v2080
      %2461 = vst [vmem:[#allocation4 + $0x30] sm:$0xff] %v2181
      %2462 = vst [vmem:[#allocation4 + $0x38] sm:$0xff] %v2183
      %2463 = vst [vmem:[#allocation4 + $0x40] sm:$0xff] %v2284
      %2464 = vst [vmem:[#allocation4 + $0x48] sm:$0xff] %v2286
      %2465 = vst [vmem:[#allocation4 + $0x50] sm:$0xff] %v2387
      %2466 = vst [vmem:[#allocation4 + $0x58] sm:$0xff] %v2389
      %2467 = vst [vmem:[#allocation4 + $0x60] sm:$0xff] %v1876
      %2468 = vst [vmem:[#allocation4 + $0x68] sm:$0xff] %v1878
      %2469 = vst [vmem:[#allocation4 + $0x70] sm:$0xff] %v1979
      %2470 = vst [vmem:[#allocation4 + $0x78] sm:$0xff] %v1981
      %2471 = vst [vmem:[#allocation4 + $0x80] sm:$0xff] %v2082
      %2472 = vst [vmem:[#allocation4 + $0x88] sm:$0xff] %v2084
      %2473 = vst [vmem:[#allocation4 + $0x90] sm:$0xff] %v2185
      %2474 = vst [vmem:[#allocation4 + $0x98] sm:$0xff] %v2187
      %2475 = vst [vmem:[#allocation4 + $0xa0] sm:$0xff] %v2288
      %2476 = vst [vmem:[#allocation4 + $0xa8] sm:$0xff] %v2290
      %2477 = vst [vmem:[#allocation4 + $0xb0] sm:$0xff] %v2391
      %2478 = vst [vmem:[#allocation4 + $0xb8] sm:$0xff] %v2393
      %2479 = vst [vmem:[#allocation4 + $0xc0] sm:$0xff] %v1882
      %2480 = vst [vmem:[#allocation4 + $0xc8] sm:$0xff] %v1884
      %2481 = vst [vmem:[#allocation4 + $0xd0] sm:$0xff] %v1985
      %2482 = vst [vmem:[#allocation4 + $0xd8] sm:$0xff] %v1987
      %2483 = vst [vmem:[#allocation4 + $0xe0] sm:$0xff] %v2088
      %2484 = vst [vmem:[#allocation4 + $0xe8] sm:$0xff] %v2090
      %2485 = vst [vmem:[#allocation4 + $0xf0] sm:$0xff] %v2191
      %2486 = vst [vmem:[#allocation4 + $0xf8] sm:$0xff] %v2193
      %2487 = vst [vmem:[#allocation4 + $0x100] sm:$0xff] %v2294
      %2488 = vst [vmem:[#allocation4 + $0x108] sm:$0xff] %v2296
      %2489 = vst [vmem:[#allocation4 + $0x110] sm:$0xff] %v2397
      %2490 = vst [vmem:[#allocation4 + $0x118] sm:$0xff] %v2399
      %2491 = vst [vmem:[#allocation4 + $0x120] sm:$0xff] %v1886
      %2492 = vst [vmem:[#allocation4 + $0x128] sm:$0xff] %v1888
      %2493 = vst [vmem:[#allocation4 + $0x130] sm:$0xff] %v1989
      %2494 = vst [vmem:[#allocation4 + $0x138] sm:$0xff] %v1991
      %2495 = vst [vmem:[#allocation4 + $0x140] sm:$0xff] %v2092
      %2496 = vst [vmem:[#allocation4 + $0x148] sm:$0xff] %v2094
      %2497 = vst [vmem:[#allocation4 + $0x150] sm:$0xff] %v2195
      %2498 = vst [vmem:[#allocation4 + $0x158] sm:$0xff] %v2197
      %2499 = vst [vmem:[#allocation4 + $0x160] sm:$0xff] %v2298
      %2500 = vst [vmem:[#allocation4 + $0x168] sm:$0xff] %v2300
      %2501 = vst [vmem:[#allocation4 + $0x170] sm:$0xff] %v2401
      %2502 = vst [vmem:[#allocation4 + $0x178] sm:$0xff] %v2403
      %2503 = vst [vmem:[#allocation4 + $0x180] sm:$0xff] %v1892
      %2504 = vst [vmem:[#allocation4 + $0x188] sm:$0xff] %v1894
      %2505 = vst [vmem:[#allocation4 + $0x190] sm:$0xff] %v1995
      %2506 = vst [vmem:[#allocation4 + $0x198] sm:$0xff] %v1997
      %2507 = vst [vmem:[#allocation4 + $0x1a0] sm:$0xff] %v2098
      %2508 = vst [vmem:[#allocation4 + $0x1a8] sm:$0xff] %v2100
      %2509 = vst [vmem:[#allocation4 + $0x1b0] sm:$0xff] %v2201
      %2510 = vst [vmem:[#allocation4 + $0x1b8] sm:$0xff] %v2203
      %2511 = vst [vmem:[#allocation4 + $0x1c0] sm:$0xff] %v2304
      %2512 = vst [vmem:[#allocation4 + $0x1c8] sm:$0xff] %v2306
      %2513 = vst [vmem:[#allocation4 + $0x1d0] sm:$0xff] %v2407
      %2514 = vst [vmem:[#allocation4 + $0x1d8] sm:$0xff] %v2409
      %2515 = vst [vmem:[#allocation4 + $0x1e0] sm:$0xff] %v1896
      %2516 = vst [vmem:[#allocation4 + $0x1e8] sm:$0xff] %v1898
      %2517 = vst [vmem:[#allocation4 + $0x1f0] sm:$0xff] %v1999
      %2518 = vst [vmem:[#allocation4 + $0x1f8] sm:$0xff] %v2001
      %2519 = vst [vmem:[#allocation4 + $0x200] sm:$0xff] %v2102
      %2520 = vst [vmem:[#allocation4 + $0x208] sm:$0xff] %v2104
      %2521 = vst [vmem:[#allocation4 + $0x210] sm:$0xff] %v2205
      %2522 = vst [vmem:[#allocation4 + $0x218] sm:$0xff] %v2207
      %2523 = vst [vmem:[#allocation4 + $0x220] sm:$0xff] %v2308
      %2524 = vst [vmem:[#allocation4 + $0x228] sm:$0xff] %v2310
      %2525 = vst [vmem:[#allocation4 + $0x230] sm:$0xff] %v2411
      %2526 = vst [vmem:[#allocation4 + $0x238] sm:$0xff] %v2413
      %2527 = vst [vmem:[#allocation4 + $0x240] sm:$0xff] %v1902
      %2528 = vst [vmem:[#allocation4 + $0x248] sm:$0xff] %v1904
      %2529 = vst [vmem:[#allocation4 + $0x250] sm:$0xff] %v2005
      %2530 = vst [vmem:[#allocation4 + $0x258] sm:$0xff] %v2007
      %2531 = vst [vmem:[#allocation4 + $0x260] sm:$0xff] %v2108
      %2532 = vst [vmem:[#allocation4 + $0x268] sm:$0xff] %v2110
      %2533 = vst [vmem:[#allocation4 + $0x270] sm:$0xff] %v2211
      %2534 = vst [vmem:[#allocation4 + $0x278] sm:$0xff] %v2213
      %2535 = vst [vmem:[#allocation4 + $0x280] sm:$0xff] %v2314
      %2536 = vst [vmem:[#allocation4 + $0x288] sm:$0xff] %v2316
      %2537 = vst [vmem:[#allocation4 + $0x290] sm:$0xff] %v2417
      %2538 = vst [vmem:[#allocation4 + $0x298] sm:$0xff] %v2419
      %2539 = vst [vmem:[#allocation4 + $0x2a0] sm:$0xff] %v1906
      %2540 = vst [vmem:[#allocation4 + $0x2a8] sm:$0xff] %v1908
      %2541 = vst [vmem:[#allocation4 + $0x2b0] sm:$0xff] %v2009
      %2542 = vst [vmem:[#allocation4 + $0x2b8] sm:$0xff] %v2011
      %2543 = vst [vmem:[#allocation4 + $0x2c0] sm:$0xff] %v2112
      %2544 = vst [vmem:[#allocation4 + $0x2c8] sm:$0xff] %v2114
      %2545 = vst [vmem:[#allocation4 + $0x2d0] sm:$0xff] %v2215
      %2546 = vst [vmem:[#allocation4 + $0x2d8] sm:$0xff] %v2217
      %2547 = vst [vmem:[#allocation4 + $0x2e0] sm:$0xff] %v2318
      %2548 = vst [vmem:[#allocation4 + $0x2e8] sm:$0xff] %v2320
      %2549 = vst [vmem:[#allocation4 + $0x2f0] sm:$0xff] %v2421
      %2550 = vst [vmem:[#allocation4 + $0x2f8] sm:$0xff] %v2423
      %2551 = vst [vmem:[#allocation4 + $0x300] sm:$0xff] %v1912
      %2552 = vst [vmem:[#allocation4 + $0x308] sm:$0xff] %v1914
      %2553 = vst [vmem:[#allocation4 + $0x310] sm:$0xff] %v2015
      %2554 = vst [vmem:[#allocation4 + $0x318] sm:$0xff] %v2017
      %2555 = vst [vmem:[#allocation4 + $0x320] sm:$0xff] %v2118
      %2556 = vst [vmem:[#allocation4 + $0x328] sm:$0xff] %v2120
      %2557 = vst [vmem:[#allocation4 + $0x330] sm:$0xff] %v2221
      %2558 = vst [vmem:[#allocation4 + $0x338] sm:$0xff] %v2223
      %2559 = vst [vmem:[#allocation4 + $0x340] sm:$0xff] %v2324
      %2560 = vst [vmem:[#allocation4 + $0x348] sm:$0xff] %v2326
      %2561 = vst [vmem:[#allocation4 + $0x350] sm:$0xff] %v2427
      %2562 = vst [vmem:[#allocation4 + $0x358] sm:$0xff] %v2429
      %2563 = vst [vmem:[#allocation4 + $0x360] sm:$0xff] %v1916
      %2564 = vst [vmem:[#allocation4 + $0x368] sm:$0xff] %v1918
      %2565 = vst [vmem:[#allocation4 + $0x370] sm:$0xff] %v2019
      %2566 = vst [vmem:[#allocation4 + $0x378] sm:$0xff] %v2021
      %2567 = vst [vmem:[#allocation4 + $0x380] sm:$0xff] %v2122
      %2568 = vst [vmem:[#allocation4 + $0x388] sm:$0xff] %v2124
      %2569 = vst [vmem:[#allocation4 + $0x390] sm:$0xff] %v2225
      %2570 = vst [vmem:[#allocation4 + $0x398] sm:$0xff] %v2227
      %2571 = vst [vmem:[#allocation4 + $0x3a0] sm:$0xff] %v2328
      %2572 = vst [vmem:[#allocation4 + $0x3a8] sm:$0xff] %v2330
      %2573 = vst [vmem:[#allocation4 + $0x3b0] sm:$0xff] %v2431
      %2574 = vst [vmem:[#allocation4 + $0x3b8] sm:$0xff] %v2433
      %2575 = vst [vmem:[#allocation4 + $0x3c0] sm:$0xff] %v1922
      %2576 = vst [vmem:[#allocation4 + $0x3c8] sm:$0xff] %v1924
      %2577 = vst [vmem:[#allocation4 + $0x3d0] sm:$0xff] %v2025
      %2578 = vst [vmem:[#allocation4 + $0x3d8] sm:$0xff] %v2027
      %2579 = vst [vmem:[#allocation4 + $0x3e0] sm:$0xff] %v2128
      %2580 = vst [vmem:[#allocation4 + $0x3e8] sm:$0xff] %v2130
      %2581 = vst [vmem:[#allocation4 + $0x3f0] sm:$0xff] %v2231
      %2582 = vst [vmem:[#allocation4 + $0x3f8] sm:$0xff] %v2233
      %2583 = vst [vmem:[#allocation4 + $0x400] sm:$0xff] %v2334
      %2584 = vst [vmem:[#allocation4 + $0x408] sm:$0xff] %v2336
      %2585 = vst [vmem:[#allocation4 + $0x410] sm:$0xff] %v2437
      %2586 = vst [vmem:[#allocation4 + $0x418] sm:$0xff] %v2439
      %2587 = vst [vmem:[#allocation4 + $0x420] sm:$0xff] %v1926
      %2588 = vst [vmem:[#allocation4 + $0x428] sm:$0xff] %v1928
      %2589 = vst [vmem:[#allocation4 + $0x430] sm:$0xff] %v2029
      %2590 = vst [vmem:[#allocation4 + $0x438] sm:$0xff] %v2031
      %2591 = vst [vmem:[#allocation4 + $0x440] sm:$0xff] %v2132
      %2592 = vst [vmem:[#allocation4 + $0x448] sm:$0xff] %v2134
      %2593 = vst [vmem:[#allocation4 + $0x450] sm:$0xff] %v2235
      %2594 = vst [vmem:[#allocation4 + $0x458] sm:$0xff] %v2237
      %2595 = vst [vmem:[#allocation4 + $0x460] sm:$0xff] %v2338
      %2596 = vst [vmem:[#allocation4 + $0x468] sm:$0xff] %v2340
      %2597 = vst [vmem:[#allocation4 + $0x470] sm:$0xff] %v2441
      %2598 = vst [vmem:[#allocation4 + $0x478] sm:$0xff] %v2443
      %2599 = vst [vmem:[#allocation4 + $0x480] sm:$0xff] %v1932
      %2600 = vst [vmem:[#allocation4 + $0x488] sm:$0xff] %v1934
      %2601 = vst [vmem:[#allocation4 + $0x490] sm:$0xff] %v2035
      %2602 = vst [vmem:[#allocation4 + $0x498] sm:$0xff] %v2037
      %2603 = vst [vmem:[#allocation4 + $0x4a0] sm:$0xff] %v2138
      %2604 = vst [vmem:[#allocation4 + $0x4a8] sm:$0xff] %v2140
      %2605 = vst [vmem:[#allocation4 + $0x4b0] sm:$0xff] %v2241
      %2606 = vst [vmem:[#allocation4 + $0x4b8] sm:$0xff] %v2243
      %2607 = vst [vmem:[#allocation4 + $0x4c0] sm:$0xff] %v2344
      %2608 = vst [vmem:[#allocation4 + $0x4c8] sm:$0xff] %v2346
      %2609 = vst [vmem:[#allocation4 + $0x4d0] sm:$0xff] %v2447
      %2610 = vst [vmem:[#allocation4 + $0x4d8] sm:$0xff] %v2449
      %2611 = vst [vmem:[#allocation4 + $0x4e0] sm:$0xff] %v1936
      %2612 = vst [vmem:[#allocation4 + $0x4e8] sm:$0xff] %v1938
      %2613 = vst [vmem:[#allocation4 + $0x4f0] sm:$0xff] %v2039
      %2614 = vst [vmem:[#allocation4 + $0x4f8] sm:$0xff] %v2041
      %2615 = vst [vmem:[#allocation4 + $0x500] sm:$0xff] %v2142
      %2616 = vst [vmem:[#allocation4 + $0x508] sm:$0xff] %v2144
      %2617 = vst [vmem:[#allocation4 + $0x510] sm:$0xff] %v2245
      %2618 = vst [vmem:[#allocation4 + $0x518] sm:$0xff] %v2247
      %2619 = vst [vmem:[#allocation4 + $0x520] sm:$0xff] %v2348
      %2620 = vst [vmem:[#allocation4 + $0x528] sm:$0xff] %v2350
      %2621 = vst [vmem:[#allocation4 + $0x530] sm:$0xff] %v2451
      %2622 = vst [vmem:[#allocation4 + $0x538] sm:$0xff] %v2453
      %v2623 = vld [vmem:[#allocation4] sm:$0xff]
      %v2624 = vld [vmem:[#allocation4 + $0x8] sm:$0xff]
      %v2625 = vld [vmem:[#allocation4 + $0x10] sm:$0xff]
      %v2626 = vld [vmem:[#allocation4 + $0x18] sm:$0xff]
      %v2627 = vld [vmem:[#allocation4 + $0x20] sm:$0xff]
      %v2628 = vld [vmem:[#allocation4 + $0x28] sm:$0xff]
      %v2629 = vld [vmem:[#allocation4 + $0x30] sm:$0xff]
      %v2630 = vld [vmem:[#allocation4 + $0x38] sm:$0xff]
      %v2631 = vld [vmem:[#allocation4 + $0x40] sm:$0xff]
      %v2632 = vld [vmem:[#allocation4 + $0x48] sm:$0xff]
      %v2633 = vld [vmem:[#allocation4 + $0x60] sm:$0xff]
      %v2634 = vld [vmem:[#allocation4 + $0x68] sm:$0xff]
      %v2635 = vld [vmem:[#allocation4 + $0x70] sm:$0xff]
      %v2636 = vld [vmem:[#allocation4 + $0x78] sm:$0xff]
      %v2637 = vld [vmem:[#allocation4 + $0x80] sm:$0xff]
      %v2638 = vld [vmem:[#allocation4 + $0x88] sm:$0xff]
      %v2639 = vld [vmem:[#allocation4 + $0x90] sm:$0xff]
      %v2640 = vld [vmem:[#allocation4 + $0x98] sm:$0xff]
      %v2641 = vld [vmem:[#allocation4 + $0xa0] sm:$0xff]
      %v2642 = vld [vmem:[#allocation4 + $0xa8] sm:$0xff]
      %v2643 = vld [vmem:[#allocation4 + $0xc0] sm:$0xff]
      %v2644 = vld [vmem:[#allocation4 + $0xc8] sm:$0xff]
      %v2645 = vld [vmem:[#allocation4 + $0xd0] sm:$0xff]
      %v2646 = vld [vmem:[#allocation4 + $0xd8] sm:$0xff]
      %v2647 = vld [vmem:[#allocation4 + $0xe0] sm:$0xff]
      %v2648 = vld [vmem:[#allocation4 + $0xe8] sm:$0xff]
      %v2649 = vld [vmem:[#allocation4 + $0xf0] sm:$0xff]
      %v2650 = vld [vmem:[#allocation4 + $0xf8] sm:$0xff]
      %v2651 = vld [vmem:[#allocation4 + $0x100] sm:$0xff]
      %v2652 = vld [vmem:[#allocation4 + $0x108] sm:$0xff]
      %v2653 = vld [vmem:[#allocation4 + $0x120] sm:$0xff]
      %v2654 = vld [vmem:[#allocation4 + $0x128] sm:$0xff]
      %v2655 = vld [vmem:[#allocation4 + $0x130] sm:$0xff]
      %v2656 = vld [vmem:[#allocation4 + $0x138] sm:$0xff]
      %v2657 = vld [vmem:[#allocation4 + $0x140] sm:$0xff]
      %v2658 = vld [vmem:[#allocation4 + $0x148] sm:$0xff]
      %v2659 = vld [vmem:[#allocation4 + $0x150] sm:$0xff]
      %v2660 = vld [vmem:[#allocation4 + $0x158] sm:$0xff]
      %v2661 = vld [vmem:[#allocation4 + $0x160] sm:$0xff]
      %v2662 = vld [vmem:[#allocation4 + $0x168] sm:$0xff]
      %2683 = vrot.lane.b32.xlu0 %v2643, 90
      %v2684 = vpop.permute.xlu0 %2683
      %2685 = vrot.lane.b32.xlu0 %v2644, 90
      %v2686 = vpop.permute.xlu0 %2685
      %2687 = vrot.lane.b32.xlu0 %v2645, 90
      %v2688 = vpop.permute.xlu0 %2687
      %2689 = vrot.lane.b32.xlu0 %v2646, 90
      %v2690 = vpop.permute.xlu0 %2689
      %2691 = vrot.lane.b32.xlu0 %v2647, 90
      %v2692 = vpop.permute.xlu0 %2691
      %2693 = vrot.lane.b32.xlu0 %v2648, 90
      %v2694 = vpop.permute.xlu0 %2693
      %2695 = vrot.lane.b32.xlu0 %v2649, 90
      %v2696 = vpop.permute.xlu0 %2695
      %2697 = vrot.lane.b32.xlu0 %v2650, 90
      %v2698 = vpop.permute.xlu0 %2697
      %2699 = vrot.lane.b32.xlu0 %v2651, 90
      %v2700 = vpop.permute.xlu0 %2699
      %2701 = vrot.lane.b32.xlu0 %v2652, 90
      %v2702 = vpop.permute.xlu0 %2701
      %2703 = vrot.lane.b32.xlu0 %v2653, 90
      %v2704 = vpop.permute.xlu0 %2703
      %2705 = vrot.lane.b32.xlu0 %v2654, 90
      %v2706 = vpop.permute.xlu0 %2705
      %2707 = vrot.lane.b32.xlu0 %v2655, 90
      %v2708 = vpop.permute.xlu0 %2707
      %2709 = vrot.lane.b32.xlu0 %v2656, 90
      %v2710 = vpop.permute.xlu0 %2709
      %2711 = vrot.lane.b32.xlu0 %v2657, 90
      %v2712 = vpop.permute.xlu0 %2711
      %2713 = vrot.lane.b32.xlu0 %v2658, 90
      %v2714 = vpop.permute.xlu0 %2713
      %2715 = vrot.lane.b32.xlu0 %v2659, 90
      %v2716 = vpop.permute.xlu0 %2715
      %2717 = vrot.lane.b32.xlu0 %v2660, 90
      %v2718 = vpop.permute.xlu0 %2717
      %2719 = vrot.lane.b32.xlu0 %v2661, 90
      %v2720 = vpop.permute.xlu0 %2719
      %2721 = vrot.lane.b32.xlu0 %v2662, 90
      %v2722 = vpop.permute.xlu0 %2721
      %vm2723 = vcmask 736256
      %v2724 = vsel %vm2723, %v2684, %v2686
      %v2725 = vsel %vm2723, %v2686, %v2688
      %v2726 = vsel %vm2723, %v2688, %v2690
      %v2727 = vsel %vm2723, %v2690, %v2692
      %v2728 = vsel %vm2723, %v2692, %v2694
      %v2729 = vsel %vm2723, %v2694, %v2696
      %v2730 = vsel %vm2723, %v2696, %v2698
      %v2731 = vsel %vm2723, %v2698, %v2700
      %v2732 = vsel %vm2723, %v2700, %v2702
      %v2733 = vsel %vm2723, %v2704, %v2706
      %v2734 = vsel %vm2723, %v2706, %v2708
      %v2735 = vsel %vm2723, %v2708, %v2710
      %v2736 = vsel %vm2723, %v2710, %v2712
      %v2737 = vsel %vm2723, %v2712, %v2714
      %v2738 = vsel %vm2723, %v2714, %v2716
      %v2739 = vsel %vm2723, %v2716, %v2718
      %v2740 = vsel %vm2723, %v2718, %v2720
      %v2741 = vsel %vm2723, %v2720, %v2722
      %v2762 = vadd.f32 %v2623, %v2724
      %v2763 = vadd.f32 %v2624, %v2725
      %v2764 = vadd.f32 %v2625, %v2726
      %v2765 = vadd.f32 %v2626, %v2727
      %v2766 = vadd.f32 %v2627, %v2728
      %v2767 = vadd.f32 %v2628, %v2729
      %v2768 = vadd.f32 %v2629, %v2730
      %v2769 = vadd.f32 %v2630, %v2731
      %v2770 = vadd.f32 %v2631, %v2732
      %v2771 = vadd.f32 %v2632, %v2702
      %v2772 = vadd.f32 %v2633, %v2733
      %v2773 = vadd.f32 %v2634, %v2734
      %v2774 = vadd.f32 %v2635, %v2735
      %v2775 = vadd.f32 %v2636, %v2736
      %v2776 = vadd.f32 %v2637, %v2737
      %v2777 = vadd.f32 %v2638, %v2738
      %v2778 = vadd.f32 %v2639, %v2739
      %v2779 = vadd.f32 %v2640, %v2740
      %v2780 = vadd.f32 %v2641, %v2741
      %v2781 = vadd.f32 %v2642, %v2722
      %v2782 = vld [vmem:[#allocation4 + $0x180] sm:$0xff]
      %v2783 = vld [vmem:[#allocation4 + $0x188] sm:$0xff]
      %v2784 = vld [vmem:[#allocation4 + $0x190] sm:$0xff]
      %v2785 = vld [vmem:[#allocation4 + $0x198] sm:$0xff]
      %v2786 = vld [vmem:[#allocation4 + $0x1a0] sm:$0xff]
      %v2787 = vld [vmem:[#allocation4 + $0x1a8] sm:$0xff]
      %v2788 = vld [vmem:[#allocation4 + $0x1b0] sm:$0xff]
      %v2789 = vld [vmem:[#allocation4 + $0x1b8] sm:$0xff]
      %v2790 = vld [vmem:[#allocation4 + $0x1c0] sm:$0xff]
      %v2791 = vld [vmem:[#allocation4 + $0x1c8] sm:$0xff]
      %v2792 = vld [vmem:[#allocation4 + $0x1d0] sm:$0xff]
      %v2793 = vld [vmem:[#allocation4 + $0x1e0] sm:$0xff]
      %v2794 = vld [vmem:[#allocation4 + $0x1e8] sm:$0xff]
      %v2795 = vld [vmem:[#allocation4 + $0x1f0] sm:$0xff]
      %v2796 = vld [vmem:[#allocation4 + $0x1f8] sm:$0xff]
      %v2797 = vld [vmem:[#allocation4 + $0x200] sm:$0xff]
      %v2798 = vld [vmem:[#allocation4 + $0x208] sm:$0xff]
      %v2799 = vld [vmem:[#allocation4 + $0x210] sm:$0xff]
      %v2800 = vld [vmem:[#allocation4 + $0x218] sm:$0xff]
      %v2801 = vld [vmem:[#allocation4 + $0x220] sm:$0xff]
      %v2802 = vld [vmem:[#allocation4 + $0x228] sm:$0xff]
      %v2803 = vld [vmem:[#allocation4 + $0x230] sm:$0xff]
      %2826 = vrot.lane.b32.xlu0 %v2782, 52
      %v2827 = vpop.permute.xlu0 %2826
      %2828 = vrot.lane.b32.xlu0 %v2783, 52
      %v2829 = vpop.permute.xlu0 %2828
      %2830 = vrot.lane.b32.xlu0 %v2784, 52
      %v2831 = vpop.permute.xlu0 %2830
      %2832 = vrot.lane.b32.xlu0 %v2785, 52
      %v2833 = vpop.permute.xlu0 %2832
      %2834 = vrot.lane.b32.xlu0 %v2786, 52
      %v2835 = vpop.permute.xlu0 %2834
      %2836 = vrot.lane.b32.xlu0 %v2787, 52
      %v2837 = vpop.permute.xlu0 %2836
      %2838 = vrot.lane.b32.xlu0 %v2788, 52
      %v2839 = vpop.permute.xlu0 %2838
      %2840 = vrot.lane.b32.xlu0 %v2789, 52
      %v2841 = vpop.permute.xlu0 %2840
      %2842 = vrot.lane.b32.xlu0 %v2790, 52
      %v2843 = vpop.permute.xlu0 %2842
      %2844 = vrot.lane.b32.xlu0 %v2791, 52
      %v2845 = vpop.permute.xlu0 %2844
      %2846 = vrot.lane.b32.xlu0 %v2792, 52
      %v2847 = vpop.permute.xlu0 %2846
      %2848 = vrot.lane.b32.xlu0 %v2793, 52
      %v2849 = vpop.permute.xlu0 %2848
      %2850 = vrot.lane.b32.xlu0 %v2794, 52
      %v2851 = vpop.permute.xlu0 %2850
      %2852 = vrot.lane.b32.xlu0 %v2795, 52
      %v2853 = vpop.permute.xlu0 %2852
      %2854 = vrot.lane.b32.xlu0 %v2796, 52
      %v2855 = vpop.permute.xlu0 %2854
      %2856 = vrot.lane.b32.xlu0 %v2797, 52
      %v2857 = vpop.permute.xlu0 %2856
      %2858 = vrot.lane.b32.xlu0 %v2798, 52
      %v2859 = vpop.permute.xlu0 %2858
      %2860 = vrot.lane.b32.xlu0 %v2799, 52
      %v2861 = vpop.permute.xlu0 %2860
      %2862 = vrot.lane.b32.xlu0 %v2800, 52
      %v2863 = vpop.permute.xlu0 %2862
      %2864 = vrot.lane.b32.xlu0 %v2801, 52
      %v2865 = vpop.permute.xlu0 %2864
      %2866 = vrot.lane.b32.xlu0 %v2802, 52
      %v2867 = vpop.permute.xlu0 %2866
      %2868 = vrot.lane.b32.xlu0 %v2803, 52
      %v2869 = vpop.permute.xlu0 %2868
      %vm2870 = vcmask 424960
      %v2871 = vsel %vm2870, %v2827, %v2829
      %v2872 = vsel %vm2870, %v2829, %v2831
      %v2873 = vsel %vm2870, %v2831, %v2833
      %v2874 = vsel %vm2870, %v2833, %v2835
      %v2875 = vsel %vm2870, %v2835, %v2837
      %v2876 = vsel %vm2870, %v2837, %v2839
      %v2877 = vsel %vm2870, %v2839, %v2841
      %v2878 = vsel %vm2870, %v2841, %v2843
      %v2879 = vsel %vm2870, %v2843, %v2845
      %v2880 = vsel %vm2870, %v2845, %v2847
      %v2881 = vsel %vm2870, %v2849, %v2851
      %v2882 = vsel %vm2870, %v2851, %v2853
      %v2883 = vsel %vm2870, %v2853, %v2855
      %v2884 = vsel %vm2870, %v2855, %v2857
      %v2885 = vsel %vm2870, %v2857, %v2859
      %v2886 = vsel %vm2870, %v2859, %v2861
      %v2887 = vsel %vm2870, %v2861, %v2863
      %v2888 = vsel %vm2870, %v2863, %v2865
      %v2889 = vsel %vm2870, %v2865, %v2867
      %v2890 = vsel %vm2870, %v2867, %v2869
      %v2911 = vadd.f32 %v2762, %v2871
      %v2912 = vadd.f32 %v2763, %v2872
      %v2913 = vadd.f32 %v2764, %v2873
      %v2914 = vadd.f32 %v2765, %v2874
      %v2915 = vadd.f32 %v2766, %v2875
      %v2916 = vadd.f32 %v2767, %v2876
      %v2917 = vadd.f32 %v2768, %v2877
      %v2918 = vadd.f32 %v2769, %v2878
      %v2919 = vadd.f32 %v2770, %v2879
      %v2920 = vadd.f32 %v2771, %v2880
      %v2921 = vadd.f32 %v2772, %v2881
      %v2922 = vadd.f32 %v2773, %v2882
      %v2923 = vadd.f32 %v2774, %v2883
      %v2924 = vadd.f32 %v2775, %v2884
      %v2925 = vadd.f32 %v2776, %v2885
      %v2926 = vadd.f32 %v2777, %v2886
      %v2927 = vadd.f32 %v2778, %v2887
      %v2928 = vadd.f32 %v2779, %v2888
      %v2929 = vadd.f32 %v2780, %v2889
      %v2930 = vadd.f32 %v2781, %v2890
      %v2931 = vld [vmem:[#allocation4 + $0x240] sm:$0xff]
      %v2932 = vld [vmem:[#allocation4 + $0x248] sm:$0xff]
      %v2933 = vld [vmem:[#allocation4 + $0x250] sm:$0xff]
      %v2934 = vld [vmem:[#allocation4 + $0x258] sm:$0xff]
      %v2935 = vld [vmem:[#allocation4 + $0x260] sm:$0xff]
      %v2936 = vld [vmem:[#allocation4 + $0x268] sm:$0xff]
      %v2937 = vld [vmem:[#allocation4 + $0x270] sm:$0xff]
      %v2938 = vld [vmem:[#allocation4 + $0x278] sm:$0xff]
      %v2939 = vld [vmem:[#allocation4 + $0x280] sm:$0xff]
      %v2940 = vld [vmem:[#allocation4 + $0x288] sm:$0xff]
      %v2941 = vld [vmem:[#allocation4 + $0x290] sm:$0xff]
      %v2942 = vld [vmem:[#allocation4 + $0x2a0] sm:$0xff]
      %v2943 = vld [vmem:[#allocation4 + $0x2a8] sm:$0xff]
      %v2944 = vld [vmem:[#allocation4 + $0x2b0] sm:$0xff]
      %v2945 = vld [vmem:[#allocation4 + $0x2b8] sm:$0xff]
      %v2946 = vld [vmem:[#allocation4 + $0x2c0] sm:$0xff]
      %v2947 = vld [vmem:[#allocation4 + $0x2c8] sm:$0xff]
      %v2948 = vld [vmem:[#allocation4 + $0x2d0] sm:$0xff]
      %v2949 = vld [vmem:[#allocation4 + $0x2d8] sm:$0xff]
      %v2950 = vld [vmem:[#allocation4 + $0x2e0] sm:$0xff]
      %v2951 = vld [vmem:[#allocation4 + $0x2e8] sm:$0xff]
      %v2952 = vld [vmem:[#allocation4 + $0x2f0] sm:$0xff]
      %2975 = vrot.lane.b32.xlu0 %v2931, 14
      %v2976 = vpop.permute.xlu0 %2975
      %2977 = vrot.lane.b32.xlu0 %v2932, 14
      %v2978 = vpop.permute.xlu0 %2977
      %2979 = vrot.lane.b32.xlu0 %v2933, 14
      %v2980 = vpop.permute.xlu0 %2979
      %2981 = vrot.lane.b32.xlu0 %v2934, 14
      %v2982 = vpop.permute.xlu0 %2981
      %2983 = vrot.lane.b32.xlu0 %v2935, 14
      %v2984 = vpop.permute.xlu0 %2983
      %2985 = vrot.lane.b32.xlu0 %v2936, 14
      %v2986 = vpop.permute.xlu0 %2985
      %2987 = vrot.lane.b32.xlu0 %v2937, 14
      %v2988 = vpop.permute.xlu0 %2987
      %2989 = vrot.lane.b32.xlu0 %v2938, 14
      %v2990 = vpop.permute.xlu0 %2989
      %2991 = vrot.lane.b32.xlu0 %v2939, 14
      %v2992 = vpop.permute.xlu0 %2991
      %2993 = vrot.lane.b32.xlu0 %v2940, 14
      %v2994 = vpop.permute.xlu0 %2993
      %2995 = vrot.lane.b32.xlu0 %v2941, 14
      %v2996 = vpop.permute.xlu0 %2995
      %2997 = vrot.lane.b32.xlu0 %v2942, 14
      %v2998 = vpop.permute.xlu0 %2997
      %2999 = vrot.lane.b32.xlu0 %v2943, 14
      %v3000 = vpop.permute.xlu0 %2999
      %3001 = vrot.lane.b32.xlu0 %v2944, 14
      %v3002 = vpop.permute.xlu0 %3001
      %3003 = vrot.lane.b32.xlu0 %v2945, 14
      %v3004 = vpop.permute.xlu0 %3003
      %3005 = vrot.lane.b32.xlu0 %v2946, 14
      %v3006 = vpop.permute.xlu0 %3005
      %3007 = vrot.lane.b32.xlu0 %v2947, 14
      %v3008 = vpop.permute.xlu0 %3007
      %3009 = vrot.lane.b32.xlu0 %v2948, 14
      %v3010 = vpop.permute.xlu0 %3009
      %3011 = vrot.lane.b32.xlu0 %v2949, 14
      %v3012 = vpop.permute.xlu0 %3011
      %3013 = vrot.lane.b32.xlu0 %v2950, 14
      %v3014 = vpop.permute.xlu0 %3013
      %3015 = vrot.lane.b32.xlu0 %v2951, 14
      %v3016 = vpop.permute.xlu0 %3015
      %3017 = vrot.lane.b32.xlu0 %v2952, 14
      %v3018 = vpop.permute.xlu0 %3017
      %vm3019 = vcmask 113664
      %v3020 = vsel %vm3019, %v2976, %v2978
      %v3021 = vsel %vm3019, %v2978, %v2980
      %v3022 = vsel %vm3019, %v2980, %v2982
      %v3023 = vsel %vm3019, %v2982, %v2984
      %v3024 = vsel %vm3019, %v2984, %v2986
      %v3025 = vsel %vm3019, %v2986, %v2988
      %v3026 = vsel %vm3019, %v2988, %v2990
      %v3027 = vsel %vm3019, %v2990, %v2992
      %v3028 = vsel %vm3019, %v2992, %v2994
      %v3029 = vsel %vm3019, %v2994, %v2996
      %v3030 = vsel %vm3019, %v2998, %v3000
      %v3031 = vsel %vm3019, %v3000, %v3002
      %v3032 = vsel %vm3019, %v3002, %v3004
      %v3033 = vsel %vm3019, %v3004, %v3006
      %v3034 = vsel %vm3019, %v3006, %v3008
      %v3035 = vsel %vm3019, %v3008, %v3010
      %v3036 = vsel %vm3019, %v3010, %v3012
      %v3037 = vsel %vm3019, %v3012, %v3014
      %v3038 = vsel %vm3019, %v3014, %v3016
      %v3039 = vsel %vm3019, %v3016, %v3018
      %v3060 = vadd.f32 %v2911, %v3020
      %v3061 = vadd.f32 %v2912, %v3021
      %v3062 = vadd.f32 %v2913, %v3022
      %v3063 = vadd.f32 %v2914, %v3023
      %v3064 = vadd.f32 %v2915, %v3024
      %v3065 = vadd.f32 %v2916, %v3025
      %v3066 = vadd.f32 %v2917, %v3026
      %v3067 = vadd.f32 %v2918, %v3027
      %v3068 = vadd.f32 %v2919, %v3028
      %v3069 = vadd.f32 %v2920, %v3029
      %v3070 = vadd.f32 %v2921, %v3030
      %v3071 = vadd.f32 %v2922, %v3031
      %v3072 = vadd.f32 %v2923, %v3032
      %v3073 = vadd.f32 %v2924, %v3033
      %v3074 = vadd.f32 %v2925, %v3034
      %v3075 = vadd.f32 %v2926, %v3035
      %v3076 = vadd.f32 %v2927, %v3036
      %v3077 = vadd.f32 %v2928, %v3037
      %v3078 = vadd.f32 %v2929, %v3038
      %v3079 = vadd.f32 %v2930, %v3039
      %v3080 = vld [vmem:[#allocation4 + $0x308] sm:$0xff]
      %v3081 = vld [vmem:[#allocation4 + $0x310] sm:$0xff]
      %v3082 = vld [vmem:[#allocation4 + $0x318] sm:$0xff]
      %v3083 = vld [vmem:[#allocation4 + $0x320] sm:$0xff]
      %v3084 = vld [vmem:[#allocation4 + $0x328] sm:$0xff]
      %v3085 = vld [vmem:[#allocation4 + $0x330] sm:$0xff]
      %v3086 = vld [vmem:[#allocation4 + $0x338] sm:$0xff]
      %v3087 = vld [vmem:[#allocation4 + $0x340] sm:$0xff]
      %v3088 = vld [vmem:[#allocation4 + $0x348] sm:$0xff]
      %v3089 = vld [vmem:[#allocation4 + $0x350] sm:$0xff]
      %v3090 = vld [vmem:[#allocation4 + $0x368] sm:$0xff]
      %v3091 = vld [vmem:[#allocation4 + $0x370] sm:$0xff]
      %v3092 = vld [vmem:[#allocation4 + $0x378] sm:$0xff]
      %v3093 = vld [vmem:[#allocation4 + $0x380] sm:$0xff]
      %v3094 = vld [vmem:[#allocation4 + $0x388] sm:$0xff]
      %v3095 = vld [vmem:[#allocation4 + $0x390] sm:$0xff]
      %v3096 = vld [vmem:[#allocation4 + $0x398] sm:$0xff]
      %v3097 = vld [vmem:[#allocation4 + $0x3a0] sm:$0xff]
      %v3098 = vld [vmem:[#allocation4 + $0x3a8] sm:$0xff]
      %v3099 = vld [vmem:[#allocation4 + $0x3b0] sm:$0xff]
      %3120 = vrot.lane.b32.xlu0 %v3080, 104
      %v3121 = vpop.permute.xlu0 %3120
      %3122 = vrot.lane.b32.xlu0 %v3081, 104
      %v3123 = vpop.permute.xlu0 %3122
      %3124 = vrot.lane.b32.xlu0 %v3082, 104
      %v3125 = vpop.permute.xlu0 %3124
      %3126 = vrot.lane.b32.xlu0 %v3083, 104
      %v3127 = vpop.permute.xlu0 %3126
      %3128 = vrot.lane.b32.xlu0 %v3084, 104
      %v3129 = vpop.permute.xlu0 %3128
      %3130 = vrot.lane.b32.xlu0 %v3085, 104
      %v3131 = vpop.permute.xlu0 %3130
      %3132 = vrot.lane.b32.xlu0 %v3086, 104
      %v3133 = vpop.permute.xlu0 %3132
      %3134 = vrot.lane.b32.xlu0 %v3087, 104
      %v3135 = vpop.permute.xlu0 %3134
      %3136 = vrot.lane.b32.xlu0 %v3088, 104
      %v3137 = vpop.permute.xlu0 %3136
      %3138 = vrot.lane.b32.xlu0 %v3089, 104
      %v3139 = vpop.permute.xlu0 %3138
      %3140 = vrot.lane.b32.xlu0 %v3090, 104
      %v3141 = vpop.permute.xlu0 %3140
      %3142 = vrot.lane.b32.xlu0 %v3091, 104
      %v3143 = vpop.permute.xlu0 %3142
      %3144 = vrot.lane.b32.xlu0 %v3092, 104
      %v3145 = vpop.permute.xlu0 %3144
      %3146 = vrot.lane.b32.xlu0 %v3093, 104
      %v3147 = vpop.permute.xlu0 %3146
      %3148 = vrot.lane.b32.xlu0 %v3094, 104
      %v3149 = vpop.permute.xlu0 %3148
      %3150 = vrot.lane.b32.xlu0 %v3095, 104
      %v3151 = vpop.permute.xlu0 %3150
      %3152 = vrot.lane.b32.xlu0 %v3096, 104
      %v3153 = vpop.permute.xlu0 %3152
      %3154 = vrot.lane.b32.xlu0 %v3097, 104
      %v3155 = vpop.permute.xlu0 %3154
      %3156 = vrot.lane.b32.xlu0 %v3098, 104
      %v3157 = vpop.permute.xlu0 %3156
      %3158 = vrot.lane.b32.xlu0 %v3099, 104
      %v3159 = vpop.permute.xlu0 %3158
      %vm3160 = vcmask 850944
      %v3161 = vsel %vm3160, %v3121, %v3123
      %v3162 = vsel %vm3160, %v3123, %v3125
      %v3163 = vsel %vm3160, %v3125, %v3127
      %v3164 = vsel %vm3160, %v3127, %v3129
      %v3165 = vsel %vm3160, %v3129, %v3131
      %v3166 = vsel %vm3160, %v3131, %v3133
      %v3167 = vsel %vm3160, %v3133, %v3135
      %v3168 = vsel %vm3160, %v3135, %v3137
      %v3169 = vsel %vm3160, %v3137, %v3139
      %v3170 = vsel %vm3160, %v3141, %v3143
      %v3171 = vsel %vm3160, %v3143, %v3145
      %v3172 = vsel %vm3160, %v3145, %v3147
      %v3173 = vsel %vm3160, %v3147, %v3149
      %v3174 = vsel %vm3160, %v3149, %v3151
      %v3175 = vsel %vm3160, %v3151, %v3153
      %v3176 = vsel %vm3160, %v3153, %v3155
      %v3177 = vsel %vm3160, %v3155, %v3157
      %v3178 = vsel %vm3160, %v3157, %v3159
      %v3199 = vadd.f32 %v3060, %v3161
      %v3200 = vadd.f32 %v3061, %v3162
      %v3201 = vadd.f32 %v3062, %v3163
      %v3202 = vadd.f32 %v3063, %v3164
      %v3203 = vadd.f32 %v3064, %v3165
      %v3204 = vadd.f32 %v3065, %v3166
      %v3205 = vadd.f32 %v3066, %v3167
      %v3206 = vadd.f32 %v3067, %v3168
      %v3207 = vadd.f32 %v3068, %v3169
      %v3208 = vadd.f32 %v3069, %v3139
      %v3209 = vadd.f32 %v3070, %v3170
      %v3210 = vadd.f32 %v3071, %v3171
      %v3211 = vadd.f32 %v3072, %v3172
      %v3212 = vadd.f32 %v3073, %v3173
      %v3213 = vadd.f32 %v3074, %v3174
      %v3214 = vadd.f32 %v3075, %v3175
      %v3215 = vadd.f32 %v3076, %v3176
      %v3216 = vadd.f32 %v3077, %v3177
      %v3217 = vadd.f32 %v3078, %v3178
      %v3218 = vadd.f32 %v3079, %v3159
      %v3219 = vld [vmem:[#allocation4 + $0x3c8] sm:$0xff]
      %v3220 = vld [vmem:[#allocation4 + $0x3d0] sm:$0xff]
      %v3221 = vld [vmem:[#allocation4 + $0x3d8] sm:$0xff]
      %v3222 = vld [vmem:[#allocation4 + $0x3e0] sm:$0xff]
      %v3223 = vld [vmem:[#allocation4 + $0x3e8] sm:$0xff]
      %v3224 = vld [vmem:[#allocation4 + $0x3f0] sm:$0xff]
      %v3225 = vld [vmem:[#allocation4 + $0x3f8] sm:$0xff]
      %v3226 = vld [vmem:[#allocation4 + $0x400] sm:$0xff]
      %v3227 = vld [vmem:[#allocation4 + $0x408] sm:$0xff]
      %v3228 = vld [vmem:[#allocation4 + $0x410] sm:$0xff]
      %v3229 = vld [vmem:[#allocation4 + $0x428] sm:$0xff]
      %v3230 = vld [vmem:[#allocation4 + $0x430] sm:$0xff]
      %v3231 = vld [vmem:[#allocation4 + $0x438] sm:$0xff]
      %v3232 = vld [vmem:[#allocation4 + $0x440] sm:$0xff]
      %v3233 = vld [vmem:[#allocation4 + $0x448] sm:$0xff]
      %v3234 = vld [vmem:[#allocation4 + $0x450] sm:$0xff]
      %v3235 = vld [vmem:[#allocation4 + $0x458] sm:$0xff]
      %v3236 = vld [vmem:[#allocation4 + $0x460] sm:$0xff]
      %v3237 = vld [vmem:[#allocation4 + $0x468] sm:$0xff]
      %v3238 = vld [vmem:[#allocation4 + $0x470] sm:$0xff]
      %3259 = vrot.lane.b32.xlu0 %v3219, 66
      %v3260 = vpop.permute.xlu0 %3259
      %3261 = vrot.lane.b32.xlu0 %v3220, 66
      %v3262 = vpop.permute.xlu0 %3261
      %3263 = vrot.lane.b32.xlu0 %v3221, 66
      %v3264 = vpop.permute.xlu0 %3263
      %3265 = vrot.lane.b32.xlu0 %v3222, 66
      %v3266 = vpop.permute.xlu0 %3265
      %3267 = vrot.lane.b32.xlu0 %v3223, 66
      %v3268 = vpop.permute.xlu0 %3267
      %3269 = vrot.lane.b32.xlu0 %v3224, 66
      %v3270 = vpop.permute.xlu0 %3269
      %3271 = vrot.lane.b32.xlu0 %v3225, 66
      %v3272 = vpop.permute.xlu0 %3271
      %3273 = vrot.lane.b32.xlu0 %v3226, 66
      %v3274 = vpop.permute.xlu0 %3273
      %3275 = vrot.lane.b32.xlu0 %v3227, 66
      %v3276 = vpop.permute.xlu0 %3275
      %3277 = vrot.lane.b32.xlu0 %v3228, 66
      %v3278 = vpop.permute.xlu0 %3277
      %3279 = vrot.lane.b32.xlu0 %v3229, 66
      %v3280 = vpop.permute.xlu0 %3279
      %3281 = vrot.lane.b32.xlu0 %v3230, 66
      %v3282 = vpop.permute.xlu0 %3281
      %3283 = vrot.lane.b32.xlu0 %v3231, 66
      %v3284 = vpop.permute.xlu0 %3283
      %3285 = vrot.lane.b32.xlu0 %v3232, 66
      %v3286 = vpop.permute.xlu0 %3285
      %3287 = vrot.lane.b32.xlu0 %v3233, 66
      %v3288 = vpop.permute.xlu0 %3287
      %3289 = vrot.lane.b32.xlu0 %v3234, 66
      %v3290 = vpop.permute.xlu0 %3289
      %3291 = vrot.lane.b32.xlu0 %v3235, 66
      %v3292 = vpop.permute.xlu0 %3291
      %3293 = vrot.lane.b32.xlu0 %v3236, 66
      %v3294 = vpop.permute.xlu0 %3293
      %3295 = vrot.lane.b32.xlu0 %v3237, 66
      %v3296 = vpop.permute.xlu0 %3295
      %3297 = vrot.lane.b32.xlu0 %v3238, 66
      %v3298 = vpop.permute.xlu0 %3297
      %vm3299 = vcmask 539648
      %v3300 = vsel %vm3299, %v3260, %v3262
      %v3301 = vsel %vm3299, %v3262, %v3264
      %v3302 = vsel %vm3299, %v3264, %v3266
      %v3303 = vsel %vm3299, %v3266, %v3268
      %v3304 = vsel %vm3299, %v3268, %v3270
      %v3305 = vsel %vm3299, %v3270, %v3272
      %v3306 = vsel %vm3299, %v3272, %v3274
      %v3307 = vsel %vm3299, %v3274, %v3276
      %v3308 = vsel %vm3299, %v3276, %v3278
      %v3309 = vsel %vm3299, %v3280, %v3282
      %v3310 = vsel %vm3299, %v3282, %v3284
      %v3311 = vsel %vm3299, %v3284, %v3286
      %v3312 = vsel %vm3299, %v3286, %v3288
      %v3313 = vsel %vm3299, %v3288, %v3290
      %v3314 = vsel %vm3299, %v3290, %v3292
      %v3315 = vsel %vm3299, %v3292, %v3294
      %v3316 = vsel %vm3299, %v3294, %v3296
      %v3317 = vsel %vm3299, %v3296, %v3298
      %v3338 = vadd.f32 %v3199, %v3300
      %v3339 = vadd.f32 %v3200, %v3301
      %v3340 = vadd.f32 %v3201, %v3302
      %v3341 = vadd.f32 %v3202, %v3303
      %v3342 = vadd.f32 %v3203, %v3304
      %v3343 = vadd.f32 %v3204, %v3305
      %v3344 = vadd.f32 %v3205, %v3306
      %v3345 = vadd.f32 %v3206, %v3307
      %v3346 = vadd.f32 %v3207, %v3308
      %v3347 = vadd.f32 %v3208, %v3278
      %v3348 = vadd.f32 %v3209, %v3309
      %v3349 = vadd.f32 %v3210, %v3310
      %v3350 = vadd.f32 %v3211, %v3311
      %v3351 = vadd.f32 %v3212, %v3312
      %v3352 = vadd.f32 %v3213, %v3313
      %v3353 = vadd.f32 %v3214, %v3314
      %v3354 = vadd.f32 %v3215, %v3315
      %v3355 = vadd.f32 %v3216, %v3316
      %v3356 = vadd.f32 %v3217, %v3317
      %v3357 = vadd.f32 %v3218, %v3298
      %v3358 = vld [vmem:[#allocation4 + $0x488] sm:$0xff]
      %v3359 = vld [vmem:[#allocation4 + $0x490] sm:$0xff]
      %v3360 = vld [vmem:[#allocation4 + $0x498] sm:$0xff]
      %v3361 = vld [vmem:[#allocation4 + $0x4a0] sm:$0xff]
      %v3362 = vld [vmem:[#allocation4 + $0x4a8] sm:$0xff]
      %v3363 = vld [vmem:[#allocation4 + $0x4b0] sm:$0xff]
      %v3364 = vld [vmem:[#allocation4 + $0x4b8] sm:$0xff]
      %v3365 = vld [vmem:[#allocation4 + $0x4c0] sm:$0xff]
      %v3366 = vld [vmem:[#allocation4 + $0x4c8] sm:$0xff]
      %v3367 = vld [vmem:[#allocation4 + $0x4d0] sm:$0xff]
      %v3368 = vld [vmem:[#allocation4 + $0x4d8] sm:$0xff]
      %v3369 = vld [vmem:[#allocation4 + $0x4e8] sm:$0xff]
      %v3370 = vld [vmem:[#allocation4 + $0x4f0] sm:$0xff]
      %v3371 = vld [vmem:[#allocation4 + $0x4f8] sm:$0xff]
      %v3372 = vld [vmem:[#allocation4 + $0x500] sm:$0xff]
      %v3373 = vld [vmem:[#allocation4 + $0x508] sm:$0xff]
      %v3374 = vld [vmem:[#allocation4 + $0x510] sm:$0xff]
      %v3375 = vld [vmem:[#allocation4 + $0x518] sm:$0xff]
      %v3376 = vld [vmem:[#allocation4 + $0x520] sm:$0xff]
      %v3377 = vld [vmem:[#allocation4 + $0x528] sm:$0xff]
      %v3378 = vld [vmem:[#allocation4 + $0x530] sm:$0xff]
      %v3379 = vld [vmem:[#allocation4 + $0x538] sm:$0xff]
      %3402 = vrot.lane.b32.xlu0 %v3358, 28
      %v3403 = vpop.permute.xlu0 %3402
      %3404 = vrot.lane.b32.xlu0 %v3359, 28
      %v3405 = vpop.permute.xlu0 %3404
      %3406 = vrot.lane.b32.xlu0 %v3360, 28
      %v3407 = vpop.permute.xlu0 %3406
      %3408 = vrot.lane.b32.xlu0 %v3361, 28
      %v3409 = vpop.permute.xlu0 %3408
      %3410 = vrot.lane.b32.xlu0 %v3362, 28
      %v3411 = vpop.permute.xlu0 %3410
      %3412 = vrot.lane.b32.xlu0 %v3363, 28
      %v3413 = vpop.permute.xlu0 %3412
      %3414 = vrot.lane.b32.xlu0 %v3364, 28
      %v3415 = vpop.permute.xlu0 %3414
      %3416 = vrot.lane.b32.xlu0 %v3365, 28
      %v3417 = vpop.permute.xlu0 %3416
      %3418 = vrot.lane.b32.xlu0 %v3366, 28
      %v3419 = vpop.permute.xlu0 %3418
      %3420 = vrot.lane.b32.xlu0 %v3367, 28
      %v3421 = vpop.permute.xlu0 %3420
      %3422 = vrot.lane.b32.xlu0 %v3368, 28
      %v3423 = vpop.permute.xlu0 %3422
      %3424 = vrot.lane.b32.xlu0 %v3369, 28
      %v3425 = vpop.permute.xlu0 %3424
      %3426 = vrot.lane.b32.xlu0 %v3370, 28
      %v3427 = vpop.permute.xlu0 %3426
      %3428 = vrot.lane.b32.xlu0 %v3371, 28
      %v3429 = vpop.permute.xlu0 %3428
      %3430 = vrot.lane.b32.xlu0 %v3372, 28
      %v3431 = vpop.permute.xlu0 %3430
      %3432 = vrot.lane.b32.xlu0 %v3373, 28
      %v3433 = vpop.permute.xlu0 %3432
      %3434 = vrot.lane.b32.xlu0 %v3374, 28
      %v3435 = vpop.permute.xlu0 %3434
      %3436 = vrot.lane.b32.xlu0 %v3375, 28
      %v3437 = vpop.permute.xlu0 %3436
      %3438 = vrot.lane.b32.xlu0 %v3376, 28
      %v3439 = vpop.permute.xlu0 %3438
      %3440 = vrot.lane.b32.xlu0 %v3377, 28
      %v3441 = vpop.permute.xlu0 %3440
      %3442 = vrot.lane.b32.xlu0 %v3378, 28
      %v3443 = vpop.permute.xlu0 %3442
      %3444 = vrot.lane.b32.xlu0 %v3379, 28
      %v3445 = vpop.permute.xlu0 %3444
      %vm3446 = vcmask 228352
      %v3447 = vsel %vm3446, %v3403, %v3405
      %v3448 = vsel %vm3446, %v3405, %v3407
      %v3449 = vsel %vm3446, %v3407, %v3409
      %v3450 = vsel %vm3446, %v3409, %v3411
      %v3451 = vsel %vm3446, %v3411, %v3413
      %v3452 = vsel %vm3446, %v3413, %v3415
      %v3453 = vsel %vm3446, %v3415, %v3417
      %v3454 = vsel %vm3446, %v3417, %v3419
      %v3455 = vsel %vm3446, %v3419, %v3421
      %v3456 = vsel %vm3446, %v3421, %v3423
      %v3457 = vsel %vm3446, %v3425, %v3427
      %v3458 = vsel %vm3446, %v3427, %v3429
      %v3459 = vsel %vm3446, %v3429, %v3431
      %v3460 = vsel %vm3446, %v3431, %v3433
      %v3461 = vsel %vm3446, %v3433, %v3435
      %v3462 = vsel %vm3446, %v3435, %v3437
      %v3463 = vsel %vm3446, %v3437, %v3439
      %v3464 = vsel %vm3446, %v3439, %v3441
      %v3465 = vsel %vm3446, %v3441, %v3443
      %v3466 = vsel %vm3446, %v3443, %v3445
      %v3487 = vadd.f32 %v3338, %v3447
      %v3488 = vadd.f32 %v3339, %v3448
      %v3489 = vadd.f32 %v3340, %v3449
      %v3490 = vadd.f32 %v3341, %v3450
      %v3491 = vadd.f32 %v3342, %v3451
      %v3492 = vadd.f32 %v3343, %v3452
      %v3493 = vadd.f32 %v3344, %v3453
      %v3494 = vadd.f32 %v3345, %v3454
      %v3495 = vadd.f32 %v3346, %v3455
      %v3496 = vadd.f32 %v3347, %v3456
      %v3497 = vadd.f32 %v3348, %v3457
      %v3498 = vadd.f32 %v3349, %v3458
      %v3499 = vadd.f32 %v3350, %v3459
      %v3500 = vadd.f32 %v3351, %v3460
      %v3501 = vadd.f32 %v3352, %v3461
      %v3502 = vadd.f32 %v3353, %v3462
      %v3503 = vadd.f32 %v3354, %v3463
      %v3504 = vadd.f32 %v3355, %v3464
      %v3505 = vadd.f32 %v3356, %v3465
      %v3506 = vadd.f32 %v3357, %v3466
      %v3507 = vld [vmem:[%s4] sm:$0xff]
      %v3508 = vld [vmem:[%s4 + $0x8] sm:$0xff]
      %3510 = vset.pattern.permute.xlu0 0
      %3511 = vperm.xlu0 %3510, %v3507
      %v3512 = vpop.permute.xlu0 %3511
      %3515 = vset.pattern.permute.xlu0 0
      %3516 = vperm.xlu0 %3515, %v3508
      %v3517 = vpop.permute.xlu0 %3516
      %v3519 = vadd.f32 %v3487, %v3512
      %v3520 = vadd.f32 %v3488, %v3512
      %v3521 = vadd.f32 %v3489, %v3512
      %v3522 = vadd.f32 %v3490, %v3512
      %v3523 = vadd.f32 %v3491, %v3512
      %v3524 = vadd.f32 %v3492, %v3512
      %v3525 = vadd.f32 %v3493, %v3512
      %v3526 = vadd.f32 %v3494, %v3512
      %v3527 = vadd.f32 %v3495, %v3512
      %v3528 = vadd.f32 %v3496, %v3512
      %v3529 = vadd.f32 %v3497, %v3517
      %v3530 = vadd.f32 %v3498, %v3517
      %v3531 = vadd.f32 %v3499, %v3517
      %v3532 = vadd.f32 %v3500, %v3517
      %v3533 = vadd.f32 %v3501, %v3517
      %v3534 = vadd.f32 %v3502, %v3517
      %v3535 = vadd.f32 %v3503, %v3517
      %v3536 = vadd.f32 %v3504, %v3517
      %v3537 = vadd.f32 %v3505, %v3517
      %v3538 = vadd.f32 %v3506, %v3517
      %v3539 = vmax.f32 %v3519, 0.0
      %v3540 = vmax.f32 %v3520, 0.0
      %v3541 = vmax.f32 %v3521, 0.0
      %v3542 = vmax.f32 %v3522, 0.0
      %v3543 = vmax.f32 %v3523, 0.0
      %v3544 = vmax.f32 %v3524, 0.0
      %v3545 = vmax.f32 %v3525, 0.0
      %v3546 = vmax.f32 %v3526, 0.0
      %v3547 = vmax.f32 %v3527, 0.0
      %v3548 = vmax.f32 %v3528, 0.0
      %v3549 = vmax.f32 %v3529, 0.0
      %v3550 = vmax.f32 %v3530, 0.0
      %v3551 = vmax.f32 %v3531, 0.0
      %v3552 = vmax.f32 %v3532, 0.0
      %v3553 = vmax.f32 %v3533, 0.0
      %v3554 = vmax.f32 %v3534, 0.0
      %v3555 = vmax.f32 %v3535, 0.0
      %v3556 = vmax.f32 %v3536, 0.0
      %v3557 = vmax.f32 %v3537, 0.0
      %v3558 = vmax.f32 %v3538, 0.0
      %v3559 = vld [vmem:[%s5] sm:$0xff]
      %v3560 = vld [vmem:[%s5 + $0x8] sm:$0x3]
      %v3563 = vlaneseq
      %v3564 = vshrl.u32 %v3563, 7
      %v3565 = vsub.s32 0, %v3564
      %v3566 = vrot.slane %v3559, %v3565
      %v3567 = vlaneseq
      %v3568 = vshrl.u32 %v3567, 7
      %v3569 = vsub.s32 1, %v3568
      %v3570 = vrot.slane %v3559, %v3569
      %v3571 = vlaneseq
      %v3572 = vshrl.u32 %v3571, 7
      %v3573 = vsub.s32 2, %v3572
      %v3574 = vrot.slane %v3559, %v3573
      %v3575 = vlaneseq
      %v3576 = vshrl.u32 %v3575, 7
      %v3577 = vsub.s32 3, %v3576
      %v3578 = vrot.slane %v3559, %v3577
      %v3579 = vlaneseq
      %v3580 = vshrl.u32 %v3579, 7
      %v3581 = vsub.s32 4, %v3580
      %v3582 = vrot.slane %v3559, %v3581
      %v3583 = vlaneseq
      %v3584 = vshrl.u32 %v3583, 7
      %v3585 = vsub.s32 5, %v3584
      %v3586 = vrot.slane %v3559, %v3585
      %v3587 = vlaneseq
      %v3588 = vshrl.u32 %v3587, 7
      %v3589 = vsub.s32 6, %v3588
      %v3590 = vrot.slane %v3559, %v3589
      %v3591 = vlaneseq
      %v3592 = vshrl.u32 %v3591, 7
      %v3593 = vsub.s32 7, %v3592
      %v3594 = vrot.slane %v3559, %v3593
      %v3595 = vlaneseq
      %v3596 = vshrl.u32 %v3595, 7
      %v3597 = vsub.s32 0, %v3596
      %v3598 = vrot.slane %v3560, %v3597
      %v3599 = vlaneseq
      %v3600 = vshrl.u32 %v3599, 7
      %v3601 = vsub.s32 1, %v3600
      %v3602 = vrot.slane %v3560, %v3601
      %v3613 = vmul.f32 %v3539, %v3566
      %v3614 = vmul.f32 %v3540, %v3570
      %v3615 = vmul.f32 %v3541, %v3574
      %v3616 = vmul.f32 %v3542, %v3578
      %v3617 = vmul.f32 %v3543, %v3582
      %v3618 = vmul.f32 %v3544, %v3586
      %v3619 = vmul.f32 %v3545, %v3590
      %v3620 = vmul.f32 %v3546, %v3594
      %v3621 = vmul.f32 %v3547, %v3598
      %v3622 = vmul.f32 %v3548, %v3602
      %v3623 = vmul.f32 %v3549, %v3566
      %v3624 = vmul.f32 %v3550, %v3570
      %v3625 = vmul.f32 %v3551, %v3574
      %v3626 = vmul.f32 %v3552, %v3578
      %v3627 = vmul.f32 %v3553, %v3582
      %v3628 = vmul.f32 %v3554, %v3586
      %v3629 = vmul.f32 %v3555, %v3590
      %v3630 = vmul.f32 %v3556, %v3594
      %v3631 = vmul.f32 %v3557, %v3598
      %v3632 = vmul.f32 %v3558, %v3602
      %v3633 = vpack.c.bf16 %v3623, %v3613
      %v3634 = vpack.c.bf16 %v3624, %v3614
      %v3635 = vpack.c.bf16 %v3625, %v3615
      %v3636 = vpack.c.bf16 %v3626, %v3616
      %v3637 = vpack.c.bf16 %v3627, %v3617
      %v3638 = vpack.c.bf16 %v3628, %v3618
      %v3639 = vpack.c.bf16 %v3629, %v3619
      %v3640 = vpack.c.bf16 %v3630, %v3620
      %v3641 = vpack.c.bf16 %v3631, %v3621
      %v3642 = vpack.c.bf16 %v3632, %v3622
      %v3653 = vunpack.c.l.b16 %v3633
      %v3654 = vunpack.c.l.b16 %v3634
      %v3655 = vunpack.c.l.b16 %v3635
      %v3656 = vunpack.c.l.b16 %v3636
      %v3657 = vunpack.c.l.b16 %v3637
      %v3658 = vunpack.c.l.b16 %v3638
      %v3659 = vunpack.c.l.b16 %v3639
      %v3660 = vunpack.c.l.b16 %v3640
      %v3661 = vunpack.c.l.b16 %v3641
      %v3662 = vunpack.c.l.b16 %v3642
      %v3663 = vunpack.c.h.b16 %v3633
      %v3664 = vunpack.c.h.b16 %v3634
      %v3665 = vunpack.c.h.b16 %v3635
      %v3666 = vunpack.c.h.b16 %v3636
      %v3667 = vunpack.c.h.b16 %v3637
      %v3668 = vunpack.c.h.b16 %v3638
      %v3669 = vunpack.c.h.b16 %v3639
      %v3670 = vunpack.c.h.b16 %v3640
      %v3671 = vunpack.c.h.b16 %v3641
      %v3672 = vunpack.c.h.b16 %v3642
      %v3673 = vpack.c.b16 %v3654, %v3653
      %v3674 = vpack.c.b16 %v3656, %v3655
      %v3675 = vpack.c.b16 %v3658, %v3657
      %v3676 = vpack.c.b16 %v3660, %v3659
      %v3677 = vpack.c.b16 %v3662, %v3661
      %v3678 = vpack.c.b16 %v3664, %v3663
      %v3679 = vpack.c.b16 %v3666, %v3665
      %v3680 = vpack.c.b16 %v3668, %v3667
      %v3681 = vpack.c.b16 %v3670, %v3669
      %v3682 = vpack.c.b16 %v3672, %v3671
      %3683 = vrot.lane.b32.xlu0 %v3673, 117
      %v3684 = vpop.permute.xlu0 %3683
      %3685 = vrot.lane.b32.xlu0 %v3674, 117
      %v3686 = vpop.permute.xlu0 %3685
      %3687 = vrot.lane.b32.xlu0 %v3675, 117
      %v3688 = vpop.permute.xlu0 %3687
      %3689 = vrot.lane.b32.xlu0 %v3676, 117
      %v3690 = vpop.permute.xlu0 %3689
      %3691 = vrot.lane.b32.xlu0 %v3677, 117
      %v3692 = vpop.permute.xlu0 %3691
      %3693 = vrot.lane.b32.xlu0 %v3678, 117
      %v3694 = vpop.permute.xlu0 %3693
      %3695 = vrot.lane.b32.xlu0 %v3679, 117
      %v3696 = vpop.permute.xlu0 %3695
      %3697 = vrot.lane.b32.xlu0 %v3680, 117
      %v3698 = vpop.permute.xlu0 %3697
      %3699 = vrot.lane.b32.xlu0 %v3681, 117
      %v3700 = vpop.permute.xlu0 %3699
      %3701 = vrot.lane.b32.xlu0 %v3682, 117
      %v3702 = vpop.permute.xlu0 %3701
      %v3703 = vrot.slane %v3684, 4
      %v3704 = vrot.slane %v3686, 4
      %v3705 = vrot.slane %v3688, 4
      %v3706 = vrot.slane %v3690, 4
      %v3707 = vrot.slane %v3692, 4
      %v3708 = vrot.slane %v3694, 4
      %v3709 = vrot.slane %v3696, 4
      %v3710 = vrot.slane %v3698, 4
      %v3711 = vrot.slane %v3700, 4
      %v3712 = vrot.slane %v3702, 4
      %v3713 = vsel %vm477, %v3703, %v3684
      %v3714 = vsel %vm479, %v3703, %v3704
      %v3715 = vsel %vm477, %v3714, %v3686
      %v3716 = vsel %vm479, %v3704, %v3705
      %v3717 = vsel %vm477, %v3716, %v3688
      %v3718 = vsel %vm479, %v3705, %v3706
      %v3719 = vsel %vm477, %v3718, %v3690
      %v3720 = vsel %vm479, %v3706, %v3707
      %v3721 = vsel %vm477, %v3720, %v3692
      %v3722 = vsel %vm477, %v3708, %v3694
      %v3723 = vsel %vm479, %v3708, %v3709
      %v3724 = vsel %vm477, %v3723, %v3696
      %v3725 = vsel %vm479, %v3709, %v3710
      %v3726 = vsel %vm477, %v3725, %v3698
      %v3727 = vsel %vm479, %v3710, %v3711
      %v3728 = vsel %vm477, %v3727, %v3700
      %v3729 = vsel %vm479, %v3711, %v3712
      %v3730 = vsel %vm477, %v3729, %v3702
      %3743 = vst.msk [vmem:[#allocation2] sm:$0xff] %vm510, %v3713
      %3744 = vst [vmem:[#allocation2 + $0x8] sm:$0xff] %v3715
      %3745 = vst [vmem:[#allocation2 + $0x10] sm:$0xff] %v3717
      %3746 = vst [vmem:[#allocation2 + $0x18] sm:$0xff] %v3719
      %3747 = vst [vmem:[#allocation2 + $0x20] sm:$0xff] %v3721
      %3748 = vst.msk [vmem:[#allocation2 + $0x28] sm:$0xf] %vm516, %v3707
      %3749 = vst.msk [vmem:[#allocation2 + $0x34] sm:$0xff] %vm510, %v3722
      %3750 = vst [vmem:[#allocation2 + $0x3c] sm:$0xff] %v3724
      %3751 = vst [vmem:[#allocation2 + $0x44] sm:$0xff] %v3726
      %3752 = vst [vmem:[#allocation2 + $0x4c] sm:$0xff] %v3728
      %3753 = vst [vmem:[#allocation2 + $0x54] sm:$0xff] %v3730
      %3754 = vst.msk [vmem:[#allocation2 + $0x5c] sm:$0xf] %vm516, %v3712
      %v3755 = vld [vmem:[#allocation2] sm:$0xff]
      %v3756 = vld [vmem:[#allocation2 + $0x8] sm:$0xff]
      %v3757 = vld [vmem:[#allocation2 + $0x10] sm:$0xff]
      %v3758 = vld [vmem:[#allocation2 + $0x18] sm:$0xff]
      %v3759 = vld [vmem:[#allocation2 + $0x20] sm:$0xff]
      %v3760 = vld [vmem:[#allocation2 + $0x28] sm:$0xff]
      %v3761 = vld [vmem:[#allocation2 + $0x34] sm:$0xff]
      %v3762 = vld [vmem:[#allocation2 + $0x3c] sm:$0xff]
      %v3763 = vld [vmem:[#allocation2 + $0x44] sm:$0xff]
      %v3764 = vld [vmem:[#allocation2 + $0x4c] sm:$0xff]
      %v3765 = vld [vmem:[#allocation2 + $0x54] sm:$0xff]
      %v3766 = vld [vmem:[#allocation2 + $0x5c] sm:$0xff]
      %3767 = vst [vmem:[#allocation3] sm:$0xff] %v3755
      %3768 = vst [vmem:[#allocation3 + $0x8] sm:$0xff] %v3756
      %3769 = vst [vmem:[#allocation3 + $0x10] sm:$0xff] %v3757
      %3770 = vst [vmem:[#allocation3 + $0x18] sm:$0xff] %v3758
      %3771 = vst [vmem:[#allocation3 + $0x20] sm:$0xff] %v3759
      %3772 = vst [vmem:[#allocation3 + $0x28] sm:$0xff] %v3760
      %3773 = vst [vmem:[#allocation3 + $0x30] sm:$0xff] %v3761
      %3774 = vst [vmem:[#allocation3 + $0x38] sm:$0xff] %v3762
      %3775 = vst [vmem:[#allocation3 + $0x40] sm:$0xff] %v3763
      %3776 = vst [vmem:[#allocation3 + $0x48] sm:$0xff] %v3764
      %3777 = vst [vmem:[#allocation3 + $0x50] sm:$0xff] %v3765
      %3778 = vst [vmem:[#allocation3 + $0x58] sm:$0xff] %v3766
      %v3779 = vld [vmem:[#allocation2] sm:$0xff]
      %v3780 = vld [vmem:[#allocation2 + $0x8] sm:$0xff]
      %v3781 = vld [vmem:[#allocation2 + $0x10] sm:$0xff]
      %v3782 = vld [vmem:[#allocation2 + $0x18] sm:$0xff]
      %v3783 = vld [vmem:[#allocation2 + $0x20] sm:$0xff]
      %v3784 = vld [vmem:[#allocation2 + $0x28] sm:$0xff]
      %v3785 = vld [vmem:[#allocation2 + $0x30] sm:$0xf]
      %v3786 = vld [vmem:[#allocation2 + $0x34] sm:$0xff]
      %v3787 = vld [vmem:[#allocation2 + $0x3c] sm:$0xff]
      %v3788 = vld [vmem:[#allocation2 + $0x44] sm:$0xff]
      %v3789 = vld [vmem:[#allocation2 + $0x4c] sm:$0xff]
      %v3790 = vld [vmem:[#allocation2 + $0x54] sm:$0xff]
      %v3791 = vld [vmem:[#allocation2 + $0x5c] sm:$0xff]
      %v3792 = vld [vmem:[#allocation2 + $0x64] sm:$0xf]
      %3807 = vrot.lane.b32.xlu0 %v3779, 127
      %v3808 = vpop.permute.xlu0 %3807
      %3809 = vrot.lane.b32.xlu0 %v3780, 127
      %v3810 = vpop.permute.xlu0 %3809
      %3811 = vrot.lane.b32.xlu0 %v3781, 127
      %v3812 = vpop.permute.xlu0 %3811
      %3813 = vrot.lane.b32.xlu0 %v3782, 127
      %v3814 = vpop.permute.xlu0 %3813
      %3815 = vrot.lane.b32.xlu0 %v3783, 127
      %v3816 = vpop.permute.xlu0 %3815
      %3817 = vrot.lane.b32.xlu0 %v3784, 127
      %v3818 = vpop.permute.xlu0 %3817
      %3819 = vrot.lane.b32.xlu0 %v3785, 127
      %v3820 = vpop.permute.xlu0 %3819
      %3821 = vrot.lane.b32.xlu0 %v3786, 127
      %v3822 = vpop.permute.xlu0 %3821
      %3823 = vrot.lane.b32.xlu0 %v3787, 127
      %v3824 = vpop.permute.xlu0 %3823
      %3825 = vrot.lane.b32.xlu0 %v3788, 127
      %v3826 = vpop.permute.xlu0 %3825
      %3827 = vrot.lane.b32.xlu0 %v3789, 127
      %v3828 = vpop.permute.xlu0 %3827
      %3829 = vrot.lane.b32.xlu0 %v3790, 127
      %v3830 = vpop.permute.xlu0 %3829
      %3831 = vrot.lane.b32.xlu0 %v3791, 127
      %v3832 = vpop.permute.xlu0 %3831
      %3833 = vrot.lane.b32.xlu0 %v3792, 127
      %v3834 = vpop.permute.xlu0 %3833
      %v3835 = vrot.slane %v3808, 4
      %v3836 = vrot.slane %v3810, 4
      %v3837 = vrot.slane %v3812, 4
      %v3838 = vrot.slane %v3814, 4
      %v3839 = vrot.slane %v3816, 4
      %v3840 = vrot.slane %v3818, 4
      %v3841 = vrot.slane %v3820, 4
      %v3842 = vrot.slane %v3822, 4
      %v3843 = vrot.slane %v3824, 4
      %v3844 = vrot.slane %v3826, 4
      %v3845 = vrot.slane %v3828, 4
      %v3846 = vrot.slane %v3830, 4
      %v3847 = vrot.slane %v3832, 4
      %v3848 = vrot.slane %v3834, 4
      %v3849 = vsel %vm479, %v3835, %v3836
      %v3850 = vsel %vm619, %v3808, %v3849
      %v3851 = vsel %vm479, %v3836, %v3837
      %v3852 = vsel %vm619, %v3810, %v3851
      %v3853 = vsel %vm479, %v3837, %v3838
      %v3854 = vsel %vm619, %v3812, %v3853
      %v3855 = vsel %vm479, %v3838, %v3839
      %v3856 = vsel %vm619, %v3814, %v3855
      %v3857 = vsel %vm479, %v3839, %v3840
      %v3858 = vsel %vm619, %v3816, %v3857
      %v3859 = vsel %vm479, %v3840, %v3841
      %v3860 = vsel %vm619, %v3818, %v3859
      %v3861 = vsel %vm479, %v3842, %v3843
      %v3862 = vsel %vm619, %v3822, %v3861
      %v3863 = vsel %vm479, %v3843, %v3844
      %v3864 = vsel %vm619, %v3824, %v3863
      %v3865 = vsel %vm479, %v3844, %v3845
      %v3866 = vsel %vm619, %v3826, %v3865
      %v3867 = vsel %vm479, %v3845, %v3846
      %v3868 = vsel %vm619, %v3828, %v3867
      %v3869 = vsel %vm479, %v3846, %v3847
      %v3870 = vsel %vm619, %v3830, %v3869
      %v3871 = vsel %vm479, %v3847, %v3848
      %v3872 = vsel %vm619, %v3832, %v3871
      %3885 = vst [vmem:[#allocation3 + $0x60] sm:$0xff] %v3850
      %3886 = vst [vmem:[#allocation3 + $0x68] sm:$0xff] %v3852
      %3887 = vst [vmem:[#allocation3 + $0x70] sm:$0xff] %v3854
      %3888 = vst [vmem:[#allocation3 + $0x78] sm:$0xff] %v3856
      %3889 = vst [vmem:[#allocation3 + $0x80] sm:$0xff] %v3858
      %3890 = vst [vmem:[#allocation3 + $0x88] sm:$0xff] %v3860
      %3891 = vst [vmem:[#allocation3 + $0x90] sm:$0xff] %v3862
      %3892 = vst [vmem:[#allocation3 + $0x98] sm:$0xff] %v3864
      %3893 = vst [vmem:[#allocation3 + $0xa0] sm:$0xff] %v3866
      %3894 = vst [vmem:[#allocation3 + $0xa8] sm:$0xff] %v3868
      %3895 = vst [vmem:[#allocation3 + $0xb0] sm:$0xff] %v3870
      %3896 = vst [vmem:[#allocation3 + $0xb8] sm:$0xff] %v3872
      %v3897 = vld [vmem:[#allocation2] sm:$0xff]
      %v3898 = vld [vmem:[#allocation2 + $0x8] sm:$0xff]
      %v3899 = vld [vmem:[#allocation2 + $0x10] sm:$0xff]
      %v3900 = vld [vmem:[#allocation2 + $0x18] sm:$0xff]
      %v3901 = vld [vmem:[#allocation2 + $0x20] sm:$0xff]
      %v3902 = vld [vmem:[#allocation2 + $0x28] sm:$0xff]
      %v3903 = vld [vmem:[#allocation2 + $0x30] sm:$0xf]
      %v3904 = vld [vmem:[#allocation2 + $0x34] sm:$0xff]
      %v3905 = vld [vmem:[#allocation2 + $0x3c] sm:$0xff]
      %v3906 = vld [vmem:[#allocation2 + $0x44] sm:$0xff]
      %v3907 = vld [vmem:[#allocation2 + $0x4c] sm:$0xff]
      %v3908 = vld [vmem:[#allocation2 + $0x54] sm:$0xff]
      %v3909 = vld [vmem:[#allocation2 + $0x5c] sm:$0xff]
      %v3910 = vld [vmem:[#allocation2 + $0x64] sm:$0xf]
      %3925 = vrot.lane.b32.xlu0 %v3897, 126
      %v3926 = vpop.permute.xlu0 %3925
      %3927 = vrot.lane.b32.xlu0 %v3898, 126
      %v3928 = vpop.permute.xlu0 %3927
      %3929 = vrot.lane.b32.xlu0 %v3899, 126
      %v3930 = vpop.permute.xlu0 %3929
      %3931 = vrot.lane.b32.xlu0 %v3900, 126
      %v3932 = vpop.permute.xlu0 %3931
      %3933 = vrot.lane.b32.xlu0 %v3901, 126
      %v3934 = vpop.permute.xlu0 %3933
      %3935 = vrot.lane.b32.xlu0 %v3902, 126
      %v3936 = vpop.permute.xlu0 %3935
      %3937 = vrot.lane.b32.xlu0 %v3903, 126
      %v3938 = vpop.permute.xlu0 %3937
      %3939 = vrot.lane.b32.xlu0 %v3904, 126
      %v3940 = vpop.permute.xlu0 %3939
      %3941 = vrot.lane.b32.xlu0 %v3905, 126
      %v3942 = vpop.permute.xlu0 %3941
      %3943 = vrot.lane.b32.xlu0 %v3906, 126
      %v3944 = vpop.permute.xlu0 %3943
      %3945 = vrot.lane.b32.xlu0 %v3907, 126
      %v3946 = vpop.permute.xlu0 %3945
      %3947 = vrot.lane.b32.xlu0 %v3908, 126
      %v3948 = vpop.permute.xlu0 %3947
      %3949 = vrot.lane.b32.xlu0 %v3909, 126
      %v3950 = vpop.permute.xlu0 %3949
      %3951 = vrot.lane.b32.xlu0 %v3910, 126
      %v3952 = vpop.permute.xlu0 %3951
      %v3953 = vrot.slane %v3926, 4
      %v3954 = vrot.slane %v3928, 4
      %v3955 = vrot.slane %v3930, 4
      %v3956 = vrot.slane %v3932, 4
      %v3957 = vrot.slane %v3934, 4
      %v3958 = vrot.slane %v3936, 4
      %v3959 = vrot.slane %v3938, 4
      %v3960 = vrot.slane %v3940, 4
      %v3961 = vrot.slane %v3942, 4
      %v3962 = vrot.slane %v3944, 4
      %v3963 = vrot.slane %v3946, 4
      %v3964 = vrot.slane %v3948, 4
      %v3965 = vrot.slane %v3950, 4
      %v3966 = vrot.slane %v3952, 4
      %v3967 = vsel %vm479, %v3953, %v3954
      %v3968 = vsel %vm738, %v3926, %v3967
      %v3969 = vsel %vm479, %v3954, %v3955
      %v3970 = vsel %vm738, %v3928, %v3969
      %v3971 = vsel %vm479, %v3955, %v3956
      %v3972 = vsel %vm738, %v3930, %v3971
      %v3973 = vsel %vm479, %v3956, %v3957
      %v3974 = vsel %vm738, %v3932, %v3973
      %v3975 = vsel %vm479, %v3957, %v3958
      %v3976 = vsel %vm738, %v3934, %v3975
      %v3977 = vsel %vm479, %v3958, %v3959
      %v3978 = vsel %vm738, %v3936, %v3977
      %v3979 = vsel %vm479, %v3960, %v3961
      %v3980 = vsel %vm738, %v3940, %v3979
      %v3981 = vsel %vm479, %v3961, %v3962
      %v3982 = vsel %vm738, %v3942, %v3981
      %v3983 = vsel %vm479, %v3962, %v3963
      %v3984 = vsel %vm738, %v3944, %v3983
      %v3985 = vsel %vm479, %v3963, %v3964
      %v3986 = vsel %vm738, %v3946, %v3985
      %v3987 = vsel %vm479, %v3964, %v3965
      %v3988 = vsel %vm738, %v3948, %v3987
      %v3989 = vsel %vm479, %v3965, %v3966
      %v3990 = vsel %vm738, %v3950, %v3989
      %4003 = vst [vmem:[#allocation3 + $0xc0] sm:$0xff] %v3968
      %4004 = vst [vmem:[#allocation3 + $0xc8] sm:$0xff] %v3970
      %4005 = vst [vmem:[#allocation3 + $0xd0] sm:$0xff] %v3972
      %4006 = vst [vmem:[#allocation3 + $0xd8] sm:$0xff] %v3974
      %4007 = vst [vmem:[#allocation3 + $0xe0] sm:$0xff] %v3976
      %4008 = vst [vmem:[#allocation3 + $0xe8] sm:$0xff] %v3978
      %4009 = vst [vmem:[#allocation3 + $0xf0] sm:$0xff] %v3980
      %4010 = vst [vmem:[#allocation3 + $0xf8] sm:$0xff] %v3982
      %4011 = vst [vmem:[#allocation3 + $0x100] sm:$0xff] %v3984
      %4012 = vst [vmem:[#allocation3 + $0x108] sm:$0xff] %v3986
      %4013 = vst [vmem:[#allocation3 + $0x110] sm:$0xff] %v3988
      %4014 = vst [vmem:[#allocation3 + $0x118] sm:$0xff] %v3990
      %v4015 = vld [vmem:[#allocation2] sm:$0xff]
      %v4016 = vld [vmem:[#allocation2 + $0x8] sm:$0xff]
      %v4017 = vld [vmem:[#allocation2 + $0x10] sm:$0xff]
      %v4018 = vld [vmem:[#allocation2 + $0x18] sm:$0xff]
      %v4019 = vld [vmem:[#allocation2 + $0x20] sm:$0xff]
      %v4020 = vld [vmem:[#allocation2 + $0x28] sm:$0xff]
      %v4021 = vld [vmem:[#allocation2 + $0x30] sm:$0xf]
      %v4022 = vld [vmem:[#allocation2 + $0x34] sm:$0xff]
      %v4023 = vld [vmem:[#allocation2 + $0x3c] sm:$0xff]
      %v4024 = vld [vmem:[#allocation2 + $0x44] sm:$0xff]
      %v4025 = vld [vmem:[#allocation2 + $0x4c] sm:$0xff]
      %v4026 = vld [vmem:[#allocation2 + $0x54] sm:$0xff]
      %v4027 = vld [vmem:[#allocation2 + $0x5c] sm:$0xff]
      %v4028 = vld [vmem:[#allocation2 + $0x64] sm:$0xf]
      %4043 = vrot.lane.b32.xlu0 %v4015, 125
      %v4044 = vpop.permute.xlu0 %4043
      %4045 = vrot.lane.b32.xlu0 %v4016, 125
      %v4046 = vpop.permute.xlu0 %4045
      %4047 = vrot.lane.b32.xlu0 %v4017, 125
      %v4048 = vpop.permute.xlu0 %4047
      %4049 = vrot.lane.b32.xlu0 %v4018, 125
      %v4050 = vpop.permute.xlu0 %4049
      %4051 = vrot.lane.b32.xlu0 %v4019, 125
      %v4052 = vpop.permute.xlu0 %4051
      %4053 = vrot.lane.b32.xlu0 %v4020, 125
      %v4054 = vpop.permute.xlu0 %4053
      %4055 = vrot.lane.b32.xlu0 %v4021, 125
      %v4056 = vpop.permute.xlu0 %4055
      %4057 = vrot.lane.b32.xlu0 %v4022, 125
      %v4058 = vpop.permute.xlu0 %4057
      %4059 = vrot.lane.b32.xlu0 %v4023, 125
      %v4060 = vpop.permute.xlu0 %4059
      %4061 = vrot.lane.b32.xlu0 %v4024, 125
      %v4062 = vpop.permute.xlu0 %4061
      %4063 = vrot.lane.b32.xlu0 %v4025, 125
      %v4064 = vpop.permute.xlu0 %4063
      %4065 = vrot.lane.b32.xlu0 %v4026, 125
      %v4066 = vpop.permute.xlu0 %4065
      %4067 = vrot.lane.b32.xlu0 %v4027, 125
      %v4068 = vpop.permute.xlu0 %4067
      %4069 = vrot.lane.b32.xlu0 %v4028, 125
      %v4070 = vpop.permute.xlu0 %4069
      %v4071 = vrot.slane %v4044, 4
      %v4072 = vrot.slane %v4046, 4
      %v4073 = vrot.slane %v4048, 4
      %v4074 = vrot.slane %v4050, 4
      %v4075 = vrot.slane %v4052, 4
      %v4076 = vrot.slane %v4054, 4
      %v4077 = vrot.slane %v4056, 4
      %v4078 = vrot.slane %v4058, 4
      %v4079 = vrot.slane %v4060, 4
      %v4080 = vrot.slane %v4062, 4
      %v4081 = vrot.slane %v4064, 4
      %v4082 = vrot.slane %v4066, 4
      %v4083 = vrot.slane %v4068, 4
      %v4084 = vrot.slane %v4070, 4
      %v4085 = vsel %vm479, %v4071, %v4072
      %v4086 = vsel %vm857, %v4044, %v4085
      %v4087 = vsel %vm479, %v4072, %v4073
      %v4088 = vsel %vm857, %v4046, %v4087
      %v4089 = vsel %vm479, %v4073, %v4074
      %v4090 = vsel %vm857, %v4048, %v4089
      %v4091 = vsel %vm479, %v4074, %v4075
      %v4092 = vsel %vm857, %v4050, %v4091
      %v4093 = vsel %vm479, %v4075, %v4076
      %v4094 = vsel %vm857, %v4052, %v4093
      %v4095 = vsel %vm479, %v4076, %v4077
      %v4096 = vsel %vm857, %v4054, %v4095
      %v4097 = vsel %vm479, %v4078, %v4079
      %v4098 = vsel %vm857, %v4058, %v4097
      %v4099 = vsel %vm479, %v4079, %v4080
      %v4100 = vsel %vm857, %v4060, %v4099
      %v4101 = vsel %vm479, %v4080, %v4081
      %v4102 = vsel %vm857, %v4062, %v4101
      %v4103 = vsel %vm479, %v4081, %v4082
      %v4104 = vsel %vm857, %v4064, %v4103
      %v4105 = vsel %vm479, %v4082, %v4083
      %v4106 = vsel %vm857, %v4066, %v4105
      %v4107 = vsel %vm479, %v4083, %v4084
      %v4108 = vsel %vm857, %v4068, %v4107
      %4121 = vst [vmem:[#allocation3 + $0x120] sm:$0xff] %v4086
      %4122 = vst [vmem:[#allocation3 + $0x128] sm:$0xff] %v4088
      %4123 = vst [vmem:[#allocation3 + $0x130] sm:$0xff] %v4090
      %4124 = vst [vmem:[#allocation3 + $0x138] sm:$0xff] %v4092
      %4125 = vst [vmem:[#allocation3 + $0x140] sm:$0xff] %v4094
      %4126 = vst [vmem:[#allocation3 + $0x148] sm:$0xff] %v4096
      %4127 = vst [vmem:[#allocation3 + $0x150] sm:$0xff] %v4098
      %4128 = vst [vmem:[#allocation3 + $0x158] sm:$0xff] %v4100
      %4129 = vst [vmem:[#allocation3 + $0x160] sm:$0xff] %v4102
      %4130 = vst [vmem:[#allocation3 + $0x168] sm:$0xff] %v4104
      %4131 = vst [vmem:[#allocation3 + $0x170] sm:$0xff] %v4106
      %4132 = vst [vmem:[#allocation3 + $0x178] sm:$0xff] %v4108
      %v4133 = vld [vmem:[#allocation2] sm:$0xff]
      %v4134 = vld [vmem:[#allocation2 + $0x8] sm:$0xff]
      %v4135 = vld [vmem:[#allocation2 + $0x10] sm:$0xff]
      %v4136 = vld [vmem:[#allocation2 + $0x18] sm:$0xff]
      %v4137 = vld [vmem:[#allocation2 + $0x20] sm:$0xff]
      %v4138 = vld [vmem:[#allocation2 + $0x28] sm:$0xff]
      %v4139 = vld [vmem:[#allocation2 + $0x30] sm:$0xf]
      %v4140 = vld [vmem:[#allocation2 + $0x34] sm:$0xff]
      %v4141 = vld [vmem:[#allocation2 + $0x3c] sm:$0xff]
      %v4142 = vld [vmem:[#allocation2 + $0x44] sm:$0xff]
      %v4143 = vld [vmem:[#allocation2 + $0x4c] sm:$0xff]
      %v4144 = vld [vmem:[#allocation2 + $0x54] sm:$0xff]
      %v4145 = vld [vmem:[#allocation2 + $0x5c] sm:$0xff]
      %v4146 = vld [vmem:[#allocation2 + $0x64] sm:$0xf]
      %4161 = vrot.lane.b32.xlu0 %v4133, 124
      %v4162 = vpop.permute.xlu0 %4161
      %4163 = vrot.lane.b32.xlu0 %v4134, 124
      %v4164 = vpop.permute.xlu0 %4163
      %4165 = vrot.lane.b32.xlu0 %v4135, 124
      %v4166 = vpop.permute.xlu0 %4165
      %4167 = vrot.lane.b32.xlu0 %v4136, 124
      %v4168 = vpop.permute.xlu0 %4167
      %4169 = vrot.lane.b32.xlu0 %v4137, 124
      %v4170 = vpop.permute.xlu0 %4169
      %4171 = vrot.lane.b32.xlu0 %v4138, 124
      %v4172 = vpop.permute.xlu0 %4171
      %4173 = vrot.lane.b32.xlu0 %v4139, 124
      %v4174 = vpop.permute.xlu0 %4173
      %4175 = vrot.lane.b32.xlu0 %v4140, 124
      %v4176 = vpop.permute.xlu0 %4175
      %4177 = vrot.lane.b32.xlu0 %v4141, 124
      %v4178 = vpop.permute.xlu0 %4177
      %4179 = vrot.lane.b32.xlu0 %v4142, 124
      %v4180 = vpop.permute.xlu0 %4179
      %4181 = vrot.lane.b32.xlu0 %v4143, 124
      %v4182 = vpop.permute.xlu0 %4181
      %4183 = vrot.lane.b32.xlu0 %v4144, 124
      %v4184 = vpop.permute.xlu0 %4183
      %4185 = vrot.lane.b32.xlu0 %v4145, 124
      %v4186 = vpop.permute.xlu0 %4185
      %4187 = vrot.lane.b32.xlu0 %v4146, 124
      %v4188 = vpop.permute.xlu0 %4187
      %v4189 = vrot.slane %v4162, 4
      %v4190 = vrot.slane %v4164, 4
      %v4191 = vrot.slane %v4166, 4
      %v4192 = vrot.slane %v4168, 4
      %v4193 = vrot.slane %v4170, 4
      %v4194 = vrot.slane %v4172, 4
      %v4195 = vrot.slane %v4174, 4
      %v4196 = vrot.slane %v4176, 4
      %v4197 = vrot.slane %v4178, 4
      %v4198 = vrot.slane %v4180, 4
      %v4199 = vrot.slane %v4182, 4
      %v4200 = vrot.slane %v4184, 4
      %v4201 = vrot.slane %v4186, 4
      %v4202 = vrot.slane %v4188, 4
      %v4203 = vsel %vm479, %v4189, %v4190
      %v4204 = vsel %vm976, %v4162, %v4203
      %v4205 = vsel %vm479, %v4190, %v4191
      %v4206 = vsel %vm976, %v4164, %v4205
      %v4207 = vsel %vm479, %v4191, %v4192
      %v4208 = vsel %vm976, %v4166, %v4207
      %v4209 = vsel %vm479, %v4192, %v4193
      %v4210 = vsel %vm976, %v4168, %v4209
      %v4211 = vsel %vm479, %v4193, %v4194
      %v4212 = vsel %vm976, %v4170, %v4211
      %v4213 = vsel %vm479, %v4194, %v4195
      %v4214 = vsel %vm976, %v4172, %v4213
      %v4215 = vsel %vm479, %v4196, %v4197
      %v4216 = vsel %vm976, %v4176, %v4215
      %v4217 = vsel %vm479, %v4197, %v4198
      %v4218 = vsel %vm976, %v4178, %v4217
      %v4219 = vsel %vm479, %v4198, %v4199
      %v4220 = vsel %vm976, %v4180, %v4219
      %v4221 = vsel %vm479, %v4199, %v4200
      %v4222 = vsel %vm976, %v4182, %v4221
      %v4223 = vsel %vm479, %v4200, %v4201
      %v4224 = vsel %vm976, %v4184, %v4223
      %v4225 = vsel %vm479, %v4201, %v4202
      %v4226 = vsel %vm976, %v4186, %v4225
      %4239 = vst [vmem:[#allocation3 + $0x180] sm:$0xff] %v4204
      %4240 = vst [vmem:[#allocation3 + $0x188] sm:$0xff] %v4206
      %4241 = vst [vmem:[#allocation3 + $0x190] sm:$0xff] %v4208
      %4242 = vst [vmem:[#allocation3 + $0x198] sm:$0xff] %v4210
      %4243 = vst [vmem:[#allocation3 + $0x1a0] sm:$0xff] %v4212
      %4244 = vst [vmem:[#allocation3 + $0x1a8] sm:$0xff] %v4214
      %4245 = vst [vmem:[#allocation3 + $0x1b0] sm:$0xff] %v4216
      %4246 = vst [vmem:[#allocation3 + $0x1b8] sm:$0xff] %v4218
      %4247 = vst [vmem:[#allocation3 + $0x1c0] sm:$0xff] %v4220
      %4248 = vst [vmem:[#allocation3 + $0x1c8] sm:$0xff] %v4222
      %4249 = vst [vmem:[#allocation3 + $0x1d0] sm:$0xff] %v4224
      %4250 = vst [vmem:[#allocation3 + $0x1d8] sm:$0xff] %v4226
      %v4251 = vld [vmem:[#allocation2] sm:$0xff]
      %v4252 = vld [vmem:[#allocation2 + $0x8] sm:$0xff]
      %v4253 = vld [vmem:[#allocation2 + $0x10] sm:$0xff]
      %v4254 = vld [vmem:[#allocation2 + $0x18] sm:$0xff]
      %v4255 = vld [vmem:[#allocation2 + $0x20] sm:$0xff]
      %v4256 = vld [vmem:[#allocation2 + $0x28] sm:$0xff]
      %v4257 = vld [vmem:[#allocation2 + $0x30] sm:$0xf]
      %v4258 = vld [vmem:[#allocation2 + $0x34] sm:$0xff]
      %v4259 = vld [vmem:[#allocation2 + $0x3c] sm:$0xff]
      %v4260 = vld [vmem:[#allocation2 + $0x44] sm:$0xff]
      %v4261 = vld [vmem:[#allocation2 + $0x4c] sm:$0xff]
      %v4262 = vld [vmem:[#allocation2 + $0x54] sm:$0xff]
      %v4263 = vld [vmem:[#allocation2 + $0x5c] sm:$0xff]
      %v4264 = vld [vmem:[#allocation2 + $0x64] sm:$0xf]
      %4279 = vrot.lane.b32.xlu0 %v4251, 123
      %v4280 = vpop.permute.xlu0 %4279
      %4281 = vrot.lane.b32.xlu0 %v4252, 123
      %v4282 = vpop.permute.xlu0 %4281
      %4283 = vrot.lane.b32.xlu0 %v4253, 123
      %v4284 = vpop.permute.xlu0 %4283
      %4285 = vrot.lane.b32.xlu0 %v4254, 123
      %v4286 = vpop.permute.xlu0 %4285
      %4287 = vrot.lane.b32.xlu0 %v4255, 123
      %v4288 = vpop.permute.xlu0 %4287
      %4289 = vrot.lane.b32.xlu0 %v4256, 123
      %v4290 = vpop.permute.xlu0 %4289
      %4291 = vrot.lane.b32.xlu0 %v4257, 123
      %v4292 = vpop.permute.xlu0 %4291
      %4293 = vrot.lane.b32.xlu0 %v4258, 123
      %v4294 = vpop.permute.xlu0 %4293
      %4295 = vrot.lane.b32.xlu0 %v4259, 123
      %v4296 = vpop.permute.xlu0 %4295
      %4297 = vrot.lane.b32.xlu0 %v4260, 123
      %v4298 = vpop.permute.xlu0 %4297
      %4299 = vrot.lane.b32.xlu0 %v4261, 123
      %v4300 = vpop.permute.xlu0 %4299
      %4301 = vrot.lane.b32.xlu0 %v4262, 123
      %v4302 = vpop.permute.xlu0 %4301
      %4303 = vrot.lane.b32.xlu0 %v4263, 123
      %v4304 = vpop.permute.xlu0 %4303
      %4305 = vrot.lane.b32.xlu0 %v4264, 123
      %v4306 = vpop.permute.xlu0 %4305
      %v4307 = vrot.slane %v4280, 4
      %v4308 = vrot.slane %v4282, 4
      %v4309 = vrot.slane %v4284, 4
      %v4310 = vrot.slane %v4286, 4
      %v4311 = vrot.slane %v4288, 4
      %v4312 = vrot.slane %v4290, 4
      %v4313 = vrot.slane %v4292, 4
      %v4314 = vrot.slane %v4294, 4
      %v4315 = vrot.slane %v4296, 4
      %v4316 = vrot.slane %v4298, 4
      %v4317 = vrot.slane %v4300, 4
      %v4318 = vrot.slane %v4302, 4
      %v4319 = vrot.slane %v4304, 4
      %v4320 = vrot.slane %v4306, 4
      %v4321 = vsel %vm479, %v4307, %v4308
      %v4322 = vsel %vm1095, %v4280, %v4321
      %v4323 = vsel %vm479, %v4308, %v4309
      %v4324 = vsel %vm1095, %v4282, %v4323
      %v4325 = vsel %vm479, %v4309, %v4310
      %v4326 = vsel %vm1095, %v4284, %v4325
      %v4327 = vsel %vm479, %v4310, %v4311
      %v4328 = vsel %vm1095, %v4286, %v4327
      %v4329 = vsel %vm479, %v4311, %v4312
      %v4330 = vsel %vm1095, %v4288, %v4329
      %v4331 = vsel %vm479, %v4312, %v4313
      %v4332 = vsel %vm1095, %v4290, %v4331
      %v4333 = vsel %vm479, %v4314, %v4315
      %v4334 = vsel %vm1095, %v4294, %v4333
      %v4335 = vsel %vm479, %v4315, %v4316
      %v4336 = vsel %vm1095, %v4296, %v4335
      %v4337 = vsel %vm479, %v4316, %v4317
      %v4338 = vsel %vm1095, %v4298, %v4337
      %v4339 = vsel %vm479, %v4317, %v4318
      %v4340 = vsel %vm1095, %v4300, %v4339
      %v4341 = vsel %vm479, %v4318, %v4319
      %v4342 = vsel %vm1095, %v4302, %v4341
      %v4343 = vsel %vm479, %v4319, %v4320
      %v4344 = vsel %vm1095, %v4304, %v4343
      %4357 = vst [vmem:[#allocation3 + $0x1e0] sm:$0xff] %v4322
      %4358 = vst [vmem:[#allocation3 + $0x1e8] sm:$0xff] %v4324
      %4359 = vst [vmem:[#allocation3 + $0x1f0] sm:$0xff] %v4326
      %4360 = vst [vmem:[#allocation3 + $0x1f8] sm:$0xff] %v4328
      %4361 = vst [vmem:[#allocation3 + $0x200] sm:$0xff] %v4330
      %4362 = vst [vmem:[#allocation3 + $0x208] sm:$0xff] %v4332
      %4363 = vst [vmem:[#allocation3 + $0x210] sm:$0xff] %v4334
      %4364 = vst [vmem:[#allocation3 + $0x218] sm:$0xff] %v4336
      %4365 = vst [vmem:[#allocation3 + $0x220] sm:$0xff] %v4338
      %4366 = vst [vmem:[#allocation3 + $0x228] sm:$0xff] %v4340
      %4367 = vst [vmem:[#allocation3 + $0x230] sm:$0xff] %v4342
      %4368 = vst [vmem:[#allocation3 + $0x238] sm:$0xff] %v4344
      %v4369 = vld [vmem:[#allocation2] sm:$0xff]
      %v4370 = vld [vmem:[#allocation2 + $0x8] sm:$0xff]
      %v4371 = vld [vmem:[#allocation2 + $0x10] sm:$0xff]
      %v4372 = vld [vmem:[#allocation2 + $0x18] sm:$0xff]
      %v4373 = vld [vmem:[#allocation2 + $0x20] sm:$0xff]
      %v4374 = vld [vmem:[#allocation2 + $0x28] sm:$0xff]
      %v4375 = vld [vmem:[#allocation2 + $0x30] sm:$0xf]
      %v4376 = vld [vmem:[#allocation2 + $0x34] sm:$0xff]
      %v4377 = vld [vmem:[#allocation2 + $0x3c] sm:$0xff]
      %v4378 = vld [vmem:[#allocation2 + $0x44] sm:$0xff]
      %v4379 = vld [vmem:[#allocation2 + $0x4c] sm:$0xff]
      %v4380 = vld [vmem:[#allocation2 + $0x54] sm:$0xff]
      %v4381 = vld [vmem:[#allocation2 + $0x5c] sm:$0xff]
      %v4382 = vld [vmem:[#allocation2 + $0x64] sm:$0xf]
      %4397 = vrot.lane.b32.xlu0 %v4369, 122
      %v4398 = vpop.permute.xlu0 %4397
      %4399 = vrot.lane.b32.xlu0 %v4370, 122
      %v4400 = vpop.permute.xlu0 %4399
      %4401 = vrot.lane.b32.xlu0 %v4371, 122
      %v4402 = vpop.permute.xlu0 %4401
      %4403 = vrot.lane.b32.xlu0 %v4372, 122
      %v4404 = vpop.permute.xlu0 %4403
      %4405 = vrot.lane.b32.xlu0 %v4373, 122
      %v4406 = vpop.permute.xlu0 %4405
      %4407 = vrot.lane.b32.xlu0 %v4374, 122
      %v4408 = vpop.permute.xlu0 %4407
      %4409 = vrot.lane.b32.xlu0 %v4375, 122
      %v4410 = vpop.permute.xlu0 %4409
      %4411 = vrot.lane.b32.xlu0 %v4376, 122
      %v4412 = vpop.permute.xlu0 %4411
      %4413 = vrot.lane.b32.xlu0 %v4377, 122
      %v4414 = vpop.permute.xlu0 %4413
      %4415 = vrot.lane.b32.xlu0 %v4378, 122
      %v4416 = vpop.permute.xlu0 %4415
      %4417 = vrot.lane.b32.xlu0 %v4379, 122
      %v4418 = vpop.permute.xlu0 %4417
      %4419 = vrot.lane.b32.xlu0 %v4380, 122
      %v4420 = vpop.permute.xlu0 %4419
      %4421 = vrot.lane.b32.xlu0 %v4381, 122
      %v4422 = vpop.permute.xlu0 %4421
      %4423 = vrot.lane.b32.xlu0 %v4382, 122
      %v4424 = vpop.permute.xlu0 %4423
      %v4425 = vrot.slane %v4398, 4
      %v4426 = vrot.slane %v4400, 4
      %v4427 = vrot.slane %v4402, 4
      %v4428 = vrot.slane %v4404, 4
      %v4429 = vrot.slane %v4406, 4
      %v4430 = vrot.slane %v4408, 4
      %v4431 = vrot.slane %v4410, 4
      %v4432 = vrot.slane %v4412, 4
      %v4433 = vrot.slane %v4414, 4
      %v4434 = vrot.slane %v4416, 4
      %v4435 = vrot.slane %v4418, 4
      %v4436 = vrot.slane %v4420, 4
      %v4437 = vrot.slane %v4422, 4
      %v4438 = vrot.slane %v4424, 4
      %v4439 = vsel %vm479, %v4425, %v4426
      %v4440 = vsel %vm1214, %v4398, %v4439
      %v4441 = vsel %vm479, %v4426, %v4427
      %v4442 = vsel %vm1214, %v4400, %v4441
      %v4443 = vsel %vm479, %v4427, %v4428
      %v4444 = vsel %vm1214, %v4402, %v4443
      %v4445 = vsel %vm479, %v4428, %v4429
      %v4446 = vsel %vm1214, %v4404, %v4445
      %v4447 = vsel %vm479, %v4429, %v4430
      %v4448 = vsel %vm1214, %v4406, %v4447
      %v4449 = vsel %vm479, %v4430, %v4431
      %v4450 = vsel %vm1214, %v4408, %v4449
      %v4451 = vsel %vm479, %v4432, %v4433
      %v4452 = vsel %vm1214, %v4412, %v4451
      %v4453 = vsel %vm479, %v4433, %v4434
      %v4454 = vsel %vm1214, %v4414, %v4453
      %v4455 = vsel %vm479, %v4434, %v4435
      %v4456 = vsel %vm1214, %v4416, %v4455
      %v4457 = vsel %vm479, %v4435, %v4436
      %v4458 = vsel %vm1214, %v4418, %v4457
      %v4459 = vsel %vm479, %v4436, %v4437
      %v4460 = vsel %vm1214, %v4420, %v4459
      %v4461 = vsel %vm479, %v4437, %v4438
      %v4462 = vsel %vm1214, %v4422, %v4461
      %4475 = vst [vmem:[#allocation3 + $0x240] sm:$0xff] %v4440
      %4476 = vst [vmem:[#allocation3 + $0x248] sm:$0xff] %v4442
      %4477 = vst [vmem:[#allocation3 + $0x250] sm:$0xff] %v4444
      %4478 = vst [vmem:[#allocation3 + $0x258] sm:$0xff] %v4446
      %4479 = vst [vmem:[#allocation3 + $0x260] sm:$0xff] %v4448
      %4480 = vst [vmem:[#allocation3 + $0x268] sm:$0xff] %v4450
      %4481 = vst [vmem:[#allocation3 + $0x270] sm:$0xff] %v4452
      %4482 = vst [vmem:[#allocation3 + $0x278] sm:$0xff] %v4454
      %4483 = vst [vmem:[#allocation3 + $0x280] sm:$0xff] %v4456
      %4484 = vst [vmem:[#allocation3 + $0x288] sm:$0xff] %v4458
      %4485 = vst [vmem:[#allocation3 + $0x290] sm:$0xff] %v4460
      %4486 = vst [vmem:[#allocation3 + $0x298] sm:$0xff] %v4462
      %v4487 = vld [vmem:[%s281] sm:$0xff]
      %v4488 = vld [vmem:[%s281 + $0x8] sm:$0xff]
      %v4489 = vld [vmem:[%s281 + $0x10] sm:$0xff]
      %v4490 = vld [vmem:[%s281 + $0x18] sm:$0xff]
      %v4491 = vld [vmem:[%s281 + $0x20] sm:$0xff]
      %v4492 = vld [vmem:[%s281 + $0x28] sm:$0xff]
      %v4493 = vld [vmem:[%s281 + $0x30] sm:$0xff]
      %v4494 = vld [vmem:[%s281 + $0x38] sm:$0xff]
      %v4495 = vld [vmem:[%s281 + $0x40] sm:$0xff]
      %v4496 = vld [vmem:[%s281 + $0x48] sm:$0xff]
      %v4497 = vld [vmem:[%s281 + $0x50] sm:$0xff]
      %v4498 = vld [vmem:[%s281 + $0x58] sm:$0xff]
      %v4499 = vld [vmem:[%s281 + $0x60] sm:$0xff]
      %v4500 = vld [vmem:[%s281 + $0x68] sm:$0xff]
      %v4501 = vld [vmem:[%s281 + $0x70] sm:$0xff]
      %v4502 = vld [vmem:[%s281 + $0x78] sm:$0xff]
      %v4503 = vld [vmem:[%s281 + $0x80] sm:$0xff]
      %v4504 = vld [vmem:[%s281 + $0x88] sm:$0xff]
      %v4505 = vld [vmem:[%s281 + $0x90] sm:$0xff]
      %v4506 = vld [vmem:[%s281 + $0x98] sm:$0xff]
      %s4507 = scalar_lea.vmem %s3, 56
      %v4508 = vld [vmem:[%s4507] sm:$0xf]
      %v4509 = vld [vmem:[%s4507 + $0x4] sm:$0xf]
      %v4510 = vld [vmem:[%s4507 + $0x8] sm:$0xf]
      %v4511 = vld [vmem:[%s4507 + $0xc] sm:$0xf]
      %v4512 = vld [vmem:[%s4507 + $0x10] sm:$0xf]
      %v4513 = vld [vmem:[%s4507 + $0x14] sm:$0xf]
      %v4514 = vld [vmem:[%s4507 + $0x18] sm:$0xf]
      %v4515 = vld [vmem:[%s4507 + $0x1c] sm:$0xf]
      %v4516 = vld [vmem:[%s4507 + $0x20] sm:$0xf]
      %v4517 = vld [vmem:[%s4507 + $0x24] sm:$0xf]
      %v4518 = vld [vmem:[%s4507 + $0x28] sm:$0xf]
      %v4519 = vld [vmem:[%s4507 + $0x2c] sm:$0xf]
      %v4520 = vld [vmem:[%s4507 + $0x30] sm:$0xf]
      %v4521 = vld [vmem:[%s4507 + $0x34] sm:$0xf]
      %v4522 = vld [vmem:[#allocation3] sm:$0xff]
      %v4523 = vld [vmem:[#allocation3 + $0x8] sm:$0xff]
      %v4524 = vld [vmem:[#allocation3 + $0x10] sm:$0xff]
      %v4525 = vld [vmem:[#allocation3 + $0x18] sm:$0xff]
      %v4526 = vld [vmem:[#allocation3 + $0x20] sm:$0xff]
      %v4527 = vld [vmem:[#allocation3 + $0x28] sm:$0xff]
      %v4528 = vld [vmem:[#allocation3 + $0x30] sm:$0xff]
      %v4529 = vld [vmem:[#allocation3 + $0x38] sm:$0xff]
      %v4530 = vld [vmem:[#allocation3 + $0x40] sm:$0xff]
      %v4531 = vld [vmem:[#allocation3 + $0x48] sm:$0xff]
      %v4532 = vld [vmem:[#allocation3 + $0x50] sm:$0xff]
      %v4533 = vld [vmem:[#allocation3 + $0x58] sm:$0xff]
      %v4534 = vld [vmem:[#allocation3 + $0x60] sm:$0xff]
      %v4535 = vld [vmem:[#allocation3 + $0x68] sm:$0xff]
      %v4536 = vld [vmem:[#allocation3 + $0x70] sm:$0xff]
      %v4537 = vld [vmem:[#allocation3 + $0x78] sm:$0xff]
      %v4538 = vld [vmem:[#allocation3 + $0x80] sm:$0xff]
      %v4539 = vld [vmem:[#allocation3 + $0x88] sm:$0xff]
      %v4540 = vld [vmem:[#allocation3 + $0x90] sm:$0xff]
      %v4541 = vld [vmem:[#allocation3 + $0x98] sm:$0xff]
      %v4542 = vld [vmem:[#allocation3 + $0xa0] sm:$0xff]
      %v4543 = vld [vmem:[#allocation3 + $0xa8] sm:$0xff]
      %v4544 = vld [vmem:[#allocation3 + $0xb0] sm:$0xff]
      %v4545 = vld [vmem:[#allocation3 + $0xb8] sm:$0xff]
      %v4546 = vld [vmem:[#allocation3 + $0xc0] sm:$0xff]
      %v4547 = vld [vmem:[#allocation3 + $0xc8] sm:$0xff]
      %v4548 = vld [vmem:[#allocation3 + $0xd0] sm:$0xff]
      %v4549 = vld [vmem:[#allocation3 + $0xd8] sm:$0xff]
      %v4550 = vld [vmem:[#allocation3 + $0xe0] sm:$0xff]
      %v4551 = vld [vmem:[#allocation3 + $0xe8] sm:$0xff]
      %v4552 = vld [vmem:[#allocation3 + $0xf0] sm:$0xff]
      %v4553 = vld [vmem:[#allocation3 + $0xf8] sm:$0xff]
      %v4554 = vld [vmem:[#allocation3 + $0x100] sm:$0xff]
      %v4555 = vld [vmem:[#allocation3 + $0x108] sm:$0xff]
      %v4556 = vld [vmem:[#allocation3 + $0x110] sm:$0xff]
      %v4557 = vld [vmem:[#allocation3 + $0x118] sm:$0xff]
      %v4558 = vld [vmem:[#allocation3 + $0x120] sm:$0xff]
      %v4559 = vld [vmem:[#allocation3 + $0x128] sm:$0xff]
      %v4560 = vld [vmem:[#allocation3 + $0x130] sm:$0xff]
      %v4561 = vld [vmem:[#allocation3 + $0x138] sm:$0xff]
      %v4562 = vld [vmem:[#allocation3 + $0x140] sm:$0xff]
      %v4563 = vld [vmem:[#allocation3 + $0x148] sm:$0xff]
      %v4564 = vld [vmem:[#allocation3 + $0x150] sm:$0xff]
      %v4565 = vld [vmem:[#allocation3 + $0x158] sm:$0xff]
      %v4566 = vld [vmem:[#allocation3 + $0x160] sm:$0xff]
      %v4567 = vld [vmem:[#allocation3 + $0x168] sm:$0xff]
      %v4568 = vld [vmem:[#allocation3 + $0x170] sm:$0xff]
      %v4569 = vld [vmem:[#allocation3 + $0x178] sm:$0xff]
      %v4570 = vld [vmem:[#allocation3 + $0x180] sm:$0xff]
      %v4571 = vld [vmem:[#allocation3 + $0x188] sm:$0xff]
      %v4572 = vld [vmem:[#allocation3 + $0x190] sm:$0xff]
      %v4573 = vld [vmem:[#allocation3 + $0x198] sm:$0xff]
      %v4574 = vld [vmem:[#allocation3 + $0x1a0] sm:$0xff]
      %v4575 = vld [vmem:[#allocation3 + $0x1a8] sm:$0xff]
      %v4576 = vld [vmem:[#allocation3 + $0x1b0] sm:$0xff]
      %v4577 = vld [vmem:[#allocation3 + $0x1b8] sm:$0xff]
      %v4578 = vld [vmem:[#allocation3 + $0x1c0] sm:$0xff]
      %v4579 = vld [vmem:[#allocation3 + $0x1c8] sm:$0xff]
      %v4580 = vld [vmem:[#allocation3 + $0x1d0] sm:$0xff]
      %v4581 = vld [vmem:[#allocation3 + $0x1d8] sm:$0xff]
      %v4582 = vld [vmem:[#allocation3 + $0x1e0] sm:$0xff]
      %v4583 = vld [vmem:[#allocation3 + $0x1e8] sm:$0xff]
      %v4584 = vld [vmem:[#allocation3 + $0x1f0] sm:$0xff]
      %v4585 = vld [vmem:[#allocation3 + $0x1f8] sm:$0xff]
      %v4586 = vld [vmem:[#allocation3 + $0x200] sm:$0xff]
      %v4587 = vld [vmem:[#allocation3 + $0x208] sm:$0xff]
      %v4588 = vld [vmem:[#allocation3 + $0x210] sm:$0xff]
      %v4589 = vld [vmem:[#allocation3 + $0x218] sm:$0xff]
      %v4590 = vld [vmem:[#allocation3 + $0x220] sm:$0xff]
      %v4591 = vld [vmem:[#allocation3 + $0x228] sm:$0xff]
      %v4592 = vld [vmem:[#allocation3 + $0x230] sm:$0xff]
      %v4593 = vld [vmem:[#allocation3 + $0x238] sm:$0xff]
      %v4594 = vld [vmem:[#allocation3 + $0x240] sm:$0xff]
      %v4595 = vld [vmem:[#allocation3 + $0x248] sm:$0xff]
      %v4596 = vld [vmem:[#allocation3 + $0x250] sm:$0xff]
      %v4597 = vld [vmem:[#allocation3 + $0x258] sm:$0xff]
      %v4598 = vld [vmem:[#allocation3 + $0x260] sm:$0xff]
      %v4599 = vld [vmem:[#allocation3 + $0x268] sm:$0xff]
      %v4600 = vld [vmem:[#allocation3 + $0x270] sm:$0xff]
      %v4601 = vld [vmem:[#allocation3 + $0x278] sm:$0xff]
      %v4602 = vld [vmem:[#allocation3 + $0x280] sm:$0xff]
      %v4603 = vld [vmem:[#allocation3 + $0x288] sm:$0xff]
      %v4604 = vld [vmem:[#allocation3 + $0x290] sm:$0xff]
      %v4605 = vld [vmem:[#allocation3 + $0x298] sm:$0xff]
      %v4620 = vunpack.c.l.b16 %v4508
      %v4621 = vunpack.c.l.b16 %v4509
      %v4622 = vunpack.c.l.b16 %v4510
      %v4623 = vunpack.c.l.b16 %v4511
      %v4624 = vunpack.c.l.b16 %v4512
      %v4625 = vunpack.c.l.b16 %v4513
      %v4626 = vunpack.c.l.b16 %v4514
      %v4627 = vunpack.c.l.b16 %v4515
      %v4628 = vunpack.c.l.b16 %v4516
      %v4629 = vunpack.c.l.b16 %v4517
      %v4630 = vunpack.c.l.b16 %v4518
      %v4631 = vunpack.c.l.b16 %v4519
      %v4632 = vunpack.c.l.b16 %v4520
      %v4633 = vunpack.c.l.b16 %v4521
      %v4634 = vpack.c.b16 %v4621, %v4620
      %v4635 = vpack.c.b16 %v4623, %v4622
      %v4636 = vpack.c.b16 %v4625, %v4624
      %v4637 = vpack.c.b16 %v4627, %v4626
      %v4638 = vpack.c.b16 %v4629, %v4628
      %v4639 = vpack.c.b16 %v4631, %v4630
      %v4640 = vpack.c.b16 %v4633, %v4632
      %v4725 = vunpack.c.l.b16 %v4522
      %v4726 = vunpack.c.h.b16 %v4522
      %v4727 = vunpack.c.l.b16 %v4523
      %v4728 = vunpack.c.h.b16 %v4523
      %v4729 = vunpack.c.l.b16 %v4524
      %v4730 = vunpack.c.h.b16 %v4524
      %v4731 = vunpack.c.l.b16 %v4525
      %v4732 = vunpack.c.h.b16 %v4525
      %v4733 = vunpack.c.l.b16 %v4526
      %v4734 = vunpack.c.h.b16 %v4526
      %v4735 = vunpack.c.l.b16 %v4527
      %v4736 = vunpack.c.h.b16 %v4527
      %v4737 = vunpack.c.l.b16 %v4528
      %v4738 = vunpack.c.h.b16 %v4528
      %v4739 = vunpack.c.l.b16 %v4529
      %v4740 = vunpack.c.h.b16 %v4529
      %v4741 = vunpack.c.l.b16 %v4530
      %v4742 = vunpack.c.h.b16 %v4530
      %v4743 = vunpack.c.l.b16 %v4531
      %v4744 = vunpack.c.h.b16 %v4531
      %v4745 = vunpack.c.l.b16 %v4532
      %v4746 = vunpack.c.h.b16 %v4532
      %v4747 = vunpack.c.l.b16 %v4533
      %v4748 = vunpack.c.h.b16 %v4533
      %v4749 = vunpack.c.l.b16 %v4534
      %v4750 = vunpack.c.h.b16 %v4534
      %v4751 = vunpack.c.l.b16 %v4535
      %v4752 = vunpack.c.h.b16 %v4535
      %v4753 = vunpack.c.l.b16 %v4536
      %v4754 = vunpack.c.h.b16 %v4536
      %v4755 = vunpack.c.l.b16 %v4537
      %v4756 = vunpack.c.h.b16 %v4537
      %v4757 = vunpack.c.l.b16 %v4538
      %v4758 = vunpack.c.h.b16 %v4538
      %v4759 = vunpack.c.l.b16 %v4539
      %v4760 = vunpack.c.h.b16 %v4539
      %v4761 = vunpack.c.l.b16 %v4540
      %v4762 = vunpack.c.h.b16 %v4540
      %v4763 = vunpack.c.l.b16 %v4541
      %v4764 = vunpack.c.h.b16 %v4541
      %v4765 = vunpack.c.l.b16 %v4542
      %v4766 = vunpack.c.h.b16 %v4542
      %v4767 = vunpack.c.l.b16 %v4543
      %v4768 = vunpack.c.h.b16 %v4543
      %v4769 = vunpack.c.l.b16 %v4544
      %v4770 = vunpack.c.h.b16 %v4544
      %v4771 = vunpack.c.l.b16 %v4545
      %v4772 = vunpack.c.h.b16 %v4545
      %v4773 = vunpack.c.l.b16 %v4546
      %v4774 = vunpack.c.h.b16 %v4546
      %v4775 = vunpack.c.l.b16 %v4547
      %v4776 = vunpack.c.h.b16 %v4547
      %v4777 = vunpack.c.l.b16 %v4548
      %v4778 = vunpack.c.h.b16 %v4548
      %v4779 = vunpack.c.l.b16 %v4549
      %v4780 = vunpack.c.h.b16 %v4549
      %v4781 = vunpack.c.l.b16 %v4550
      %v4782 = vunpack.c.h.b16 %v4550
      %v4783 = vunpack.c.l.b16 %v4551
      %v4784 = vunpack.c.h.b16 %v4551
      %v4785 = vunpack.c.l.b16 %v4552
      %v4786 = vunpack.c.h.b16 %v4552
      %v4787 = vunpack.c.l.b16 %v4553
      %v4788 = vunpack.c.h.b16 %v4553
      %v4789 = vunpack.c.l.b16 %v4554
      %v4790 = vunpack.c.h.b16 %v4554
      %v4791 = vunpack.c.l.b16 %v4555
      %v4792 = vunpack.c.h.b16 %v4555
      %v4793 = vunpack.c.l.b16 %v4556
      %v4794 = vunpack.c.h.b16 %v4556
      %v4795 = vunpack.c.l.b16 %v4557
      %v4796 = vunpack.c.h.b16 %v4557
      %v4797 = vunpack.c.l.b16 %v4558
      %v4798 = vunpack.c.h.b16 %v4558
      %v4799 = vunpack.c.l.b16 %v4559
      %v4800 = vunpack.c.h.b16 %v4559
      %v4801 = vunpack.c.l.b16 %v4560
      %v4802 = vunpack.c.h.b16 %v4560
      %v4803 = vunpack.c.l.b16 %v4561
      %v4804 = vunpack.c.h.b16 %v4561
      %v4805 = vunpack.c.l.b16 %v4562
      %v4806 = vunpack.c.h.b16 %v4562
      %v4807 = vunpack.c.l.b16 %v4563
      %v4808 = vunpack.c.h.b16 %v4563
      %v4809 = vunpack.c.l.b16 %v4564
      %v4810 = vunpack.c.h.b16 %v4564
      %v4811 = vunpack.c.l.b16 %v4565
      %v4812 = vunpack.c.h.b16 %v4565
      %v4813 = vunpack.c.l.b16 %v4566
      %v4814 = vunpack.c.h.b16 %v4566
      %v4815 = vunpack.c.l.b16 %v4567
      %v4816 = vunpack.c.h.b16 %v4567
      %v4817 = vunpack.c.l.b16 %v4568
      %v4818 = vunpack.c.h.b16 %v4568
      %v4819 = vunpack.c.l.b16 %v4569
      %v4820 = vunpack.c.h.b16 %v4569
      %v4821 = vunpack.c.l.b16 %v4570
      %v4822 = vunpack.c.h.b16 %v4570
      %v4823 = vunpack.c.l.b16 %v4571
      %v4824 = vunpack.c.h.b16 %v4571
      %v4825 = vunpack.c.l.b16 %v4572
      %v4826 = vunpack.c.h.b16 %v4572
      %v4827 = vunpack.c.l.b16 %v4573
      %v4828 = vunpack.c.h.b16 %v4573
      %v4829 = vunpack.c.l.b16 %v4574
      %v4830 = vunpack.c.h.b16 %v4574
      %v4831 = vunpack.c.l.b16 %v4575
      %v4832 = vunpack.c.h.b16 %v4575
      %v4833 = vunpack.c.l.b16 %v4576
      %v4834 = vunpack.c.h.b16 %v4576
      %v4835 = vunpack.c.l.b16 %v4577
      %v4836 = vunpack.c.h.b16 %v4577
      %v4837 = vunpack.c.l.b16 %v4578
      %v4838 = vunpack.c.h.b16 %v4578
      %v4839 = vunpack.c.l.b16 %v4579
      %v4840 = vunpack.c.h.b16 %v4579
      %v4841 = vunpack.c.l.b16 %v4580
      %v4842 = vunpack.c.h.b16 %v4580
      %v4843 = vunpack.c.l.b16 %v4581
      %v4844 = vunpack.c.h.b16 %v4581
      %v4845 = vunpack.c.l.b16 %v4582
      %v4846 = vunpack.c.h.b16 %v4582
      %v4847 = vunpack.c.l.b16 %v4583
      %v4848 = vunpack.c.h.b16 %v4583
      %v4849 = vunpack.c.l.b16 %v4584
      %v4850 = vunpack.c.h.b16 %v4584
      %v4851 = vunpack.c.l.b16 %v4585
      %v4852 = vunpack.c.h.b16 %v4585
      %v4853 = vunpack.c.l.b16 %v4586
      %v4854 = vunpack.c.h.b16 %v4586
      %v4855 = vunpack.c.l.b16 %v4587
      %v4856 = vunpack.c.h.b16 %v4587
      %v4857 = vunpack.c.l.b16 %v4588
      %v4858 = vunpack.c.h.b16 %v4588
      %v4859 = vunpack.c.l.b16 %v4589
      %v4860 = vunpack.c.h.b16 %v4589
      %v4861 = vunpack.c.l.b16 %v4590
      %v4862 = vunpack.c.h.b16 %v4590
      %v4863 = vunpack.c.l.b16 %v4591
      %v4864 = vunpack.c.h.b16 %v4591
      %v4865 = vunpack.c.l.b16 %v4592
      %v4866 = vunpack.c.h.b16 %v4592
      %v4867 = vunpack.c.l.b16 %v4593
      %v4868 = vunpack.c.h.b16 %v4593
      %v4869 = vunpack.c.l.b16 %v4594
      %v4870 = vunpack.c.h.b16 %v4594
      %v4871 = vunpack.c.l.b16 %v4595
      %v4872 = vunpack.c.h.b16 %v4595
      %v4873 = vunpack.c.l.b16 %v4596
      %v4874 = vunpack.c.h.b16 %v4596
      %v4875 = vunpack.c.l.b16 %v4597
      %v4876 = vunpack.c.h.b16 %v4597
      %v4877 = vunpack.c.l.b16 %v4598
      %v4878 = vunpack.c.h.b16 %v4598
      %v4879 = vunpack.c.l.b16 %v4599
      %v4880 = vunpack.c.h.b16 %v4599
      %v4881 = vunpack.c.l.b16 %v4600
      %v4882 = vunpack.c.h.b16 %v4600
      %v4883 = vunpack.c.l.b16 %v4601
      %v4884 = vunpack.c.h.b16 %v4601
      %v4885 = vunpack.c.l.b16 %v4602
      %v4886 = vunpack.c.h.b16 %v4602
      %v4887 = vunpack.c.l.b16 %v4603
      %v4888 = vunpack.c.h.b16 %v4603
      %v4889 = vunpack.c.l.b16 %v4604
      %v4890 = vunpack.c.h.b16 %v4604
      %v4891 = vunpack.c.l.b16 %v4605
      %v4892 = vunpack.c.h.b16 %v4605
      %v4893 = vpack.c.b16 %v4737, %v4725
      %v4894 = vpack.c.b16 %v4738, %v4726
      %v4895 = vpack.c.b16 %v4739, %v4727
      %v4896 = vpack.c.b16 %v4740, %v4728
      %v4897 = vpack.c.b16 %v4741, %v4729
      %v4898 = vpack.c.b16 %v4742, %v4730
      %v4899 = vpack.c.b16 %v4743, %v4731
      %v4900 = vpack.c.b16 %v4744, %v4732
      %v4901 = vpack.c.b16 %v4745, %v4733
      %v4902 = vpack.c.b16 %v4746, %v4734
      %v4903 = vpack.c.b16 %v4747, %v4735
      %v4904 = vpack.c.b16 %v4748, %v4736
      %v4905 = vpack.c.b16 %v4761, %v4749
      %v4906 = vpack.c.b16 %v4762, %v4750
      %v4907 = vpack.c.b16 %v4763, %v4751
      %v4908 = vpack.c.b16 %v4764, %v4752
      %v4909 = vpack.c.b16 %v4765, %v4753
      %v4910 = vpack.c.b16 %v4766, %v4754
      %v4911 = vpack.c.b16 %v4767, %v4755
      %v4912 = vpack.c.b16 %v4768, %v4756
      %v4913 = vpack.c.b16 %v4769, %v4757
      %v4914 = vpack.c.b16 %v4770, %v4758
      %v4915 = vpack.c.b16 %v4771, %v4759
      %v4916 = vpack.c.b16 %v4772, %v4760
      %v4917 = vpack.c.b16 %v4785, %v4773
      %v4918 = vpack.c.b16 %v4786, %v4774
      %v4919 = vpack.c.b16 %v4787, %v4775
      %v4920 = vpack.c.b16 %v4788, %v4776
      %v4921 = vpack.c.b16 %v4789, %v4777
      %v4922 = vpack.c.b16 %v4790, %v4778
      %v4923 = vpack.c.b16 %v4791, %v4779
      %v4924 = vpack.c.b16 %v4792, %v4780
      %v4925 = vpack.c.b16 %v4793, %v4781
      %v4926 = vpack.c.b16 %v4794, %v4782
      %v4927 = vpack.c.b16 %v4795, %v4783
      %v4928 = vpack.c.b16 %v4796, %v4784
      %v4929 = vpack.c.b16 %v4809, %v4797
      %v4930 = vpack.c.b16 %v4810, %v4798
      %v4931 = vpack.c.b16 %v4811, %v4799
      %v4932 = vpack.c.b16 %v4812, %v4800
      %v4933 = vpack.c.b16 %v4813, %v4801
      %v4934 = vpack.c.b16 %v4814, %v4802
      %v4935 = vpack.c.b16 %v4815, %v4803
      %v4936 = vpack.c.b16 %v4816, %v4804
      %v4937 = vpack.c.b16 %v4817, %v4805
      %v4938 = vpack.c.b16 %v4818, %v4806
      %v4939 = vpack.c.b16 %v4819, %v4807
      %v4940 = vpack.c.b16 %v4820, %v4808
      %v4941 = vpack.c.b16 %v4833, %v4821
      %v4942 = vpack.c.b16 %v4834, %v4822
      %v4943 = vpack.c.b16 %v4835, %v4823
      %v4944 = vpack.c.b16 %v4836, %v4824
      %v4945 = vpack.c.b16 %v4837, %v4825
      %v4946 = vpack.c.b16 %v4838, %v4826
      %v4947 = vpack.c.b16 %v4839, %v4827
      %v4948 = vpack.c.b16 %v4840, %v4828
      %v4949 = vpack.c.b16 %v4841, %v4829
      %v4950 = vpack.c.b16 %v4842, %v4830
      %v4951 = vpack.c.b16 %v4843, %v4831
      %v4952 = vpack.c.b16 %v4844, %v4832
      %v4953 = vpack.c.b16 %v4857, %v4845
      %v4954 = vpack.c.b16 %v4858, %v4846
      %v4955 = vpack.c.b16 %v4859, %v4847
      %v4956 = vpack.c.b16 %v4860, %v4848
      %v4957 = vpack.c.b16 %v4861, %v4849
      %v4958 = vpack.c.b16 %v4862, %v4850
      %v4959 = vpack.c.b16 %v4863, %v4851
      %v4960 = vpack.c.b16 %v4864, %v4852
      %v4961 = vpack.c.b16 %v4865, %v4853
      %v4962 = vpack.c.b16 %v4866, %v4854
      %v4963 = vpack.c.b16 %v4867, %v4855
      %v4964 = vpack.c.b16 %v4868, %v4856
      %v4965 = vpack.c.b16 %v4881, %v4869
      %v4966 = vpack.c.b16 %v4882, %v4870
      %v4967 = vpack.c.b16 %v4883, %v4871
      %v4968 = vpack.c.b16 %v4884, %v4872
      %v4969 = vpack.c.b16 %v4885, %v4873
      %v4970 = vpack.c.b16 %v4886, %v4874
      %v4971 = vpack.c.b16 %v4887, %v4875
      %v4972 = vpack.c.b16 %v4888, %v4876
      %v4973 = vpack.c.b16 %v4889, %v4877
      %v4974 = vpack.c.b16 %v4890, %v4878
      %v4975 = vpack.c.b16 %v4891, %v4879
      %v4976 = vpack.c.b16 %v4892, %v4880
      %v5062 = vsel %vm1815, %v4634, 0
      %v5065 = vsel %vm1815, %v4635, 0
      %v5068 = vsel %vm1815, %v4636, 0
      %v5071 = vsel %vm1815, %v4637, 0
      %v5074 = vsel %vm1815, %v4638, 0
      %v5077 = vsel %vm1815, %v4639, 0
      %v5080 = vsel %vm1815, %v4640, 0
      %5082 = vmatprep.subr.bf16.mxu0 0
      %5083 = vmatpush1.bf16.msra.mxu0 0
      %5084 = vmatprep.subr.bf16.mxu0 %v4966
      %5085 = vmatpush1.bf16.msra.mxu0 %v4965
      %5086 = vmatprep.subr.bf16.mxu0 %v4954
      %5087 = vmatpush1.bf16.msra.mxu0 %v4953
      %5088 = vmatprep.subr.bf16.mxu0 %v4942
      %5089 = vmatpush1.bf16.msra.mxu0 %v4941
      %5090 = vmatprep.subr.bf16.mxu0 %v4930
      %5091 = vmatpush1.bf16.msra.mxu0 %v4929
      %5092 = vmatprep.subr.bf16.mxu0 %v4918
      %5093 = vmatpush1.bf16.msra.mxu0 %v4917
      %5094 = vmatprep.subr.bf16.mxu0 %v4906
      %5095 = vmatpush1.bf16.msra.mxu0 %v4905
      %5096 = vmatprep.subr.bf16.mxu0 %v4894
      %5097 = vmatpush1.bf16.msra.mxu0 %v4893
      %5098 = vmatprep.subr.bf16.mxu0 0
      %5099 = vmatpush2.bf16.msra.mxu0 0
      %5100 = vmatprep.subr.bf16.mxu0 0
      %5101 = vmatpush2.bf16.msra.mxu0 0
      %5102 = vmatprep.subr.bf16.mxu0 0
      %5103 = vmatpush2.bf16.msra.mxu0 0
      %5104 = vmatprep.subr.bf16.mxu0 0
      %5105 = vmatpush2.bf16.msra.mxu0 0
      %5106 = vmatprep.subr.bf16.mxu0 0
      %5107 = vmatpush2.bf16.msra.mxu0 0
      %5108 = vmatprep.subr.bf16.mxu0 0
      %5109 = vmatpush2.bf16.msra.mxu0 0
      %5110 = vmatprep.subr.bf16.mxu0 0
      %5111 = vmatpush2.bf16.msra.mxu0 0
      %5112 = vmatprep.subr.bf16.mxu0 0
      %5113 = vmatpush2.bf16.msra.mxu0 0
      %5114 = vmatprep.mubr.bf16.mxu0 0
      %5115 = vmatmul.mubr.bf16.gmra.mxu0 %v5062
      %v5116 = vpop.f32.mrf.mxu0
      %v5117 = vadd.f32 0.0, %v5116
      %v5118 = vpop.f32.mrf.mxu0
      %v5119 = vadd.f32 0.0, %v5118
      %v5120 = vpop.f32.mrf.mxu0
      %v5121 = vadd.f32 0.0, %v5120
      %v5122 = vpop.f32.mrf.mxu0
      %v5123 = vadd.f32 0.0, %v5122
      %5124 = vmatprep.mubr.bf16.mxu0 0
      %5125 = vmatmul.mubr.bf16.gmra.mxu0 %v5065
      %v5126 = vpop.f32.mrf.mxu0
      %v5127 = vadd.f32 0.0, %v5126
      %v5128 = vpop.f32.mrf.mxu0
      %v5129 = vadd.f32 0.0, %v5128
      %v5130 = vpop.f32.mrf.mxu0
      %v5131 = vadd.f32 0.0, %v5130
      %v5132 = vpop.f32.mrf.mxu0
      %v5133 = vadd.f32 0.0, %v5132
      %5134 = vmatprep.mubr.bf16.mxu0 0
      %5135 = vmatmul.mubr.bf16.gmra.mxu0 %v5068
      %v5136 = vpop.f32.mrf.mxu0
      %v5137 = vadd.f32 0.0, %v5136
      %v5138 = vpop.f32.mrf.mxu0
      %v5139 = vadd.f32 0.0, %v5138
      %v5140 = vpop.f32.mrf.mxu0
      %v5141 = vadd.f32 0.0, %v5140
      %v5142 = vpop.f32.mrf.mxu0
      %v5143 = vadd.f32 0.0, %v5142
      %5144 = vmatprep.mubr.bf16.mxu0 0
      %5145 = vmatmul.mubr.bf16.gmra.mxu0 %v5071
      %v5146 = vpop.f32.mrf.mxu0
      %v5147 = vadd.f32 0.0, %v5146
      %v5148 = vpop.f32.mrf.mxu0
      %v5149 = vadd.f32 0.0, %v5148
      %v5150 = vpop.f32.mrf.mxu0
      %v5151 = vadd.f32 0.0, %v5150
      %v5152 = vpop.f32.mrf.mxu0
      %v5153 = vadd.f32 0.0, %v5152
      %5154 = vmatprep.mubr.bf16.mxu0 0
      %5155 = vmatmul.mubr.bf16.gmra.mxu0 %v5074
      %v5156 = vpop.f32.mrf.mxu0
      %v5157 = vadd.f32 0.0, %v5156
      %v5158 = vpop.f32.mrf.mxu0
      %v5159 = vadd.f32 0.0, %v5158
      %v5160 = vpop.f32.mrf.mxu0
      %v5161 = vadd.f32 0.0, %v5160
      %v5162 = vpop.f32.mrf.mxu0
      %v5163 = vadd.f32 0.0, %v5162
      %5164 = vmatprep.mubr.bf16.mxu0 0
      %5165 = vmatmul.mubr.bf16.gmra.mxu0 %v5077
      %v5166 = vpop.f32.mrf.mxu0
      %v5167 = vadd.f32 0.0, %v5166
      %v5168 = vpop.f32.mrf.mxu0
      %v5169 = vadd.f32 0.0, %v5168
      %v5170 = vpop.f32.mrf.mxu0
      %v5171 = vadd.f32 0.0, %v5170
      %v5172 = vpop.f32.mrf.mxu0
      %v5173 = vadd.f32 0.0, %v5172
      %5174 = vmatprep.mubr.bf16.mxu0 0
      %5175 = vmatmul.mubr.bf16.gmra.mxu0 %v5080
      %v5176 = vpop.f32.mrf.mxu0
      %v5177 = vadd.f32 0.0, %v5176
      %v5178 = vpop.f32.mrf.mxu0
      %v5179 = vadd.f32 0.0, %v5178
      %v5180 = vpop.f32.mrf.mxu0
      %v5181 = vadd.f32 0.0, %v5180
      %v5182 = vpop.f32.mrf.mxu0
      %v5183 = vadd.f32 0.0, %v5182
      %5184 = vdwg.mxu0
      %5185 = vmatprep.subr.bf16.mxu0 0
      %5186 = vmatpush1.bf16.msra.mxu0 0
      %5187 = vmatprep.subr.bf16.mxu0 %v4968
      %5188 = vmatpush1.bf16.msra.mxu0 %v4967
      %5189 = vmatprep.subr.bf16.mxu0 %v4956
      %5190 = vmatpush1.bf16.msra.mxu0 %v4955
      %5191 = vmatprep.subr.bf16.mxu0 %v4944
      %5192 = vmatpush1.bf16.msra.mxu0 %v4943
      %5193 = vmatprep.subr.bf16.mxu0 %v4932
      %5194 = vmatpush1.bf16.msra.mxu0 %v4931
      %5195 = vmatprep.subr.bf16.mxu0 %v4920
      %5196 = vmatpush1.bf16.msra.mxu0 %v4919
      %5197 = vmatprep.subr.bf16.mxu0 %v4908
      %5198 = vmatpush1.bf16.msra.mxu0 %v4907
      %5199 = vmatprep.subr.bf16.mxu0 %v4896
      %5200 = vmatpush1.bf16.msra.mxu0 %v4895
      %5201 = vmatprep.subr.bf16.mxu0 0
      %5202 = vmatpush2.bf16.msra.mxu0 0
      %5203 = vmatprep.subr.bf16.mxu0 0
      %5204 = vmatpush2.bf16.msra.mxu0 0
      %5205 = vmatprep.subr.bf16.mxu0 0
      %5206 = vmatpush2.bf16.msra.mxu0 0
      %5207 = vmatprep.subr.bf16.mxu0 0
      %5208 = vmatpush2.bf16.msra.mxu0 0
      %5209 = vmatprep.subr.bf16.mxu0 0
      %5210 = vmatpush2.bf16.msra.mxu0 0
      %5211 = vmatprep.subr.bf16.mxu0 0
      %5212 = vmatpush2.bf16.msra.mxu0 0
      %5213 = vmatprep.subr.bf16.mxu0 0
      %5214 = vmatpush2.bf16.msra.mxu0 0
      %5215 = vmatprep.subr.bf16.mxu0 0
      %5216 = vmatpush2.bf16.msra.mxu0 0
      %5217 = vmatprep.mubr.bf16.mxu0 0
      %5218 = vmatmul.mubr.bf16.gmra.mxu0 %v5062
      %v5219 = vpop.f32.mrf.mxu0
      %v5220 = vadd.f32 0.0, %v5219
      %v5221 = vpop.f32.mrf.mxu0
      %v5222 = vadd.f32 0.0, %v5221
      %v5223 = vpop.f32.mrf.mxu0
      %v5224 = vadd.f32 0.0, %v5223
      %v5225 = vpop.f32.mrf.mxu0
      %v5226 = vadd.f32 0.0, %v5225
      %5227 = vmatprep.mubr.bf16.mxu0 0
      %5228 = vmatmul.mubr.bf16.gmra.mxu0 %v5065
      %v5229 = vpop.f32.mrf.mxu0
      %v5230 = vadd.f32 0.0, %v5229
      %v5231 = vpop.f32.mrf.mxu0
      %v5232 = vadd.f32 0.0, %v5231
      %v5233 = vpop.f32.mrf.mxu0
      %v5234 = vadd.f32 0.0, %v5233
      %v5235 = vpop.f32.mrf.mxu0
      %v5236 = vadd.f32 0.0, %v5235
      %5237 = vmatprep.mubr.bf16.mxu0 0
      %5238 = vmatmul.mubr.bf16.gmra.mxu0 %v5068
      %v5239 = vpop.f32.mrf.mxu0
      %v5240 = vadd.f32 0.0, %v5239
      %v5241 = vpop.f32.mrf.mxu0
      %v5242 = vadd.f32 0.0, %v5241
      %v5243 = vpop.f32.mrf.mxu0
      %v5244 = vadd.f32 0.0, %v5243
      %v5245 = vpop.f32.mrf.mxu0
      %v5246 = vadd.f32 0.0, %v5245
      %5247 = vmatprep.mubr.bf16.mxu0 0
      %5248 = vmatmul.mubr.bf16.gmra.mxu0 %v5071
      %v5249 = vpop.f32.mrf.mxu0
      %v5250 = vadd.f32 0.0, %v5249
      %v5251 = vpop.f32.mrf.mxu0
      %v5252 = vadd.f32 0.0, %v5251
      %v5253 = vpop.f32.mrf.mxu0
      %v5254 = vadd.f32 0.0, %v5253
      %v5255 = vpop.f32.mrf.mxu0
      %v5256 = vadd.f32 0.0, %v5255
      %5257 = vmatprep.mubr.bf16.mxu0 0
      %5258 = vmatmul.mubr.bf16.gmra.mxu0 %v5074
      %v5259 = vpop.f32.mrf.mxu0
      %v5260 = vadd.f32 0.0, %v5259
      %v5261 = vpop.f32.mrf.mxu0
      %v5262 = vadd.f32 0.0, %v5261
      %v5263 = vpop.f32.mrf.mxu0
      %v5264 = vadd.f32 0.0, %v5263
      %v5265 = vpop.f32.mrf.mxu0
      %v5266 = vadd.f32 0.0, %v5265
      %5267 = vmatprep.mubr.bf16.mxu0 0
      %5268 = vmatmul.mubr.bf16.gmra.mxu0 %v5077
      %v5269 = vpop.f32.mrf.mxu0
      %v5270 = vadd.f32 0.0, %v5269
      %v5271 = vpop.f32.mrf.mxu0
      %v5272 = vadd.f32 0.0, %v5271
      %v5273 = vpop.f32.mrf.mxu0
      %v5274 = vadd.f32 0.0, %v5273
      %v5275 = vpop.f32.mrf.mxu0
      %v5276 = vadd.f32 0.0, %v5275
      %5277 = vmatprep.mubr.bf16.mxu0 0
      %5278 = vmatmul.mubr.bf16.gmra.mxu0 %v5080
      %v5279 = vpop.f32.mrf.mxu0
      %v5280 = vadd.f32 0.0, %v5279
      %v5281 = vpop.f32.mrf.mxu0
      %v5282 = vadd.f32 0.0, %v5281
      %v5283 = vpop.f32.mrf.mxu0
      %v5284 = vadd.f32 0.0, %v5283
      %v5285 = vpop.f32.mrf.mxu0
      %v5286 = vadd.f32 0.0, %v5285
      %5287 = vdwg.mxu0
      %5288 = vmatprep.subr.bf16.mxu0 0
      %5289 = vmatpush1.bf16.msra.mxu0 0
      %5290 = vmatprep.subr.bf16.mxu0 %v4970
      %5291 = vmatpush1.bf16.msra.mxu0 %v4969
      %5292 = vmatprep.subr.bf16.mxu0 %v4958
      %5293 = vmatpush1.bf16.msra.mxu0 %v4957
      %5294 = vmatprep.subr.bf16.mxu0 %v4946
      %5295 = vmatpush1.bf16.msra.mxu0 %v4945
      %5296 = vmatprep.subr.bf16.mxu0 %v4934
      %5297 = vmatpush1.bf16.msra.mxu0 %v4933
      %5298 = vmatprep.subr.bf16.mxu0 %v4922
      %5299 = vmatpush1.bf16.msra.mxu0 %v4921
      %5300 = vmatprep.subr.bf16.mxu0 %v4910
      %5301 = vmatpush1.bf16.msra.mxu0 %v4909
      %5302 = vmatprep.subr.bf16.mxu0 %v4898
      %5303 = vmatpush1.bf16.msra.mxu0 %v4897
      %5304 = vmatprep.subr.bf16.mxu0 0
      %5305 = vmatpush2.bf16.msra.mxu0 0
      %5306 = vmatprep.subr.bf16.mxu0 0
      %5307 = vmatpush2.bf16.msra.mxu0 0
      %5308 = vmatprep.subr.bf16.mxu0 0
      %5309 = vmatpush2.bf16.msra.mxu0 0
      %5310 = vmatprep.subr.bf16.mxu0 0
      %5311 = vmatpush2.bf16.msra.mxu0 0
      %5312 = vmatprep.subr.bf16.mxu0 0
      %5313 = vmatpush2.bf16.msra.mxu0 0
      %5314 = vmatprep.subr.bf16.mxu0 0
      %5315 = vmatpush2.bf16.msra.mxu0 0
      %5316 = vmatprep.subr.bf16.mxu0 0
      %5317 = vmatpush2.bf16.msra.mxu0 0
      %5318 = vmatprep.subr.bf16.mxu0 0
      %5319 = vmatpush2.bf16.msra.mxu0 0
      %5320 = vmatprep.mubr.bf16.mxu0 0
      %5321 = vmatmul.mubr.bf16.gmra.mxu0 %v5062
      %v5322 = vpop.f32.mrf.mxu0
      %v5323 = vadd.f32 0.0, %v5322
      %v5324 = vpop.f32.mrf.mxu0
      %v5325 = vadd.f32 0.0, %v5324
      %v5326 = vpop.f32.mrf.mxu0
      %v5327 = vadd.f32 0.0, %v5326
      %v5328 = vpop.f32.mrf.mxu0
      %v5329 = vadd.f32 0.0, %v5328
      %5330 = vmatprep.mubr.bf16.mxu0 0
      %5331 = vmatmul.mubr.bf16.gmra.mxu0 %v5065
      %v5332 = vpop.f32.mrf.mxu0
      %v5333 = vadd.f32 0.0, %v5332
      %v5334 = vpop.f32.mrf.mxu0
      %v5335 = vadd.f32 0.0, %v5334
      %v5336 = vpop.f32.mrf.mxu0
      %v5337 = vadd.f32 0.0, %v5336
      %v5338 = vpop.f32.mrf.mxu0
      %v5339 = vadd.f32 0.0, %v5338
      %5340 = vmatprep.mubr.bf16.mxu0 0
      %5341 = vmatmul.mubr.bf16.gmra.mxu0 %v5068
      %v5342 = vpop.f32.mrf.mxu0
      %v5343 = vadd.f32 0.0, %v5342
      %v5344 = vpop.f32.mrf.mxu0
      %v5345 = vadd.f32 0.0, %v5344
      %v5346 = vpop.f32.mrf.mxu0
      %v5347 = vadd.f32 0.0, %v5346
      %v5348 = vpop.f32.mrf.mxu0
      %v5349 = vadd.f32 0.0, %v5348
      %5350 = vmatprep.mubr.bf16.mxu0 0
      %5351 = vmatmul.mubr.bf16.gmra.mxu0 %v5071
      %v5352 = vpop.f32.mrf.mxu0
      %v5353 = vadd.f32 0.0, %v5352
      %v5354 = vpop.f32.mrf.mxu0
      %v5355 = vadd.f32 0.0, %v5354
      %v5356 = vpop.f32.mrf.mxu0
      %v5357 = vadd.f32 0.0, %v5356
      %v5358 = vpop.f32.mrf.mxu0
      %v5359 = vadd.f32 0.0, %v5358
      %5360 = vmatprep.mubr.bf16.mxu0 0
      %5361 = vmatmul.mubr.bf16.gmra.mxu0 %v5074
      %v5362 = vpop.f32.mrf.mxu0
      %v5363 = vadd.f32 0.0, %v5362
      %v5364 = vpop.f32.mrf.mxu0
      %v5365 = vadd.f32 0.0, %v5364
      %v5366 = vpop.f32.mrf.mxu0
      %v5367 = vadd.f32 0.0, %v5366
      %v5368 = vpop.f32.mrf.mxu0
      %v5369 = vadd.f32 0.0, %v5368
      %5370 = vmatprep.mubr.bf16.mxu0 0
      %5371 = vmatmul.mubr.bf16.gmra.mxu0 %v5077
      %v5372 = vpop.f32.mrf.mxu0
      %v5373 = vadd.f32 0.0, %v5372
      %v5374 = vpop.f32.mrf.mxu0
      %v5375 = vadd.f32 0.0, %v5374
      %v5376 = vpop.f32.mrf.mxu0
      %v5377 = vadd.f32 0.0, %v5376
      %v5378 = vpop.f32.mrf.mxu0
      %v5379 = vadd.f32 0.0, %v5378
      %5380 = vmatprep.mubr.bf16.mxu0 0
      %5381 = vmatmul.mubr.bf16.gmra.mxu0 %v5080
      %v5382 = vpop.f32.mrf.mxu0
      %v5383 = vadd.f32 0.0, %v5382
      %v5384 = vpop.f32.mrf.mxu0
      %v5385 = vadd.f32 0.0, %v5384
      %v5386 = vpop.f32.mrf.mxu0
      %v5387 = vadd.f32 0.0, %v5386
      %v5388 = vpop.f32.mrf.mxu0
      %v5389 = vadd.f32 0.0, %v5388
      %5390 = vdwg.mxu0
      %5391 = vmatprep.subr.bf16.mxu0 0
      %5392 = vmatpush1.bf16.msra.mxu0 0
      %5393 = vmatprep.subr.bf16.mxu0 %v4972
      %5394 = vmatpush1.bf16.msra.mxu0 %v4971
      %5395 = vmatprep.subr.bf16.mxu0 %v4960
      %5396 = vmatpush1.bf16.msra.mxu0 %v4959
      %5397 = vmatprep.subr.bf16.mxu0 %v4948
      %5398 = vmatpush1.bf16.msra.mxu0 %v4947
      %5399 = vmatprep.subr.bf16.mxu0 %v4936
      %5400 = vmatpush1.bf16.msra.mxu0 %v4935
      %5401 = vmatprep.subr.bf16.mxu0 %v4924
      %5402 = vmatpush1.bf16.msra.mxu0 %v4923
      %5403 = vmatprep.subr.bf16.mxu0 %v4912
      %5404 = vmatpush1.bf16.msra.mxu0 %v4911
      %5405 = vmatprep.subr.bf16.mxu0 %v4900
      %5406 = vmatpush1.bf16.msra.mxu0 %v4899
      %5407 = vmatprep.subr.bf16.mxu0 0
      %5408 = vmatpush2.bf16.msra.mxu0 0
      %5409 = vmatprep.subr.bf16.mxu0 0
      %5410 = vmatpush2.bf16.msra.mxu0 0
      %5411 = vmatprep.subr.bf16.mxu0 0
      %5412 = vmatpush2.bf16.msra.mxu0 0
      %5413 = vmatprep.subr.bf16.mxu0 0
      %5414 = vmatpush2.bf16.msra.mxu0 0
      %5415 = vmatprep.subr.bf16.mxu0 0
      %5416 = vmatpush2.bf16.msra.mxu0 0
      %5417 = vmatprep.subr.bf16.mxu0 0
      %5418 = vmatpush2.bf16.msra.mxu0 0
      %5419 = vmatprep.subr.bf16.mxu0 0
      %5420 = vmatpush2.bf16.msra.mxu0 0
      %5421 = vmatprep.subr.bf16.mxu0 0
      %5422 = vmatpush2.bf16.msra.mxu0 0
      %5423 = vmatprep.mubr.bf16.mxu0 0
      %5424 = vmatmul.mubr.bf16.gmra.mxu0 %v5062
      %v5425 = vpop.f32.mrf.mxu0
      %v5426 = vadd.f32 0.0, %v5425
      %v5427 = vpop.f32.mrf.mxu0
      %v5428 = vadd.f32 0.0, %v5427
      %v5429 = vpop.f32.mrf.mxu0
      %v5430 = vadd.f32 0.0, %v5429
      %v5431 = vpop.f32.mrf.mxu0
      %v5432 = vadd.f32 0.0, %v5431
      %5433 = vmatprep.mubr.bf16.mxu0 0
      %5434 = vmatmul.mubr.bf16.gmra.mxu0 %v5065
      %v5435 = vpop.f32.mrf.mxu0
      %v5436 = vadd.f32 0.0, %v5435
      %v5437 = vpop.f32.mrf.mxu0
      %v5438 = vadd.f32 0.0, %v5437
      %v5439 = vpop.f32.mrf.mxu0
      %v5440 = vadd.f32 0.0, %v5439
      %v5441 = vpop.f32.mrf.mxu0
      %v5442 = vadd.f32 0.0, %v5441
      %5443 = vmatprep.mubr.bf16.mxu0 0
      %5444 = vmatmul.mubr.bf16.gmra.mxu0 %v5068
      %v5445 = vpop.f32.mrf.mxu0
      %v5446 = vadd.f32 0.0, %v5445
      %v5447 = vpop.f32.mrf.mxu0
      %v5448 = vadd.f32 0.0, %v5447
      %v5449 = vpop.f32.mrf.mxu0
      %v5450 = vadd.f32 0.0, %v5449
      %v5451 = vpop.f32.mrf.mxu0
      %v5452 = vadd.f32 0.0, %v5451
      %5453 = vmatprep.mubr.bf16.mxu0 0
      %5454 = vmatmul.mubr.bf16.gmra.mxu0 %v5071
      %v5455 = vpop.f32.mrf.mxu0
      %v5456 = vadd.f32 0.0, %v5455
      %v5457 = vpop.f32.mrf.mxu0
      %v5458 = vadd.f32 0.0, %v5457
      %v5459 = vpop.f32.mrf.mxu0
      %v5460 = vadd.f32 0.0, %v5459
      %v5461 = vpop.f32.mrf.mxu0
      %v5462 = vadd.f32 0.0, %v5461
      %5463 = vmatprep.mubr.bf16.mxu0 0
      %5464 = vmatmul.mubr.bf16.gmra.mxu0 %v5074
      %v5465 = vpop.f32.mrf.mxu0
      %v5466 = vadd.f32 0.0, %v5465
      %v5467 = vpop.f32.mrf.mxu0
      %v5468 = vadd.f32 0.0, %v5467
      %v5469 = vpop.f32.mrf.mxu0
      %v5470 = vadd.f32 0.0, %v5469
      %v5471 = vpop.f32.mrf.mxu0
      %v5472 = vadd.f32 0.0, %v5471
      %5473 = vmatprep.mubr.bf16.mxu0 0
      %5474 = vmatmul.mubr.bf16.gmra.mxu0 %v5077
      %v5475 = vpop.f32.mrf.mxu0
      %v5476 = vadd.f32 0.0, %v5475
      %v5477 = vpop.f32.mrf.mxu0
      %v5478 = vadd.f32 0.0, %v5477
      %v5479 = vpop.f32.mrf.mxu0
      %v5480 = vadd.f32 0.0, %v5479
      %v5481 = vpop.f32.mrf.mxu0
      %v5482 = vadd.f32 0.0, %v5481
      %5483 = vmatprep.mubr.bf16.mxu0 0
      %5484 = vmatmul.mubr.bf16.gmra.mxu0 %v5080
      %v5485 = vpop.f32.mrf.mxu0
      %v5486 = vadd.f32 0.0, %v5485
      %v5487 = vpop.f32.mrf.mxu0
      %v5488 = vadd.f32 0.0, %v5487
      %v5489 = vpop.f32.mrf.mxu0
      %v5490 = vadd.f32 0.0, %v5489
      %v5491 = vpop.f32.mrf.mxu0
      %v5492 = vadd.f32 0.0, %v5491
      %5493 = vdwg.mxu0
      %5494 = vmatprep.subr.bf16.mxu0 0
      %5495 = vmatpush1.bf16.msra.mxu0 0
      %5496 = vmatprep.subr.bf16.mxu0 %v4974
      %5497 = vmatpush1.bf16.msra.mxu0 %v4973
      %5498 = vmatprep.subr.bf16.mxu0 %v4962
      %5499 = vmatpush1.bf16.msra.mxu0 %v4961
      %5500 = vmatprep.subr.bf16.mxu0 %v4950
      %5501 = vmatpush1.bf16.msra.mxu0 %v4949
      %5502 = vmatprep.subr.bf16.mxu0 %v4938
      %5503 = vmatpush1.bf16.msra.mxu0 %v4937
      %5504 = vmatprep.subr.bf16.mxu0 %v4926
      %5505 = vmatpush1.bf16.msra.mxu0 %v4925
      %5506 = vmatprep.subr.bf16.mxu0 %v4914
      %5507 = vmatpush1.bf16.msra.mxu0 %v4913
      %5508 = vmatprep.subr.bf16.mxu0 %v4902
      %5509 = vmatpush1.bf16.msra.mxu0 %v4901
      %5510 = vmatprep.subr.bf16.mxu0 0
      %5511 = vmatpush2.bf16.msra.mxu0 0
      %5512 = vmatprep.subr.bf16.mxu0 0
      %5513 = vmatpush2.bf16.msra.mxu0 0
      %5514 = vmatprep.subr.bf16.mxu0 0
      %5515 = vmatpush2.bf16.msra.mxu0 0
      %5516 = vmatprep.subr.bf16.mxu0 0
      %5517 = vmatpush2.bf16.msra.mxu0 0
      %5518 = vmatprep.subr.bf16.mxu0 0
      %5519 = vmatpush2.bf16.msra.mxu0 0
      %5520 = vmatprep.subr.bf16.mxu0 0
      %5521 = vmatpush2.bf16.msra.mxu0 0
      %5522 = vmatprep.subr.bf16.mxu0 0
      %5523 = vmatpush2.bf16.msra.mxu0 0
      %5524 = vmatprep.subr.bf16.mxu0 0
      %5525 = vmatpush2.bf16.msra.mxu0 0
      %5526 = vmatprep.mubr.bf16.mxu0 0
      %5527 = vmatmul.mubr.bf16.gmra.mxu0 %v5062
      %v5528 = vpop.f32.mrf.mxu0
      %v5529 = vadd.f32 0.0, %v5528
      %v5530 = vpop.f32.mrf.mxu0
      %v5531 = vadd.f32 0.0, %v5530
      %v5532 = vpop.f32.mrf.mxu0
      %v5533 = vadd.f32 0.0, %v5532
      %v5534 = vpop.f32.mrf.mxu0
      %v5535 = vadd.f32 0.0, %v5534
      %5536 = vmatprep.mubr.bf16.mxu0 0
      %5537 = vmatmul.mubr.bf16.gmra.mxu0 %v5065
      %v5538 = vpop.f32.mrf.mxu0
      %v5539 = vadd.f32 0.0, %v5538
      %v5540 = vpop.f32.mrf.mxu0
      %v5541 = vadd.f32 0.0, %v5540
      %v5542 = vpop.f32.mrf.mxu0
      %v5543 = vadd.f32 0.0, %v5542
      %v5544 = vpop.f32.mrf.mxu0
      %v5545 = vadd.f32 0.0, %v5544
      %5546 = vmatprep.mubr.bf16.mxu0 0
      %5547 = vmatmul.mubr.bf16.gmra.mxu0 %v5068
      %v5548 = vpop.f32.mrf.mxu0
      %v5549 = vadd.f32 0.0, %v5548
      %v5550 = vpop.f32.mrf.mxu0
      %v5551 = vadd.f32 0.0, %v5550
      %v5552 = vpop.f32.mrf.mxu0
      %v5553 = vadd.f32 0.0, %v5552
      %v5554 = vpop.f32.mrf.mxu0
      %v5555 = vadd.f32 0.0, %v5554
      %5556 = vmatprep.mubr.bf16.mxu0 0
      %5557 = vmatmul.mubr.bf16.gmra.mxu0 %v5071
      %v5558 = vpop.f32.mrf.mxu0
      %v5559 = vadd.f32 0.0, %v5558
      %v5560 = vpop.f32.mrf.mxu0
      %v5561 = vadd.f32 0.0, %v5560
      %v5562 = vpop.f32.mrf.mxu0
      %v5563 = vadd.f32 0.0, %v5562
      %v5564 = vpop.f32.mrf.mxu0
      %v5565 = vadd.f32 0.0, %v5564
      %5566 = vmatprep.mubr.bf16.mxu0 0
      %5567 = vmatmul.mubr.bf16.gmra.mxu0 %v5074
      %v5568 = vpop.f32.mrf.mxu0
      %v5569 = vadd.f32 0.0, %v5568
      %v5570 = vpop.f32.mrf.mxu0
      %v5571 = vadd.f32 0.0, %v5570
      %v5572 = vpop.f32.mrf.mxu0
      %v5573 = vadd.f32 0.0, %v5572
      %v5574 = vpop.f32.mrf.mxu0
      %v5575 = vadd.f32 0.0, %v5574
      %5576 = vmatprep.mubr.bf16.mxu0 0
      %5577 = vmatmul.mubr.bf16.gmra.mxu0 %v5077
      %v5578 = vpop.f32.mrf.mxu0
      %v5579 = vadd.f32 0.0, %v5578
      %v5580 = vpop.f32.mrf.mxu0
      %v5581 = vadd.f32 0.0, %v5580
      %v5582 = vpop.f32.mrf.mxu0
      %v5583 = vadd.f32 0.0, %v5582
      %v5584 = vpop.f32.mrf.mxu0
      %v5585 = vadd.f32 0.0, %v5584
      %5586 = vmatprep.mubr.bf16.mxu0 0
      %5587 = vmatmul.mubr.bf16.gmra.mxu0 %v5080
      %v5588 = vpop.f32.mrf.mxu0
      %v5589 = vadd.f32 0.0, %v5588
      %v5590 = vpop.f32.mrf.mxu0
      %v5591 = vadd.f32 0.0, %v5590
      %v5592 = vpop.f32.mrf.mxu0
      %v5593 = vadd.f32 0.0, %v5592
      %v5594 = vpop.f32.mrf.mxu0
      %v5595 = vadd.f32 0.0, %v5594
      %5596 = vdwg.mxu0
      %5597 = vmatprep.subr.bf16.mxu0 0
      %5598 = vmatpush1.bf16.msra.mxu0 0
      %5599 = vmatprep.subr.bf16.mxu0 %v4976
      %5600 = vmatpush1.bf16.msra.mxu0 %v4975
      %5601 = vmatprep.subr.bf16.mxu0 %v4964
      %5602 = vmatpush1.bf16.msra.mxu0 %v4963
      %5603 = vmatprep.subr.bf16.mxu0 %v4952
      %5604 = vmatpush1.bf16.msra.mxu0 %v4951
      %5605 = vmatprep.subr.bf16.mxu0 %v4940
      %5606 = vmatpush1.bf16.msra.mxu0 %v4939
      %5607 = vmatprep.subr.bf16.mxu0 %v4928
      %5608 = vmatpush1.bf16.msra.mxu0 %v4927
      %5609 = vmatprep.subr.bf16.mxu0 %v4916
      %5610 = vmatpush1.bf16.msra.mxu0 %v4915
      %5611 = vmatprep.subr.bf16.mxu0 %v4904
      %5612 = vmatpush1.bf16.msra.mxu0 %v4903
      %5613 = vmatprep.subr.bf16.mxu0 0
      %5614 = vmatpush2.bf16.msra.mxu0 0
      %5615 = vmatprep.subr.bf16.mxu0 0
      %5616 = vmatpush2.bf16.msra.mxu0 0
      %5617 = vmatprep.subr.bf16.mxu0 0
      %5618 = vmatpush2.bf16.msra.mxu0 0
      %5619 = vmatprep.subr.bf16.mxu0 0
      %5620 = vmatpush2.bf16.msra.mxu0 0
      %5621 = vmatprep.subr.bf16.mxu0 0
      %5622 = vmatpush2.bf16.msra.mxu0 0
      %5623 = vmatprep.subr.bf16.mxu0 0
      %5624 = vmatpush2.bf16.msra.mxu0 0
      %5625 = vmatprep.subr.bf16.mxu0 0
      %5626 = vmatpush2.bf16.msra.mxu0 0
      %5627 = vmatprep.subr.bf16.mxu0 0
      %5628 = vmatpush2.bf16.msra.mxu0 0
      %5629 = vmatprep.mubr.bf16.mxu0 0
      %5630 = vmatmul.mubr.bf16.gmra.mxu0 %v5062
      %v5631 = vpop.f32.mrf.mxu0
      %v5632 = vadd.f32 0.0, %v5631
      %v5633 = vpop.f32.mrf.mxu0
      %v5634 = vadd.f32 0.0, %v5633
      %v5635 = vpop.f32.mrf.mxu0
      %v5636 = vadd.f32 0.0, %v5635
      %v5637 = vpop.f32.mrf.mxu0
      %v5638 = vadd.f32 0.0, %v5637
      %5639 = vmatprep.mubr.bf16.mxu0 0
      %5640 = vmatmul.mubr.bf16.gmra.mxu0 %v5065
      %v5641 = vpop.f32.mrf.mxu0
      %v5642 = vadd.f32 0.0, %v5641
      %v5643 = vpop.f32.mrf.mxu0
      %v5644 = vadd.f32 0.0, %v5643
      %v5645 = vpop.f32.mrf.mxu0
      %v5646 = vadd.f32 0.0, %v5645
      %v5647 = vpop.f32.mrf.mxu0
      %v5648 = vadd.f32 0.0, %v5647
      %5649 = vmatprep.mubr.bf16.mxu0 0
      %5650 = vmatmul.mubr.bf16.gmra.mxu0 %v5068
      %v5651 = vpop.f32.mrf.mxu0
      %v5652 = vadd.f32 0.0, %v5651
      %v5653 = vpop.f32.mrf.mxu0
      %v5654 = vadd.f32 0.0, %v5653
      %v5655 = vpop.f32.mrf.mxu0
      %v5656 = vadd.f32 0.0, %v5655
      %v5657 = vpop.f32.mrf.mxu0
      %v5658 = vadd.f32 0.0, %v5657
      %5659 = vmatprep.mubr.bf16.mxu0 0
      %5660 = vmatmul.mubr.bf16.gmra.mxu0 %v5071
      %v5661 = vpop.f32.mrf.mxu0
      %v5662 = vadd.f32 0.0, %v5661
      %v5663 = vpop.f32.mrf.mxu0
      %v5664 = vadd.f32 0.0, %v5663
      %v5665 = vpop.f32.mrf.mxu0
      %v5666 = vadd.f32 0.0, %v5665
      %v5667 = vpop.f32.mrf.mxu0
      %v5668 = vadd.f32 0.0, %v5667
      %5669 = vmatprep.mubr.bf16.mxu0 0
      %5670 = vmatmul.mubr.bf16.gmra.mxu0 %v5074
      %v5671 = vpop.f32.mrf.mxu0
      %v5672 = vadd.f32 0.0, %v5671
      %v5673 = vpop.f32.mrf.mxu0
      %v5674 = vadd.f32 0.0, %v5673
      %v5675 = vpop.f32.mrf.mxu0
      %v5676 = vadd.f32 0.0, %v5675
      %v5677 = vpop.f32.mrf.mxu0
      %v5678 = vadd.f32 0.0, %v5677
      %5679 = vmatprep.mubr.bf16.mxu0 0
      %5680 = vmatmul.mubr.bf16.gmra.mxu0 %v5077
      %v5681 = vpop.f32.mrf.mxu0
      %v5682 = vadd.f32 0.0, %v5681
      %v5683 = vpop.f32.mrf.mxu0
      %v5684 = vadd.f32 0.0, %v5683
      %v5685 = vpop.f32.mrf.mxu0
      %v5686 = vadd.f32 0.0, %v5685
      %v5687 = vpop.f32.mrf.mxu0
      %v5688 = vadd.f32 0.0, %v5687
      %5689 = vmatprep.mubr.bf16.mxu0 0
      %5690 = vmatmul.mubr.bf16.gmra.mxu0 %v5080
      %v5691 = vpop.f32.mrf.mxu0
      %v5692 = vadd.f32 0.0, %v5691
      %v5693 = vpop.f32.mrf.mxu0
      %v5694 = vadd.f32 0.0, %v5693
      %v5695 = vpop.f32.mrf.mxu0
      %v5696 = vadd.f32 0.0, %v5695
      %v5697 = vpop.f32.mrf.mxu0
      %v5698 = vadd.f32 0.0, %v5697
      %5699 = vdwg.mxu0
      %5700 = vst [vmem:[#allocation4] sm:$0xff] %v5117
      %5701 = vst [vmem:[#allocation4 + $0x8] sm:$0xff] %v5119
      %5702 = vst [vmem:[#allocation4 + $0x10] sm:$0xff] %v5220
      %5703 = vst [vmem:[#allocation4 + $0x18] sm:$0xff] %v5222
      %5704 = vst [vmem:[#allocation4 + $0x20] sm:$0xff] %v5323
      %5705 = vst [vmem:[#allocation4 + $0x28] sm:$0xff] %v5325
      %5706 = vst [vmem:[#allocation4 + $0x30] sm:$0xff] %v5426
      %5707 = vst [vmem:[#allocation4 + $0x38] sm:$0xff] %v5428
      %5708 = vst [vmem:[#allocation4 + $0x40] sm:$0xff] %v5529
      %5709 = vst [vmem:[#allocation4 + $0x48] sm:$0xff] %v5531
      %5710 = vst [vmem:[#allocation4 + $0x50] sm:$0xff] %v5632
      %5711 = vst [vmem:[#allocation4 + $0x58] sm:$0xff] %v5634
      %5712 = vst [vmem:[#allocation4 + $0x60] sm:$0xff] %v5121
      %5713 = vst [vmem:[#allocation4 + $0x68] sm:$0xff] %v5123
      %5714 = vst [vmem:[#allocation4 + $0x70] sm:$0xff] %v5224
      %5715 = vst [vmem:[#allocation4 + $0x78] sm:$0xff] %v5226
      %5716 = vst [vmem:[#allocation4 + $0x80] sm:$0xff] %v5327
      %5717 = vst [vmem:[#allocation4 + $0x88] sm:$0xff] %v5329
      %5718 = vst [vmem:[#allocation4 + $0x90] sm:$0xff] %v5430
      %5719 = vst [vmem:[#allocation4 + $0x98] sm:$0xff] %v5432
      %5720 = vst [vmem:[#allocation4 + $0xa0] sm:$0xff] %v5533
      %5721 = vst [vmem:[#allocation4 + $0xa8] sm:$0xff] %v5535
      %5722 = vst [vmem:[#allocation4 + $0xb0] sm:$0xff] %v5636
      %5723 = vst [vmem:[#allocation4 + $0xb8] sm:$0xff] %v5638
      %5724 = vst [vmem:[#allocation4 + $0xc0] sm:$0xff] %v5127
      %5725 = vst [vmem:[#allocation4 + $0xc8] sm:$0xff] %v5129
      %5726 = vst [vmem:[#allocation4 + $0xd0] sm:$0xff] %v5230
      %5727 = vst [vmem:[#allocation4 + $0xd8] sm:$0xff] %v5232
      %5728 = vst [vmem:[#allocation4 + $0xe0] sm:$0xff] %v5333
      %5729 = vst [vmem:[#allocation4 + $0xe8] sm:$0xff] %v5335
      %5730 = vst [vmem:[#allocation4 + $0xf0] sm:$0xff] %v5436
      %5731 = vst [vmem:[#allocation4 + $0xf8] sm:$0xff] %v5438
      %5732 = vst [vmem:[#allocation4 + $0x100] sm:$0xff] %v5539
      %5733 = vst [vmem:[#allocation4 + $0x108] sm:$0xff] %v5541
      %5734 = vst [vmem:[#allocation4 + $0x110] sm:$0xff] %v5642
      %5735 = vst [vmem:[#allocation4 + $0x118] sm:$0xff] %v5644
      %5736 = vst [vmem:[#allocation4 + $0x120] sm:$0xff] %v5131
      %5737 = vst [vmem:[#allocation4 + $0x128] sm:$0xff] %v5133
      %5738 = vst [vmem:[#allocation4 + $0x130] sm:$0xff] %v5234
      %5739 = vst [vmem:[#allocation4 + $0x138] sm:$0xff] %v5236
      %5740 = vst [vmem:[#allocation4 + $0x140] sm:$0xff] %v5337
      %5741 = vst [vmem:[#allocation4 + $0x148] sm:$0xff] %v5339
      %5742 = vst [vmem:[#allocation4 + $0x150] sm:$0xff] %v5440
      %5743 = vst [vmem:[#allocation4 + $0x158] sm:$0xff] %v5442
      %5744 = vst [vmem:[#allocation4 + $0x160] sm:$0xff] %v5543
      %5745 = vst [vmem:[#allocation4 + $0x168] sm:$0xff] %v5545
      %5746 = vst [vmem:[#allocation4 + $0x170] sm:$0xff] %v5646
      %5747 = vst [vmem:[#allocation4 + $0x178] sm:$0xff] %v5648
      %5748 = vst [vmem:[#allocation4 + $0x180] sm:$0xff] %v5137
      %5749 = vst [vmem:[#allocation4 + $0x188] sm:$0xff] %v5139
      %5750 = vst [vmem:[#allocation4 + $0x190] sm:$0xff] %v5240
      %5751 = vst [vmem:[#allocation4 + $0x198] sm:$0xff] %v5242
      %5752 = vst [vmem:[#allocation4 + $0x1a0] sm:$0xff] %v5343
      %5753 = vst [vmem:[#allocation4 + $0x1a8] sm:$0xff] %v5345
      %5754 = vst [vmem:[#allocation4 + $0x1b0] sm:$0xff] %v5446
      %5755 = vst [vmem:[#allocation4 + $0x1b8] sm:$0xff] %v5448
      %5756 = vst [vmem:[#allocation4 + $0x1c0] sm:$0xff] %v5549
      %5757 = vst [vmem:[#allocation4 + $0x1c8] sm:$0xff] %v5551
      %5758 = vst [vmem:[#allocation4 + $0x1d0] sm:$0xff] %v5652
      %5759 = vst [vmem:[#allocation4 + $0x1d8] sm:$0xff] %v5654
      %5760 = vst [vmem:[#allocation4 + $0x1e0] sm:$0xff] %v5141
      %5761 = vst [vmem:[#allocation4 + $0x1e8] sm:$0xff] %v5143
      %5762 = vst [vmem:[#allocation4 + $0x1f0] sm:$0xff] %v5244
      %5763 = vst [vmem:[#allocation4 + $0x1f8] sm:$0xff] %v5246
      %5764 = vst [vmem:[#allocation4 + $0x200] sm:$0xff] %v5347
      %5765 = vst [vmem:[#allocation4 + $0x208] sm:$0xff] %v5349
      %5766 = vst [vmem:[#allocation4 + $0x210] sm:$0xff] %v5450
      %5767 = vst [vmem:[#allocation4 + $0x218] sm:$0xff] %v5452
      %5768 = vst [vmem:[#allocation4 + $0x220] sm:$0xff] %v5553
      %5769 = vst [vmem:[#allocation4 + $0x228] sm:$0xff] %v5555
      %5770 = vst [vmem:[#allocation4 + $0x230] sm:$0xff] %v5656
      %5771 = vst [vmem:[#allocation4 + $0x238] sm:$0xff] %v5658
      %5772 = vst [vmem:[#allocation4 + $0x240] sm:$0xff] %v5147
      %5773 = vst [vmem:[#allocation4 + $0x248] sm:$0xff] %v5149
      %5774 = vst [vmem:[#allocation4 + $0x250] sm:$0xff] %v5250
      %5775 = vst [vmem:[#allocation4 + $0x258] sm:$0xff] %v5252
      %5776 = vst [vmem:[#allocation4 + $0x260] sm:$0xff] %v5353
      %5777 = vst [vmem:[#allocation4 + $0x268] sm:$0xff] %v5355
      %5778 = vst [vmem:[#allocation4 + $0x270] sm:$0xff] %v5456
      %5779 = vst [vmem:[#allocation4 + $0x278] sm:$0xff] %v5458
      %5780 = vst [vmem:[#allocation4 + $0x280] sm:$0xff] %v5559
      %5781 = vst [vmem:[#allocation4 + $0x288] sm:$0xff] %v5561
      %5782 = vst [vmem:[#allocation4 + $0x290] sm:$0xff] %v5662
      %5783 = vst [vmem:[#allocation4 + $0x298] sm:$0xff] %v5664
      %5784 = vst [vmem:[#allocation4 + $0x2a0] sm:$0xff] %v5151
      %5785 = vst [vmem:[#allocation4 + $0x2a8] sm:$0xff] %v5153
      %5786 = vst [vmem:[#allocation4 + $0x2b0] sm:$0xff] %v5254
      %5787 = vst [vmem:[#allocation4 + $0x2b8] sm:$0xff] %v5256
      %5788 = vst [vmem:[#allocation4 + $0x2c0] sm:$0xff] %v5357
      %5789 = vst [vmem:[#allocation4 + $0x2c8] sm:$0xff] %v5359
      %5790 = vst [vmem:[#allocation4 + $0x2d0] sm:$0xff] %v5460
      %5791 = vst [vmem:[#allocation4 + $0x2d8] sm:$0xff] %v5462
      %5792 = vst [vmem:[#allocation4 + $0x2e0] sm:$0xff] %v5563
      %5793 = vst [vmem:[#allocation4 + $0x2e8] sm:$0xff] %v5565
      %5794 = vst [vmem:[#allocation4 + $0x2f0] sm:$0xff] %v5666
      %5795 = vst [vmem:[#allocation4 + $0x2f8] sm:$0xff] %v5668
      %5796 = vst [vmem:[#allocation4 + $0x300] sm:$0xff] %v5157
      %5797 = vst [vmem:[#allocation4 + $0x308] sm:$0xff] %v5159
      %5798 = vst [vmem:[#allocation4 + $0x310] sm:$0xff] %v5260
      %5799 = vst [vmem:[#allocation4 + $0x318] sm:$0xff] %v5262
      %5800 = vst [vmem:[#allocation4 + $0x320] sm:$0xff] %v5363
      %5801 = vst [vmem:[#allocation4 + $0x328] sm:$0xff] %v5365
      %5802 = vst [vmem:[#allocation4 + $0x330] sm:$0xff] %v5466
      %5803 = vst [vmem:[#allocation4 + $0x338] sm:$0xff] %v5468
      %5804 = vst [vmem:[#allocation4 + $0x340] sm:$0xff] %v5569
      %5805 = vst [vmem:[#allocation4 + $0x348] sm:$0xff] %v5571
      %5806 = vst [vmem:[#allocation4 + $0x350] sm:$0xff] %v5672
      %5807 = vst [vmem:[#allocation4 + $0x358] sm:$0xff] %v5674
      %5808 = vst [vmem:[#allocation4 + $0x360] sm:$0xff] %v5161
      %5809 = vst [vmem:[#allocation4 + $0x368] sm:$0xff] %v5163
      %5810 = vst [vmem:[#allocation4 + $0x370] sm:$0xff] %v5264
      %5811 = vst [vmem:[#allocation4 + $0x378] sm:$0xff] %v5266
      %5812 = vst [vmem:[#allocation4 + $0x380] sm:$0xff] %v5367
      %5813 = vst [vmem:[#allocation4 + $0x388] sm:$0xff] %v5369
      %5814 = vst [vmem:[#allocation4 + $0x390] sm:$0xff] %v5470
      %5815 = vst [vmem:[#allocation4 + $0x398] sm:$0xff] %v5472
      %5816 = vst [vmem:[#allocation4 + $0x3a0] sm:$0xff] %v5573
      %5817 = vst [vmem:[#allocation4 + $0x3a8] sm:$0xff] %v5575
      %5818 = vst [vmem:[#allocation4 + $0x3b0] sm:$0xff] %v5676
      %5819 = vst [vmem:[#allocation4 + $0x3b8] sm:$0xff] %v5678
      %5820 = vst [vmem:[#allocation4 + $0x3c0] sm:$0xff] %v5167
      %5821 = vst [vmem:[#allocation4 + $0x3c8] sm:$0xff] %v5169
      %5822 = vst [vmem:[#allocation4 + $0x3d0] sm:$0xff] %v5270
      %5823 = vst [vmem:[#allocation4 + $0x3d8] sm:$0xff] %v5272
      %5824 = vst [vmem:[#allocation4 + $0x3e0] sm:$0xff] %v5373
      %5825 = vst [vmem:[#allocation4 + $0x3e8] sm:$0xff] %v5375
      %5826 = vst [vmem:[#allocation4 + $0x3f0] sm:$0xff] %v5476
      %5827 = vst [vmem:[#allocation4 + $0x3f8] sm:$0xff] %v5478
      %5828 = vst [vmem:[#allocation4 + $0x400] sm:$0xff] %v5579
      %5829 = vst [vmem:[#allocation4 + $0x408] sm:$0xff] %v5581
      %5830 = vst [vmem:[#allocation4 + $0x410] sm:$0xff] %v5682
      %5831 = vst [vmem:[#allocation4 + $0x418] sm:$0xff] %v5684
      %5832 = vst [vmem:[#allocation4 + $0x420] sm:$0xff] %v5171
      %5833 = vst [vmem:[#allocation4 + $0x428] sm:$0xff] %v5173
      %5834 = vst [vmem:[#allocation4 + $0x430] sm:$0xff] %v5274
      %5835 = vst [vmem:[#allocation4 + $0x438] sm:$0xff] %v5276
      %5836 = vst [vmem:[#allocation4 + $0x440] sm:$0xff] %v5377
      %5837 = vst [vmem:[#allocation4 + $0x448] sm:$0xff] %v5379
      %5838 = vst [vmem:[#allocation4 + $0x450] sm:$0xff] %v5480
      %5839 = vst [vmem:[#allocation4 + $0x458] sm:$0xff] %v5482
      %5840 = vst [vmem:[#allocation4 + $0x460] sm:$0xff] %v5583
      %5841 = vst [vmem:[#allocation4 + $0x468] sm:$0xff] %v5585
      %5842 = vst [vmem:[#allocation4 + $0x470] sm:$0xff] %v5686
      %5843 = vst [vmem:[#allocation4 + $0x478] sm:$0xff] %v5688
      %5844 = vst [vmem:[#allocation4 + $0x480] sm:$0xff] %v5177
      %5845 = vst [vmem:[#allocation4 + $0x488] sm:$0xff] %v5179
      %5846 = vst [vmem:[#allocation4 + $0x490] sm:$0xff] %v5280
      %5847 = vst [vmem:[#allocation4 + $0x498] sm:$0xff] %v5282
      %5848 = vst [vmem:[#allocation4 + $0x4a0] sm:$0xff] %v5383
      %5849 = vst [vmem:[#allocation4 + $0x4a8] sm:$0xff] %v5385
      %5850 = vst [vmem:[#allocation4 + $0x4b0] sm:$0xff] %v5486
      %5851 = vst [vmem:[#allocation4 + $0x4b8] sm:$0xff] %v5488
      %5852 = vst [vmem:[#allocation4 + $0x4c0] sm:$0xff] %v5589
      %5853 = vst [vmem:[#allocation4 + $0x4c8] sm:$0xff] %v5591
      %5854 = vst [vmem:[#allocation4 + $0x4d0] sm:$0xff] %v5692
      %5855 = vst [vmem:[#allocation4 + $0x4d8] sm:$0xff] %v5694
      %5856 = vst [vmem:[#allocation4 + $0x4e0] sm:$0xff] %v5181
      %5857 = vst [vmem:[#allocation4 + $0x4e8] sm:$0xff] %v5183
      %5858 = vst [vmem:[#allocation4 + $0x4f0] sm:$0xff] %v5284
      %5859 = vst [vmem:[#allocation4 + $0x4f8] sm:$0xff] %v5286
      %5860 = vst [vmem:[#allocation4 + $0x500] sm:$0xff] %v5387
      %5861 = vst [vmem:[#allocation4 + $0x508] sm:$0xff] %v5389
      %5862 = vst [vmem:[#allocation4 + $0x510] sm:$0xff] %v5490
      %5863 = vst [vmem:[#allocation4 + $0x518] sm:$0xff] %v5492
      %5864 = vst [vmem:[#allocation4 + $0x520] sm:$0xff] %v5593
      %5865 = vst [vmem:[#allocation4 + $0x528] sm:$0xff] %v5595
      %5866 = vst [vmem:[#allocation4 + $0x530] sm:$0xff] %v5696
      %5867 = vst [vmem:[#allocation4 + $0x538] sm:$0xff] %v5698
      %v5868 = vld [vmem:[#allocation4] sm:$0xff]
      %v5869 = vld [vmem:[#allocation4 + $0x8] sm:$0xff]
      %v5870 = vld [vmem:[#allocation4 + $0x10] sm:$0xff]
      %v5871 = vld [vmem:[#allocation4 + $0x18] sm:$0xff]
      %v5872 = vld [vmem:[#allocation4 + $0x20] sm:$0xff]
      %v5873 = vld [vmem:[#allocation4 + $0x28] sm:$0xff]
      %v5874 = vld [vmem:[#allocation4 + $0x30] sm:$0xff]
      %v5875 = vld [vmem:[#allocation4 + $0x38] sm:$0xff]
      %v5876 = vld [vmem:[#allocation4 + $0x40] sm:$0xff]
      %v5877 = vld [vmem:[#allocation4 + $0x48] sm:$0xff]
      %v5878 = vld [vmem:[#allocation4 + $0x60] sm:$0xff]
      %v5879 = vld [vmem:[#allocation4 + $0x68] sm:$0xff]
      %v5880 = vld [vmem:[#allocation4 + $0x70] sm:$0xff]
      %v5881 = vld [vmem:[#allocation4 + $0x78] sm:$0xff]
      %v5882 = vld [vmem:[#allocation4 + $0x80] sm:$0xff]
      %v5883 = vld [vmem:[#allocation4 + $0x88] sm:$0xff]
      %v5884 = vld [vmem:[#allocation4 + $0x90] sm:$0xff]
      %v5885 = vld [vmem:[#allocation4 + $0x98] sm:$0xff]
      %v5886 = vld [vmem:[#allocation4 + $0xa0] sm:$0xff]
      %v5887 = vld [vmem:[#allocation4 + $0xa8] sm:$0xff]
      %v5888 = vld [vmem:[#allocation4 + $0xc0] sm:$0xff]
      %v5889 = vld [vmem:[#allocation4 + $0xc8] sm:$0xff]
      %v5890 = vld [vmem:[#allocation4 + $0xd0] sm:$0xff]
      %v5891 = vld [vmem:[#allocation4 + $0xd8] sm:$0xff]
      %v5892 = vld [vmem:[#allocation4 + $0xe0] sm:$0xff]
      %v5893 = vld [vmem:[#allocation4 + $0xe8] sm:$0xff]
      %v5894 = vld [vmem:[#allocation4 + $0xf0] sm:$0xff]
      %v5895 = vld [vmem:[#allocation4 + $0xf8] sm:$0xff]
      %v5896 = vld [vmem:[#allocation4 + $0x100] sm:$0xff]
      %v5897 = vld [vmem:[#allocation4 + $0x108] sm:$0xff]
      %v5898 = vld [vmem:[#allocation4 + $0x120] sm:$0xff]
      %v5899 = vld [vmem:[#allocation4 + $0x128] sm:$0xff]
      %v5900 = vld [vmem:[#allocation4 + $0x130] sm:$0xff]
      %v5901 = vld [vmem:[#allocation4 + $0x138] sm:$0xff]
      %v5902 = vld [vmem:[#allocation4 + $0x140] sm:$0xff]
      %v5903 = vld [vmem:[#allocation4 + $0x148] sm:$0xff]
      %v5904 = vld [vmem:[#allocation4 + $0x150] sm:$0xff]
      %v5905 = vld [vmem:[#allocation4 + $0x158] sm:$0xff]
      %v5906 = vld [vmem:[#allocation4 + $0x160] sm:$0xff]
      %v5907 = vld [vmem:[#allocation4 + $0x168] sm:$0xff]
      %5928 = vrot.lane.b32.xlu0 %v5888, 90
      %v5929 = vpop.permute.xlu0 %5928
      %5930 = vrot.lane.b32.xlu0 %v5889, 90
      %v5931 = vpop.permute.xlu0 %5930
      %5932 = vrot.lane.b32.xlu0 %v5890, 90
      %v5933 = vpop.permute.xlu0 %5932
      %5934 = vrot.lane.b32.xlu0 %v5891, 90
      %v5935 = vpop.permute.xlu0 %5934
      %5936 = vrot.lane.b32.xlu0 %v5892, 90
      %v5937 = vpop.permute.xlu0 %5936
      %5938 = vrot.lane.b32.xlu0 %v5893, 90
      %v5939 = vpop.permute.xlu0 %5938
      %5940 = vrot.lane.b32.xlu0 %v5894, 90
      %v5941 = vpop.permute.xlu0 %5940
      %5942 = vrot.lane.b32.xlu0 %v5895, 90
      %v5943 = vpop.permute.xlu0 %5942
      %5944 = vrot.lane.b32.xlu0 %v5896, 90
      %v5945 = vpop.permute.xlu0 %5944
      %5946 = vrot.lane.b32.xlu0 %v5897, 90
      %v5947 = vpop.permute.xlu0 %5946
      %5948 = vrot.lane.b32.xlu0 %v5898, 90
      %v5949 = vpop.permute.xlu0 %5948
      %5950 = vrot.lane.b32.xlu0 %v5899, 90
      %v5951 = vpop.permute.xlu0 %5950
      %5952 = vrot.lane.b32.xlu0 %v5900, 90
      %v5953 = vpop.permute.xlu0 %5952
      %5954 = vrot.lane.b32.xlu0 %v5901, 90
      %v5955 = vpop.permute.xlu0 %5954
      %5956 = vrot.lane.b32.xlu0 %v5902, 90
      %v5957 = vpop.permute.xlu0 %5956
      %5958 = vrot.lane.b32.xlu0 %v5903, 90
      %v5959 = vpop.permute.xlu0 %5958
      %5960 = vrot.lane.b32.xlu0 %v5904, 90
      %v5961 = vpop.permute.xlu0 %5960
      %5962 = vrot.lane.b32.xlu0 %v5905, 90
      %v5963 = vpop.permute.xlu0 %5962
      %5964 = vrot.lane.b32.xlu0 %v5906, 90
      %v5965 = vpop.permute.xlu0 %5964
      %5966 = vrot.lane.b32.xlu0 %v5907, 90
      %v5967 = vpop.permute.xlu0 %5966
      %v5968 = vsel %vm2723, %v5929, %v5931
      %v5969 = vsel %vm2723, %v5931, %v5933
      %v5970 = vsel %vm2723, %v5933, %v5935
      %v5971 = vsel %vm2723, %v5935, %v5937
      %v5972 = vsel %vm2723, %v5937, %v5939
      %v5973 = vsel %vm2723, %v5939, %v5941
      %v5974 = vsel %vm2723, %v5941, %v5943
      %v5975 = vsel %vm2723, %v5943, %v5945
      %v5976 = vsel %vm2723, %v5945, %v5947
      %v5977 = vsel %vm2723, %v5949, %v5951
      %v5978 = vsel %vm2723, %v5951, %v5953
      %v5979 = vsel %vm2723, %v5953, %v5955
      %v5980 = vsel %vm2723, %v5955, %v5957
      %v5981 = vsel %vm2723, %v5957, %v5959
      %v5982 = vsel %vm2723, %v5959, %v5961
      %v5983 = vsel %vm2723, %v5961, %v5963
      %v5984 = vsel %vm2723, %v5963, %v5965
      %v5985 = vsel %vm2723, %v5965, %v5967
      %v6006 = vadd.f32 %v5868, %v5968
      %v6007 = vadd.f32 %v5869, %v5969
      %v6008 = vadd.f32 %v5870, %v5970
      %v6009 = vadd.f32 %v5871, %v5971
      %v6010 = vadd.f32 %v5872, %v5972
      %v6011 = vadd.f32 %v5873, %v5973
      %v6012 = vadd.f32 %v5874, %v5974
      %v6013 = vadd.f32 %v5875, %v5975
      %v6014 = vadd.f32 %v5876, %v5976
      %v6015 = vadd.f32 %v5877, %v5947
      %v6016 = vadd.f32 %v5878, %v5977
      %v6017 = vadd.f32 %v5879, %v5978
      %v6018 = vadd.f32 %v5880, %v5979
      %v6019 = vadd.f32 %v5881, %v5980
      %v6020 = vadd.f32 %v5882, %v5981
      %v6021 = vadd.f32 %v5883, %v5982
      %v6022 = vadd.f32 %v5884, %v5983
      %v6023 = vadd.f32 %v5885, %v5984
      %v6024 = vadd.f32 %v5886, %v5985
      %v6025 = vadd.f32 %v5887, %v5967
      %v6026 = vld [vmem:[#allocation4 + $0x180] sm:$0xff]
      %v6027 = vld [vmem:[#allocation4 + $0x188] sm:$0xff]
      %v6028 = vld [vmem:[#allocation4 + $0x190] sm:$0xff]
      %v6029 = vld [vmem:[#allocation4 + $0x198] sm:$0xff]
      %v6030 = vld [vmem:[#allocation4 + $0x1a0] sm:$0xff]
      %v6031 = vld [vmem:[#allocation4 + $0x1a8] sm:$0xff]
      %v6032 = vld [vmem:[#allocation4 + $0x1b0] sm:$0xff]
      %v6033 = vld [vmem:[#allocation4 + $0x1b8] sm:$0xff]
      %v6034 = vld [vmem:[#allocation4 + $0x1c0] sm:$0xff]
      %v6035 = vld [vmem:[#allocation4 + $0x1c8] sm:$0xff]
      %v6036 = vld [vmem:[#allocation4 + $0x1d0] sm:$0xff]
      %v6037 = vld [vmem:[#allocation4 + $0x1e0] sm:$0xff]
      %v6038 = vld [vmem:[#allocation4 + $0x1e8] sm:$0xff]
      %v6039 = vld [vmem:[#allocation4 + $0x1f0] sm:$0xff]
      %v6040 = vld [vmem:[#allocation4 + $0x1f8] sm:$0xff]
      %v6041 = vld [vmem:[#allocation4 + $0x200] sm:$0xff]
      %v6042 = vld [vmem:[#allocation4 + $0x208] sm:$0xff]
      %v6043 = vld [vmem:[#allocation4 + $0x210] sm:$0xff]
      %v6044 = vld [vmem:[#allocation4 + $0x218] sm:$0xff]
      %v6045 = vld [vmem:[#allocation4 + $0x220] sm:$0xff]
      %v6046 = vld [vmem:[#allocation4 + $0x228] sm:$0xff]
      %v6047 = vld [vmem:[#allocation4 + $0x230] sm:$0xff]
      %6070 = vrot.lane.b32.xlu0 %v6026, 52
      %v6071 = vpop.permute.xlu0 %6070
      %6072 = vrot.lane.b32.xlu0 %v6027, 52
      %v6073 = vpop.permute.xlu0 %6072
      %6074 = vrot.lane.b32.xlu0 %v6028, 52
      %v6075 = vpop.permute.xlu0 %6074
      %6076 = vrot.lane.b32.xlu0 %v6029, 52
      %v6077 = vpop.permute.xlu0 %6076
      %6078 = vrot.lane.b32.xlu0 %v6030, 52
      %v6079 = vpop.permute.xlu0 %6078
      %6080 = vrot.lane.b32.xlu0 %v6031, 52
      %v6081 = vpop.permute.xlu0 %6080
      %6082 = vrot.lane.b32.xlu0 %v6032, 52
      %v6083 = vpop.permute.xlu0 %6082
      %6084 = vrot.lane.b32.xlu0 %v6033, 52
      %v6085 = vpop.permute.xlu0 %6084
      %6086 = vrot.lane.b32.xlu0 %v6034, 52
      %v6087 = vpop.permute.xlu0 %6086
      %6088 = vrot.lane.b32.xlu0 %v6035, 52
      %v6089 = vpop.permute.xlu0 %6088
      %6090 = vrot.lane.b32.xlu0 %v6036, 52
      %v6091 = vpop.permute.xlu0 %6090
      %6092 = vrot.lane.b32.xlu0 %v6037, 52
      %v6093 = vpop.permute.xlu0 %6092
      %6094 = vrot.lane.b32.xlu0 %v6038, 52
      %v6095 = vpop.permute.xlu0 %6094
      %6096 = vrot.lane.b32.xlu0 %v6039, 52
      %v6097 = vpop.permute.xlu0 %6096
      %6098 = vrot.lane.b32.xlu0 %v6040, 52
      %v6099 = vpop.permute.xlu0 %6098
      %6100 = vrot.lane.b32.xlu0 %v6041, 52
      %v6101 = vpop.permute.xlu0 %6100
      %6102 = vrot.lane.b32.xlu0 %v6042, 52
      %v6103 = vpop.permute.xlu0 %6102
      %6104 = vrot.lane.b32.xlu0 %v6043, 52
      %v6105 = vpop.permute.xlu0 %6104
      %6106 = vrot.lane.b32.xlu0 %v6044, 52
      %v6107 = vpop.permute.xlu0 %6106
      %6108 = vrot.lane.b32.xlu0 %v6045, 52
      %v6109 = vpop.permute.xlu0 %6108
      %6110 = vrot.lane.b32.xlu0 %v6046, 52
      %v6111 = vpop.permute.xlu0 %6110
      %6112 = vrot.lane.b32.xlu0 %v6047, 52
      %v6113 = vpop.permute.xlu0 %6112
      %v6114 = vsel %vm2870, %v6071, %v6073
      %v6115 = vsel %vm2870, %v6073, %v6075
      %v6116 = vsel %vm2870, %v6075, %v6077
      %v6117 = vsel %vm2870, %v6077, %v6079
      %v6118 = vsel %vm2870, %v6079, %v6081
      %v6119 = vsel %vm2870, %v6081, %v6083
      %v6120 = vsel %vm2870, %v6083, %v6085
      %v6121 = vsel %vm2870, %v6085, %v6087
      %v6122 = vsel %vm2870, %v6087, %v6089
      %v6123 = vsel %vm2870, %v6089, %v6091
      %v6124 = vsel %vm2870, %v6093, %v6095
      %v6125 = vsel %vm2870, %v6095, %v6097
      %v6126 = vsel %vm2870, %v6097, %v6099
      %v6127 = vsel %vm2870, %v6099, %v6101
      %v6128 = vsel %vm2870, %v6101, %v6103
      %v6129 = vsel %vm2870, %v6103, %v6105
      %v6130 = vsel %vm2870, %v6105, %v6107
      %v6131 = vsel %vm2870, %v6107, %v6109
      %v6132 = vsel %vm2870, %v6109, %v6111
      %v6133 = vsel %vm2870, %v6111, %v6113
      %v6154 = vadd.f32 %v6006, %v6114
      %v6155 = vadd.f32 %v6007, %v6115
      %v6156 = vadd.f32 %v6008, %v6116
      %v6157 = vadd.f32 %v6009, %v6117
      %v6158 = vadd.f32 %v6010, %v6118
      %v6159 = vadd.f32 %v6011, %v6119
      %v6160 = vadd.f32 %v6012, %v6120
      %v6161 = vadd.f32 %v6013, %v6121
      %v6162 = vadd.f32 %v6014, %v6122
      %v6163 = vadd.f32 %v6015, %v6123
      %v6164 = vadd.f32 %v6016, %v6124
      %v6165 = vadd.f32 %v6017, %v6125
      %v6166 = vadd.f32 %v6018, %v6126
      %v6167 = vadd.f32 %v6019, %v6127
      %v6168 = vadd.f32 %v6020, %v6128
      %v6169 = vadd.f32 %v6021, %v6129
      %v6170 = vadd.f32 %v6022, %v6130
      %v6171 = vadd.f32 %v6023, %v6131
      %v6172 = vadd.f32 %v6024, %v6132
      %v6173 = vadd.f32 %v6025, %v6133
      %v6174 = vld [vmem:[#allocation4 + $0x240] sm:$0xff]
      %v6175 = vld [vmem:[#allocation4 + $0x248] sm:$0xff]
      %v6176 = vld [vmem:[#allocation4 + $0x250] sm:$0xff]
      %v6177 = vld [vmem:[#allocation4 + $0x258] sm:$0xff]
      %v6178 = vld [vmem:[#allocation4 + $0x260] sm:$0xff]
      %v6179 = vld [vmem:[#allocation4 + $0x268] sm:$0xff]
      %v6180 = vld [vmem:[#allocation4 + $0x270] sm:$0xff]
      %v6181 = vld [vmem:[#allocation4 + $0x278] sm:$0xff]
      %v6182 = vld [vmem:[#allocation4 + $0x280] sm:$0xff]
      %v6183 = vld [vmem:[#allocation4 + $0x288] sm:$0xff]
      %v6184 = vld [vmem:[#allocation4 + $0x290] sm:$0xff]
      %v6185 = vld [vmem:[#allocation4 + $0x2a0] sm:$0xff]
      %v6186 = vld [vmem:[#allocation4 + $0x2a8] sm:$0xff]
      %v6187 = vld [vmem:[#allocation4 + $0x2b0] sm:$0xff]
      %v6188 = vld [vmem:[#allocation4 + $0x2b8] sm:$0xff]
      %v6189 = vld [vmem:[#allocation4 + $0x2c0] sm:$0xff]
      %v6190 = vld [vmem:[#allocation4 + $0x2c8] sm:$0xff]
      %v6191 = vld [vmem:[#allocation4 + $0x2d0] sm:$0xff]
      %v6192 = vld [vmem:[#allocation4 + $0x2d8] sm:$0xff]
      %v6193 = vld [vmem:[#allocation4 + $0x2e0] sm:$0xff]
      %v6194 = vld [vmem:[#allocation4 + $0x2e8] sm:$0xff]
      %v6195 = vld [vmem:[#allocation4 + $0x2f0] sm:$0xff]
      %6218 = vrot.lane.b32.xlu0 %v6174, 14
      %v6219 = vpop.permute.xlu0 %6218
      %6220 = vrot.lane.b32.xlu0 %v6175, 14
      %v6221 = vpop.permute.xlu0 %6220
      %6222 = vrot.lane.b32.xlu0 %v6176, 14
      %v6223 = vpop.permute.xlu0 %6222
      %6224 = vrot.lane.b32.xlu0 %v6177, 14
      %v6225 = vpop.permute.xlu0 %6224
      %6226 = vrot.lane.b32.xlu0 %v6178, 14
      %v6227 = vpop.permute.xlu0 %6226
      %6228 = vrot.lane.b32.xlu0 %v6179, 14
      %v6229 = vpop.permute.xlu0 %6228
      %6230 = vrot.lane.b32.xlu0 %v6180, 14
      %v6231 = vpop.permute.xlu0 %6230
      %6232 = vrot.lane.b32.xlu0 %v6181, 14
      %v6233 = vpop.permute.xlu0 %6232
      %6234 = vrot.lane.b32.xlu0 %v6182, 14
      %v6235 = vpop.permute.xlu0 %6234
      %6236 = vrot.lane.b32.xlu0 %v6183, 14
      %v6237 = vpop.permute.xlu0 %6236
      %6238 = vrot.lane.b32.xlu0 %v6184, 14
      %v6239 = vpop.permute.xlu0 %6238
      %6240 = vrot.lane.b32.xlu0 %v6185, 14
      %v6241 = vpop.permute.xlu0 %6240
      %6242 = vrot.lane.b32.xlu0 %v6186, 14
      %v6243 = vpop.permute.xlu0 %6242
      %6244 = vrot.lane.b32.xlu0 %v6187, 14
      %v6245 = vpop.permute.xlu0 %6244
      %6246 = vrot.lane.b32.xlu0 %v6188, 14
      %v6247 = vpop.permute.xlu0 %6246
      %6248 = vrot.lane.b32.xlu0 %v6189, 14
      %v6249 = vpop.permute.xlu0 %6248
      %6250 = vrot.lane.b32.xlu0 %v6190, 14
      %v6251 = vpop.permute.xlu0 %6250
      %6252 = vrot.lane.b32.xlu0 %v6191, 14
      %v6253 = vpop.permute.xlu0 %6252
      %6254 = vrot.lane.b32.xlu0 %v6192, 14
      %v6255 = vpop.permute.xlu0 %6254
      %6256 = vrot.lane.b32.xlu0 %v6193, 14
      %v6257 = vpop.permute.xlu0 %6256
      %6258 = vrot.lane.b32.xlu0 %v6194, 14
      %v6259 = vpop.permute.xlu0 %6258
      %6260 = vrot.lane.b32.xlu0 %v6195, 14
      %v6261 = vpop.permute.xlu0 %6260
      %v6262 = vsel %vm3019, %v6219, %v6221
      %v6263 = vsel %vm3019, %v6221, %v6223
      %v6264 = vsel %vm3019, %v6223, %v6225
      %v6265 = vsel %vm3019, %v6225, %v6227
      %v6266 = vsel %vm3019, %v6227, %v6229
      %v6267 = vsel %vm3019, %v6229, %v6231
      %v6268 = vsel %vm3019, %v6231, %v6233
      %v6269 = vsel %vm3019, %v6233, %v6235
      %v6270 = vsel %vm3019, %v6235, %v6237
      %v6271 = vsel %vm3019, %v6237, %v6239
      %v6272 = vsel %vm3019, %v6241, %v6243
      %v6273 = vsel %vm3019, %v6243, %v6245
      %v6274 = vsel %vm3019, %v6245, %v6247
      %v6275 = vsel %vm3019, %v6247, %v6249
      %v6276 = vsel %vm3019, %v6249, %v6251
      %v6277 = vsel %vm3019, %v6251, %v6253
      %v6278 = vsel %vm3019, %v6253, %v6255
      %v6279 = vsel %vm3019, %v6255, %v6257
      %v6280 = vsel %vm3019, %v6257, %v6259
      %v6281 = vsel %vm3019, %v6259, %v6261
      %v6302 = vadd.f32 %v6154, %v6262
      %v6303 = vadd.f32 %v6155, %v6263
      %v6304 = vadd.f32 %v6156, %v6264
      %v6305 = vadd.f32 %v6157, %v6265
      %v6306 = vadd.f32 %v6158, %v6266
      %v6307 = vadd.f32 %v6159, %v6267
      %v6308 = vadd.f32 %v6160, %v6268
      %v6309 = vadd.f32 %v6161, %v6269
      %v6310 = vadd.f32 %v6162, %v6270
      %v6311 = vadd.f32 %v6163, %v6271
      %v6312 = vadd.f32 %v6164, %v6272
      %v6313 = vadd.f32 %v6165, %v6273
      %v6314 = vadd.f32 %v6166, %v6274
      %v6315 = vadd.f32 %v6167, %v6275
      %v6316 = vadd.f32 %v6168, %v6276
      %v6317 = vadd.f32 %v6169, %v6277
      %v6318 = vadd.f32 %v6170, %v6278
      %v6319 = vadd.f32 %v6171, %v6279
      %v6320 = vadd.f32 %v6172, %v6280
      %v6321 = vadd.f32 %v6173, %v6281
      %v6322 = vld [vmem:[#allocation4 + $0x308] sm:$0xff]
      %v6323 = vld [vmem:[#allocation4 + $0x310] sm:$0xff]
      %v6324 = vld [vmem:[#allocation4 + $0x318] sm:$0xff]
      %v6325 = vld [vmem:[#allocation4 + $0x320] sm:$0xff]
      %v6326 = vld [vmem:[#allocation4 + $0x328] sm:$0xff]
      %v6327 = vld [vmem:[#allocation4 + $0x330] sm:$0xff]
      %v6328 = vld [vmem:[#allocation4 + $0x338] sm:$0xff]
      %v6329 = vld [vmem:[#allocation4 + $0x340] sm:$0xff]
      %v6330 = vld [vmem:[#allocation4 + $0x348] sm:$0xff]
      %v6331 = vld [vmem:[#allocation4 + $0x350] sm:$0xff]
      %v6332 = vld [vmem:[#allocation4 + $0x368] sm:$0xff]
      %v6333 = vld [vmem:[#allocation4 + $0x370] sm:$0xff]
      %v6334 = vld [vmem:[#allocation4 + $0x378] sm:$0xff]
      %v6335 = vld [vmem:[#allocation4 + $0x380] sm:$0xff]
      %v6336 = vld [vmem:[#allocation4 + $0x388] sm:$0xff]
      %v6337 = vld [vmem:[#allocation4 + $0x390] sm:$0xff]
      %v6338 = vld [vmem:[#allocation4 + $0x398] sm:$0xff]
      %v6339 = vld [vmem:[#allocation4 + $0x3a0] sm:$0xff]
      %v6340 = vld [vmem:[#allocation4 + $0x3a8] sm:$0xff]
      %v6341 = vld [vmem:[#allocation4 + $0x3b0] sm:$0xff]
      %6362 = vrot.lane.b32.xlu0 %v6322, 104
      %v6363 = vpop.permute.xlu0 %6362
      %6364 = vrot.lane.b32.xlu0 %v6323, 104
      %v6365 = vpop.permute.xlu0 %6364
      %6366 = vrot.lane.b32.xlu0 %v6324, 104
      %v6367 = vpop.permute.xlu0 %6366
      %6368 = vrot.lane.b32.xlu0 %v6325, 104
      %v6369 = vpop.permute.xlu0 %6368
      %6370 = vrot.lane.b32.xlu0 %v6326, 104
      %v6371 = vpop.permute.xlu0 %6370
      %6372 = vrot.lane.b32.xlu0 %v6327, 104
      %v6373 = vpop.permute.xlu0 %6372
      %6374 = vrot.lane.b32.xlu0 %v6328, 104
      %v6375 = vpop.permute.xlu0 %6374
      %6376 = vrot.lane.b32.xlu0 %v6329, 104
      %v6377 = vpop.permute.xlu0 %6376
      %6378 = vrot.lane.b32.xlu0 %v6330, 104
      %v6379 = vpop.permute.xlu0 %6378
      %6380 = vrot.lane.b32.xlu0 %v6331, 104
      %v6381 = vpop.permute.xlu0 %6380
      %6382 = vrot.lane.b32.xlu0 %v6332, 104
      %v6383 = vpop.permute.xlu0 %6382
      %6384 = vrot.lane.b32.xlu0 %v6333, 104
      %v6385 = vpop.permute.xlu0 %6384
      %6386 = vrot.lane.b32.xlu0 %v6334, 104
      %v6387 = vpop.permute.xlu0 %6386
      %6388 = vrot.lane.b32.xlu0 %v6335, 104
      %v6389 = vpop.permute.xlu0 %6388
      %6390 = vrot.lane.b32.xlu0 %v6336, 104
      %v6391 = vpop.permute.xlu0 %6390
      %6392 = vrot.lane.b32.xlu0 %v6337, 104
      %v6393 = vpop.permute.xlu0 %6392
      %6394 = vrot.lane.b32.xlu0 %v6338, 104
      %v6395 = vpop.permute.xlu0 %6394
      %6396 = vrot.lane.b32.xlu0 %v6339, 104
      %v6397 = vpop.permute.xlu0 %6396
      %6398 = vrot.lane.b32.xlu0 %v6340, 104
      %v6399 = vpop.permute.xlu0 %6398
      %6400 = vrot.lane.b32.xlu0 %v6341, 104
      %v6401 = vpop.permute.xlu0 %6400
      %v6402 = vsel %vm3160, %v6363, %v6365
      %v6403 = vsel %vm3160, %v6365, %v6367
      %v6404 = vsel %vm3160, %v6367, %v6369
      %v6405 = vsel %vm3160, %v6369, %v6371
      %v6406 = vsel %vm3160, %v6371, %v6373
      %v6407 = vsel %vm3160, %v6373, %v6375
      %v6408 = vsel %vm3160, %v6375, %v6377
      %v6409 = vsel %vm3160, %v6377, %v6379
      %v6410 = vsel %vm3160, %v6379, %v6381
      %v6411 = vsel %vm3160, %v6383, %v6385
      %v6412 = vsel %vm3160, %v6385, %v6387
      %v6413 = vsel %vm3160, %v6387, %v6389
      %v6414 = vsel %vm3160, %v6389, %v6391
      %v6415 = vsel %vm3160, %v6391, %v6393
      %v6416 = vsel %vm3160, %v6393, %v6395
      %v6417 = vsel %vm3160, %v6395, %v6397
      %v6418 = vsel %vm3160, %v6397, %v6399
      %v6419 = vsel %vm3160, %v6399, %v6401
      %v6440 = vadd.f32 %v6302, %v6402
      %v6441 = vadd.f32 %v6303, %v6403
      %v6442 = vadd.f32 %v6304, %v6404
      %v6443 = vadd.f32 %v6305, %v6405
      %v6444 = vadd.f32 %v6306, %v6406
      %v6445 = vadd.f32 %v6307, %v6407
      %v6446 = vadd.f32 %v6308, %v6408
      %v6447 = vadd.f32 %v6309, %v6409
      %v6448 = vadd.f32 %v6310, %v6410
      %v6449 = vadd.f32 %v6311, %v6381
      %v6450 = vadd.f32 %v6312, %v6411
      %v6451 = vadd.f32 %v6313, %v6412
      %v6452 = vadd.f32 %v6314, %v6413
      %v6453 = vadd.f32 %v6315, %v6414
      %v6454 = vadd.f32 %v6316, %v6415
      %v6455 = vadd.f32 %v6317, %v6416
      %v6456 = vadd.f32 %v6318, %v6417
      %v6457 = vadd.f32 %v6319, %v6418
      %v6458 = vadd.f32 %v6320, %v6419
      %v6459 = vadd.f32 %v6321, %v6401
      %v6460 = vld [vmem:[#allocation4 + $0x3c8] sm:$0xff]
      %v6461 = vld [vmem:[#allocation4 + $0x3d0] sm:$0xff]
      %v6462 = vld [vmem:[#allocation4 + $0x3d8] sm:$0xff]
      %v6463 = vld [vmem:[#allocation4 + $0x3e0] sm:$0xff]
      %v6464 = vld [vmem:[#allocation4 + $0x3e8] sm:$0xff]
      %v6465 = vld [vmem:[#allocation4 + $0x3f0] sm:$0xff]
      %v6466 = vld [vmem:[#allocation4 + $0x3f8] sm:$0xff]
      %v6467 = vld [vmem:[#allocation4 + $0x400] sm:$0xff]
      %v6468 = vld [vmem:[#allocation4 + $0x408] sm:$0xff]
      %v6469 = vld [vmem:[#allocation4 + $0x410] sm:$0xff]
      %v6470 = vld [vmem:[#allocation4 + $0x428] sm:$0xff]
      %v6471 = vld [vmem:[#allocation4 + $0x430] sm:$0xff]
      %v6472 = vld [vmem:[#allocation4 + $0x438] sm:$0xff]
      %v6473 = vld [vmem:[#allocation4 + $0x440] sm:$0xff]
      %v6474 = vld [vmem:[#allocation4 + $0x448] sm:$0xff]
      %v6475 = vld [vmem:[#allocation4 + $0x450] sm:$0xff]
      %v6476 = vld [vmem:[#allocation4 + $0x458] sm:$0xff]
      %v6477 = vld [vmem:[#allocation4 + $0x460] sm:$0xff]
      %v6478 = vld [vmem:[#allocation4 + $0x468] sm:$0xff]
      %v6479 = vld [vmem:[#allocation4 + $0x470] sm:$0xff]
      %6500 = vrot.lane.b32.xlu0 %v6460, 66
      %v6501 = vpop.permute.xlu0 %6500
      %6502 = vrot.lane.b32.xlu0 %v6461, 66
      %v6503 = vpop.permute.xlu0 %6502
      %6504 = vrot.lane.b32.xlu0 %v6462, 66
      %v6505 = vpop.permute.xlu0 %6504
      %6506 = vrot.lane.b32.xlu0 %v6463, 66
      %v6507 = vpop.permute.xlu0 %6506
      %6508 = vrot.lane.b32.xlu0 %v6464, 66
      %v6509 = vpop.permute.xlu0 %6508
      %6510 = vrot.lane.b32.xlu0 %v6465, 66
      %v6511 = vpop.permute.xlu0 %6510
      %6512 = vrot.lane.b32.xlu0 %v6466, 66
      %v6513 = vpop.permute.xlu0 %6512
      %6514 = vrot.lane.b32.xlu0 %v6467, 66
      %v6515 = vpop.permute.xlu0 %6514
      %6516 = vrot.lane.b32.xlu0 %v6468, 66
      %v6517 = vpop.permute.xlu0 %6516
      %6518 = vrot.lane.b32.xlu0 %v6469, 66
      %v6519 = vpop.permute.xlu0 %6518
      %6520 = vrot.lane.b32.xlu0 %v6470, 66
      %v6521 = vpop.permute.xlu0 %6520
      %6522 = vrot.lane.b32.xlu0 %v6471, 66
      %v6523 = vpop.permute.xlu0 %6522
      %6524 = vrot.lane.b32.xlu0 %v6472, 66
      %v6525 = vpop.permute.xlu0 %6524
      %6526 = vrot.lane.b32.xlu0 %v6473, 66
      %v6527 = vpop.permute.xlu0 %6526
      %6528 = vrot.lane.b32.xlu0 %v6474, 66
      %v6529 = vpop.permute.xlu0 %6528
      %6530 = vrot.lane.b32.xlu0 %v6475, 66
      %v6531 = vpop.permute.xlu0 %6530
      %6532 = vrot.lane.b32.xlu0 %v6476, 66
      %v6533 = vpop.permute.xlu0 %6532
      %6534 = vrot.lane.b32.xlu0 %v6477, 66
      %v6535 = vpop.permute.xlu0 %6534
      %6536 = vrot.lane.b32.xlu0 %v6478, 66
      %v6537 = vpop.permute.xlu0 %6536
      %6538 = vrot.lane.b32.xlu0 %v6479, 66
      %v6539 = vpop.permute.xlu0 %6538
      %v6540 = vsel %vm3299, %v6501, %v6503
      %v6541 = vsel %vm3299, %v6503, %v6505
      %v6542 = vsel %vm3299, %v6505, %v6507
      %v6543 = vsel %vm3299, %v6507, %v6509
      %v6544 = vsel %vm3299, %v6509, %v6511
      %v6545 = vsel %vm3299, %v6511, %v6513
      %v6546 = vsel %vm3299, %v6513, %v6515
      %v6547 = vsel %vm3299, %v6515, %v6517
      %v6548 = vsel %vm3299, %v6517, %v6519
      %v6549 = vsel %vm3299, %v6521, %v6523
      %v6550 = vsel %vm3299, %v6523, %v6525
      %v6551 = vsel %vm3299, %v6525, %v6527
      %v6552 = vsel %vm3299, %v6527, %v6529
      %v6553 = vsel %vm3299, %v6529, %v6531
      %v6554 = vsel %vm3299, %v6531, %v6533
      %v6555 = vsel %vm3299, %v6533, %v6535
      %v6556 = vsel %vm3299, %v6535, %v6537
      %v6557 = vsel %vm3299, %v6537, %v6539
      %v6578 = vadd.f32 %v6440, %v6540
      %v6579 = vadd.f32 %v6441, %v6541
      %v6580 = vadd.f32 %v6442, %v6542
      %v6581 = vadd.f32 %v6443, %v6543
      %v6582 = vadd.f32 %v6444, %v6544
      %v6583 = vadd.f32 %v6445, %v6545
      %v6584 = vadd.f32 %v6446, %v6546
      %v6585 = vadd.f32 %v6447, %v6547
      %v6586 = vadd.f32 %v6448, %v6548
      %v6587 = vadd.f32 %v6449, %v6519
      %v6588 = vadd.f32 %v6450, %v6549
      %v6589 = vadd.f32 %v6451, %v6550
      %v6590 = vadd.f32 %v6452, %v6551
      %v6591 = vadd.f32 %v6453, %v6552
      %v6592 = vadd.f32 %v6454, %v6553
      %v6593 = vadd.f32 %v6455, %v6554
      %v6594 = vadd.f32 %v6456, %v6555
      %v6595 = vadd.f32 %v6457, %v6556
      %v6596 = vadd.f32 %v6458, %v6557
      %v6597 = vadd.f32 %v6459, %v6539
      %v6598 = vld [vmem:[#allocation4 + $0x488] sm:$0xff]
      %v6599 = vld [vmem:[#allocation4 + $0x490] sm:$0xff]
      %v6600 = vld [vmem:[#allocation4 + $0x498] sm:$0xff]
      %v6601 = vld [vmem:[#allocation4 + $0x4a0] sm:$0xff]
      %v6602 = vld [vmem:[#allocation4 + $0x4a8] sm:$0xff]
      %v6603 = vld [vmem:[#allocation4 + $0x4b0] sm:$0xff]
      %v6604 = vld [vmem:[#allocation4 + $0x4b8] sm:$0xff]
      %v6605 = vld [vmem:[#allocation4 + $0x4c0] sm:$0xff]
      %v6606 = vld [vmem:[#allocation4 + $0x4c8] sm:$0xff]
      %v6607 = vld [vmem:[#allocation4 + $0x4d0] sm:$0xff]
      %v6608 = vld [vmem:[#allocation4 + $0x4d8] sm:$0xff]
      %v6609 = vld [vmem:[#allocation4 + $0x4e8] sm:$0xff]
      %v6610 = vld [vmem:[#allocation4 + $0x4f0] sm:$0xff]
      %v6611 = vld [vmem:[#allocation4 + $0x4f8] sm:$0xff]
      %v6612 = vld [vmem:[#allocation4 + $0x500] sm:$0xff]
      %v6613 = vld [vmem:[#allocation4 + $0x508] sm:$0xff]
      %v6614 = vld [vmem:[#allocation4 + $0x510] sm:$0xff]
      %v6615 = vld [vmem:[#allocation4 + $0x518] sm:$0xff]
      %v6616 = vld [vmem:[#allocation4 + $0x520] sm:$0xff]
      %v6617 = vld [vmem:[#allocation4 + $0x528] sm:$0xff]
      %v6618 = vld [vmem:[#allocation4 + $0x530] sm:$0xff]
      %v6619 = vld [vmem:[#allocation4 + $0x538] sm:$0xff]
      %6642 = vrot.lane.b32.xlu0 %v6598, 28
      %v6643 = vpop.permute.xlu0 %6642
      %6644 = vrot.lane.b32.xlu0 %v6599, 28
      %v6645 = vpop.permute.xlu0 %6644
      %6646 = vrot.lane.b32.xlu0 %v6600, 28
      %v6647 = vpop.permute.xlu0 %6646
      %6648 = vrot.lane.b32.xlu0 %v6601, 28
      %v6649 = vpop.permute.xlu0 %6648
      %6650 = vrot.lane.b32.xlu0 %v6602, 28
      %v6651 = vpop.permute.xlu0 %6650
      %6652 = vrot.lane.b32.xlu0 %v6603, 28
      %v6653 = vpop.permute.xlu0 %6652
      %6654 = vrot.lane.b32.xlu0 %v6604, 28
      %v6655 = vpop.permute.xlu0 %6654
      %6656 = vrot.lane.b32.xlu0 %v6605, 28
      %v6657 = vpop.permute.xlu0 %6656
      %6658 = vrot.lane.b32.xlu0 %v6606, 28
      %v6659 = vpop.permute.xlu0 %6658
      %6660 = vrot.lane.b32.xlu0 %v6607, 28
      %v6661 = vpop.permute.xlu0 %6660
      %6662 = vrot.lane.b32.xlu0 %v6608, 28
      %v6663 = vpop.permute.xlu0 %6662
      %6664 = vrot.lane.b32.xlu0 %v6609, 28
      %v6665 = vpop.permute.xlu0 %6664
      %6666 = vrot.lane.b32.xlu0 %v6610, 28
      %v6667 = vpop.permute.xlu0 %6666
      %6668 = vrot.lane.b32.xlu0 %v6611, 28
      %v6669 = vpop.permute.xlu0 %6668
      %6670 = vrot.lane.b32.xlu0 %v6612, 28
      %v6671 = vpop.permute.xlu0 %6670
      %6672 = vrot.lane.b32.xlu0 %v6613, 28
      %v6673 = vpop.permute.xlu0 %6672
      %6674 = vrot.lane.b32.xlu0 %v6614, 28
      %v6675 = vpop.permute.xlu0 %6674
      %6676 = vrot.lane.b32.xlu0 %v6615, 28
      %v6677 = vpop.permute.xlu0 %6676
      %6678 = vrot.lane.b32.xlu0 %v6616, 28
      %v6679 = vpop.permute.xlu0 %6678
      %6680 = vrot.lane.b32.xlu0 %v6617, 28
      %v6681 = vpop.permute.xlu0 %6680
      %6682 = vrot.lane.b32.xlu0 %v6618, 28
      %v6683 = vpop.permute.xlu0 %6682
      %6684 = vrot.lane.b32.xlu0 %v6619, 28
      %v6685 = vpop.permute.xlu0 %6684
      %v6686 = vsel %vm3446, %v6643, %v6645
      %v6687 = vsel %vm3446, %v6645, %v6647
      %v6688 = vsel %vm3446, %v6647, %v6649
      %v6689 = vsel %vm3446, %v6649, %v6651
      %v6690 = vsel %vm3446, %v6651, %v6653
      %v6691 = vsel %vm3446, %v6653, %v6655
      %v6692 = vsel %vm3446, %v6655, %v6657
      %v6693 = vsel %vm3446, %v6657, %v6659
      %v6694 = vsel %vm3446, %v6659, %v6661
      %v6695 = vsel %vm3446, %v6661, %v6663
      %v6696 = vsel %vm3446, %v6665, %v6667
      %v6697 = vsel %vm3446, %v6667, %v6669
      %v6698 = vsel %vm3446, %v6669, %v6671
      %v6699 = vsel %vm3446, %v6671, %v6673
      %v6700 = vsel %vm3446, %v6673, %v6675
      %v6701 = vsel %vm3446, %v6675, %v6677
      %v6702 = vsel %vm3446, %v6677, %v6679
      %v6703 = vsel %vm3446, %v6679, %v6681
      %v6704 = vsel %vm3446, %v6681, %v6683
      %v6705 = vsel %vm3446, %v6683, %v6685
      %v6726 = vadd.f32 %v6578, %v6686
      %v6727 = vadd.f32 %v6579, %v6687
      %v6728 = vadd.f32 %v6580, %v6688
      %v6729 = vadd.f32 %v6581, %v6689
      %v6730 = vadd.f32 %v6582, %v6690
      %v6731 = vadd.f32 %v6583, %v6691
      %v6732 = vadd.f32 %v6584, %v6692
      %v6733 = vadd.f32 %v6585, %v6693
      %v6734 = vadd.f32 %v6586, %v6694
      %v6735 = vadd.f32 %v6587, %v6695
      %v6736 = vadd.f32 %v6588, %v6696
      %v6737 = vadd.f32 %v6589, %v6697
      %v6738 = vadd.f32 %v6590, %v6698
      %v6739 = vadd.f32 %v6591, %v6699
      %v6740 = vadd.f32 %v6592, %v6700
      %v6741 = vadd.f32 %v6593, %v6701
      %v6742 = vadd.f32 %v6594, %v6702
      %v6743 = vadd.f32 %v6595, %v6703
      %v6744 = vadd.f32 %v6596, %v6704
      %v6745 = vadd.f32 %v6597, %v6705
      %s6746 = scalar_lea.vmem %s4, 16
      %v6747 = vld [vmem:[%s6746] sm:$0xff]
      %v6748 = vld [vmem:[%s6746 + $0x8] sm:$0xff]
      %6750 = vset.pattern.permute.xlu0 0
      %6751 = vperm.xlu0 %6750, %v6747
      %v6752 = vpop.permute.xlu0 %6751
      %6755 = vset.pattern.permute.xlu0 0
      %6756 = vperm.xlu0 %6755, %v6748
      %v6757 = vpop.permute.xlu0 %6756
      %v6759 = vadd.f32 %v6726, %v6752
      %v6760 = vadd.f32 %v6727, %v6752
      %v6761 = vadd.f32 %v6728, %v6752
      %v6762 = vadd.f32 %v6729, %v6752
      %v6763 = vadd.f32 %v6730, %v6752
      %v6764 = vadd.f32 %v6731, %v6752
      %v6765 = vadd.f32 %v6732, %v6752
      %v6766 = vadd.f32 %v6733, %v6752
      %v6767 = vadd.f32 %v6734, %v6752
      %v6768 = vadd.f32 %v6735, %v6752
      %v6769 = vadd.f32 %v6736, %v6757
      %v6770 = vadd.f32 %v6737, %v6757
      %v6771 = vadd.f32 %v6738, %v6757
      %v6772 = vadd.f32 %v6739, %v6757
      %v6773 = vadd.f32 %v6740, %v6757
      %v6774 = vadd.f32 %v6741, %v6757
      %v6775 = vadd.f32 %v6742, %v6757
      %v6776 = vadd.f32 %v6743, %v6757
      %v6777 = vadd.f32 %v6744, %v6757
      %v6778 = vadd.f32 %v6745, %v6757
      %v6779 = vmax.f32 %v6759, 0.0
      %v6780 = vmax.f32 %v6760, 0.0
      %v6781 = vmax.f32 %v6761, 0.0
      %v6782 = vmax.f32 %v6762, 0.0
      %v6783 = vmax.f32 %v6763, 0.0
      %v6784 = vmax.f32 %v6764, 0.0
      %v6785 = vmax.f32 %v6765, 0.0
      %v6786 = vmax.f32 %v6766, 0.0
      %v6787 = vmax.f32 %v6767, 0.0
      %v6788 = vmax.f32 %v6768, 0.0
      %v6789 = vmax.f32 %v6769, 0.0
      %v6790 = vmax.f32 %v6770, 0.0
      %v6791 = vmax.f32 %v6771, 0.0
      %v6792 = vmax.f32 %v6772, 0.0
      %v6793 = vmax.f32 %v6773, 0.0
      %v6794 = vmax.f32 %v6774, 0.0
      %v6795 = vmax.f32 %v6775, 0.0
      %v6796 = vmax.f32 %v6776, 0.0
      %v6797 = vmax.f32 %v6777, 0.0
      %v6798 = vmax.f32 %v6778, 0.0
      %v6799 = vadd.f32 %v4487, %v6779
      %v6800 = vadd.f32 %v4488, %v6780
      %v6801 = vadd.f32 %v4489, %v6781
      %v6802 = vadd.f32 %v4490, %v6782
      %v6803 = vadd.f32 %v4491, %v6783
      %v6804 = vadd.f32 %v4492, %v6784
      %v6805 = vadd.f32 %v4493, %v6785
      %v6806 = vadd.f32 %v4494, %v6786
      %v6807 = vadd.f32 %v4495, %v6787
      %v6808 = vadd.f32 %v4496, %v6788
      %v6809 = vadd.f32 %v4497, %v6789
      %v6810 = vadd.f32 %v4498, %v6790
      %v6811 = vadd.f32 %v4499, %v6791
      %v6812 = vadd.f32 %v4500, %v6792
      %v6813 = vadd.f32 %v4501, %v6793
      %v6814 = vadd.f32 %v4502, %v6794
      %v6815 = vadd.f32 %v4503, %v6795
      %v6816 = vadd.f32 %v4504, %v6796
      %v6817 = vadd.f32 %v4505, %v6797
      %v6818 = vadd.f32 %v4506, %v6798
      %v6819 = vld [vmem:[%s5] sm:$0xff]
      %v6820 = vld [vmem:[%s5 + $0x8] sm:$0x3]
      %v6823 = vlaneseq
      %v6824 = vshrl.u32 %v6823, 7
      %v6825 = vsub.s32 0, %v6824
      %v6826 = vrot.slane %v6819, %v6825
      %v6827 = vlaneseq
      %v6828 = vshrl.u32 %v6827, 7
      %v6829 = vsub.s32 1, %v6828
      %v6830 = vrot.slane %v6819, %v6829
      %v6831 = vlaneseq
      %v6832 = vshrl.u32 %v6831, 7
      %v6833 = vsub.s32 2, %v6832
      %v6834 = vrot.slane %v6819, %v6833
      %v6835 = vlaneseq
      %v6836 = vshrl.u32 %v6835, 7
      %v6837 = vsub.s32 3, %v6836
      %v6838 = vrot.slane %v6819, %v6837
      %v6839 = vlaneseq
      %v6840 = vshrl.u32 %v6839, 7
      %v6841 = vsub.s32 4, %v6840
      %v6842 = vrot.slane %v6819, %v6841
      %v6843 = vlaneseq
      %v6844 = vshrl.u32 %v6843, 7
      %v6845 = vsub.s32 5, %v6844
      %v6846 = vrot.slane %v6819, %v6845
      %v6847 = vlaneseq
      %v6848 = vshrl.u32 %v6847, 7
      %v6849 = vsub.s32 6, %v6848
      %v6850 = vrot.slane %v6819, %v6849
      %v6851 = vlaneseq
      %v6852 = vshrl.u32 %v6851, 7
      %v6853 = vsub.s32 7, %v6852
      %v6854 = vrot.slane %v6819, %v6853
      %v6855 = vlaneseq
      %v6856 = vshrl.u32 %v6855, 7
      %v6857 = vsub.s32 0, %v6856
      %v6858 = vrot.slane %v6820, %v6857
      %v6859 = vlaneseq
      %v6860 = vshrl.u32 %v6859, 7
      %v6861 = vsub.s32 1, %v6860
      %v6862 = vrot.slane %v6820, %v6861
      %v6873 = vmul.f32 %v6799, %v6826
      %v6874 = vmul.f32 %v6800, %v6830
      %v6875 = vmul.f32 %v6801, %v6834
      %v6876 = vmul.f32 %v6802, %v6838
      %v6877 = vmul.f32 %v6803, %v6842
      %v6878 = vmul.f32 %v6804, %v6846
      %v6879 = vmul.f32 %v6805, %v6850
      %v6880 = vmul.f32 %v6806, %v6854
      %v6881 = vmul.f32 %v6807, %v6858
      %v6882 = vmul.f32 %v6808, %v6862
      %v6883 = vmul.f32 %v6809, %v6826
      %v6884 = vmul.f32 %v6810, %v6830
      %v6885 = vmul.f32 %v6811, %v6834
      %v6886 = vmul.f32 %v6812, %v6838
      %v6887 = vmul.f32 %v6813, %v6842
      %v6888 = vmul.f32 %v6814, %v6846
      %v6889 = vmul.f32 %v6815, %v6850
      %v6890 = vmul.f32 %v6816, %v6854
      %v6891 = vmul.f32 %v6817, %v6858
      %v6892 = vmul.f32 %v6818, %v6862
      %v6893 = vpack.c.bf16 %v6883, %v6873
      %v6894 = vpack.c.bf16 %v6884, %v6874
      %v6895 = vpack.c.bf16 %v6885, %v6875
      %v6896 = vpack.c.bf16 %v6886, %v6876
      %v6897 = vpack.c.bf16 %v6887, %v6877
      %v6898 = vpack.c.bf16 %v6888, %v6878
      %v6899 = vpack.c.bf16 %v6889, %v6879
      %v6900 = vpack.c.bf16 %v6890, %v6880
      %v6901 = vpack.c.bf16 %v6891, %v6881
      %v6902 = vpack.c.bf16 %v6892, %v6882
      %v6913 = vunpack.c.l.b16 %v6893
      %v6914 = vunpack.c.l.b16 %v6894
      %v6915 = vunpack.c.l.b16 %v6895
      %v6916 = vunpack.c.l.b16 %v6896
      %v6917 = vunpack.c.l.b16 %v6897
      %v6918 = vunpack.c.l.b16 %v6898
      %v6919 = vunpack.c.l.b16 %v6899
      %v6920 = vunpack.c.l.b16 %v6900
      %v6921 = vunpack.c.l.b16 %v6901
      %v6922 = vunpack.c.l.b16 %v6902
      %v6923 = vunpack.c.h.b16 %v6893
      %v6924 = vunpack.c.h.b16 %v6894
      %v6925 = vunpack.c.h.b16 %v6895
      %v6926 = vunpack.c.h.b16 %v6896
      %v6927 = vunpack.c.h.b16 %v6897
      %v6928 = vunpack.c.h.b16 %v6898
      %v6929 = vunpack.c.h.b16 %v6899
      %v6930 = vunpack.c.h.b16 %v6900
      %v6931 = vunpack.c.h.b16 %v6901
      %v6932 = vunpack.c.h.b16 %v6902
      %v6933 = vpack.c.b16 %v6914, %v6913
      %v6934 = vpack.c.b16 %v6916, %v6915
      %v6935 = vpack.c.b16 %v6918, %v6917
      %v6936 = vpack.c.b16 %v6920, %v6919
      %v6937 = vpack.c.b16 %v6922, %v6921
      %v6938 = vpack.c.b16 %v6924, %v6923
      %v6939 = vpack.c.b16 %v6926, %v6925
      %v6940 = vpack.c.b16 %v6928, %v6927
      %v6941 = vpack.c.b16 %v6930, %v6929
      %v6942 = vpack.c.b16 %v6932, %v6931
      %6943 = vrot.lane.b32.xlu0 %v6933, 117
      %v6944 = vpop.permute.xlu0 %6943
      %6945 = vrot.lane.b32.xlu0 %v6934, 117
      %v6946 = vpop.permute.xlu0 %6945
      %6947 = vrot.lane.b32.xlu0 %v6935, 117
      %v6948 = vpop.permute.xlu0 %6947
      %6949 = vrot.lane.b32.xlu0 %v6936, 117
      %v6950 = vpop.permute.xlu0 %6949
      %6951 = vrot.lane.b32.xlu0 %v6937, 117
      %v6952 = vpop.permute.xlu0 %6951
      %6953 = vrot.lane.b32.xlu0 %v6938, 117
      %v6954 = vpop.permute.xlu0 %6953
      %6955 = vrot.lane.b32.xlu0 %v6939, 117
      %v6956 = vpop.permute.xlu0 %6955
      %6957 = vrot.lane.b32.xlu0 %v6940, 117
      %v6958 = vpop.permute.xlu0 %6957
      %6959 = vrot.lane.b32.xlu0 %v6941, 117
      %v6960 = vpop.permute.xlu0 %6959
      %6961 = vrot.lane.b32.xlu0 %v6942, 117
      %v6962 = vpop.permute.xlu0 %6961
      %v6963 = vrot.slane %v6944, 4
      %v6964 = vrot.slane %v6946, 4
      %v6965 = vrot.slane %v6948, 4
      %v6966 = vrot.slane %v6950, 4
      %v6967 = vrot.slane %v6952, 4
      %v6968 = vrot.slane %v6954, 4
      %v6969 = vrot.slane %v6956, 4
      %v6970 = vrot.slane %v6958, 4
      %v6971 = vrot.slane %v6960, 4
      %v6972 = vrot.slane %v6962, 4
      %v6973 = vsel %vm477, %v6963, %v6944
      %v6974 = vsel %vm479, %v6963, %v6964
      %v6975 = vsel %vm477, %v6974, %v6946
      %v6976 = vsel %vm479, %v6964, %v6965
      %v6977 = vsel %vm477, %v6976, %v6948
      %v6978 = vsel %vm479, %v6965, %v6966
      %v6979 = vsel %vm477, %v6978, %v6950
      %v6980 = vsel %vm479, %v6966, %v6967
      %v6981 = vsel %vm477, %v6980, %v6952
      %v6982 = vsel %vm477, %v6968, %v6954
      %v6983 = vsel %vm479, %v6968, %v6969
      %v6984 = vsel %vm477, %v6983, %v6956
      %v6985 = vsel %vm479, %v6969, %v6970
      %v6986 = vsel %vm477, %v6985, %v6958
      %v6987 = vsel %vm479, %v6970, %v6971
      %v6988 = vsel %vm477, %v6987, %v6960
      %v6989 = vsel %vm479, %v6971, %v6972
      %v6990 = vsel %vm477, %v6989, %v6962
      %7003 = vst.msk [vmem:[#allocation2] sm:$0xff] %vm510, %v6973
      %7004 = vst [vmem:[#allocation2 + $0x8] sm:$0xff] %v6975
      %7005 = vst [vmem:[#allocation2 + $0x10] sm:$0xff] %v6977
      %7006 = vst [vmem:[#allocation2 + $0x18] sm:$0xff] %v6979
      %7007 = vst [vmem:[#allocation2 + $0x20] sm:$0xff] %v6981
      %7008 = vst.msk [vmem:[#allocation2 + $0x28] sm:$0xf] %vm516, %v6967
      %7009 = vst.msk [vmem:[#allocation2 + $0x34] sm:$0xff] %vm510, %v6982
      %7010 = vst [vmem:[#allocation2 + $0x3c] sm:$0xff] %v6984
      %7011 = vst [vmem:[#allocation2 + $0x44] sm:$0xff] %v6986
      %7012 = vst [vmem:[#allocation2 + $0x4c] sm:$0xff] %v6988
      %7013 = vst [vmem:[#allocation2 + $0x54] sm:$0xff] %v6990
      %7014 = vst.msk [vmem:[#allocation2 + $0x5c] sm:$0xf] %vm516, %v6972
      %v7015 = vld [vmem:[#allocation2] sm:$0xff]
      %v7016 = vld [vmem:[#allocation2 + $0x8] sm:$0xff]
      %v7017 = vld [vmem:[#allocation2 + $0x10] sm:$0xff]
      %v7018 = vld [vmem:[#allocation2 + $0x18] sm:$0xff]
      %v7019 = vld [vmem:[#allocation2 + $0x20] sm:$0xff]
      %v7020 = vld [vmem:[#allocation2 + $0x28] sm:$0xff]
      %v7021 = vld [vmem:[#allocation2 + $0x34] sm:$0xff]
      %v7022 = vld [vmem:[#allocation2 + $0x3c] sm:$0xff]
      %v7023 = vld [vmem:[#allocation2 + $0x44] sm:$0xff]
      %v7024 = vld [vmem:[#allocation2 + $0x4c] sm:$0xff]
      %v7025 = vld [vmem:[#allocation2 + $0x54] sm:$0xff]
      %v7026 = vld [vmem:[#allocation2 + $0x5c] sm:$0xff]
      %7027 = vst [vmem:[#allocation3] sm:$0xff] %v7015
      %7028 = vst [vmem:[#allocation3 + $0x8] sm:$0xff] %v7016
      %7029 = vst [vmem:[#allocation3 + $0x10] sm:$0xff] %v7017
      %7030 = vst [vmem:[#allocation3 + $0x18] sm:$0xff] %v7018
      %7031 = vst [vmem:[#allocation3 + $0x20] sm:$0xff] %v7019
      %7032 = vst [vmem:[#allocation3 + $0x28] sm:$0xff] %v7020
      %7033 = vst [vmem:[#allocation3 + $0x30] sm:$0xff] %v7021
      %7034 = vst [vmem:[#allocation3 + $0x38] sm:$0xff] %v7022
      %7035 = vst [vmem:[#allocation3 + $0x40] sm:$0xff] %v7023
      %7036 = vst [vmem:[#allocation3 + $0x48] sm:$0xff] %v7024
      %7037 = vst [vmem:[#allocation3 + $0x50] sm:$0xff] %v7025
      %7038 = vst [vmem:[#allocation3 + $0x58] sm:$0xff] %v7026
      %v7039 = vld [vmem:[#allocation2] sm:$0xff]
      %v7040 = vld [vmem:[#allocation2 + $0x8] sm:$0xff]
      %v7041 = vld [vmem:[#allocation2 + $0x10] sm:$0xff]
      %v7042 = vld [vmem:[#allocation2 + $0x18] sm:$0xff]
      %v7043 = vld [vmem:[#allocation2 + $0x20] sm:$0xff]
      %v7044 = vld [vmem:[#allocation2 + $0x28] sm:$0xff]
      %v7045 = vld [vmem:[#allocation2 + $0x30] sm:$0xf]
      %v7046 = vld [vmem:[#allocation2 + $0x34] sm:$0xff]
      %v7047 = vld [vmem:[#allocation2 + $0x3c] sm:$0xff]
      %v7048 = vld [vmem:[#allocation2 + $0x44] sm:$0xff]
      %v7049 = vld [vmem:[#allocation2 + $0x4c] sm:$0xff]
      %v7050 = vld [vmem:[#allocation2 + $0x54] sm:$0xff]
      %v7051 = vld [vmem:[#allocation2 + $0x5c] sm:$0xff]
      %v7052 = vld [vmem:[#allocation2 + $0x64] sm:$0xf]
      %7067 = vrot.lane.b32.xlu0 %v7039, 127
      %v7068 = vpop.permute.xlu0 %7067
      %7069 = vrot.lane.b32.xlu0 %v7040, 127
      %v7070 = vpop.permute.xlu0 %7069
      %7071 = vrot.lane.b32.xlu0 %v7041, 127
      %v7072 = vpop.permute.xlu0 %7071
      %7073 = vrot.lane.b32.xlu0 %v7042, 127
      %v7074 = vpop.permute.xlu0 %7073
      %7075 = vrot.lane.b32.xlu0 %v7043, 127
      %v7076 = vpop.permute.xlu0 %7075
      %7077 = vrot.lane.b32.xlu0 %v7044, 127
      %v7078 = vpop.permute.xlu0 %7077
      %7079 = vrot.lane.b32.xlu0 %v7045, 127
      %v7080 = vpop.permute.xlu0 %7079
      %7081 = vrot.lane.b32.xlu0 %v7046, 127
      %v7082 = vpop.permute.xlu0 %7081
      %7083 = vrot.lane.b32.xlu0 %v7047, 127
      %v7084 = vpop.permute.xlu0 %7083
      %7085 = vrot.lane.b32.xlu0 %v7048, 127
      %v7086 = vpop.permute.xlu0 %7085
      %7087 = vrot.lane.b32.xlu0 %v7049, 127
      %v7088 = vpop.permute.xlu0 %7087
      %7089 = vrot.lane.b32.xlu0 %v7050, 127
      %v7090 = vpop.permute.xlu0 %7089
      %7091 = vrot.lane.b32.xlu0 %v7051, 127
      %v7092 = vpop.permute.xlu0 %7091
      %7093 = vrot.lane.b32.xlu0 %v7052, 127
      %v7094 = vpop.permute.xlu0 %7093
      %v7095 = vrot.slane %v7068, 4
      %v7096 = vrot.slane %v7070, 4
      %v7097 = vrot.slane %v7072, 4
      %v7098 = vrot.slane %v7074, 4
      %v7099 = vrot.slane %v7076, 4
      %v7100 = vrot.slane %v7078, 4
      %v7101 = vrot.slane %v7080, 4
      %v7102 = vrot.slane %v7082, 4
      %v7103 = vrot.slane %v7084, 4
      %v7104 = vrot.slane %v7086, 4
      %v7105 = vrot.slane %v7088, 4
      %v7106 = vrot.slane %v7090, 4
      %v7107 = vrot.slane %v7092, 4
      %v7108 = vrot.slane %v7094, 4
      %v7109 = vsel %vm479, %v7095, %v7096
      %v7110 = vsel %vm619, %v7068, %v7109
      %v7111 = vsel %vm479, %v7096, %v7097
      %v7112 = vsel %vm619, %v7070, %v7111
      %v7113 = vsel %vm479, %v7097, %v7098
      %v7114 = vsel %vm619, %v7072, %v7113
      %v7115 = vsel %vm479, %v7098, %v7099
      %v7116 = vsel %vm619, %v7074, %v7115
      %v7117 = vsel %vm479, %v7099, %v7100
      %v7118 = vsel %vm619, %v7076, %v7117
      %v7119 = vsel %vm479, %v7100, %v7101
      %v7120 = vsel %vm619, %v7078, %v7119
      %v7121 = vsel %vm479, %v7102, %v7103
      %v7122 = vsel %vm619, %v7082, %v7121
      %v7123 = vsel %vm479, %v7103, %v7104
      %v7124 = vsel %vm619, %v7084, %v7123
      %v7125 = vsel %vm479, %v7104, %v7105
      %v7126 = vsel %vm619, %v7086, %v7125
      %v7127 = vsel %vm479, %v7105, %v7106
      %v7128 = vsel %vm619, %v7088, %v7127
      %v7129 = vsel %vm479, %v7106, %v7107
      %v7130 = vsel %vm619, %v7090, %v7129
      %v7131 = vsel %vm479, %v7107, %v7108
      %v7132 = vsel %vm619, %v7092, %v7131
      %7145 = vst [vmem:[#allocation3 + $0x60] sm:$0xff] %v7110
      %7146 = vst [vmem:[#allocation3 + $0x68] sm:$0xff] %v7112
      %7147 = vst [vmem:[#allocation3 + $0x70] sm:$0xff] %v7114
      %7148 = vst [vmem:[#allocation3 + $0x78] sm:$0xff] %v7116
      %7149 = vst [vmem:[#allocation3 + $0x80] sm:$0xff] %v7118
      %7150 = vst [vmem:[#allocation3 + $0x88] sm:$0xff] %v7120
      %7151 = vst [vmem:[#allocation3 + $0x90] sm:$0xff] %v7122
      %7152 = vst [vmem:[#allocation3 + $0x98] sm:$0xff] %v7124
      %7153 = vst [vmem:[#allocation3 + $0xa0] sm:$0xff] %v7126
      %7154 = vst [vmem:[#allocation3 + $0xa8] sm:$0xff] %v7128
      %7155 = vst [vmem:[#allocation3 + $0xb0] sm:$0xff] %v7130
      %7156 = vst [vmem:[#allocation3 + $0xb8] sm:$0xff] %v7132
      %v7157 = vld [vmem:[#allocation2] sm:$0xff]
      %v7158 = vld [vmem:[#allocation2 + $0x8] sm:$0xff]
      %v7159 = vld [vmem:[#allocation2 + $0x10] sm:$0xff]
      %v7160 = vld [vmem:[#allocation2 + $0x18] sm:$0xff]
      %v7161 = vld [vmem:[#allocation2 + $0x20] sm:$0xff]
      %v7162 = vld [vmem:[#allocation2 + $0x28] sm:$0xff]
      %v7163 = vld [vmem:[#allocation2 + $0x30] sm:$0xf]
      %v7164 = vld [vmem:[#allocation2 + $0x34] sm:$0xff]
      %v7165 = vld [vmem:[#allocation2 + $0x3c] sm:$0xff]
      %v7166 = vld [vmem:[#allocation2 + $0x44] sm:$0xff]
      %v7167 = vld [vmem:[#allocation2 + $0x4c] sm:$0xff]
      %v7168 = vld [vmem:[#allocation2 + $0x54] sm:$0xff]
      %v7169 = vld [vmem:[#allocation2 + $0x5c] sm:$0xff]
      %v7170 = vld [vmem:[#allocation2 + $0x64] sm:$0xf]
      %7185 = vrot.lane.b32.xlu0 %v7157, 126
      %v7186 = vpop.permute.xlu0 %7185
      %7187 = vrot.lane.b32.xlu0 %v7158, 126
      %v7188 = vpop.permute.xlu0 %7187
      %7189 = vrot.lane.b32.xlu0 %v7159, 126
      %v7190 = vpop.permute.xlu0 %7189
      %7191 = vrot.lane.b32.xlu0 %v7160, 126
      %v7192 = vpop.permute.xlu0 %7191
      %7193 = vrot.lane.b32.xlu0 %v7161, 126
      %v7194 = vpop.permute.xlu0 %7193
      %7195 = vrot.lane.b32.xlu0 %v7162, 126
      %v7196 = vpop.permute.xlu0 %7195
      %7197 = vrot.lane.b32.xlu0 %v7163, 126
      %v7198 = vpop.permute.xlu0 %7197
      %7199 = vrot.lane.b32.xlu0 %v7164, 126
      %v7200 = vpop.permute.xlu0 %7199
      %7201 = vrot.lane.b32.xlu0 %v7165, 126
      %v7202 = vpop.permute.xlu0 %7201
      %7203 = vrot.lane.b32.xlu0 %v7166, 126
      %v7204 = vpop.permute.xlu0 %7203
      %7205 = vrot.lane.b32.xlu0 %v7167, 126
      %v7206 = vpop.permute.xlu0 %7205
      %7207 = vrot.lane.b32.xlu0 %v7168, 126
      %v7208 = vpop.permute.xlu0 %7207
      %7209 = vrot.lane.b32.xlu0 %v7169, 126
      %v7210 = vpop.permute.xlu0 %7209
      %7211 = vrot.lane.b32.xlu0 %v7170, 126
      %v7212 = vpop.permute.xlu0 %7211
      %v7213 = vrot.slane %v7186, 4
      %v7214 = vrot.slane %v7188, 4
      %v7215 = vrot.slane %v7190, 4
      %v7216 = vrot.slane %v7192, 4
      %v7217 = vrot.slane %v7194, 4
      %v7218 = vrot.slane %v7196, 4
      %v7219 = vrot.slane %v7198, 4
      %v7220 = vrot.slane %v7200, 4
      %v7221 = vrot.slane %v7202, 4
      %v7222 = vrot.slane %v7204, 4
      %v7223 = vrot.slane %v7206, 4
      %v7224 = vrot.slane %v7208, 4
      %v7225 = vrot.slane %v7210, 4
      %v7226 = vrot.slane %v7212, 4
      %v7227 = vsel %vm479, %v7213, %v7214
      %v7228 = vsel %vm738, %v7186, %v7227
      %v7229 = vsel %vm479, %v7214, %v7215
      %v7230 = vsel %vm738, %v7188, %v7229
      %v7231 = vsel %vm479, %v7215, %v7216
      %v7232 = vsel %vm738, %v7190, %v7231
      %v7233 = vsel %vm479, %v7216, %v7217
      %v7234 = vsel %vm738, %v7192, %v7233
      %v7235 = vsel %vm479, %v7217, %v7218
      %v7236 = vsel %vm738, %v7194, %v7235
      %v7237 = vsel %vm479, %v7218, %v7219
      %v7238 = vsel %vm738, %v7196, %v7237
      %v7239 = vsel %vm479, %v7220, %v7221
      %v7240 = vsel %vm738, %v7200, %v7239
      %v7241 = vsel %vm479, %v7221, %v7222
      %v7242 = vsel %vm738, %v7202, %v7241
      %v7243 = vsel %vm479, %v7222, %v7223
      %v7244 = vsel %vm738, %v7204, %v7243
      %v7245 = vsel %vm479, %v7223, %v7224
      %v7246 = vsel %vm738, %v7206, %v7245
      %v7247 = vsel %vm479, %v7224, %v7225
      %v7248 = vsel %vm738, %v7208, %v7247
      %v7249 = vsel %vm479, %v7225, %v7226
      %v7250 = vsel %vm738, %v7210, %v7249
      %7263 = vst [vmem:[#allocation3 + $0xc0] sm:$0xff] %v7228
      %7264 = vst [vmem:[#allocation3 + $0xc8] sm:$0xff] %v7230
      %7265 = vst [vmem:[#allocation3 + $0xd0] sm:$0xff] %v7232
      %7266 = vst [vmem:[#allocation3 + $0xd8] sm:$0xff] %v7234
      %7267 = vst [vmem:[#allocation3 + $0xe0] sm:$0xff] %v7236
      %7268 = vst [vmem:[#allocation3 + $0xe8] sm:$0xff] %v7238
      %7269 = vst [vmem:[#allocation3 + $0xf0] sm:$0xff] %v7240
      %7270 = vst [vmem:[#allocation3 + $0xf8] sm:$0xff] %v7242
      %7271 = vst [vmem:[#allocation3 + $0x100] sm:$0xff] %v7244
      %7272 = vst [vmem:[#allocation3 + $0x108] sm:$0xff] %v7246
      %7273 = vst [vmem:[#allocation3 + $0x110] sm:$0xff] %v7248
      %7274 = vst [vmem:[#allocation3 + $0x118] sm:$0xff] %v7250
      %v7275 = vld [vmem:[#allocation2] sm:$0xff]
      %v7276 = vld [vmem:[#allocation2 + $0x8] sm:$0xff]
      %v7277 = vld [vmem:[#allocation2 + $0x10] sm:$0xff]
      %v7278 = vld [vmem:[#allocation2 + $0x18] sm:$0xff]
      %v7279 = vld [vmem:[#allocation2 + $0x20] sm:$0xff]
      %v7280 = vld [vmem:[#allocation2 + $0x28] sm:$0xff]
      %v7281 = vld [vmem:[#allocation2 + $0x30] sm:$0xf]
      %v7282 = vld [vmem:[#allocation2 + $0x34] sm:$0xff]
      %v7283 = vld [vmem:[#allocation2 + $0x3c] sm:$0xff]
      %v7284 = vld [vmem:[#allocation2 + $0x44] sm:$0xff]
      %v7285 = vld [vmem:[#allocation2 + $0x4c] sm:$0xff]
      %v7286 = vld [vmem:[#allocation2 + $0x54] sm:$0xff]
      %v7287 = vld [vmem:[#allocation2 + $0x5c] sm:$0xff]
      %v7288 = vld [vmem:[#allocation2 + $0x64] sm:$0xf]
      %7303 = vrot.lane.b32.xlu0 %v7275, 125
      %v7304 = vpop.permute.xlu0 %7303
      %7305 = vrot.lane.b32.xlu0 %v7276, 125
      %v7306 = vpop.permute.xlu0 %7305
      %7307 = vrot.lane.b32.xlu0 %v7277, 125
      %v7308 = vpop.permute.xlu0 %7307
      %7309 = vrot.lane.b32.xlu0 %v7278, 125
      %v7310 = vpop.permute.xlu0 %7309
      %7311 = vrot.lane.b32.xlu0 %v7279, 125
      %v7312 = vpop.permute.xlu0 %7311
      %7313 = vrot.lane.b32.xlu0 %v7280, 125
      %v7314 = vpop.permute.xlu0 %7313
      %7315 = vrot.lane.b32.xlu0 %v7281, 125
      %v7316 = vpop.permute.xlu0 %7315
      %7317 = vrot.lane.b32.xlu0 %v7282, 125
      %v7318 = vpop.permute.xlu0 %7317
      %7319 = vrot.lane.b32.xlu0 %v7283, 125
      %v7320 = vpop.permute.xlu0 %7319
      %7321 = vrot.lane.b32.xlu0 %v7284, 125
      %v7322 = vpop.permute.xlu0 %7321
      %7323 = vrot.lane.b32.xlu0 %v7285, 125
      %v7324 = vpop.permute.xlu0 %7323
      %7325 = vrot.lane.b32.xlu0 %v7286, 125
      %v7326 = vpop.permute.xlu0 %7325
      %7327 = vrot.lane.b32.xlu0 %v7287, 125
      %v7328 = vpop.permute.xlu0 %7327
      %7329 = vrot.lane.b32.xlu0 %v7288, 125
      %v7330 = vpop.permute.xlu0 %7329
      %v7331 = vrot.slane %v7304, 4
      %v7332 = vrot.slane %v7306, 4
      %v7333 = vrot.slane %v7308, 4
      %v7334 = vrot.slane %v7310, 4
      %v7335 = vrot.slane %v7312, 4
      %v7336 = vrot.slane %v7314, 4
      %v7337 = vrot.slane %v7316, 4
      %v7338 = vrot.slane %v7318, 4
      %v7339 = vrot.slane %v7320, 4
      %v7340 = vrot.slane %v7322, 4
      %v7341 = vrot.slane %v7324, 4
      %v7342 = vrot.slane %v7326, 4
      %v7343 = vrot.slane %v7328, 4
      %v7344 = vrot.slane %v7330, 4
      %v7345 = vsel %vm479, %v7331, %v7332
      %v7346 = vsel %vm857, %v7304, %v7345
      %v7347 = vsel %vm479, %v7332, %v7333
      %v7348 = vsel %vm857, %v7306, %v7347
      %v7349 = vsel %vm479, %v7333, %v7334
      %v7350 = vsel %vm857, %v7308, %v7349
      %v7351 = vsel %vm479, %v7334, %v7335
      %v7352 = vsel %vm857, %v7310, %v7351
      %v7353 = vsel %vm479, %v7335, %v7336
      %v7354 = vsel %vm857, %v7312, %v7353
      %v7355 = vsel %vm479, %v7336, %v7337
      %v7356 = vsel %vm857, %v7314, %v7355
      %v7357 = vsel %vm479, %v7338, %v7339
      %v7358 = vsel %vm857, %v7318, %v7357
      %v7359 = vsel %vm479, %v7339, %v7340
      %v7360 = vsel %vm857, %v7320, %v7359
      %v7361 = vsel %vm479, %v7340, %v7341
      %v7362 = vsel %vm857, %v7322, %v7361
      %v7363 = vsel %vm479, %v7341, %v7342
      %v7364 = vsel %vm857, %v7324, %v7363
      %v7365 = vsel %vm479, %v7342, %v7343
      %v7366 = vsel %vm857, %v7326, %v7365
      %v7367 = vsel %vm479, %v7343, %v7344
      %v7368 = vsel %vm857, %v7328, %v7367
      %7381 = vst [vmem:[#allocation3 + $0x120] sm:$0xff] %v7346
      %7382 = vst [vmem:[#allocation3 + $0x128] sm:$0xff] %v7348
      %7383 = vst [vmem:[#allocation3 + $0x130] sm:$0xff] %v7350
      %7384 = vst [vmem:[#allocation3 + $0x138] sm:$0xff] %v7352
      %7385 = vst [vmem:[#allocation3 + $0x140] sm:$0xff] %v7354
      %7386 = vst [vmem:[#allocation3 + $0x148] sm:$0xff] %v7356
      %7387 = vst [vmem:[#allocation3 + $0x150] sm:$0xff] %v7358
      %7388 = vst [vmem:[#allocation3 + $0x158] sm:$0xff] %v7360
      %7389 = vst [vmem:[#allocation3 + $0x160] sm:$0xff] %v7362
      %7390 = vst [vmem:[#allocation3 + $0x168] sm:$0xff] %v7364
      %7391 = vst [vmem:[#allocation3 + $0x170] sm:$0xff] %v7366
      %7392 = vst [vmem:[#allocation3 + $0x178] sm:$0xff] %v7368
      %v7393 = vld [vmem:[#allocation2] sm:$0xff]
      %v7394 = vld [vmem:[#allocation2 + $0x8] sm:$0xff]
      %v7395 = vld [vmem:[#allocation2 + $0x10] sm:$0xff]
      %v7396 = vld [vmem:[#allocation2 + $0x18] sm:$0xff]
      %v7397 = vld [vmem:[#allocation2 + $0x20] sm:$0xff]
      %v7398 = vld [vmem:[#allocation2 + $0x28] sm:$0xff]
      %v7399 = vld [vmem:[#allocation2 + $0x30] sm:$0xf]
      %v7400 = vld [vmem:[#allocation2 + $0x34] sm:$0xff]
      %v7401 = vld [vmem:[#allocation2 + $0x3c] sm:$0xff]
      %v7402 = vld [vmem:[#allocation2 + $0x44] sm:$0xff]
      %v7403 = vld [vmem:[#allocation2 + $0x4c] sm:$0xff]
      %v7404 = vld [vmem:[#allocation2 + $0x54] sm:$0xff]
      %v7405 = vld [vmem:[#allocation2 + $0x5c] sm:$0xff]
      %v7406 = vld [vmem:[#allocation2 + $0x64] sm:$0xf]
      %7421 = vrot.lane.b32.xlu0 %v7393, 124
      %v7422 = vpop.permute.xlu0 %7421
      %7423 = vrot.lane.b32.xlu0 %v7394, 124
      %v7424 = vpop.permute.xlu0 %7423
      %7425 = vrot.lane.b32.xlu0 %v7395, 124
      %v7426 = vpop.permute.xlu0 %7425
      %7427 = vrot.lane.b32.xlu0 %v7396, 124
      %v7428 = vpop.permute.xlu0 %7427
      %7429 = vrot.lane.b32.xlu0 %v7397, 124
      %v7430 = vpop.permute.xlu0 %7429
      %7431 = vrot.lane.b32.xlu0 %v7398, 124
      %v7432 = vpop.permute.xlu0 %7431
      %7433 = vrot.lane.b32.xlu0 %v7399, 124
      %v7434 = vpop.permute.xlu0 %7433
      %7435 = vrot.lane.b32.xlu0 %v7400, 124
      %v7436 = vpop.permute.xlu0 %7435
      %7437 = vrot.lane.b32.xlu0 %v7401, 124
      %v7438 = vpop.permute.xlu0 %7437
      %7439 = vrot.lane.b32.xlu0 %v7402, 124
      %v7440 = vpop.permute.xlu0 %7439
      %7441 = vrot.lane.b32.xlu0 %v7403, 124
      %v7442 = vpop.permute.xlu0 %7441
      %7443 = vrot.lane.b32.xlu0 %v7404, 124
      %v7444 = vpop.permute.xlu0 %7443
      %7445 = vrot.lane.b32.xlu0 %v7405, 124
      %v7446 = vpop.permute.xlu0 %7445
      %7447 = vrot.lane.b32.xlu0 %v7406, 124
      %v7448 = vpop.permute.xlu0 %7447
      %v7449 = vrot.slane %v7422, 4
      %v7450 = vrot.slane %v7424, 4
      %v7451 = vrot.slane %v7426, 4
      %v7452 = vrot.slane %v7428, 4
      %v7453 = vrot.slane %v7430, 4
      %v7454 = vrot.slane %v7432, 4
      %v7455 = vrot.slane %v7434, 4
      %v7456 = vrot.slane %v7436, 4
      %v7457 = vrot.slane %v7438, 4
      %v7458 = vrot.slane %v7440, 4
      %v7459 = vrot.slane %v7442, 4
      %v7460 = vrot.slane %v7444, 4
      %v7461 = vrot.slane %v7446, 4
      %v7462 = vrot.slane %v7448, 4
      %v7463 = vsel %vm479, %v7449, %v7450
      %v7464 = vsel %vm976, %v7422, %v7463
      %v7465 = vsel %vm479, %v7450, %v7451
      %v7466 = vsel %vm976, %v7424, %v7465
      %v7467 = vsel %vm479, %v7451, %v7452
      %v7468 = vsel %vm976, %v7426, %v7467
      %v7469 = vsel %vm479, %v7452, %v7453
      %v7470 = vsel %vm976, %v7428, %v7469
      %v7471 = vsel %vm479, %v7453, %v7454
      %v7472 = vsel %vm976, %v7430, %v7471
      %v7473 = vsel %vm479, %v7454, %v7455
      %v7474 = vsel %vm976, %v7432, %v7473
      %v7475 = vsel %vm479, %v7456, %v7457
      %v7476 = vsel %vm976, %v7436, %v7475
      %v7477 = vsel %vm479, %v7457, %v7458
      %v7478 = vsel %vm976, %v7438, %v7477
      %v7479 = vsel %vm479, %v7458, %v7459
      %v7480 = vsel %vm976, %v7440, %v7479
      %v7481 = vsel %vm479, %v7459, %v7460
      %v7482 = vsel %vm976, %v7442, %v7481
      %v7483 = vsel %vm479, %v7460, %v7461
      %v7484 = vsel %vm976, %v7444, %v7483
      %v7485 = vsel %vm479, %v7461, %v7462
      %v7486 = vsel %vm976, %v7446, %v7485
      %7499 = vst [vmem:[#allocation3 + $0x180] sm:$0xff] %v7464
      %7500 = vst [vmem:[#allocation3 + $0x188] sm:$0xff] %v7466
      %7501 = vst [vmem:[#allocation3 + $0x190] sm:$0xff] %v7468
      %7502 = vst [vmem:[#allocation3 + $0x198] sm:$0xff] %v7470
      %7503 = vst [vmem:[#allocation3 + $0x1a0] sm:$0xff] %v7472
      %7504 = vst [vmem:[#allocation3 + $0x1a8] sm:$0xff] %v7474
      %7505 = vst [vmem:[#allocation3 + $0x1b0] sm:$0xff] %v7476
      %7506 = vst [vmem:[#allocation3 + $0x1b8] sm:$0xff] %v7478
      %7507 = vst [vmem:[#allocation3 + $0x1c0] sm:$0xff] %v7480
      %7508 = vst [vmem:[#allocation3 + $0x1c8] sm:$0xff] %v7482
      %7509 = vst [vmem:[#allocation3 + $0x1d0] sm:$0xff] %v7484
      %7510 = vst [vmem:[#allocation3 + $0x1d8] sm:$0xff] %v7486
      %v7511 = vld [vmem:[#allocation2] sm:$0xff]
      %v7512 = vld [vmem:[#allocation2 + $0x8] sm:$0xff]
      %v7513 = vld [vmem:[#allocation2 + $0x10] sm:$0xff]
      %v7514 = vld [vmem:[#allocation2 + $0x18] sm:$0xff]
      %v7515 = vld [vmem:[#allocation2 + $0x20] sm:$0xff]
      %v7516 = vld [vmem:[#allocation2 + $0x28] sm:$0xff]
      %v7517 = vld [vmem:[#allocation2 + $0x30] sm:$0xf]
      %v7518 = vld [vmem:[#allocation2 + $0x34] sm:$0xff]
      %v7519 = vld [vmem:[#allocation2 + $0x3c] sm:$0xff]
      %v7520 = vld [vmem:[#allocation2 + $0x44] sm:$0xff]
      %v7521 = vld [vmem:[#allocation2 + $0x4c] sm:$0xff]
      %v7522 = vld [vmem:[#allocation2 + $0x54] sm:$0xff]
      %v7523 = vld [vmem:[#allocation2 + $0x5c] sm:$0xff]
      %v7524 = vld [vmem:[#allocation2 + $0x64] sm:$0xf]
      %7539 = vrot.lane.b32.xlu0 %v7511, 123
      %v7540 = vpop.permute.xlu0 %7539
      %7541 = vrot.lane.b32.xlu0 %v7512, 123
      %v7542 = vpop.permute.xlu0 %7541
      %7543 = vrot.lane.b32.xlu0 %v7513, 123
      %v7544 = vpop.permute.xlu0 %7543
      %7545 = vrot.lane.b32.xlu0 %v7514, 123
      %v7546 = vpop.permute.xlu0 %7545
      %7547 = vrot.lane.b32.xlu0 %v7515, 123
      %v7548 = vpop.permute.xlu0 %7547
      %7549 = vrot.lane.b32.xlu0 %v7516, 123
      %v7550 = vpop.permute.xlu0 %7549
      %7551 = vrot.lane.b32.xlu0 %v7517, 123
      %v7552 = vpop.permute.xlu0 %7551
      %7553 = vrot.lane.b32.xlu0 %v7518, 123
      %v7554 = vpop.permute.xlu0 %7553
      %7555 = vrot.lane.b32.xlu0 %v7519, 123
      %v7556 = vpop.permute.xlu0 %7555
      %7557 = vrot.lane.b32.xlu0 %v7520, 123
      %v7558 = vpop.permute.xlu0 %7557
      %7559 = vrot.lane.b32.xlu0 %v7521, 123
      %v7560 = vpop.permute.xlu0 %7559
      %7561 = vrot.lane.b32.xlu0 %v7522, 123
      %v7562 = vpop.permute.xlu0 %7561
      %7563 = vrot.lane.b32.xlu0 %v7523, 123
      %v7564 = vpop.permute.xlu0 %7563
      %7565 = vrot.lane.b32.xlu0 %v7524, 123
      %v7566 = vpop.permute.xlu0 %7565
      %v7567 = vrot.slane %v7540, 4
      %v7568 = vrot.slane %v7542, 4
      %v7569 = vrot.slane %v7544, 4
      %v7570 = vrot.slane %v7546, 4
      %v7571 = vrot.slane %v7548, 4
      %v7572 = vrot.slane %v7550, 4
      %v7573 = vrot.slane %v7552, 4
      %v7574 = vrot.slane %v7554, 4
      %v7575 = vrot.slane %v7556, 4
      %v7576 = vrot.slane %v7558, 4
      %v7577 = vrot.slane %v7560, 4
      %v7578 = vrot.slane %v7562, 4
      %v7579 = vrot.slane %v7564, 4
      %v7580 = vrot.slane %v7566, 4
      %v7581 = vsel %vm479, %v7567, %v7568
      %v7582 = vsel %vm1095, %v7540, %v7581
      %v7583 = vsel %vm479, %v7568, %v7569
      %v7584 = vsel %vm1095, %v7542, %v7583
      %v7585 = vsel %vm479, %v7569, %v7570
      %v7586 = vsel %vm1095, %v7544, %v7585
      %v7587 = vsel %vm479, %v7570, %v7571
      %v7588 = vsel %vm1095, %v7546, %v7587
      %v7589 = vsel %vm479, %v7571, %v7572
      %v7590 = vsel %vm1095, %v7548, %v7589
      %v7591 = vsel %vm479, %v7572, %v7573
      %v7592 = vsel %vm1095, %v7550, %v7591
      %v7593 = vsel %vm479, %v7574, %v7575
      %v7594 = vsel %vm1095, %v7554, %v7593
      %v7595 = vsel %vm479, %v7575, %v7576
      %v7596 = vsel %vm1095, %v7556, %v7595
      %v7597 = vsel %vm479, %v7576, %v7577
      %v7598 = vsel %vm1095, %v7558, %v7597
      %v7599 = vsel %vm479, %v7577, %v7578
      %v7600 = vsel %vm1095, %v7560, %v7599
      %v7601 = vsel %vm479, %v7578, %v7579
      %v7602 = vsel %vm1095, %v7562, %v7601
      %v7603 = vsel %vm479, %v7579, %v7580
      %v7604 = vsel %vm1095, %v7564, %v7603
      %7617 = vst [vmem:[#allocation3 + $0x1e0] sm:$0xff] %v7582
      %7618 = vst [vmem:[#allocation3 + $0x1e8] sm:$0xff] %v7584
      %7619 = vst [vmem:[#allocation3 + $0x1f0] sm:$0xff] %v7586
      %7620 = vst [vmem:[#allocation3 + $0x1f8] sm:$0xff] %v7588
      %7621 = vst [vmem:[#allocation3 + $0x200] sm:$0xff] %v7590
      %7622 = vst [vmem:[#allocation3 + $0x208] sm:$0xff] %v7592
      %7623 = vst [vmem:[#allocation3 + $0x210] sm:$0xff] %v7594
      %7624 = vst [vmem:[#allocation3 + $0x218] sm:$0xff] %v7596
      %7625 = vst [vmem:[#allocation3 + $0x220] sm:$0xff] %v7598
      %7626 = vst [vmem:[#allocation3 + $0x228] sm:$0xff] %v7600
      %7627 = vst [vmem:[#allocation3 + $0x230] sm:$0xff] %v7602
      %7628 = vst [vmem:[#allocation3 + $0x238] sm:$0xff] %v7604
      %v7629 = vld [vmem:[#allocation2] sm:$0xff]
      %v7630 = vld [vmem:[#allocation2 + $0x8] sm:$0xff]
      %v7631 = vld [vmem:[#allocation2 + $0x10] sm:$0xff]
      %v7632 = vld [vmem:[#allocation2 + $0x18] sm:$0xff]
      %v7633 = vld [vmem:[#allocation2 + $0x20] sm:$0xff]
      %v7634 = vld [vmem:[#allocation2 + $0x28] sm:$0xff]
      %v7635 = vld [vmem:[#allocation2 + $0x30] sm:$0xf]
      %v7636 = vld [vmem:[#allocation2 + $0x34] sm:$0xff]
      %v7637 = vld [vmem:[#allocation2 + $0x3c] sm:$0xff]
      %v7638 = vld [vmem:[#allocation2 + $0x44] sm:$0xff]
      %v7639 = vld [vmem:[#allocation2 + $0x4c] sm:$0xff]
      %v7640 = vld [vmem:[#allocation2 + $0x54] sm:$0xff]
      %v7641 = vld [vmem:[#allocation2 + $0x5c] sm:$0xff]
      %v7642 = vld [vmem:[#allocation2 + $0x64] sm:$0xf]
      %7657 = vrot.lane.b32.xlu0 %v7629, 122
      %v7658 = vpop.permute.xlu0 %7657
      %7659 = vrot.lane.b32.xlu0 %v7630, 122
      %v7660 = vpop.permute.xlu0 %7659
      %7661 = vrot.lane.b32.xlu0 %v7631, 122
      %v7662 = vpop.permute.xlu0 %7661
      %7663 = vrot.lane.b32.xlu0 %v7632, 122
      %v7664 = vpop.permute.xlu0 %7663
      %7665 = vrot.lane.b32.xlu0 %v7633, 122
      %v7666 = vpop.permute.xlu0 %7665
      %7667 = vrot.lane.b32.xlu0 %v7634, 122
      %v7668 = vpop.permute.xlu0 %7667
      %7669 = vrot.lane.b32.xlu0 %v7635, 122
      %v7670 = vpop.permute.xlu0 %7669
      %7671 = vrot.lane.b32.xlu0 %v7636, 122
      %v7672 = vpop.permute.xlu0 %7671
      %7673 = vrot.lane.b32.xlu0 %v7637, 122
      %v7674 = vpop.permute.xlu0 %7673
      %7675 = vrot.lane.b32.xlu0 %v7638, 122
      %v7676 = vpop.permute.xlu0 %7675
      %7677 = vrot.lane.b32.xlu0 %v7639, 122
      %v7678 = vpop.permute.xlu0 %7677
      %7679 = vrot.lane.b32.xlu0 %v7640, 122
      %v7680 = vpop.permute.xlu0 %7679
      %7681 = vrot.lane.b32.xlu0 %v7641, 122
      %v7682 = vpop.permute.xlu0 %7681
      %7683 = vrot.lane.b32.xlu0 %v7642, 122
      %v7684 = vpop.permute.xlu0 %7683
      %v7685 = vrot.slane %v7658, 4
      %v7686 = vrot.slane %v7660, 4
      %v7687 = vrot.slane %v7662, 4
      %v7688 = vrot.slane %v7664, 4
      %v7689 = vrot.slane %v7666, 4
      %v7690 = vrot.slane %v7668, 4
      %v7691 = vrot.slane %v7670, 4
      %v7692 = vrot.slane %v7672, 4
      %v7693 = vrot.slane %v7674, 4
      %v7694 = vrot.slane %v7676, 4
      %v7695 = vrot.slane %v7678, 4
      %v7696 = vrot.slane %v7680, 4
      %v7697 = vrot.slane %v7682, 4
      %v7698 = vrot.slane %v7684, 4
      %v7699 = vsel %vm479, %v7685, %v7686
      %v7700 = vsel %vm1214, %v7658, %v7699
      %v7701 = vsel %vm479, %v7686, %v7687
      %v7702 = vsel %vm1214, %v7660, %v7701
      %v7703 = vsel %vm479, %v7687, %v7688
      %v7704 = vsel %vm1214, %v7662, %v7703
      %v7705 = vsel %vm479, %v7688, %v7689
      %v7706 = vsel %vm1214, %v7664, %v7705
      %v7707 = vsel %vm479, %v7689, %v7690
      %v7708 = vsel %vm1214, %v7666, %v7707
      %v7709 = vsel %vm479, %v7690, %v7691
      %v7710 = vsel %vm1214, %v7668, %v7709
      %v7711 = vsel %vm479, %v7692, %v7693
      %v7712 = vsel %vm1214, %v7672, %v7711
      %v7713 = vsel %vm479, %v7693, %v7694
      %v7714 = vsel %vm1214, %v7674, %v7713
      %v7715 = vsel %vm479, %v7694, %v7695
      %v7716 = vsel %vm1214, %v7676, %v7715
      %v7717 = vsel %vm479, %v7695, %v7696
      %v7718 = vsel %vm1214, %v7678, %v7717
      %v7719 = vsel %vm479, %v7696, %v7697
      %v7720 = vsel %vm1214, %v7680, %v7719
      %v7721 = vsel %vm479, %v7697, %v7698
      %v7722 = vsel %vm1214, %v7682, %v7721
      %7735 = vst [vmem:[#allocation3 + $0x240] sm:$0xff] %v7700
      %7736 = vst [vmem:[#allocation3 + $0x248] sm:$0xff] %v7702
      %7737 = vst [vmem:[#allocation3 + $0x250] sm:$0xff] %v7704
      %7738 = vst [vmem:[#allocation3 + $0x258] sm:$0xff] %v7706
      %7739 = vst [vmem:[#allocation3 + $0x260] sm:$0xff] %v7708
      %7740 = vst [vmem:[#allocation3 + $0x268] sm:$0xff] %v7710
      %7741 = vst [vmem:[#allocation3 + $0x270] sm:$0xff] %v7712
      %7742 = vst [vmem:[#allocation3 + $0x278] sm:$0xff] %v7714
      %7743 = vst [vmem:[#allocation3 + $0x280] sm:$0xff] %v7716
      %7744 = vst [vmem:[#allocation3 + $0x288] sm:$0xff] %v7718
      %7745 = vst [vmem:[#allocation3 + $0x290] sm:$0xff] %v7720
      %7746 = vst [vmem:[#allocation3 + $0x298] sm:$0xff] %v7722
      %v7747 = vld [vmem:[%s286] sm:$0xff]
      %v7748 = vld [vmem:[%s286 + $0x8] sm:$0xff]
      %v7749 = vld [vmem:[%s286 + $0x10] sm:$0xff]
      %v7750 = vld [vmem:[%s286 + $0x18] sm:$0xff]
      %v7751 = vld [vmem:[%s286 + $0x20] sm:$0xff]
      %v7752 = vld [vmem:[%s286 + $0x28] sm:$0xff]
      %v7753 = vld [vmem:[%s286 + $0x30] sm:$0xff]
      %v7754 = vld [vmem:[%s286 + $0x38] sm:$0xff]
      %v7755 = vld [vmem:[%s286 + $0x40] sm:$0xff]
      %v7756 = vld [vmem:[%s286 + $0x48] sm:$0xff]
      %v7757 = vld [vmem:[%s286 + $0x50] sm:$0xff]
      %v7758 = vld [vmem:[%s286 + $0x58] sm:$0xff]
      %v7759 = vld [vmem:[%s286 + $0x60] sm:$0xff]
      %v7760 = vld [vmem:[%s286 + $0x68] sm:$0xff]
      %v7761 = vld [vmem:[%s286 + $0x70] sm:$0xff]
      %v7762 = vld [vmem:[%s286 + $0x78] sm:$0xff]
      %v7763 = vld [vmem:[%s286 + $0x80] sm:$0xff]
      %v7764 = vld [vmem:[%s286 + $0x88] sm:$0xff]
      %v7765 = vld [vmem:[%s286 + $0x90] sm:$0xff]
      %v7766 = vld [vmem:[%s286 + $0x98] sm:$0xff]
      %s7767 = scalar_lea.vmem %s3, 112
      %v7768 = vld [vmem:[%s7767] sm:$0xf]
      %v7769 = vld [vmem:[%s7767 + $0x4] sm:$0xf]
      %v7770 = vld [vmem:[%s7767 + $0x8] sm:$0xf]
      %v7771 = vld [vmem:[%s7767 + $0xc] sm:$0xf]
      %v7772 = vld [vmem:[%s7767 + $0x10] sm:$0xf]
      %v7773 = vld [vmem:[%s7767 + $0x14] sm:$0xf]
      %v7774 = vld [vmem:[%s7767 + $0x18] sm:$0xf]
      %v7775 = vld [vmem:[%s7767 + $0x1c] sm:$0xf]
      %v7776 = vld [vmem:[%s7767 + $0x20] sm:$0xf]
      %v7777 = vld [vmem:[%s7767 + $0x24] sm:$0xf]
      %v7778 = vld [vmem:[%s7767 + $0x28] sm:$0xf]
      %v7779 = vld [vmem:[%s7767 + $0x2c] sm:$0xf]
      %v7780 = vld [vmem:[%s7767 + $0x30] sm:$0xf]
      %v7781 = vld [vmem:[%s7767 + $0x34] sm:$0xf]
      %v7782 = vld [vmem:[#allocation3] sm:$0xff]
      %v7783 = vld [vmem:[#allocation3 + $0x8] sm:$0xff]
      %v7784 = vld [vmem:[#allocation3 + $0x10] sm:$0xff]
      %v7785 = vld [vmem:[#allocation3 + $0x18] sm:$0xff]
      %v7786 = vld [vmem:[#allocation3 + $0x20] sm:$0xff]
      %v7787 = vld [vmem:[#allocation3 + $0x28] sm:$0xff]
      %v7788 = vld [vmem:[#allocation3 + $0x30] sm:$0xff]
      %v7789 = vld [vmem:[#allocation3 + $0x38] sm:$0xff]
      %v7790 = vld [vmem:[#allocation3 + $0x40] sm:$0xff]
      %v7791 = vld [vmem:[#allocation3 + $0x48] sm:$0xff]
      %v7792 = vld [vmem:[#allocation3 + $0x50] sm:$0xff]
      %v7793 = vld [vmem:[#allocation3 + $0x58] sm:$0xff]
      %v7794 = vld [vmem:[#allocation3 + $0x60] sm:$0xff]
      %v7795 = vld [vmem:[#allocation3 + $0x68] sm:$0xff]
      %v7796 = vld [vmem:[#allocation3 + $0x70] sm:$0xff]
      %v7797 = vld [vmem:[#allocation3 + $0x78] sm:$0xff]
      %v7798 = vld [vmem:[#allocation3 + $0x80] sm:$0xff]
      %v7799 = vld [vmem:[#allocation3 + $0x88] sm:$0xff]
      %v7800 = vld [vmem:[#allocation3 + $0x90] sm:$0xff]
      %v7801 = vld [vmem:[#allocation3 + $0x98] sm:$0xff]
      %v7802 = vld [vmem:[#allocation3 + $0xa0] sm:$0xff]
      %v7803 = vld [vmem:[#allocation3 + $0xa8] sm:$0xff]
      %v7804 = vld [vmem:[#allocation3 + $0xb0] sm:$0xff]
      %v7805 = vld [vmem:[#allocation3 + $0xb8] sm:$0xff]
      %v7806 = vld [vmem:[#allocation3 + $0xc0] sm:$0xff]
      %v7807 = vld [vmem:[#allocation3 + $0xc8] sm:$0xff]
      %v7808 = vld [vmem:[#allocation3 + $0xd0] sm:$0xff]
      %v7809 = vld [vmem:[#allocation3 + $0xd8] sm:$0xff]
      %v7810 = vld [vmem:[#allocation3 + $0xe0] sm:$0xff]
      %v7811 = vld [vmem:[#allocation3 + $0xe8] sm:$0xff]
      %v7812 = vld [vmem:[#allocation3 + $0xf0] sm:$0xff]
      %v7813 = vld [vmem:[#allocation3 + $0xf8] sm:$0xff]
      %v7814 = vld [vmem:[#allocation3 + $0x100] sm:$0xff]
      %v7815 = vld [vmem:[#allocation3 + $0x108] sm:$0xff]
      %v7816 = vld [vmem:[#allocation3 + $0x110] sm:$0xff]
      %v7817 = vld [vmem:[#allocation3 + $0x118] sm:$0xff]
      %v7818 = vld [vmem:[#allocation3 + $0x120] sm:$0xff]
      %v7819 = vld [vmem:[#allocation3 + $0x128] sm:$0xff]
      %v7820 = vld [vmem:[#allocation3 + $0x130] sm:$0xff]
      %v7821 = vld [vmem:[#allocation3 + $0x138] sm:$0xff]
      %v7822 = vld [vmem:[#allocation3 + $0x140] sm:$0xff]
      %v7823 = vld [vmem:[#allocation3 + $0x148] sm:$0xff]
      %v7824 = vld [vmem:[#allocation3 + $0x150] sm:$0xff]
      %v7825 = vld [vmem:[#allocation3 + $0x158] sm:$0xff]
      %v7826 = vld [vmem:[#allocation3 + $0x160] sm:$0xff]
      %v7827 = vld [vmem:[#allocation3 + $0x168] sm:$0xff]
      %v7828 = vld [vmem:[#allocation3 + $0x170] sm:$0xff]
      %v7829 = vld [vmem:[#allocation3 + $0x178] sm:$0xff]
      %v7830 = vld [vmem:[#allocation3 + $0x180] sm:$0xff]
      %v7831 = vld [vmem:[#allocation3 + $0x188] sm:$0xff]
      %v7832 = vld [vmem:[#allocation3 + $0x190] sm:$0xff]
      %v7833 = vld [vmem:[#allocation3 + $0x198] sm:$0xff]
      %v7834 = vld [vmem:[#allocation3 + $0x1a0] sm:$0xff]
      %v7835 = vld [vmem:[#allocation3 + $0x1a8] sm:$0xff]
      %v7836 = vld [vmem:[#allocation3 + $0x1b0] sm:$0xff]
      %v7837 = vld [vmem:[#allocation3 + $0x1b8] sm:$0xff]
      %v7838 = vld [vmem:[#allocation3 + $0x1c0] sm:$0xff]
      %v7839 = vld [vmem:[#allocation3 + $0x1c8] sm:$0xff]
      %v7840 = vld [vmem:[#allocation3 + $0x1d0] sm:$0xff]
      %v7841 = vld [vmem:[#allocation3 + $0x1d8] sm:$0xff]
      %v7842 = vld [vmem:[#allocation3 + $0x1e0] sm:$0xff]
      %v7843 = vld [vmem:[#allocation3 + $0x1e8] sm:$0xff]
      %v7844 = vld [vmem:[#allocation3 + $0x1f0] sm:$0xff]
      %v7845 = vld [vmem:[#allocation3 + $0x1f8] sm:$0xff]
      %v7846 = vld [vmem:[#allocation3 + $0x200] sm:$0xff]
      %v7847 = vld [vmem:[#allocation3 + $0x208] sm:$0xff]
      %v7848 = vld [vmem:[#allocation3 + $0x210] sm:$0xff]
      %v7849 = vld [vmem:[#allocation3 + $0x218] sm:$0xff]
      %v7850 = vld [vmem:[#allocation3 + $0x220] sm:$0xff]
      %v7851 = vld [vmem:[#allocation3 + $0x228] sm:$0xff]
      %v7852 = vld [vmem:[#allocation3 + $0x230] sm:$0xff]
      %v7853 = vld [vmem:[#allocation3 + $0x238] sm:$0xff]
      %v7854 = vld [vmem:[#allocation3 + $0x240] sm:$0xff]
      %v7855 = vld [vmem:[#allocation3 + $0x248] sm:$0xff]
      %v7856 = vld [vmem:[#allocation3 + $0x250] sm:$0xff]
      %v7857 = vld [vmem:[#allocation3 + $0x258] sm:$0xff]
      %v7858 = vld [vmem:[#allocation3 + $0x260] sm:$0xff]
      %v7859 = vld [vmem:[#allocation3 + $0x268] sm:$0xff]
      %v7860 = vld [vmem:[#allocation3 + $0x270] sm:$0xff]
      %v7861 = vld [vmem:[#allocation3 + $0x278] sm:$0xff]
      %v7862 = vld [vmem:[#allocation3 + $0x280] sm:$0xff]
      %v7863 = vld [vmem:[#allocation3 + $0x288] sm:$0xff]
      %v7864 = vld [vmem:[#allocation3 + $0x290] sm:$0xff]
      %v7865 = vld [vmem:[#allocation3 + $0x298] sm:$0xff]
      %v7880 = vunpack.c.l.b16 %v7768
      %v7881 = vunpack.c.l.b16 %v7769
      %v7882 = vunpack.c.l.b16 %v7770
      %v7883 = vunpack.c.l.b16 %v7771
      %v7884 = vunpack.c.l.b16 %v7772
      %v7885 = vunpack.c.l.b16 %v7773
      %v7886 = vunpack.c.l.b16 %v7774
      %v7887 = vunpack.c.l.b16 %v7775
      %v7888 = vunpack.c.l.b16 %v7776
      %v7889 = vunpack.c.l.b16 %v7777
      %v7890 = vunpack.c.l.b16 %v7778
      %v7891 = vunpack.c.l.b16 %v7779
      %v7892 = vunpack.c.l.b16 %v7780
      %v7893 = vunpack.c.l.b16 %v7781
      %v7894 = vpack.c.b16 %v7881, %v7880
      %v7895 = vpack.c.b16 %v7883, %v7882
      %v7896 = vpack.c.b16 %v7885, %v7884
      %v7897 = vpack.c.b16 %v7887, %v7886
      %v7898 = vpack.c.b16 %v7889, %v7888
      %v7899 = vpack.c.b16 %v7891, %v7890
      %v7900 = vpack.c.b16 %v7893, %v7892
      %v7985 = vunpack.c.l.b16 %v7782
      %v7986 = vunpack.c.h.b16 %v7782
      %v7987 = vunpack.c.l.b16 %v7783
      %v7988 = vunpack.c.h.b16 %v7783
      %v7989 = vunpack.c.l.b16 %v7784
      %v7990 = vunpack.c.h.b16 %v7784
      %v7991 = vunpack.c.l.b16 %v7785
      %v7992 = vunpack.c.h.b16 %v7785
      %v7993 = vunpack.c.l.b16 %v7786
      %v7994 = vunpack.c.h.b16 %v7786
      %v7995 = vunpack.c.l.b16 %v7787
      %v7996 = vunpack.c.h.b16 %v7787
      %v7997 = vunpack.c.l.b16 %v7788
      %v7998 = vunpack.c.h.b16 %v7788
      %v7999 = vunpack.c.l.b16 %v7789
      %v8000 = vunpack.c.h.b16 %v7789
      %v8001 = vunpack.c.l.b16 %v7790
      %v8002 = vunpack.c.h.b16 %v7790
      %v8003 = vunpack.c.l.b16 %v7791
      %v8004 = vunpack.c.h.b16 %v7791
      %v8005 = vunpack.c.l.b16 %v7792
      %v8006 = vunpack.c.h.b16 %v7792
      %v8007 = vunpack.c.l.b16 %v7793
      %v8008 = vunpack.c.h.b16 %v7793
      %v8009 = vunpack.c.l.b16 %v7794
      %v8010 = vunpack.c.h.b16 %v7794
      %v8011 = vunpack.c.l.b16 %v7795
      %v8012 = vunpack.c.h.b16 %v7795
      %v8013 = vunpack.c.l.b16 %v7796
      %v8014 = vunpack.c.h.b16 %v7796
      %v8015 = vunpack.c.l.b16 %v7797
      %v8016 = vunpack.c.h.b16 %v7797
      %v8017 = vunpack.c.l.b16 %v7798
      %v8018 = vunpack.c.h.b16 %v7798
      %v8019 = vunpack.c.l.b16 %v7799
      %v8020 = vunpack.c.h.b16 %v7799
      %v8021 = vunpack.c.l.b16 %v7800
      %v8022 = vunpack.c.h.b16 %v7800
      %v8023 = vunpack.c.l.b16 %v7801
      %v8024 = vunpack.c.h.b16 %v7801
      %v8025 = vunpack.c.l.b16 %v7802
      %v8026 = vunpack.c.h.b16 %v7802
      %v8027 = vunpack.c.l.b16 %v7803
      %v8028 = vunpack.c.h.b16 %v7803
      %v8029 = vunpack.c.l.b16 %v7804
      %v8030 = vunpack.c.h.b16 %v7804
      %v8031 = vunpack.c.l.b16 %v7805
      %v8032 = vunpack.c.h.b16 %v7805
      %v8033 = vunpack.c.l.b16 %v7806
      %v8034 = vunpack.c.h.b16 %v7806
      %v8035 = vunpack.c.l.b16 %v7807
      %v8036 = vunpack.c.h.b16 %v7807
      %v8037 = vunpack.c.l.b16 %v7808
      %v8038 = vunpack.c.h.b16 %v7808
      %v8039 = vunpack.c.l.b16 %v7809
      %v8040 = vunpack.c.h.b16 %v7809
      %v8041 = vunpack.c.l.b16 %v7810
      %v8042 = vunpack.c.h.b16 %v7810
      %v8043 = vunpack.c.l.b16 %v7811
      %v8044 = vunpack.c.h.b16 %v7811
      %v8045 = vunpack.c.l.b16 %v7812
      %v8046 = vunpack.c.h.b16 %v7812
      %v8047 = vunpack.c.l.b16 %v7813
      %v8048 = vunpack.c.h.b16 %v7813
      %v8049 = vunpack.c.l.b16 %v7814
      %v8050 = vunpack.c.h.b16 %v7814
      %v8051 = vunpack.c.l.b16 %v7815
      %v8052 = vunpack.c.h.b16 %v7815
      %v8053 = vunpack.c.l.b16 %v7816
      %v8054 = vunpack.c.h.b16 %v7816
      %v8055 = vunpack.c.l.b16 %v7817
      %v8056 = vunpack.c.h.b16 %v7817
      %v8057 = vunpack.c.l.b16 %v7818
      %v8058 = vunpack.c.h.b16 %v7818
      %v8059 = vunpack.c.l.b16 %v7819
      %v8060 = vunpack.c.h.b16 %v7819
      %v8061 = vunpack.c.l.b16 %v7820
      %v8062 = vunpack.c.h.b16 %v7820
      %v8063 = vunpack.c.l.b16 %v7821
      %v8064 = vunpack.c.h.b16 %v7821
      %v8065 = vunpack.c.l.b16 %v7822
      %v8066 = vunpack.c.h.b16 %v7822
      %v8067 = vunpack.c.l.b16 %v7823
      %v8068 = vunpack.c.h.b16 %v7823
      %v8069 = vunpack.c.l.b16 %v7824
      %v8070 = vunpack.c.h.b16 %v7824
      %v8071 = vunpack.c.l.b16 %v7825
      %v8072 = vunpack.c.h.b16 %v7825
      %v8073 = vunpack.c.l.b16 %v7826
      %v8074 = vunpack.c.h.b16 %v7826
      %v8075 = vunpack.c.l.b16 %v7827
      %v8076 = vunpack.c.h.b16 %v7827
      %v8077 = vunpack.c.l.b16 %v7828
      %v8078 = vunpack.c.h.b16 %v7828
      %v8079 = vunpack.c.l.b16 %v7829
      %v8080 = vunpack.c.h.b16 %v7829
      %v8081 = vunpack.c.l.b16 %v7830
      %v8082 = vunpack.c.h.b16 %v7830
      %v8083 = vunpack.c.l.b16 %v7831
      %v8084 = vunpack.c.h.b16 %v7831
      %v8085 = vunpack.c.l.b16 %v7832
      %v8086 = vunpack.c.h.b16 %v7832
      %v8087 = vunpack.c.l.b16 %v7833
      %v8088 = vunpack.c.h.b16 %v7833
      %v8089 = vunpack.c.l.b16 %v7834
      %v8090 = vunpack.c.h.b16 %v7834
      %v8091 = vunpack.c.l.b16 %v7835
      %v8092 = vunpack.c.h.b16 %v7835
      %v8093 = vunpack.c.l.b16 %v7836
      %v8094 = vunpack.c.h.b16 %v7836
      %v8095 = vunpack.c.l.b16 %v7837
      %v8096 = vunpack.c.h.b16 %v7837
      %v8097 = vunpack.c.l.b16 %v7838
      %v8098 = vunpack.c.h.b16 %v7838
      %v8099 = vunpack.c.l.b16 %v7839
      %v8100 = vunpack.c.h.b16 %v7839
      %v8101 = vunpack.c.l.b16 %v7840
      %v8102 = vunpack.c.h.b16 %v7840
      %v8103 = vunpack.c.l.b16 %v7841
      %v8104 = vunpack.c.h.b16 %v7841
      %v8105 = vunpack.c.l.b16 %v7842
      %v8106 = vunpack.c.h.b16 %v7842
      %v8107 = vunpack.c.l.b16 %v7843
      %v8108 = vunpack.c.h.b16 %v7843
      %v8109 = vunpack.c.l.b16 %v7844
      %v8110 = vunpack.c.h.b16 %v7844
      %v8111 = vunpack.c.l.b16 %v7845
      %v8112 = vunpack.c.h.b16 %v7845
      %v8113 = vunpack.c.l.b16 %v7846
      %v8114 = vunpack.c.h.b16 %v7846
      %v8115 = vunpack.c.l.b16 %v7847
      %v8116 = vunpack.c.h.b16 %v7847
      %v8117 = vunpack.c.l.b16 %v7848
      %v8118 = vunpack.c.h.b16 %v7848
      %v8119 = vunpack.c.l.b16 %v7849
      %v8120 = vunpack.c.h.b16 %v7849
      %v8121 = vunpack.c.l.b16 %v7850
      %v8122 = vunpack.c.h.b16 %v7850
      %v8123 = vunpack.c.l.b16 %v7851
      %v8124 = vunpack.c.h.b16 %v7851
      %v8125 = vunpack.c.l.b16 %v7852
      %v8126 = vunpack.c.h.b16 %v7852
      %v8127 = vunpack.c.l.b16 %v7853
      %v8128 = vunpack.c.h.b16 %v7853
      %v8129 = vunpack.c.l.b16 %v7854
      %v8130 = vunpack.c.h.b16 %v7854
      %v8131 = vunpack.c.l.b16 %v7855
      %v8132 = vunpack.c.h.b16 %v7855
      %v8133 = vunpack.c.l.b16 %v7856
      %v8134 = vunpack.c.h.b16 %v7856
      %v8135 = vunpack.c.l.b16 %v7857
      %v8136 = vunpack.c.h.b16 %v7857
      %v8137 = vunpack.c.l.b16 %v7858
      %v8138 = vunpack.c.h.b16 %v7858
      %v8139 = vunpack.c.l.b16 %v7859
      %v8140 = vunpack.c.h.b16 %v7859
      %v8141 = vunpack.c.l.b16 %v7860
      %v8142 = vunpack.c.h.b16 %v7860
      %v8143 = vunpack.c.l.b16 %v7861
      %v8144 = vunpack.c.h.b16 %v7861
      %v8145 = vunpack.c.l.b16 %v7862
      %v8146 = vunpack.c.h.b16 %v7862
      %v8147 = vunpack.c.l.b16 %v7863
      %v8148 = vunpack.c.h.b16 %v7863
      %v8149 = vunpack.c.l.b16 %v7864
      %v8150 = vunpack.c.h.b16 %v7864
      %v8151 = vunpack.c.l.b16 %v7865
      %v8152 = vunpack.c.h.b16 %v7865
      %v8153 = vpack.c.b16 %v7997, %v7985
      %v8154 = vpack.c.b16 %v7998, %v7986
      %v8155 = vpack.c.b16 %v7999, %v7987
      %v8156 = vpack.c.b16 %v8000, %v7988
      %v8157 = vpack.c.b16 %v8001, %v7989
      %v8158 = vpack.c.b16 %v8002, %v7990
      %v8159 = vpack.c.b16 %v8003, %v7991
      %v8160 = vpack.c.b16 %v8004, %v7992
      %v8161 = vpack.c.b16 %v8005, %v7993
      %v8162 = vpack.c.b16 %v8006, %v7994
      %v8163 = vpack.c.b16 %v8007, %v7995
      %v8164 = vpack.c.b16 %v8008, %v7996
      %v8165 = vpack.c.b16 %v8021, %v8009
      %v8166 = vpack.c.b16 %v8022, %v8010
      %v8167 = vpack.c.b16 %v8023, %v8011
      %v8168 = vpack.c.b16 %v8024, %v8012
      %v8169 = vpack.c.b16 %v8025, %v8013
      %v8170 = vpack.c.b16 %v8026, %v8014
      %v8171 = vpack.c.b16 %v8027, %v8015
      %v8172 = vpack.c.b16 %v8028, %v8016
      %v8173 = vpack.c.b16 %v8029, %v8017
      %v8174 = vpack.c.b16 %v8030, %v8018
      %v8175 = vpack.c.b16 %v8031, %v8019
      %v8176 = vpack.c.b16 %v8032, %v8020
      %v8177 = vpack.c.b16 %v8045, %v8033
      %v8178 = vpack.c.b16 %v8046, %v8034
      %v8179 = vpack.c.b16 %v8047, %v8035
      %v8180 = vpack.c.b16 %v8048, %v8036
      %v8181 = vpack.c.b16 %v8049, %v8037
      %v8182 = vpack.c.b16 %v8050, %v8038
      %v8183 = vpack.c.b16 %v8051, %v8039
      %v8184 = vpack.c.b16 %v8052, %v8040
      %v8185 = vpack.c.b16 %v8053, %v8041
      %v8186 = vpack.c.b16 %v8054, %v8042
      %v8187 = vpack.c.b16 %v8055, %v8043
      %v8188 = vpack.c.b16 %v8056, %v8044
      %v8189 = vpack.c.b16 %v8069, %v8057
      %v8190 = vpack.c.b16 %v8070, %v8058
      %v8191 = vpack.c.b16 %v8071, %v8059
      %v8192 = vpack.c.b16 %v8072, %v8060
      %v8193 = vpack.c.b16 %v8073, %v8061
      %v8194 = vpack.c.b16 %v8074, %v8062
      %v8195 = vpack.c.b16 %v8075, %v8063
      %v8196 = vpack.c.b16 %v8076, %v8064
      %v8197 = vpack.c.b16 %v8077, %v8065
      %v8198 = vpack.c.b16 %v8078, %v8066
      %v8199 = vpack.c.b16 %v8079, %v8067
      %v8200 = vpack.c.b16 %v8080, %v8068
      %v8201 = vpack.c.b16 %v8093, %v8081
      %v8202 = vpack.c.b16 %v8094, %v8082
      %v8203 = vpack.c.b16 %v8095, %v8083
      %v8204 = vpack.c.b16 %v8096, %v8084
      %v8205 = vpack.c.b16 %v8097, %v8085
      %v8206 = vpack.c.b16 %v8098, %v8086
      %v8207 = vpack.c.b16 %v8099, %v8087
      %v8208 = vpack.c.b16 %v8100, %v8088
      %v8209 = vpack.c.b16 %v8101, %v8089
      %v8210 = vpack.c.b16 %v8102, %v8090
      %v8211 = vpack.c.b16 %v8103, %v8091
      %v8212 = vpack.c.b16 %v8104, %v8092
      %v8213 = vpack.c.b16 %v8117, %v8105
      %v8214 = vpack.c.b16 %v8118, %v8106
      %v8215 = vpack.c.b16 %v8119, %v8107
      %v8216 = vpack.c.b16 %v8120, %v8108
      %v8217 = vpack.c.b16 %v8121, %v8109
      %v8218 = vpack.c.b16 %v8122, %v8110
      %v8219 = vpack.c.b16 %v8123, %v8111
      %v8220 = vpack.c.b16 %v8124, %v8112
      %v8221 = vpack.c.b16 %v8125, %v8113
      %v8222 = vpack.c.b16 %v8126, %v8114
      %v8223 = vpack.c.b16 %v8127, %v8115
      %v8224 = vpack.c.b16 %v8128, %v8116
      %v8225 = vpack.c.b16 %v8141, %v8129
      %v8226 = vpack.c.b16 %v8142, %v8130
      %v8227 = vpack.c.b16 %v8143, %v8131
      %v8228 = vpack.c.b16 %v8144, %v8132
      %v8229 = vpack.c.b16 %v8145, %v8133
      %v8230 = vpack.c.b16 %v8146, %v8134
      %v8231 = vpack.c.b16 %v8147, %v8135
      %v8232 = vpack.c.b16 %v8148, %v8136
      %v8233 = vpack.c.b16 %v8149, %v8137
      %v8234 = vpack.c.b16 %v8150, %v8138
      %v8235 = vpack.c.b16 %v8151, %v8139
      %v8236 = vpack.c.b16 %v8152, %v8140
      %v8322 = vsel %vm1815, %v7894, 0
      %v8325 = vsel %vm1815, %v7895, 0
      %v8328 = vsel %vm1815, %v7896, 0
      %v8331 = vsel %vm1815, %v7897, 0
      %v8334 = vsel %vm1815, %v7898, 0
      %v8337 = vsel %vm1815, %v7899, 0
      %v8340 = vsel %vm1815, %v7900, 0
      %8342 = vmatprep.subr.bf16.mxu0 0
      %8343 = vmatpush1.bf16.msra.mxu0 0
      %8344 = vmatprep.subr.bf16.mxu0 %v8226
      %8345 = vmatpush1.bf16.msra.mxu0 %v8225
      %8346 = vmatprep.subr.bf16.mxu0 %v8214
      %8347 = vmatpush1.bf16.msra.mxu0 %v8213
      %8348 = vmatprep.subr.bf16.mxu0 %v8202
      %8349 = vmatpush1.bf16.msra.mxu0 %v8201
      %8350 = vmatprep.subr.bf16.mxu0 %v8190
      %8351 = vmatpush1.bf16.msra.mxu0 %v8189
      %8352 = vmatprep.subr.bf16.mxu0 %v8178
      %8353 = vmatpush1.bf16.msra.mxu0 %v8177
      %8354 = vmatprep.subr.bf16.mxu0 %v8166
      %8355 = vmatpush1.bf16.msra.mxu0 %v8165
      %8356 = vmatprep.subr.bf16.mxu0 %v8154
      %8357 = vmatpush1.bf16.msra.mxu0 %v8153
      %8358 = vmatprep.subr.bf16.mxu0 0
      %8359 = vmatpush2.bf16.msra.mxu0 0
      %8360 = vmatprep.subr.bf16.mxu0 0
      %8361 = vmatpush2.bf16.msra.mxu0 0
      %8362 = vmatprep.subr.bf16.mxu0 0
      %8363 = vmatpush2.bf16.msra.mxu0 0
      %8364 = vmatprep.subr.bf16.mxu0 0
      %8365 = vmatpush2.bf16.msra.mxu0 0
      %8366 = vmatprep.subr.bf16.mxu0 0
      %8367 = vmatpush2.bf16.msra.mxu0 0
      %8368 = vmatprep.subr.bf16.mxu0 0
      %8369 = vmatpush2.bf16.msra.mxu0 0
      %8370 = vmatprep.subr.bf16.mxu0 0
      %8371 = vmatpush2.bf16.msra.mxu0 0
      %8372 = vmatprep.subr.bf16.mxu0 0
      %8373 = vmatpush2.bf16.msra.mxu0 0
      %8374 = vmatprep.mubr.bf16.mxu0 0
      %8375 = vmatmul.mubr.bf16.gmra.mxu0 %v8322
      %v8376 = vpop.f32.mrf.mxu0
      %v8377 = vadd.f32 0.0, %v8376
      %v8378 = vpop.f32.mrf.mxu0
      %v8379 = vadd.f32 0.0, %v8378
      %v8380 = vpop.f32.mrf.mxu0
      %v8381 = vadd.f32 0.0, %v8380
      %v8382 = vpop.f32.mrf.mxu0
      %v8383 = vadd.f32 0.0, %v8382
      %8384 = vmatprep.mubr.bf16.mxu0 0
      %8385 = vmatmul.mubr.bf16.gmra.mxu0 %v8325
      %v8386 = vpop.f32.mrf.mxu0
      %v8387 = vadd.f32 0.0, %v8386
      %v8388 = vpop.f32.mrf.mxu0
      %v8389 = vadd.f32 0.0, %v8388
      %v8390 = vpop.f32.mrf.mxu0
      %v8391 = vadd.f32 0.0, %v8390
      %v8392 = vpop.f32.mrf.mxu0
      %v8393 = vadd.f32 0.0, %v8392
      %8394 = vmatprep.mubr.bf16.mxu0 0
      %8395 = vmatmul.mubr.bf16.gmra.mxu0 %v8328
      %v8396 = vpop.f32.mrf.mxu0
      %v8397 = vadd.f32 0.0, %v8396
      %v8398 = vpop.f32.mrf.mxu0
      %v8399 = vadd.f32 0.0, %v8398
      %v8400 = vpop.f32.mrf.mxu0
      %v8401 = vadd.f32 0.0, %v8400
      %v8402 = vpop.f32.mrf.mxu0
      %v8403 = vadd.f32 0.0, %v8402
      %8404 = vmatprep.mubr.bf16.mxu0 0
      %8405 = vmatmul.mubr.bf16.gmra.mxu0 %v8331
      %v8406 = vpop.f32.mrf.mxu0
      %v8407 = vadd.f32 0.0, %v8406
      %v8408 = vpop.f32.mrf.mxu0
      %v8409 = vadd.f32 0.0, %v8408
      %v8410 = vpop.f32.mrf.mxu0
      %v8411 = vadd.f32 0.0, %v8410
      %v8412 = vpop.f32.mrf.mxu0
      %v8413 = vadd.f32 0.0, %v8412
      %8414 = vmatprep.mubr.bf16.mxu0 0
      %8415 = vmatmul.mubr.bf16.gmra.mxu0 %v8334
      %v8416 = vpop.f32.mrf.mxu0
      %v8417 = vadd.f32 0.0, %v8416
      %v8418 = vpop.f32.mrf.mxu0
      %v8419 = vadd.f32 0.0, %v8418
      %v8420 = vpop.f32.mrf.mxu0
      %v8421 = vadd.f32 0.0, %v8420
      %v8422 = vpop.f32.mrf.mxu0
      %v8423 = vadd.f32 0.0, %v8422
      %8424 = vmatprep.mubr.bf16.mxu0 0
      %8425 = vmatmul.mubr.bf16.gmra.mxu0 %v8337
      %v8426 = vpop.f32.mrf.mxu0
      %v8427 = vadd.f32 0.0, %v8426
      %v8428 = vpop.f32.mrf.mxu0
      %v8429 = vadd.f32 0.0, %v8428
      %v8430 = vpop.f32.mrf.mxu0
      %v8431 = vadd.f32 0.0, %v8430
      %v8432 = vpop.f32.mrf.mxu0
      %v8433 = vadd.f32 0.0, %v8432
      %8434 = vmatprep.mubr.bf16.mxu0 0
      %8435 = vmatmul.mubr.bf16.gmra.mxu0 %v8340
      %v8436 = vpop.f32.mrf.mxu0
      %v8437 = vadd.f32 0.0, %v8436
      %v8438 = vpop.f32.mrf.mxu0
      %v8439 = vadd.f32 0.0, %v8438
      %v8440 = vpop.f32.mrf.mxu0
      %v8441 = vadd.f32 0.0, %v8440
      %v8442 = vpop.f32.mrf.mxu0
      %v8443 = vadd.f32 0.0, %v8442
      %8444 = vdwg.mxu0
      %8445 = vmatprep.subr.bf16.mxu0 0
      %8446 = vmatpush1.bf16.msra.mxu0 0
      %8447 = vmatprep.subr.bf16.mxu0 %v8228
      %8448 = vmatpush1.bf16.msra.mxu0 %v8227
      %8449 = vmatprep.subr.bf16.mxu0 %v8216
      %8450 = vmatpush1.bf16.msra.mxu0 %v8215
      %8451 = vmatprep.subr.bf16.mxu0 %v8204
      %8452 = vmatpush1.bf16.msra.mxu0 %v8203
      %8453 = vmatprep.subr.bf16.mxu0 %v8192
      %8454 = vmatpush1.bf16.msra.mxu0 %v8191
      %8455 = vmatprep.subr.bf16.mxu0 %v8180
      %8456 = vmatpush1.bf16.msra.mxu0 %v8179
      %8457 = vmatprep.subr.bf16.mxu0 %v8168
      %8458 = vmatpush1.bf16.msra.mxu0 %v8167
      %8459 = vmatprep.subr.bf16.mxu0 %v8156
      %8460 = vmatpush1.bf16.msra.mxu0 %v8155
      %8461 = vmatprep.subr.bf16.mxu0 0
      %8462 = vmatpush2.bf16.msra.mxu0 0
      %8463 = vmatprep.subr.bf16.mxu0 0
      %8464 = vmatpush2.bf16.msra.mxu0 0
      %8465 = vmatprep.subr.bf16.mxu0 0
      %8466 = vmatpush2.bf16.msra.mxu0 0
      %8467 = vmatprep.subr.bf16.mxu0 0
      %8468 = vmatpush2.bf16.msra.mxu0 0
      %8469 = vmatprep.subr.bf16.mxu0 0
      %8470 = vmatpush2.bf16.msra.mxu0 0
      %8471 = vmatprep.subr.bf16.mxu0 0
      %8472 = vmatpush2.bf16.msra.mxu0 0
      %8473 = vmatprep.subr.bf16.mxu0 0
      %8474 = vmatpush2.bf16.msra.mxu0 0
      %8475 = vmatprep.subr.bf16.mxu0 0
      %8476 = vmatpush2.bf16.msra.mxu0 0
      %8477 = vmatprep.mubr.bf16.mxu0 0
      %8478 = vmatmul.mubr.bf16.gmra.mxu0 %v8322
      %v8479 = vpop.f32.mrf.mxu0
      %v8480 = vadd.f32 0.0, %v8479
      %v8481 = vpop.f32.mrf.mxu0
      %v8482 = vadd.f32 0.0, %v8481
      %v8483 = vpop.f32.mrf.mxu0
      %v8484 = vadd.f32 0.0, %v8483
      %v8485 = vpop.f32.mrf.mxu0
      %v8486 = vadd.f32 0.0, %v8485
      %8487 = vmatprep.mubr.bf16.mxu0 0
      %8488 = vmatmul.mubr.bf16.gmra.mxu0 %v8325
      %v8489 = vpop.f32.mrf.mxu0
      %v8490 = vadd.f32 0.0, %v8489
      %v8491 = vpop.f32.mrf.mxu0
      %v8492 = vadd.f32 0.0, %v8491
      %v8493 = vpop.f32.mrf.mxu0
      %v8494 = vadd.f32 0.0, %v8493
      %v8495 = vpop.f32.mrf.mxu0
      %v8496 = vadd.f32 0.0, %v8495
      %8497 = vmatprep.mubr.bf16.mxu0 0
      %8498 = vmatmul.mubr.bf16.gmra.mxu0 %v8328
      %v8499 = vpop.f32.mrf.mxu0
      %v8500 = vadd.f32 0.0, %v8499
      %v8501 = vpop.f32.mrf.mxu0
      %v8502 = vadd.f32 0.0, %v8501
      %v8503 = vpop.f32.mrf.mxu0
      %v8504 = vadd.f32 0.0, %v8503
      %v8505 = vpop.f32.mrf.mxu0
      %v8506 = vadd.f32 0.0, %v8505
      %8507 = vmatprep.mubr.bf16.mxu0 0
      %8508 = vmatmul.mubr.bf16.gmra.mxu0 %v8331
      %v8509 = vpop.f32.mrf.mxu0
      %v8510 = vadd.f32 0.0, %v8509
      %v8511 = vpop.f32.mrf.mxu0
      %v8512 = vadd.f32 0.0, %v8511
      %v8513 = vpop.f32.mrf.mxu0
      %v8514 = vadd.f32 0.0, %v8513
      %v8515 = vpop.f32.mrf.mxu0
      %v8516 = vadd.f32 0.0, %v8515
      %8517 = vmatprep.mubr.bf16.mxu0 0
      %8518 = vmatmul.mubr.bf16.gmra.mxu0 %v8334
      %v8519 = vpop.f32.mrf.mxu0
      %v8520 = vadd.f32 0.0, %v8519
      %v8521 = vpop.f32.mrf.mxu0
      %v8522 = vadd.f32 0.0, %v8521
      %v8523 = vpop.f32.mrf.mxu0
      %v8524 = vadd.f32 0.0, %v8523
      %v8525 = vpop.f32.mrf.mxu0
      %v8526 = vadd.f32 0.0, %v8525
      %8527 = vmatprep.mubr.bf16.mxu0 0
      %8528 = vmatmul.mubr.bf16.gmra.mxu0 %v8337
      %v8529 = vpop.f32.mrf.mxu0
      %v8530 = vadd.f32 0.0, %v8529
      %v8531 = vpop.f32.mrf.mxu0
      %v8532 = vadd.f32 0.0, %v8531
      %v8533 = vpop.f32.mrf.mxu0
      %v8534 = vadd.f32 0.0, %v8533
      %v8535 = vpop.f32.mrf.mxu0
      %v8536 = vadd.f32 0.0, %v8535
      %8537 = vmatprep.mubr.bf16.mxu0 0
      %8538 = vmatmul.mubr.bf16.gmra.mxu0 %v8340
      %v8539 = vpop.f32.mrf.mxu0
      %v8540 = vadd.f32 0.0, %v8539
      %v8541 = vpop.f32.mrf.mxu0
      %v8542 = vadd.f32 0.0, %v8541
      %v8543 = vpop.f32.mrf.mxu0
      %v8544 = vadd.f32 0.0, %v8543
      %v8545 = vpop.f32.mrf.mxu0
      %v8546 = vadd.f32 0.0, %v8545
      %8547 = vdwg.mxu0
      %8548 = vmatprep.subr.bf16.mxu0 0
      %8549 = vmatpush1.bf16.msra.mxu0 0
      %8550 = vmatprep.subr.bf16.mxu0 %v8230
      %8551 = vmatpush1.bf16.msra.mxu0 %v8229
      %8552 = vmatprep.subr.bf16.mxu0 %v8218
      %8553 = vmatpush1.bf16.msra.mxu0 %v8217
      %8554 = vmatprep.subr.bf16.mxu0 %v8206
      %8555 = vmatpush1.bf16.msra.mxu0 %v8205
      %8556 = vmatprep.subr.bf16.mxu0 %v8194
      %8557 = vmatpush1.bf16.msra.mxu0 %v8193
      %8558 = vmatprep.subr.bf16.mxu0 %v8182
      %8559 = vmatpush1.bf16.msra.mxu0 %v8181
      %8560 = vmatprep.subr.bf16.mxu0 %v8170
      %8561 = vmatpush1.bf16.msra.mxu0 %v8169
      %8562 = vmatprep.subr.bf16.mxu0 %v8158
      %8563 = vmatpush1.bf16.msra.mxu0 %v8157
      %8564 = vmatprep.subr.bf16.mxu0 0
      %8565 = vmatpush2.bf16.msra.mxu0 0
      %8566 = vmatprep.subr.bf16.mxu0 0
      %8567 = vmatpush2.bf16.msra.mxu0 0
      %8568 = vmatprep.subr.bf16.mxu0 0
      %8569 = vmatpush2.bf16.msra.mxu0 0
      %8570 = vmatprep.subr.bf16.mxu0 0
      %8571 = vmatpush2.bf16.msra.mxu0 0
      %8572 = vmatprep.subr.bf16.mxu0 0
      %8573 = vmatpush2.bf16.msra.mxu0 0
      %8574 = vmatprep.subr.bf16.mxu0 0
      %8575 = vmatpush2.bf16.msra.mxu0 0
      %8576 = vmatprep.subr.bf16.mxu0 0
      %8577 = vmatpush2.bf16.msra.mxu0 0
      %8578 = vmatprep.subr.bf16.mxu0 0
      %8579 = vmatpush2.bf16.msra.mxu0 0
      %8580 = vmatprep.mubr.bf16.mxu0 0
      %8581 = vmatmul.mubr.bf16.gmra.mxu0 %v8322
      %v8582 = vpop.f32.mrf.mxu0
      %v8583 = vadd.f32 0.0, %v8582
      %v8584 = vpop.f32.mrf.mxu0
      %v8585 = vadd.f32 0.0, %v8584
      %v8586 = vpop.f32.mrf.mxu0
      %v8587 = vadd.f32 0.0, %v8586
      %v8588 = vpop.f32.mrf.mxu0
      %v8589 = vadd.f32 0.0, %v8588
      %8590 = vmatprep.mubr.bf16.mxu0 0
      %8591 = vmatmul.mubr.bf16.gmra.mxu0 %v8325
      %v8592 = vpop.f32.mrf.mxu0
      %v8593 = vadd.f32 0.0, %v8592
      %v8594 = vpop.f32.mrf.mxu0
      %v8595 = vadd.f32 0.0, %v8594
      %v8596 = vpop.f32.mrf.mxu0
      %v8597 = vadd.f32 0.0, %v8596
      %v8598 = vpop.f32.mrf.mxu0
      %v8599 = vadd.f32 0.0, %v8598
      %8600 = vmatprep.mubr.bf16.mxu0 0
      %8601 = vmatmul.mubr.bf16.gmra.mxu0 %v8328
      %v8602 = vpop.f32.mrf.mxu0
      %v8603 = vadd.f32 0.0, %v8602
      %v8604 = vpop.f32.mrf.mxu0
      %v8605 = vadd.f32 0.0, %v8604
      %v8606 = vpop.f32.mrf.mxu0
      %v8607 = vadd.f32 0.0, %v8606
      %v8608 = vpop.f32.mrf.mxu0
      %v8609 = vadd.f32 0.0, %v8608
      %8610 = vmatprep.mubr.bf16.mxu0 0
      %8611 = vmatmul.mubr.bf16.gmra.mxu0 %v8331
      %v8612 = vpop.f32.mrf.mxu0
      %v8613 = vadd.f32 0.0, %v8612
      %v8614 = vpop.f32.mrf.mxu0
      %v8615 = vadd.f32 0.0, %v8614
      %v8616 = vpop.f32.mrf.mxu0
      %v8617 = vadd.f32 0.0, %v8616
      %v8618 = vpop.f32.mrf.mxu0
      %v8619 = vadd.f32 0.0, %v8618
      %8620 = vmatprep.mubr.bf16.mxu0 0
      %8621 = vmatmul.mubr.bf16.gmra.mxu0 %v8334
      %v8622 = vpop.f32.mrf.mxu0
      %v8623 = vadd.f32 0.0, %v8622
      %v8624 = vpop.f32.mrf.mxu0
      %v8625 = vadd.f32 0.0, %v8624
      %v8626 = vpop.f32.mrf.mxu0
      %v8627 = vadd.f32 0.0, %v8626
      %v8628 = vpop.f32.mrf.mxu0
      %v8629 = vadd.f32 0.0, %v8628
      %8630 = vmatprep.mubr.bf16.mxu0 0
      %8631 = vmatmul.mubr.bf16.gmra.mxu0 %v8337
      %v8632 = vpop.f32.mrf.mxu0
      %v8633 = vadd.f32 0.0, %v8632
      %v8634 = vpop.f32.mrf.mxu0
      %v8635 = vadd.f32 0.0, %v8634
      %v8636 = vpop.f32.mrf.mxu0
      %v8637 = vadd.f32 0.0, %v8636
      %v8638 = vpop.f32.mrf.mxu0
      %v8639 = vadd.f32 0.0, %v8638
      %8640 = vmatprep.mubr.bf16.mxu0 0
      %8641 = vmatmul.mubr.bf16.gmra.mxu0 %v8340
      %v8642 = vpop.f32.mrf.mxu0
      %v8643 = vadd.f32 0.0, %v8642
      %v8644 = vpop.f32.mrf.mxu0
      %v8645 = vadd.f32 0.0, %v8644
      %v8646 = vpop.f32.mrf.mxu0
      %v8647 = vadd.f32 0.0, %v8646
      %v8648 = vpop.f32.mrf.mxu0
      %v8649 = vadd.f32 0.0, %v8648
      %8650 = vdwg.mxu0
      %8651 = vmatprep.subr.bf16.mxu0 0
      %8652 = vmatpush1.bf16.msra.mxu0 0
      %8653 = vmatprep.subr.bf16.mxu0 %v8232
      %8654 = vmatpush1.bf16.msra.mxu0 %v8231
      %8655 = vmatprep.subr.bf16.mxu0 %v8220
      %8656 = vmatpush1.bf16.msra.mxu0 %v8219
      %8657 = vmatprep.subr.bf16.mxu0 %v8208
      %8658 = vmatpush1.bf16.msra.mxu0 %v8207
      %8659 = vmatprep.subr.bf16.mxu0 %v8196
      %8660 = vmatpush1.bf16.msra.mxu0 %v8195
      %8661 = vmatprep.subr.bf16.mxu0 %v8184
      %8662 = vmatpush1.bf16.msra.mxu0 %v8183
      %8663 = vmatprep.subr.bf16.mxu0 %v8172
      %8664 = vmatpush1.bf16.msra.mxu0 %v8171
      %8665 = vmatprep.subr.bf16.mxu0 %v8160
      %8666 = vmatpush1.bf16.msra.mxu0 %v8159
      %8667 = vmatprep.subr.bf16.mxu0 0
      %8668 = vmatpush2.bf16.msra.mxu0 0
      %8669 = vmatprep.subr.bf16.mxu0 0
      %8670 = vmatpush2.bf16.msra.mxu0 0
      %8671 = vmatprep.subr.bf16.mxu0 0
      %8672 = vmatpush2.bf16.msra.mxu0 0
      %8673 = vmatprep.subr.bf16.mxu0 0
      %8674 = vmatpush2.bf16.msra.mxu0 0
      %8675 = vmatprep.subr.bf16.mxu0 0
      %8676 = vmatpush2.bf16.msra.mxu0 0
      %8677 = vmatprep.subr.bf16.mxu0 0
      %8678 = vmatpush2.bf16.msra.mxu0 0
      %8679 = vmatprep.subr.bf16.mxu0 0
      %8680 = vmatpush2.bf16.msra.mxu0 0
      %8681 = vmatprep.subr.bf16.mxu0 0
      %8682 = vmatpush2.bf16.msra.mxu0 0
      %8683 = vmatprep.mubr.bf16.mxu0 0
      %8684 = vmatmul.mubr.bf16.gmra.mxu0 %v8322
      %v8685 = vpop.f32.mrf.mxu0
      %v8686 = vadd.f32 0.0, %v8685
      %v8687 = vpop.f32.mrf.mxu0
      %v8688 = vadd.f32 0.0, %v8687
      %v8689 = vpop.f32.mrf.mxu0
      %v8690 = vadd.f32 0.0, %v8689
      %v8691 = vpop.f32.mrf.mxu0
      %v8692 = vadd.f32 0.0, %v8691
      %8693 = vmatprep.mubr.bf16.mxu0 0
      %8694 = vmatmul.mubr.bf16.gmra.mxu0 %v8325
      %v8695 = vpop.f32.mrf.mxu0
      %v8696 = vadd.f32 0.0, %v8695
      %v8697 = vpop.f32.mrf.mxu0
      %v8698 = vadd.f32 0.0, %v8697
      %v8699 = vpop.f32.mrf.mxu0
      %v8700 = vadd.f32 0.0, %v8699
      %v8701 = vpop.f32.mrf.mxu0
      %v8702 = vadd.f32 0.0, %v8701
      %8703 = vmatprep.mubr.bf16.mxu0 0
      %8704 = vmatmul.mubr.bf16.gmra.mxu0 %v8328
      %v8705 = vpop.f32.mrf.mxu0
      %v8706 = vadd.f32 0.0, %v8705
      %v8707 = vpop.f32.mrf.mxu0
      %v8708 = vadd.f32 0.0, %v8707
      %v8709 = vpop.f32.mrf.mxu0
      %v8710 = vadd.f32 0.0, %v8709
      %v8711 = vpop.f32.mrf.mxu0
      %v8712 = vadd.f32 0.0, %v8711
      %8713 = vmatprep.mubr.bf16.mxu0 0
      %8714 = vmatmul.mubr.bf16.gmra.mxu0 %v8331
      %v8715 = vpop.f32.mrf.mxu0
      %v8716 = vadd.f32 0.0, %v8715
      %v8717 = vpop.f32.mrf.mxu0
      %v8718 = vadd.f32 0.0, %v8717
      %v8719 = vpop.f32.mrf.mxu0
      %v8720 = vadd.f32 0.0, %v8719
      %v8721 = vpop.f32.mrf.mxu0
      %v8722 = vadd.f32 0.0, %v8721
      %8723 = vmatprep.mubr.bf16.mxu0 0
      %8724 = vmatmul.mubr.bf16.gmra.mxu0 %v8334
      %v8725 = vpop.f32.mrf.mxu0
      %v8726 = vadd.f32 0.0, %v8725
      %v8727 = vpop.f32.mrf.mxu0
      %v8728 = vadd.f32 0.0, %v8727
      %v8729 = vpop.f32.mrf.mxu0
      %v8730 = vadd.f32 0.0, %v8729
      %v8731 = vpop.f32.mrf.mxu0
      %v8732 = vadd.f32 0.0, %v8731
      %8733 = vmatprep.mubr.bf16.mxu0 0
      %8734 = vmatmul.mubr.bf16.gmra.mxu0 %v8337
      %v8735 = vpop.f32.mrf.mxu0
      %v8736 = vadd.f32 0.0, %v8735
      %v8737 = vpop.f32.mrf.mxu0
      %v8738 = vadd.f32 0.0, %v8737
      %v8739 = vpop.f32.mrf.mxu0
      %v8740 = vadd.f32 0.0, %v8739
      %v8741 = vpop.f32.mrf.mxu0
      %v8742 = vadd.f32 0.0, %v8741
      %8743 = vmatprep.mubr.bf16.mxu0 0
      %8744 = vmatmul.mubr.bf16.gmra.mxu0 %v8340
      %v8745 = vpop.f32.mrf.mxu0
      %v8746 = vadd.f32 0.0, %v8745
      %v8747 = vpop.f32.mrf.mxu0
      %v8748 = vadd.f32 0.0, %v8747
      %v8749 = vpop.f32.mrf.mxu0
      %v8750 = vadd.f32 0.0, %v8749
      %v8751 = vpop.f32.mrf.mxu0
      %v8752 = vadd.f32 0.0, %v8751
      %8753 = vdwg.mxu0
      %8754 = vmatprep.subr.bf16.mxu0 0
      %8755 = vmatpush1.bf16.msra.mxu0 0
      %8756 = vmatprep.subr.bf16.mxu0 %v8234
      %8757 = vmatpush1.bf16.msra.mxu0 %v8233
      %8758 = vmatprep.subr.bf16.mxu0 %v8222
      %8759 = vmatpush1.bf16.msra.mxu0 %v8221
      %8760 = vmatprep.subr.bf16.mxu0 %v8210
      %8761 = vmatpush1.bf16.msra.mxu0 %v8209
      %8762 = vmatprep.subr.bf16.mxu0 %v8198
      %8763 = vmatpush1.bf16.msra.mxu0 %v8197
      %8764 = vmatprep.subr.bf16.mxu0 %v8186
      %8765 = vmatpush1.bf16.msra.mxu0 %v8185
      %8766 = vmatprep.subr.bf16.mxu0 %v8174
      %8767 = vmatpush1.bf16.msra.mxu0 %v8173
      %8768 = vmatprep.subr.bf16.mxu0 %v8162
      %8769 = vmatpush1.bf16.msra.mxu0 %v8161
      %8770 = vmatprep.subr.bf16.mxu0 0
      %8771 = vmatpush2.bf16.msra.mxu0 0
      %8772 = vmatprep.subr.bf16.mxu0 0
      %8773 = vmatpush2.bf16.msra.mxu0 0
      %8774 = vmatprep.subr.bf16.mxu0 0
      %8775 = vmatpush2.bf16.msra.mxu0 0
      %8776 = vmatprep.subr.bf16.mxu0 0
      %8777 = vmatpush2.bf16.msra.mxu0 0
      %8778 = vmatprep.subr.bf16.mxu0 0
      %8779 = vmatpush2.bf16.msra.mxu0 0
      %8780 = vmatprep.subr.bf16.mxu0 0
      %8781 = vmatpush2.bf16.msra.mxu0 0
      %8782 = vmatprep.subr.bf16.mxu0 0
      %8783 = vmatpush2.bf16.msra.mxu0 0
      %8784 = vmatprep.subr.bf16.mxu0 0
      %8785 = vmatpush2.bf16.msra.mxu0 0
      %8786 = vmatprep.mubr.bf16.mxu0 0
      %8787 = vmatmul.mubr.bf16.gmra.mxu0 %v8322
      %v8788 = vpop.f32.mrf.mxu0
      %v8789 = vadd.f32 0.0, %v8788
      %v8790 = vpop.f32.mrf.mxu0
      %v8791 = vadd.f32 0.0, %v8790
      %v8792 = vpop.f32.mrf.mxu0
      %v8793 = vadd.f32 0.0, %v8792
      %v8794 = vpop.f32.mrf.mxu0
      %v8795 = vadd.f32 0.0, %v8794
      %8796 = vmatprep.mubr.bf16.mxu0 0
      %8797 = vmatmul.mubr.bf16.gmra.mxu0 %v8325
      %v8798 = vpop.f32.mrf.mxu0
      %v8799 = vadd.f32 0.0, %v8798
      %v8800 = vpop.f32.mrf.mxu0
      %v8801 = vadd.f32 0.0, %v8800
      %v8802 = vpop.f32.mrf.mxu0
      %v8803 = vadd.f32 0.0, %v8802
      %v8804 = vpop.f32.mrf.mxu0
      %v8805 = vadd.f32 0.0, %v8804
      %8806 = vmatprep.mubr.bf16.mxu0 0
      %8807 = vmatmul.mubr.bf16.gmra.mxu0 %v8328
      %v8808 = vpop.f32.mrf.mxu0
      %v8809 = vadd.f32 0.0, %v8808
      %v8810 = vpop.f32.mrf.mxu0
      %v8811 = vadd.f32 0.0, %v8810
      %v8812 = vpop.f32.mrf.mxu0
      %v8813 = vadd.f32 0.0, %v8812
      %v8814 = vpop.f32.mrf.mxu0
      %v8815 = vadd.f32 0.0, %v8814
      %8816 = vmatprep.mubr.bf16.mxu0 0
      %8817 = vmatmul.mubr.bf16.gmra.mxu0 %v8331
      %v8818 = vpop.f32.mrf.mxu0
      %v8819 = vadd.f32 0.0, %v8818
      %v8820 = vpop.f32.mrf.mxu0
      %v8821 = vadd.f32 0.0, %v8820
      %v8822 = vpop.f32.mrf.mxu0
      %v8823 = vadd.f32 0.0, %v8822
      %v8824 = vpop.f32.mrf.mxu0
      %v8825 = vadd.f32 0.0, %v8824
      %8826 = vmatprep.mubr.bf16.mxu0 0
      %8827 = vmatmul.mubr.bf16.gmra.mxu0 %v8334
      %v8828 = vpop.f32.mrf.mxu0
      %v8829 = vadd.f32 0.0, %v8828
      %v8830 = vpop.f32.mrf.mxu0
      %v8831 = vadd.f32 0.0, %v8830
      %v8832 = vpop.f32.mrf.mxu0
      %v8833 = vadd.f32 0.0, %v8832
      %v8834 = vpop.f32.mrf.mxu0
      %v8835 = vadd.f32 0.0, %v8834
      %8836 = vmatprep.mubr.bf16.mxu0 0
      %8837 = vmatmul.mubr.bf16.gmra.mxu0 %v8337
      %v8838 = vpop.f32.mrf.mxu0
      %v8839 = vadd.f32 0.0, %v8838
      %v8840 = vpop.f32.mrf.mxu0
      %v8841 = vadd.f32 0.0, %v8840
      %v8842 = vpop.f32.mrf.mxu0
      %v8843 = vadd.f32 0.0, %v8842
      %v8844 = vpop.f32.mrf.mxu0
      %v8845 = vadd.f32 0.0, %v8844
      %8846 = vmatprep.mubr.bf16.mxu0 0
      %8847 = vmatmul.mubr.bf16.gmra.mxu0 %v8340
      %v8848 = vpop.f32.mrf.mxu0
      %v8849 = vadd.f32 0.0, %v8848
      %v8850 = vpop.f32.mrf.mxu0
      %v8851 = vadd.f32 0.0, %v8850
      %v8852 = vpop.f32.mrf.mxu0
      %v8853 = vadd.f32 0.0, %v8852
      %v8854 = vpop.f32.mrf.mxu0
      %v8855 = vadd.f32 0.0, %v8854
      %8856 = vdwg.mxu0
      %8857 = vmatprep.subr.bf16.mxu0 0
      %8858 = vmatpush1.bf16.msra.mxu0 0
      %8859 = vmatprep.subr.bf16.mxu0 %v8236
      %8860 = vmatpush1.bf16.msra.mxu0 %v8235
      %8861 = vmatprep.subr.bf16.mxu0 %v8224
      %8862 = vmatpush1.bf16.msra.mxu0 %v8223
      %8863 = vmatprep.subr.bf16.mxu0 %v8212
      %8864 = vmatpush1.bf16.msra.mxu0 %v8211
      %8865 = vmatprep.subr.bf16.mxu0 %v8200
      %8866 = vmatpush1.bf16.msra.mxu0 %v8199
      %8867 = vmatprep.subr.bf16.mxu0 %v8188
      %8868 = vmatpush1.bf16.msra.mxu0 %v8187
      %8869 = vmatprep.subr.bf16.mxu0 %v8176
      %8870 = vmatpush1.bf16.msra.mxu0 %v8175
      %8871 = vmatprep.subr.bf16.mxu0 %v8164
      %8872 = vmatpush1.bf16.msra.mxu0 %v8163
      %8873 = vmatprep.subr.bf16.mxu0 0
      %8874 = vmatpush2.bf16.msra.mxu0 0
      %8875 = vmatprep.subr.bf16.mxu0 0
      %8876 = vmatpush2.bf16.msra.mxu0 0
      %8877 = vmatprep.subr.bf16.mxu0 0
      %8878 = vmatpush2.bf16.msra.mxu0 0
      %8879 = vmatprep.subr.bf16.mxu0 0
      %8880 = vmatpush2.bf16.msra.mxu0 0
      %8881 = vmatprep.subr.bf16.mxu0 0
      %8882 = vmatpush2.bf16.msra.mxu0 0
      %8883 = vmatprep.subr.bf16.mxu0 0
      %8884 = vmatpush2.bf16.msra.mxu0 0
      %8885 = vmatprep.subr.bf16.mxu0 0
      %8886 = vmatpush2.bf16.msra.mxu0 0
      %8887 = vmatprep.subr.bf16.mxu0 0
      %8888 = vmatpush2.bf16.msra.mxu0 0
      %8889 = vmatprep.mubr.bf16.mxu0 0
      %8890 = vmatmul.mubr.bf16.gmra.mxu0 %v8322
      %v8891 = vpop.f32.mrf.mxu0
      %v8892 = vadd.f32 0.0, %v8891
      %v8893 = vpop.f32.mrf.mxu0
      %v8894 = vadd.f32 0.0, %v8893
      %v8895 = vpop.f32.mrf.mxu0
      %v8896 = vadd.f32 0.0, %v8895
      %v8897 = vpop.f32.mrf.mxu0
      %v8898 = vadd.f32 0.0, %v8897
      %8899 = vmatprep.mubr.bf16.mxu0 0
      %8900 = vmatmul.mubr.bf16.gmra.mxu0 %v8325
      %v8901 = vpop.f32.mrf.mxu0
      %v8902 = vadd.f32 0.0, %v8901
      %v8903 = vpop.f32.mrf.mxu0
      %v8904 = vadd.f32 0.0, %v8903
      %v8905 = vpop.f32.mrf.mxu0
      %v8906 = vadd.f32 0.0, %v8905
      %v8907 = vpop.f32.mrf.mxu0
      %v8908 = vadd.f32 0.0, %v8907
      %8909 = vmatprep.mubr.bf16.mxu0 0
      %8910 = vmatmul.mubr.bf16.gmra.mxu0 %v8328
      %v8911 = vpop.f32.mrf.mxu0
      %v8912 = vadd.f32 0.0, %v8911
      %v8913 = vpop.f32.mrf.mxu0
      %v8914 = vadd.f32 0.0, %v8913
      %v8915 = vpop.f32.mrf.mxu0
      %v8916 = vadd.f32 0.0, %v8915
      %v8917 = vpop.f32.mrf.mxu0
      %v8918 = vadd.f32 0.0, %v8917
      %8919 = vmatprep.mubr.bf16.mxu0 0
      %8920 = vmatmul.mubr.bf16.gmra.mxu0 %v8331
      %v8921 = vpop.f32.mrf.mxu0
      %v8922 = vadd.f32 0.0, %v8921
      %v8923 = vpop.f32.mrf.mxu0
      %v8924 = vadd.f32 0.0, %v8923
      %v8925 = vpop.f32.mrf.mxu0
      %v8926 = vadd.f32 0.0, %v8925
      %v8927 = vpop.f32.mrf.mxu0
      %v8928 = vadd.f32 0.0, %v8927
      %8929 = vmatprep.mubr.bf16.mxu0 0
      %8930 = vmatmul.mubr.bf16.gmra.mxu0 %v8334
      %v8931 = vpop.f32.mrf.mxu0
      %v8932 = vadd.f32 0.0, %v8931
      %v8933 = vpop.f32.mrf.mxu0
      %v8934 = vadd.f32 0.0, %v8933
      %v8935 = vpop.f32.mrf.mxu0
      %v8936 = vadd.f32 0.0, %v8935
      %v8937 = vpop.f32.mrf.mxu0
      %v8938 = vadd.f32 0.0, %v8937
      %8939 = vmatprep.mubr.bf16.mxu0 0
      %8940 = vmatmul.mubr.bf16.gmra.mxu0 %v8337
      %v8941 = vpop.f32.mrf.mxu0
      %v8942 = vadd.f32 0.0, %v8941
      %v8943 = vpop.f32.mrf.mxu0
      %v8944 = vadd.f32 0.0, %v8943
      %v8945 = vpop.f32.mrf.mxu0
      %v8946 = vadd.f32 0.0, %v8945
      %v8947 = vpop.f32.mrf.mxu0
      %v8948 = vadd.f32 0.0, %v8947
      %8949 = vmatprep.mubr.bf16.mxu0 0
      %8950 = vmatmul.mubr.bf16.gmra.mxu0 %v8340
      %v8951 = vpop.f32.mrf.mxu0
      %v8952 = vadd.f32 0.0, %v8951
      %v8953 = vpop.f32.mrf.mxu0
      %v8954 = vadd.f32 0.0, %v8953
      %v8955 = vpop.f32.mrf.mxu0
      %v8956 = vadd.f32 0.0, %v8955
      %v8957 = vpop.f32.mrf.mxu0
      %v8958 = vadd.f32 0.0, %v8957
      %8959 = vdwg.mxu0
      %8960 = vst [vmem:[#allocation4] sm:$0xff] %v8377
      %8961 = vst [vmem:[#allocation4 + $0x8] sm:$0xff] %v8379
      %8962 = vst [vmem:[#allocation4 + $0x10] sm:$0xff] %v8480
      %8963 = vst [vmem:[#allocation4 + $0x18] sm:$0xff] %v8482
      %8964 = vst [vmem:[#allocation4 + $0x20] sm:$0xff] %v8583
      %8965 = vst [vmem:[#allocation4 + $0x28] sm:$0xff] %v8585
      %8966 = vst [vmem:[#allocation4 + $0x30] sm:$0xff] %v8686
      %8967 = vst [vmem:[#allocation4 + $0x38] sm:$0xff] %v8688
      %8968 = vst [vmem:[#allocation4 + $0x40] sm:$0xff] %v8789
      %8969 = vst [vmem:[#allocation4 + $0x48] sm:$0xff] %v8791
      %8970 = vst [vmem:[#allocation4 + $0x50] sm:$0xff] %v8892
      %8971 = vst [vmem:[#allocation4 + $0x58] sm:$0xff] %v8894
      %8972 = vst [vmem:[#allocation4 + $0x60] sm:$0xff] %v8381
      %8973 = vst [vmem:[#allocation4 + $0x68] sm:$0xff] %v8383
      %8974 = vst [vmem:[#allocation4 + $0x70] sm:$0xff] %v8484
      %8975 = vst [vmem:[#allocation4 + $0x78] sm:$0xff] %v8486
      %8976 = vst [vmem:[#allocation4 + $0x80] sm:$0xff] %v8587
      %8977 = vst [vmem:[#allocation4 + $0x88] sm:$0xff] %v8589
      %8978 = vst [vmem:[#allocation4 + $0x90] sm:$0xff] %v8690
      %8979 = vst [vmem:[#allocation4 + $0x98] sm:$0xff] %v8692
      %8980 = vst [vmem:[#allocation4 + $0xa0] sm:$0xff] %v8793
      %8981 = vst [vmem:[#allocation4 + $0xa8] sm:$0xff] %v8795
      %8982 = vst [vmem:[#allocation4 + $0xb0] sm:$0xff] %v8896
      %8983 = vst [vmem:[#allocation4 + $0xb8] sm:$0xff] %v8898
      %8984 = vst [vmem:[#allocation4 + $0xc0] sm:$0xff] %v8387
      %8985 = vst [vmem:[#allocation4 + $0xc8] sm:$0xff] %v8389
      %8986 = vst [vmem:[#allocation4 + $0xd0] sm:$0xff] %v8490
      %8987 = vst [vmem:[#allocation4 + $0xd8] sm:$0xff] %v8492
      %8988 = vst [vmem:[#allocation4 + $0xe0] sm:$0xff] %v8593
      %8989 = vst [vmem:[#allocation4 + $0xe8] sm:$0xff] %v8595
      %8990 = vst [vmem:[#allocation4 + $0xf0] sm:$0xff] %v8696
      %8991 = vst [vmem:[#allocation4 + $0xf8] sm:$0xff] %v8698
      %8992 = vst [vmem:[#allocation4 + $0x100] sm:$0xff] %v8799
      %8993 = vst [vmem:[#allocation4 + $0x108] sm:$0xff] %v8801
      %8994 = vst [vmem:[#allocation4 + $0x110] sm:$0xff] %v8902
      %8995 = vst [vmem:[#allocation4 + $0x118] sm:$0xff] %v8904
      %8996 = vst [vmem:[#allocation4 + $0x120] sm:$0xff] %v8391
      %8997 = vst [vmem:[#allocation4 + $0x128] sm:$0xff] %v8393
      %8998 = vst [vmem:[#allocation4 + $0x130] sm:$0xff] %v8494
      %8999 = vst [vmem:[#allocation4 + $0x138] sm:$0xff] %v8496
      %9000 = vst [vmem:[#allocation4 + $0x140] sm:$0xff] %v8597
      %9001 = vst [vmem:[#allocation4 + $0x148] sm:$0xff] %v8599
      %9002 = vst [vmem:[#allocation4 + $0x150] sm:$0xff] %v8700
      %9003 = vst [vmem:[#allocation4 + $0x158] sm:$0xff] %v8702
      %9004 = vst [vmem:[#allocation4 + $0x160] sm:$0xff] %v8803
      %9005 = vst [vmem:[#allocation4 + $0x168] sm:$0xff] %v8805
      %9006 = vst [vmem:[#allocation4 + $0x170] sm:$0xff] %v8906
      %9007 = vst [vmem:[#allocation4 + $0x178] sm:$0xff] %v8908
      %9008 = vst [vmem:[#allocation4 + $0x180] sm:$0xff] %v8397
      %9009 = vst [vmem:[#allocation4 + $0x188] sm:$0xff] %v8399
      %9010 = vst [vmem:[#allocation4 + $0x190] sm:$0xff] %v8500
      %9011 = vst [vmem:[#allocation4 + $0x198] sm:$0xff] %v8502
      %9012 = vst [vmem:[#allocation4 + $0x1a0] sm:$0xff] %v8603
      %9013 = vst [vmem:[#allocation4 + $0x1a8] sm:$0xff] %v8605
      %9014 = vst [vmem:[#allocation4 + $0x1b0] sm:$0xff] %v8706
      %9015 = vst [vmem:[#allocation4 + $0x1b8] sm:$0xff] %v8708
      %9016 = vst [vmem:[#allocation4 + $0x1c0] sm:$0xff] %v8809
      %9017 = vst [vmem:[#allocation4 + $0x1c8] sm:$0xff] %v8811
      %9018 = vst [vmem:[#allocation4 + $0x1d0] sm:$0xff] %v8912
      %9019 = vst [vmem:[#allocation4 + $0x1d8] sm:$0xff] %v8914
      %9020 = vst [vmem:[#allocation4 + $0x1e0] sm:$0xff] %v8401
      %9021 = vst [vmem:[#allocation4 + $0x1e8] sm:$0xff] %v8403
      %9022 = vst [vmem:[#allocation4 + $0x1f0] sm:$0xff] %v8504
      %9023 = vst [vmem:[#allocation4 + $0x1f8] sm:$0xff] %v8506
      %9024 = vst [vmem:[#allocation4 + $0x200] sm:$0xff] %v8607
      %9025 = vst [vmem:[#allocation4 + $0x208] sm:$0xff] %v8609
      %9026 = vst [vmem:[#allocation4 + $0x210] sm:$0xff] %v8710
      %9027 = vst [vmem:[#allocation4 + $0x218] sm:$0xff] %v8712
      %9028 = vst [vmem:[#allocation4 + $0x220] sm:$0xff] %v8813
      %9029 = vst [vmem:[#allocation4 + $0x228] sm:$0xff] %v8815
      %9030 = vst [vmem:[#allocation4 + $0x230] sm:$0xff] %v8916
      %9031 = vst [vmem:[#allocation4 + $0x238] sm:$0xff] %v8918
      %9032 = vst [vmem:[#allocation4 + $0x240] sm:$0xff] %v8407
      %9033 = vst [vmem:[#allocation4 + $0x248] sm:$0xff] %v8409
      %9034 = vst [vmem:[#allocation4 + $0x250] sm:$0xff] %v8510
      %9035 = vst [vmem:[#allocation4 + $0x258] sm:$0xff] %v8512
      %9036 = vst [vmem:[#allocation4 + $0x260] sm:$0xff] %v8613
      %9037 = vst [vmem:[#allocation4 + $0x268] sm:$0xff] %v8615
      %9038 = vst [vmem:[#allocation4 + $0x270] sm:$0xff] %v8716
      %9039 = vst [vmem:[#allocation4 + $0x278] sm:$0xff] %v8718
      %9040 = vst [vmem:[#allocation4 + $0x280] sm:$0xff] %v8819
      %9041 = vst [vmem:[#allocation4 + $0x288] sm:$0xff] %v8821
      %9042 = vst [vmem:[#allocation4 + $0x290] sm:$0xff] %v8922
      %9043 = vst [vmem:[#allocation4 + $0x298] sm:$0xff] %v8924
      %9044 = vst [vmem:[#allocation4 + $0x2a0] sm:$0xff] %v8411
      %9045 = vst [vmem:[#allocation4 + $0x2a8] sm:$0xff] %v8413
      %9046 = vst [vmem:[#allocation4 + $0x2b0] sm:$0xff] %v8514
      %9047 = vst [vmem:[#allocation4 + $0x2b8] sm:$0xff] %v8516
      %9048 = vst [vmem:[#allocation4 + $0x2c0] sm:$0xff] %v8617
      %9049 = vst [vmem:[#allocation4 + $0x2c8] sm:$0xff] %v8619
      %9050 = vst [vmem:[#allocation4 + $0x2d0] sm:$0xff] %v8720
      %9051 = vst [vmem:[#allocation4 + $0x2d8] sm:$0xff] %v8722
      %9052 = vst [vmem:[#allocation4 + $0x2e0] sm:$0xff] %v8823
      %9053 = vst [vmem:[#allocation4 + $0x2e8] sm:$0xff] %v8825
      %9054 = vst [vmem:[#allocation4 + $0x2f0] sm:$0xff] %v8926
      %9055 = vst [vmem:[#allocation4 + $0x2f8] sm:$0xff] %v8928
      %9056 = vst [vmem:[#allocation4 + $0x300] sm:$0xff] %v8417
      %9057 = vst [vmem:[#allocation4 + $0x308] sm:$0xff] %v8419
      %9058 = vst [vmem:[#allocation4 + $0x310] sm:$0xff] %v8520
      %9059 = vst [vmem:[#allocation4 + $0x318] sm:$0xff] %v8522
      %9060 = vst [vmem:[#allocation4 + $0x320] sm:$0xff] %v8623
      %9061 = vst [vmem:[#allocation4 + $0x328] sm:$0xff] %v8625
      %9062 = vst [vmem:[#allocation4 + $0x330] sm:$0xff] %v8726
      %9063 = vst [vmem:[#allocation4 + $0x338] sm:$0xff] %v8728
      %9064 = vst [vmem:[#allocation4 + $0x340] sm:$0xff] %v8829
      %9065 = vst [vmem:[#allocation4 + $0x348] sm:$0xff] %v8831
      %9066 = vst [vmem:[#allocation4 + $0x350] sm:$0xff] %v8932
      %9067 = vst [vmem:[#allocation4 + $0x358] sm:$0xff] %v8934
      %9068 = vst [vmem:[#allocation4 + $0x360] sm:$0xff] %v8421
      %9069 = vst [vmem:[#allocation4 + $0x368] sm:$0xff] %v8423
      %9070 = vst [vmem:[#allocation4 + $0x370] sm:$0xff] %v8524
      %9071 = vst [vmem:[#allocation4 + $0x378] sm:$0xff] %v8526
      %9072 = vst [vmem:[#allocation4 + $0x380] sm:$0xff] %v8627
      %9073 = vst [vmem:[#allocation4 + $0x388] sm:$0xff] %v8629
      %9074 = vst [vmem:[#allocation4 + $0x390] sm:$0xff] %v8730
      %9075 = vst [vmem:[#allocation4 + $0x398] sm:$0xff] %v8732
      %9076 = vst [vmem:[#allocation4 + $0x3a0] sm:$0xff] %v8833
      %9077 = vst [vmem:[#allocation4 + $0x3a8] sm:$0xff] %v8835
      %9078 = vst [vmem:[#allocation4 + $0x3b0] sm:$0xff] %v8936
      %9079 = vst [vmem:[#allocation4 + $0x3b8] sm:$0xff] %v8938
      %9080 = vst [vmem:[#allocation4 + $0x3c0] sm:$0xff] %v8427
      %9081 = vst [vmem:[#allocation4 + $0x3c8] sm:$0xff] %v8429
      %9082 = vst [vmem:[#allocation4 + $0x3d0] sm:$0xff] %v8530
      %9083 = vst [vmem:[#allocation4 + $0x3d8] sm:$0xff] %v8532
      %9084 = vst [vmem:[#allocation4 + $0x3e0] sm:$0xff] %v8633
      %9085 = vst [vmem:[#allocation4 + $0x3e8] sm:$0xff] %v8635
      %9086 = vst [vmem:[#allocation4 + $0x3f0] sm:$0xff] %v8736
      %9087 = vst [vmem:[#allocation4 + $0x3f8] sm:$0xff] %v8738
      %9088 = vst [vmem:[#allocation4 + $0x400] sm:$0xff] %v8839
      %9089 = vst [vmem:[#allocation4 + $0x408] sm:$0xff] %v8841
      %9090 = vst [vmem:[#allocation4 + $0x410] sm:$0xff] %v8942
      %9091 = vst [vmem:[#allocation4 + $0x418] sm:$0xff] %v8944
      %9092 = vst [vmem:[#allocation4 + $0x420] sm:$0xff] %v8431
      %9093 = vst [vmem:[#allocation4 + $0x428] sm:$0xff] %v8433
      %9094 = vst [vmem:[#allocation4 + $0x430] sm:$0xff] %v8534
      %9095 = vst [vmem:[#allocation4 + $0x438] sm:$0xff] %v8536
      %9096 = vst [vmem:[#allocation4 + $0x440] sm:$0xff] %v8637
      %9097 = vst [vmem:[#allocation4 + $0x448] sm:$0xff] %v8639
      %9098 = vst [vmem:[#allocation4 + $0x450] sm:$0xff] %v8740
      %9099 = vst [vmem:[#allocation4 + $0x458] sm:$0xff] %v8742
      %9100 = vst [vmem:[#allocation4 + $0x460] sm:$0xff] %v8843
      %9101 = vst [vmem:[#allocation4 + $0x468] sm:$0xff] %v8845
      %9102 = vst [vmem:[#allocation4 + $0x470] sm:$0xff] %v8946
      %9103 = vst [vmem:[#allocation4 + $0x478] sm:$0xff] %v8948
      %9104 = vst [vmem:[#allocation4 + $0x480] sm:$0xff] %v8437
      %9105 = vst [vmem:[#allocation4 + $0x488] sm:$0xff] %v8439
      %9106 = vst [vmem:[#allocation4 + $0x490] sm:$0xff] %v8540
      %9107 = vst [vmem:[#allocation4 + $0x498] sm:$0xff] %v8542
      %9108 = vst [vmem:[#allocation4 + $0x4a0] sm:$0xff] %v8643
      %9109 = vst [vmem:[#allocation4 + $0x4a8] sm:$0xff] %v8645
      %9110 = vst [vmem:[#allocation4 + $0x4b0] sm:$0xff] %v8746
      %9111 = vst [vmem:[#allocation4 + $0x4b8] sm:$0xff] %v8748
      %9112 = vst [vmem:[#allocation4 + $0x4c0] sm:$0xff] %v8849
      %9113 = vst [vmem:[#allocation4 + $0x4c8] sm:$0xff] %v8851
      %9114 = vst [vmem:[#allocation4 + $0x4d0] sm:$0xff] %v8952
      %9115 = vst [vmem:[#allocation4 + $0x4d8] sm:$0xff] %v8954
      %9116 = vst [vmem:[#allocation4 + $0x4e0] sm:$0xff] %v8441
      %9117 = vst [vmem:[#allocation4 + $0x4e8] sm:$0xff] %v8443
      %9118 = vst [vmem:[#allocation4 + $0x4f0] sm:$0xff] %v8544
      %9119 = vst [vmem:[#allocation4 + $0x4f8] sm:$0xff] %v8546
      %9120 = vst [vmem:[#allocation4 + $0x500] sm:$0xff] %v8647
      %9121 = vst [vmem:[#allocation4 + $0x508] sm:$0xff] %v8649
      %9122 = vst [vmem:[#allocation4 + $0x510] sm:$0xff] %v8750
      %9123 = vst [vmem:[#allocation4 + $0x518] sm:$0xff] %v8752
      %9124 = vst [vmem:[#allocation4 + $0x520] sm:$0xff] %v8853
      %9125 = vst [vmem:[#allocation4 + $0x528] sm:$0xff] %v8855
      %9126 = vst [vmem:[#allocation4 + $0x530] sm:$0xff] %v8956
      %9127 = vst [vmem:[#allocation4 + $0x538] sm:$0xff] %v8958
      %v9128 = vld [vmem:[#allocation4] sm:$0xff]
      %v9129 = vld [vmem:[#allocation4 + $0x8] sm:$0xff]
      %v9130 = vld [vmem:[#allocation4 + $0x10] sm:$0xff]
      %v9131 = vld [vmem:[#allocation4 + $0x18] sm:$0xff]
      %v9132 = vld [vmem:[#allocation4 + $0x20] sm:$0xff]
      %v9133 = vld [vmem:[#allocation4 + $0x28] sm:$0xff]
      %v9134 = vld [vmem:[#allocation4 + $0x30] sm:$0xff]
      %v9135 = vld [vmem:[#allocation4 + $0x38] sm:$0xff]
      %v9136 = vld [vmem:[#allocation4 + $0x40] sm:$0xff]
      %v9137 = vld [vmem:[#allocation4 + $0x48] sm:$0xff]
      %v9138 = vld [vmem:[#allocation4 + $0x60] sm:$0xff]
      %v9139 = vld [vmem:[#allocation4 + $0x68] sm:$0xff]
      %v9140 = vld [vmem:[#allocation4 + $0x70] sm:$0xff]
      %v9141 = vld [vmem:[#allocation4 + $0x78] sm:$0xff]
      %v9142 = vld [vmem:[#allocation4 + $0x80] sm:$0xff]
      %v9143 = vld [vmem:[#allocation4 + $0x88] sm:$0xff]
      %v9144 = vld [vmem:[#allocation4 + $0x90] sm:$0xff]
      %v9145 = vld [vmem:[#allocation4 + $0x98] sm:$0xff]
      %v9146 = vld [vmem:[#allocation4 + $0xa0] sm:$0xff]
      %v9147 = vld [vmem:[#allocation4 + $0xa8] sm:$0xff]
      %v9148 = vld [vmem:[#allocation4 + $0xc0] sm:$0xff]
      %v9149 = vld [vmem:[#allocation4 + $0xc8] sm:$0xff]
      %v9150 = vld [vmem:[#allocation4 + $0xd0] sm:$0xff]
      %v9151 = vld [vmem:[#allocation4 + $0xd8] sm:$0xff]
      %v9152 = vld [vmem:[#allocation4 + $0xe0] sm:$0xff]
      %v9153 = vld [vmem:[#allocation4 + $0xe8] sm:$0xff]
      %v9154 = vld [vmem:[#allocation4 + $0xf0] sm:$0xff]
      %v9155 = vld [vmem:[#allocation4 + $0xf8] sm:$0xff]
      %v9156 = vld [vmem:[#allocation4 + $0x100] sm:$0xff]
      %v9157 = vld [vmem:[#allocation4 + $0x108] sm:$0xff]
      %v9158 = vld [vmem:[#allocation4 + $0x120] sm:$0xff]
      %v9159 = vld [vmem:[#allocation4 + $0x128] sm:$0xff]
      %v9160 = vld [vmem:[#allocation4 + $0x130] sm:$0xff]
      %v9161 = vld [vmem:[#allocation4 + $0x138] sm:$0xff]
      %v9162 = vld [vmem:[#allocation4 + $0x140] sm:$0xff]
      %v9163 = vld [vmem:[#allocation4 + $0x148] sm:$0xff]
      %v9164 = vld [vmem:[#allocation4 + $0x150] sm:$0xff]
      %v9165 = vld [vmem:[#allocation4 + $0x158] sm:$0xff]
      %v9166 = vld [vmem:[#allocation4 + $0x160] sm:$0xff]
      %v9167 = vld [vmem:[#allocation4 + $0x168] sm:$0xff]
      %9188 = vrot.lane.b32.xlu0 %v9148, 90
      %v9189 = vpop.permute.xlu0 %9188
      %9190 = vrot.lane.b32.xlu0 %v9149, 90
      %v9191 = vpop.permute.xlu0 %9190
      %9192 = vrot.lane.b32.xlu0 %v9150, 90
      %v9193 = vpop.permute.xlu0 %9192
      %9194 = vrot.lane.b32.xlu0 %v9151, 90
      %v9195 = vpop.permute.xlu0 %9194
      %9196 = vrot.lane.b32.xlu0 %v9152, 90
      %v9197 = vpop.permute.xlu0 %9196
      %9198 = vrot.lane.b32.xlu0 %v9153, 90
      %v9199 = vpop.permute.xlu0 %9198
      %9200 = vrot.lane.b32.xlu0 %v9154, 90
      %v9201 = vpop.permute.xlu0 %9200
      %9202 = vrot.lane.b32.xlu0 %v9155, 90
      %v9203 = vpop.permute.xlu0 %9202
      %9204 = vrot.lane.b32.xlu0 %v9156, 90
      %v9205 = vpop.permute.xlu0 %9204
      %9206 = vrot.lane.b32.xlu0 %v9157, 90
      %v9207 = vpop.permute.xlu0 %9206
      %9208 = vrot.lane.b32.xlu0 %v9158, 90
      %v9209 = vpop.permute.xlu0 %9208
      %9210 = vrot.lane.b32.xlu0 %v9159, 90
      %v9211 = vpop.permute.xlu0 %9210
      %9212 = vrot.lane.b32.xlu0 %v9160, 90
      %v9213 = vpop.permute.xlu0 %9212
      %9214 = vrot.lane.b32.xlu0 %v9161, 90
      %v9215 = vpop.permute.xlu0 %9214
      %9216 = vrot.lane.b32.xlu0 %v9162, 90
      %v9217 = vpop.permute.xlu0 %9216
      %9218 = vrot.lane.b32.xlu0 %v9163, 90
      %v9219 = vpop.permute.xlu0 %9218
      %9220 = vrot.lane.b32.xlu0 %v9164, 90
      %v9221 = vpop.permute.xlu0 %9220
      %9222 = vrot.lane.b32.xlu0 %v9165, 90
      %v9223 = vpop.permute.xlu0 %9222
      %9224 = vrot.lane.b32.xlu0 %v9166, 90
      %v9225 = vpop.permute.xlu0 %9224
      %9226 = vrot.lane.b32.xlu0 %v9167, 90
      %v9227 = vpop.permute.xlu0 %9226
      %v9228 = vsel %vm2723, %v9189, %v9191
      %v9229 = vsel %vm2723, %v9191, %v9193
      %v9230 = vsel %vm2723, %v9193, %v9195
      %v9231 = vsel %vm2723, %v9195, %v9197
      %v9232 = vsel %vm2723, %v9197, %v9199
      %v9233 = vsel %vm2723, %v9199, %v9201
      %v9234 = vsel %vm2723, %v9201, %v9203
      %v9235 = vsel %vm2723, %v9203, %v9205
      %v9236 = vsel %vm2723, %v9205, %v9207
      %v9237 = vsel %vm2723, %v9209, %v9211
      %v9238 = vsel %vm2723, %v9211, %v9213
      %v9239 = vsel %vm2723, %v9213, %v9215
      %v9240 = vsel %vm2723, %v9215, %v9217
      %v9241 = vsel %vm2723, %v9217, %v9219
      %v9242 = vsel %vm2723, %v9219, %v9221
      %v9243 = vsel %vm2723, %v9221, %v9223
      %v9244 = vsel %vm2723, %v9223, %v9225
      %v9245 = vsel %vm2723, %v9225, %v9227
      %v9266 = vadd.f32 %v9128, %v9228
      %v9267 = vadd.f32 %v9129, %v9229
      %v9268 = vadd.f32 %v9130, %v9230
      %v9269 = vadd.f32 %v9131, %v9231
      %v9270 = vadd.f32 %v9132, %v9232
      %v9271 = vadd.f32 %v9133, %v9233
      %v9272 = vadd.f32 %v9134, %v9234
      %v9273 = vadd.f32 %v9135, %v9235
      %v9274 = vadd.f32 %v9136, %v9236
      %v9275 = vadd.f32 %v9137, %v9207
      %v9276 = vadd.f32 %v9138, %v9237
      %v9277 = vadd.f32 %v9139, %v9238
      %v9278 = vadd.f32 %v9140, %v9239
      %v9279 = vadd.f32 %v9141, %v9240
      %v9280 = vadd.f32 %v9142, %v9241
      %v9281 = vadd.f32 %v9143, %v9242
      %v9282 = vadd.f32 %v9144, %v9243
      %v9283 = vadd.f32 %v9145, %v9244
      %v9284 = vadd.f32 %v9146, %v9245
      %v9285 = vadd.f32 %v9147, %v9227
      %v9286 = vld [vmem:[#allocation4 + $0x180] sm:$0xff]
      %v9287 = vld [vmem:[#allocation4 + $0x188] sm:$0xff]
      %v9288 = vld [vmem:[#allocation4 + $0x190] sm:$0xff]
      %v9289 = vld [vmem:[#allocation4 + $0x198] sm:$0xff]
      %v9290 = vld [vmem:[#allocation4 + $0x1a0] sm:$0xff]
      %v9291 = vld [vmem:[#allocation4 + $0x1a8] sm:$0xff]
      %v9292 = vld [vmem:[#allocation4 + $0x1b0] sm:$0xff]
      %v9293 = vld [vmem:[#allocation4 + $0x1b8] sm:$0xff]
      %v9294 = vld [vmem:[#allocation4 + $0x1c0] sm:$0xff]
      %v9295 = vld [vmem:[#allocation4 + $0x1c8] sm:$0xff]
      %v9296 = vld [vmem:[#allocation4 + $0x1d0] sm:$0xff]
      %v9297 = vld [vmem:[#allocation4 + $0x1e0] sm:$0xff]
      %v9298 = vld [vmem:[#allocation4 + $0x1e8] sm:$0xff]
      %v9299 = vld [vmem:[#allocation4 + $0x1f0] sm:$0xff]
      %v9300 = vld [vmem:[#allocation4 + $0x1f8] sm:$0xff]
      %v9301 = vld [vmem:[#allocation4 + $0x200] sm:$0xff]
      %v9302 = vld [vmem:[#allocation4 + $0x208] sm:$0xff]
      %v9303 = vld [vmem:[#allocation4 + $0x210] sm:$0xff]
      %v9304 = vld [vmem:[#allocation4 + $0x218] sm:$0xff]
      %v9305 = vld [vmem:[#allocation4 + $0x220] sm:$0xff]
      %v9306 = vld [vmem:[#allocation4 + $0x228] sm:$0xff]
      %v9307 = vld [vmem:[#allocation4 + $0x230] sm:$0xff]
      %9330 = vrot.lane.b32.xlu0 %v9286, 52
      %v9331 = vpop.permute.xlu0 %9330
      %9332 = vrot.lane.b32.xlu0 %v9287, 52
      %v9333 = vpop.permute.xlu0 %9332
      %9334 = vrot.lane.b32.xlu0 %v9288, 52
      %v9335 = vpop.permute.xlu0 %9334
      %9336 = vrot.lane.b32.xlu0 %v9289, 52
      %v9337 = vpop.permute.xlu0 %9336
      %9338 = vrot.lane.b32.xlu0 %v9290, 52
      %v9339 = vpop.permute.xlu0 %9338
      %9340 = vrot.lane.b32.xlu0 %v9291, 52
      %v9341 = vpop.permute.xlu0 %9340
      %9342 = vrot.lane.b32.xlu0 %v9292, 52
      %v9343 = vpop.permute.xlu0 %9342
      %9344 = vrot.lane.b32.xlu0 %v9293, 52
      %v9345 = vpop.permute.xlu0 %9344
      %9346 = vrot.lane.b32.xlu0 %v9294, 52
      %v9347 = vpop.permute.xlu0 %9346
      %9348 = vrot.lane.b32.xlu0 %v9295, 52
      %v9349 = vpop.permute.xlu0 %9348
      %9350 = vrot.lane.b32.xlu0 %v9296, 52
      %v9351 = vpop.permute.xlu0 %9350
      %9352 = vrot.lane.b32.xlu0 %v9297, 52
      %v9353 = vpop.permute.xlu0 %9352
      %9354 = vrot.lane.b32.xlu0 %v9298, 52
      %v9355 = vpop.permute.xlu0 %9354
      %9356 = vrot.lane.b32.xlu0 %v9299, 52
      %v9357 = vpop.permute.xlu0 %9356
      %9358 = vrot.lane.b32.xlu0 %v9300, 52
      %v9359 = vpop.permute.xlu0 %9358
      %9360 = vrot.lane.b32.xlu0 %v9301, 52
      %v9361 = vpop.permute.xlu0 %9360
      %9362 = vrot.lane.b32.xlu0 %v9302, 52
      %v9363 = vpop.permute.xlu0 %9362
      %9364 = vrot.lane.b32.xlu0 %v9303, 52
      %v9365 = vpop.permute.xlu0 %9364
      %9366 = vrot.lane.b32.xlu0 %v9304, 52
      %v9367 = vpop.permute.xlu0 %9366
      %9368 = vrot.lane.b32.xlu0 %v9305, 52
      %v9369 = vpop.permute.xlu0 %9368
      %9370 = vrot.lane.b32.xlu0 %v9306, 52
      %v9371 = vpop.permute.xlu0 %9370
      %9372 = vrot.lane.b32.xlu0 %v9307, 52
      %v9373 = vpop.permute.xlu0 %9372
      %v9374 = vsel %vm2870, %v9331, %v9333
      %v9375 = vsel %vm2870, %v9333, %v9335
      %v9376 = vsel %vm2870, %v9335, %v9337
      %v9377 = vsel %vm2870, %v9337, %v9339
      %v9378 = vsel %vm2870, %v9339, %v9341
      %v9379 = vsel %vm2870, %v9341, %v9343
      %v9380 = vsel %vm2870, %v9343, %v9345
      %v9381 = vsel %vm2870, %v9345, %v9347
      %v9382 = vsel %vm2870, %v9347, %v9349
      %v9383 = vsel %vm2870, %v9349, %v9351
      %v9384 = vsel %vm2870, %v9353, %v9355
      %v9385 = vsel %vm2870, %v9355, %v9357
      %v9386 = vsel %vm2870, %v9357, %v9359
      %v9387 = vsel %vm2870, %v9359, %v9361
      %v9388 = vsel %vm2870, %v9361, %v9363
      %v9389 = vsel %vm2870, %v9363, %v9365
      %v9390 = vsel %vm2870, %v9365, %v9367
      %v9391 = vsel %vm2870, %v9367, %v9369
      %v9392 = vsel %vm2870, %v9369, %v9371
      %v9393 = vsel %vm2870, %v9371, %v9373
      %v9414 = vadd.f32 %v9266, %v9374
      %v9415 = vadd.f32 %v9267, %v9375
      %v9416 = vadd.f32 %v9268, %v9376
      %v9417 = vadd.f32 %v9269, %v9377
      %v9418 = vadd.f32 %v9270, %v9378
      %v9419 = vadd.f32 %v9271, %v9379
      %v9420 = vadd.f32 %v9272, %v9380
      %v9421 = vadd.f32 %v9273, %v9381
      %v9422 = vadd.f32 %v9274, %v9382
      %v9423 = vadd.f32 %v9275, %v9383
      %v9424 = vadd.f32 %v9276, %v9384
      %v9425 = vadd.f32 %v9277, %v9385
      %v9426 = vadd.f32 %v9278, %v9386
      %v9427 = vadd.f32 %v9279, %v9387
      %v9428 = vadd.f32 %v9280, %v9388
      %v9429 = vadd.f32 %v9281, %v9389
      %v9430 = vadd.f32 %v9282, %v9390
      %v9431 = vadd.f32 %v9283, %v9391
      %v9432 = vadd.f32 %v9284, %v9392
      %v9433 = vadd.f32 %v9285, %v9393
      %v9434 = vld [vmem:[#allocation4 + $0x240] sm:$0xff]
      %v9435 = vld [vmem:[#allocation4 + $0x248] sm:$0xff]
      %v9436 = vld [vmem:[#allocation4 + $0x250] sm:$0xff]
      %v9437 = vld [vmem:[#allocation4 + $0x258] sm:$0xff]
      %v9438 = vld [vmem:[#allocation4 + $0x260] sm:$0xff]
      %v9439 = vld [vmem:[#allocation4 + $0x268] sm:$0xff]
      %v9440 = vld [vmem:[#allocation4 + $0x270] sm:$0xff]
      %v9441 = vld [vmem:[#allocation4 + $0x278] sm:$0xff]
      %v9442 = vld [vmem:[#allocation4 + $0x280] sm:$0xff]
      %v9443 = vld [vmem:[#allocation4 + $0x288] sm:$0xff]
      %v9444 = vld [vmem:[#allocation4 + $0x290] sm:$0xff]
      %v9445 = vld [vmem:[#allocation4 + $0x2a0] sm:$0xff]
      %v9446 = vld [vmem:[#allocation4 + $0x2a8] sm:$0xff]
      %v9447 = vld [vmem:[#allocation4 + $0x2b0] sm:$0xff]
      %v9448 = vld [vmem:[#allocation4 + $0x2b8] sm:$0xff]
      %v9449 = vld [vmem:[#allocation4 + $0x2c0] sm:$0xff]
      %v9450 = vld [vmem:[#allocation4 + $0x2c8] sm:$0xff]
      %v9451 = vld [vmem:[#allocation4 + $0x2d0] sm:$0xff]
      %v9452 = vld [vmem:[#allocation4 + $0x2d8] sm:$0xff]
      %v9453 = vld [vmem:[#allocation4 + $0x2e0] sm:$0xff]
      %v9454 = vld [vmem:[#allocation4 + $0x2e8] sm:$0xff]
      %v9455 = vld [vmem:[#allocation4 + $0x2f0] sm:$0xff]
      %9478 = vrot.lane.b32.xlu0 %v9434, 14
      %v9479 = vpop.permute.xlu0 %9478
      %9480 = vrot.lane.b32.xlu0 %v9435, 14
      %v9481 = vpop.permute.xlu0 %9480
      %9482 = vrot.lane.b32.xlu0 %v9436, 14
      %v9483 = vpop.permute.xlu0 %9482
      %9484 = vrot.lane.b32.xlu0 %v9437, 14
      %v9485 = vpop.permute.xlu0 %9484
      %9486 = vrot.lane.b32.xlu0 %v9438, 14
      %v9487 = vpop.permute.xlu0 %9486
      %9488 = vrot.lane.b32.xlu0 %v9439, 14
      %v9489 = vpop.permute.xlu0 %9488
      %9490 = vrot.lane.b32.xlu0 %v9440, 14
      %v9491 = vpop.permute.xlu0 %9490
      %9492 = vrot.lane.b32.xlu0 %v9441, 14
      %v9493 = vpop.permute.xlu0 %9492
      %9494 = vrot.lane.b32.xlu0 %v9442, 14
      %v9495 = vpop.permute.xlu0 %9494
      %9496 = vrot.lane.b32.xlu0 %v9443, 14
      %v9497 = vpop.permute.xlu0 %9496
      %9498 = vrot.lane.b32.xlu0 %v9444, 14
      %v9499 = vpop.permute.xlu0 %9498
      %9500 = vrot.lane.b32.xlu0 %v9445, 14
      %v9501 = vpop.permute.xlu0 %9500
      %9502 = vrot.lane.b32.xlu0 %v9446, 14
      %v9503 = vpop.permute.xlu0 %9502
      %9504 = vrot.lane.b32.xlu0 %v9447, 14
      %v9505 = vpop.permute.xlu0 %9504
      %9506 = vrot.lane.b32.xlu0 %v9448, 14
      %v9507 = vpop.permute.xlu0 %9506
      %9508 = vrot.lane.b32.xlu0 %v9449, 14
      %v9509 = vpop.permute.xlu0 %9508
      %9510 = vrot.lane.b32.xlu0 %v9450, 14
      %v9511 = vpop.permute.xlu0 %9510
      %9512 = vrot.lane.b32.xlu0 %v9451, 14
      %v9513 = vpop.permute.xlu0 %9512
      %9514 = vrot.lane.b32.xlu0 %v9452, 14
      %v9515 = vpop.permute.xlu0 %9514
      %9516 = vrot.lane.b32.xlu0 %v9453, 14
      %v9517 = vpop.permute.xlu0 %9516
      %9518 = vrot.lane.b32.xlu0 %v9454, 14
      %v9519 = vpop.permute.xlu0 %9518
      %9520 = vrot.lane.b32.xlu0 %v9455, 14
      %v9521 = vpop.permute.xlu0 %9520
      %v9522 = vsel %vm3019, %v9479, %v9481
      %v9523 = vsel %vm3019, %v9481, %v9483
      %v9524 = vsel %vm3019, %v9483, %v9485
      %v9525 = vsel %vm3019, %v9485, %v9487
      %v9526 = vsel %vm3019, %v9487, %v9489
      %v9527 = vsel %vm3019, %v9489, %v9491
      %v9528 = vsel %vm3019, %v9491, %v9493
      %v9529 = vsel %vm3019, %v9493, %v9495
      %v9530 = vsel %vm3019, %v9495, %v9497
      %v9531 = vsel %vm3019, %v9497, %v9499
      %v9532 = vsel %vm3019, %v9501, %v9503
      %v9533 = vsel %vm3019, %v9503, %v9505
      %v9534 = vsel %vm3019, %v9505, %v9507
      %v9535 = vsel %vm3019, %v9507, %v9509
      %v9536 = vsel %vm3019, %v9509, %v9511
      %v9537 = vsel %vm3019, %v9511, %v9513
      %v9538 = vsel %vm3019, %v9513, %v9515
      %v9539 = vsel %vm3019, %v9515, %v9517
      %v9540 = vsel %vm3019, %v9517, %v9519
      %v9541 = vsel %vm3019, %v9519, %v9521
      %v9562 = vadd.f32 %v9414, %v9522
      %v9563 = vadd.f32 %v9415, %v9523
      %v9564 = vadd.f32 %v9416, %v9524
      %v9565 = vadd.f32 %v9417, %v9525
      %v9566 = vadd.f32 %v9418, %v9526
      %v9567 = vadd.f32 %v9419, %v9527
      %v9568 = vadd.f32 %v9420, %v9528
      %v9569 = vadd.f32 %v9421, %v9529
      %v9570 = vadd.f32 %v9422, %v9530
      %v9571 = vadd.f32 %v9423, %v9531
      %v9572 = vadd.f32 %v9424, %v9532
      %v9573 = vadd.f32 %v9425, %v9533
      %v9574 = vadd.f32 %v9426, %v9534
      %v9575 = vadd.f32 %v9427, %v9535
      %v9576 = vadd.f32 %v9428, %v9536
      %v9577 = vadd.f32 %v9429, %v9537
      %v9578 = vadd.f32 %v9430, %v9538
      %v9579 = vadd.f32 %v9431, %v9539
      %v9580 = vadd.f32 %v9432, %v9540
      %v9581 = vadd.f32 %v9433, %v9541
      %v9582 = vld [vmem:[#allocation4 + $0x308] sm:$0xff]
      %v9583 = vld [vmem:[#allocation4 + $0x310] sm:$0xff]
      %v9584 = vld [vmem:[#allocation4 + $0x318] sm:$0xff]
      %v9585 = vld [vmem:[#allocation4 + $0x320] sm:$0xff]
      %v9586 = vld [vmem:[#allocation4 + $0x328] sm:$0xff]
      %v9587 = vld [vmem:[#allocation4 + $0x330] sm:$0xff]
      %v9588 = vld [vmem:[#allocation4 + $0x338] sm:$0xff]
      %v9589 = vld [vmem:[#allocation4 + $0x340] sm:$0xff]
      %v9590 = vld [vmem:[#allocation4 + $0x348] sm:$0xff]
      %v9591 = vld [vmem:[#allocation4 + $0x350] sm:$0xff]
      %v9592 = vld [vmem:[#allocation4 + $0x368] sm:$0xff]
      %v9593 = vld [vmem:[#allocation4 + $0x370] sm:$0xff]
      %v9594 = vld [vmem:[#allocation4 + $0x378] sm:$0xff]
      %v9595 = vld [vmem:[#allocation4 + $0x380] sm:$0xff]
      %v9596 = vld [vmem:[#allocation4 + $0x388] sm:$0xff]
      %v9597 = vld [vmem:[#allocation4 + $0x390] sm:$0xff]
      %v9598 = vld [vmem:[#allocation4 + $0x398] sm:$0xff]
      %v9599 = vld [vmem:[#allocation4 + $0x3a0] sm:$0xff]
      %v9600 = vld [vmem:[#allocation4 + $0x3a8] sm:$0xff]
      %v9601 = vld [vmem:[#allocation4 + $0x3b0] sm:$0xff]
      %9622 = vrot.lane.b32.xlu0 %v9582, 104
      %v9623 = vpop.permute.xlu0 %9622
      %9624 = vrot.lane.b32.xlu0 %v9583, 104
      %v9625 = vpop.permute.xlu0 %9624
      %9626 = vrot.lane.b32.xlu0 %v9584, 104
      %v9627 = vpop.permute.xlu0 %9626
      %9628 = vrot.lane.b32.xlu0 %v9585, 104
      %v9629 = vpop.permute.xlu0 %9628
      %9630 = vrot.lane.b32.xlu0 %v9586, 104
      %v9631 = vpop.permute.xlu0 %9630
      %9632 = vrot.lane.b32.xlu0 %v9587, 104
      %v9633 = vpop.permute.xlu0 %9632
      %9634 = vrot.lane.b32.xlu0 %v9588, 104
      %v9635 = vpop.permute.xlu0 %9634
      %9636 = vrot.lane.b32.xlu0 %v9589, 104
      %v9637 = vpop.permute.xlu0 %9636
      %9638 = vrot.lane.b32.xlu0 %v9590, 104
      %v9639 = vpop.permute.xlu0 %9638
      %9640 = vrot.lane.b32.xlu0 %v9591, 104
      %v9641 = vpop.permute.xlu0 %9640
      %9642 = vrot.lane.b32.xlu0 %v9592, 104
      %v9643 = vpop.permute.xlu0 %9642
      %9644 = vrot.lane.b32.xlu0 %v9593, 104
      %v9645 = vpop.permute.xlu0 %9644
      %9646 = vrot.lane.b32.xlu0 %v9594, 104
      %v9647 = vpop.permute.xlu0 %9646
      %9648 = vrot.lane.b32.xlu0 %v9595, 104
      %v9649 = vpop.permute.xlu0 %9648
      %9650 = vrot.lane.b32.xlu0 %v9596, 104
      %v9651 = vpop.permute.xlu0 %9650
      %9652 = vrot.lane.b32.xlu0 %v9597, 104
      %v9653 = vpop.permute.xlu0 %9652
      %9654 = vrot.lane.b32.xlu0 %v9598, 104
      %v9655 = vpop.permute.xlu0 %9654
      %9656 = vrot.lane.b32.xlu0 %v9599, 104
      %v9657 = vpop.permute.xlu0 %9656
      %9658 = vrot.lane.b32.xlu0 %v9600, 104
      %v9659 = vpop.permute.xlu0 %9658
      %9660 = vrot.lane.b32.xlu0 %v9601, 104
      %v9661 = vpop.permute.xlu0 %9660
      %v9662 = vsel %vm3160, %v9623, %v9625
      %v9663 = vsel %vm3160, %v9625, %v9627
      %v9664 = vsel %vm3160, %v9627, %v9629
      %v9665 = vsel %vm3160, %v9629, %v9631
      %v9666 = vsel %vm3160, %v9631, %v9633
      %v9667 = vsel %vm3160, %v9633, %v9635
      %v9668 = vsel %vm3160, %v9635, %v9637
      %v9669 = vsel %vm3160, %v9637, %v9639
      %v9670 = vsel %vm3160, %v9639, %v9641
      %v9671 = vsel %vm3160, %v9643, %v9645
      %v9672 = vsel %vm3160, %v9645, %v9647
      %v9673 = vsel %vm3160, %v9647, %v9649
      %v9674 = vsel %vm3160, %v9649, %v9651
      %v9675 = vsel %vm3160, %v9651, %v9653
      %v9676 = vsel %vm3160, %v9653, %v9655
      %v9677 = vsel %vm3160, %v9655, %v9657
      %v9678 = vsel %vm3160, %v9657, %v9659
      %v9679 = vsel %vm3160, %v9659, %v9661
      %v9700 = vadd.f32 %v9562, %v9662
      %v9701 = vadd.f32 %v9563, %v9663
      %v9702 = vadd.f32 %v9564, %v9664
      %v9703 = vadd.f32 %v9565, %v9665
      %v9704 = vadd.f32 %v9566, %v9666
      %v9705 = vadd.f32 %v9567, %v9667
      %v9706 = vadd.f32 %v9568, %v9668
      %v9707 = vadd.f32 %v9569, %v9669
      %v9708 = vadd.f32 %v9570, %v9670
      %v9709 = vadd.f32 %v9571, %v9641
      %v9710 = vadd.f32 %v9572, %v9671
      %v9711 = vadd.f32 %v9573, %v9672
      %v9712 = vadd.f32 %v9574, %v9673
      %v9713 = vadd.f32 %v9575, %v9674
      %v9714 = vadd.f32 %v9576, %v9675
      %v9715 = vadd.f32 %v9577, %v9676
      %v9716 = vadd.f32 %v9578, %v9677
      %v9717 = vadd.f32 %v9579, %v9678
      %v9718 = vadd.f32 %v9580, %v9679
      %v9719 = vadd.f32 %v9581, %v9661
      %v9720 = vld [vmem:[#allocation4 + $0x3c8] sm:$0xff]
      %v9721 = vld [vmem:[#allocation4 + $0x3d0] sm:$0xff]
      %v9722 = vld [vmem:[#allocation4 + $0x3d8] sm:$0xff]
      %v9723 = vld [vmem:[#allocation4 + $0x3e0] sm:$0xff]
      %v9724 = vld [vmem:[#allocation4 + $0x3e8] sm:$0xff]
      %v9725 = vld [vmem:[#allocation4 + $0x3f0] sm:$0xff]
      %v9726 = vld [vmem:[#allocation4 + $0x3f8] sm:$0xff]
      %v9727 = vld [vmem:[#allocation4 + $0x400] sm:$0xff]
      %v9728 = vld [vmem:[#allocation4 + $0x408] sm:$0xff]
      %v9729 = vld [vmem:[#allocation4 + $0x410] sm:$0xff]
      %v9730 = vld [vmem:[#allocation4 + $0x428] sm:$0xff]
      %v9731 = vld [vmem:[#allocation4 + $0x430] sm:$0xff]
      %v9732 = vld [vmem:[#allocation4 + $0x438] sm:$0xff]
      %v9733 = vld [vmem:[#allocation4 + $0x440] sm:$0xff]
      %v9734 = vld [vmem:[#allocation4 + $0x448] sm:$0xff]
      %v9735 = vld [vmem:[#allocation4 + $0x450] sm:$0xff]
      %v9736 = vld [vmem:[#allocation4 + $0x458] sm:$0xff]
      %v9737 = vld [vmem:[#allocation4 + $0x460] sm:$0xff]
      %v9738 = vld [vmem:[#allocation4 + $0x468] sm:$0xff]
      %v9739 = vld [vmem:[#allocation4 + $0x470] sm:$0xff]
      %9760 = vrot.lane.b32.xlu0 %v9720, 66
      %v9761 = vpop.permute.xlu0 %9760
      %9762 = vrot.lane.b32.xlu0 %v9721, 66
      %v9763 = vpop.permute.xlu0 %9762
      %9764 = vrot.lane.b32.xlu0 %v9722, 66
      %v9765 = vpop.permute.xlu0 %9764
      %9766 = vrot.lane.b32.xlu0 %v9723, 66
      %v9767 = vpop.permute.xlu0 %9766
      %9768 = vrot.lane.b32.xlu0 %v9724, 66
      %v9769 = vpop.permute.xlu0 %9768
      %9770 = vrot.lane.b32.xlu0 %v9725, 66
      %v9771 = vpop.permute.xlu0 %9770
      %9772 = vrot.lane.b32.xlu0 %v9726, 66
      %v9773 = vpop.permute.xlu0 %9772
      %9774 = vrot.lane.b32.xlu0 %v9727, 66
      %v9775 = vpop.permute.xlu0 %9774
      %9776 = vrot.lane.b32.xlu0 %v9728, 66
      %v9777 = vpop.permute.xlu0 %9776
      %9778 = vrot.lane.b32.xlu0 %v9729, 66
      %v9779 = vpop.permute.xlu0 %9778
      %9780 = vrot.lane.b32.xlu0 %v9730, 66
      %v9781 = vpop.permute.xlu0 %9780
      %9782 = vrot.lane.b32.xlu0 %v9731, 66
      %v9783 = vpop.permute.xlu0 %9782
      %9784 = vrot.lane.b32.xlu0 %v9732, 66
      %v9785 = vpop.permute.xlu0 %9784
      %9786 = vrot.lane.b32.xlu0 %v9733, 66
      %v9787 = vpop.permute.xlu0 %9786
      %9788 = vrot.lane.b32.xlu0 %v9734, 66
      %v9789 = vpop.permute.xlu0 %9788
      %9790 = vrot.lane.b32.xlu0 %v9735, 66
      %v9791 = vpop.permute.xlu0 %9790
      %9792 = vrot.lane.b32.xlu0 %v9736, 66
      %v9793 = vpop.permute.xlu0 %9792
      %9794 = vrot.lane.b32.xlu0 %v9737, 66
      %v9795 = vpop.permute.xlu0 %9794
      %9796 = vrot.lane.b32.xlu0 %v9738, 66
      %v9797 = vpop.permute.xlu0 %9796
      %9798 = vrot.lane.b32.xlu0 %v9739, 66
      %v9799 = vpop.permute.xlu0 %9798
      %v9800 = vsel %vm3299, %v9761, %v9763
      %v9801 = vsel %vm3299, %v9763, %v9765
      %v9802 = vsel %vm3299, %v9765, %v9767
      %v9803 = vsel %vm3299, %v9767, %v9769
      %v9804 = vsel %vm3299, %v9769, %v9771
      %v9805 = vsel %vm3299, %v9771, %v9773
      %v9806 = vsel %vm3299, %v9773, %v9775
      %v9807 = vsel %vm3299, %v9775, %v9777
      %v9808 = vsel %vm3299, %v9777, %v9779
      %v9809 = vsel %vm3299, %v9781, %v9783
      %v9810 = vsel %vm3299, %v9783, %v9785
      %v9811 = vsel %vm3299, %v9785, %v9787
      %v9812 = vsel %vm3299, %v9787, %v9789
      %v9813 = vsel %vm3299, %v9789, %v9791
      %v9814 = vsel %vm3299, %v9791, %v9793
      %v9815 = vsel %vm3299, %v9793, %v9795
      %v9816 = vsel %vm3299, %v9795, %v9797
      %v9817 = vsel %vm3299, %v9797, %v9799
      %v9838 = vadd.f32 %v9700, %v9800
      %v9839 = vadd.f32 %v9701, %v9801
      %v9840 = vadd.f32 %v9702, %v9802
      %v9841 = vadd.f32 %v9703, %v9803
      %v9842 = vadd.f32 %v9704, %v9804
      %v9843 = vadd.f32 %v9705, %v9805
      %v9844 = vadd.f32 %v9706, %v9806
      %v9845 = vadd.f32 %v9707, %v9807
      %v9846 = vadd.f32 %v9708, %v9808
      %v9847 = vadd.f32 %v9709, %v9779
      %v9848 = vadd.f32 %v9710, %v9809
      %v9849 = vadd.f32 %v9711, %v9810
      %v9850 = vadd.f32 %v9712, %v9811
      %v9851 = vadd.f32 %v9713, %v9812
      %v9852 = vadd.f32 %v9714, %v9813
      %v9853 = vadd.f32 %v9715, %v9814
      %v9854 = vadd.f32 %v9716, %v9815
      %v9855 = vadd.f32 %v9717, %v9816
      %v9856 = vadd.f32 %v9718, %v9817
      %v9857 = vadd.f32 %v9719, %v9799
      %v9858 = vld [vmem:[#allocation4 + $0x488] sm:$0xff]
      %v9859 = vld [vmem:[#allocation4 + $0x490] sm:$0xff]
      %v9860 = vld [vmem:[#allocation4 + $0x498] sm:$0xff]
      %v9861 = vld [vmem:[#allocation4 + $0x4a0] sm:$0xff]
      %v9862 = vld [vmem:[#allocation4 + $0x4a8] sm:$0xff]
      %v9863 = vld [vmem:[#allocation4 + $0x4b0] sm:$0xff]
      %v9864 = vld [vmem:[#allocation4 + $0x4b8] sm:$0xff]
      %v9865 = vld [vmem:[#allocation4 + $0x4c0] sm:$0xff]
      %v9866 = vld [vmem:[#allocation4 + $0x4c8] sm:$0xff]
      %v9867 = vld [vmem:[#allocation4 + $0x4d0] sm:$0xff]
      %v9868 = vld [vmem:[#allocation4 + $0x4d8] sm:$0xff]
      %v9869 = vld [vmem:[#allocation4 + $0x4e8] sm:$0xff]
      %v9870 = vld [vmem:[#allocation4 + $0x4f0] sm:$0xff]
      %v9871 = vld [vmem:[#allocation4 + $0x4f8] sm:$0xff]
      %v9872 = vld [vmem:[#allocation4 + $0x500] sm:$0xff]
      %v9873 = vld [vmem:[#allocation4 + $0x508] sm:$0xff]
      %v9874 = vld [vmem:[#allocation4 + $0x510] sm:$0xff]
      %v9875 = vld [vmem:[#allocation4 + $0x518] sm:$0xff]
      %v9876 = vld [vmem:[#allocation4 + $0x520] sm:$0xff]
      %v9877 = vld [vmem:[#allocation4 + $0x528] sm:$0xff]
      %v9878 = vld [vmem:[#allocation4 + $0x530] sm:$0xff]
      %v9879 = vld [vmem:[#allocation4 + $0x538] sm:$0xff]
      %9902 = vrot.lane.b32.xlu0 %v9858, 28
      %v9903 = vpop.permute.xlu0 %9902
      %9904 = vrot.lane.b32.xlu0 %v9859, 28
      %v9905 = vpop.permute.xlu0 %9904
      %9906 = vrot.lane.b32.xlu0 %v9860, 28
      %v9907 = vpop.permute.xlu0 %9906
      %9908 = vrot.lane.b32.xlu0 %v9861, 28
      %v9909 = vpop.permute.xlu0 %9908
      %9910 = vrot.lane.b32.xlu0 %v9862, 28
      %v9911 = vpop.permute.xlu0 %9910
      %9912 = vrot.lane.b32.xlu0 %v9863, 28
      %v9913 = vpop.permute.xlu0 %9912
      %9914 = vrot.lane.b32.xlu0 %v9864, 28
      %v9915 = vpop.permute.xlu0 %9914
      %9916 = vrot.lane.b32.xlu0 %v9865, 28
      %v9917 = vpop.permute.xlu0 %9916
      %9918 = vrot.lane.b32.xlu0 %v9866, 28
      %v9919 = vpop.permute.xlu0 %9918
      %9920 = vrot.lane.b32.xlu0 %v9867, 28
      %v9921 = vpop.permute.xlu0 %9920
      %9922 = vrot.lane.b32.xlu0 %v9868, 28
      %v9923 = vpop.permute.xlu0 %9922
      %9924 = vrot.lane.b32.xlu0 %v9869, 28
      %v9925 = vpop.permute.xlu0 %9924
      %9926 = vrot.lane.b32.xlu0 %v9870, 28
      %v9927 = vpop.permute.xlu0 %9926
      %9928 = vrot.lane.b32.xlu0 %v9871, 28
      %v9929 = vpop.permute.xlu0 %9928
      %9930 = vrot.lane.b32.xlu0 %v9872, 28
      %v9931 = vpop.permute.xlu0 %9930
      %9932 = vrot.lane.b32.xlu0 %v9873, 28
      %v9933 = vpop.permute.xlu0 %9932
      %9934 = vrot.lane.b32.xlu0 %v9874, 28
      %v9935 = vpop.permute.xlu0 %9934
      %9936 = vrot.lane.b32.xlu0 %v9875, 28
      %v9937 = vpop.permute.xlu0 %9936
      %9938 = vrot.lane.b32.xlu0 %v9876, 28
      %v9939 = vpop.permute.xlu0 %9938
      %9940 = vrot.lane.b32.xlu0 %v9877, 28
      %v9941 = vpop.permute.xlu0 %9940
      %9942 = vrot.lane.b32.xlu0 %v9878, 28
      %v9943 = vpop.permute.xlu0 %9942
      %9944 = vrot.lane.b32.xlu0 %v9879, 28
      %v9945 = vpop.permute.xlu0 %9944
      %v9946 = vsel %vm3446, %v9903, %v9905
      %v9947 = vsel %vm3446, %v9905, %v9907
      %v9948 = vsel %vm3446, %v9907, %v9909
      %v9949 = vsel %vm3446, %v9909, %v9911
      %v9950 = vsel %vm3446, %v9911, %v9913
      %v9951 = vsel %vm3446, %v9913, %v9915
      %v9952 = vsel %vm3446, %v9915, %v9917
      %v9953 = vsel %vm3446, %v9917, %v9919
      %v9954 = vsel %vm3446, %v9919, %v9921
      %v9955 = vsel %vm3446, %v9921, %v9923
      %v9956 = vsel %vm3446, %v9925, %v9927
      %v9957 = vsel %vm3446, %v9927, %v9929
      %v9958 = vsel %vm3446, %v9929, %v9931
      %v9959 = vsel %vm3446, %v9931, %v9933
      %v9960 = vsel %vm3446, %v9933, %v9935
      %v9961 = vsel %vm3446, %v9935, %v9937
      %v9962 = vsel %vm3446, %v9937, %v9939
      %v9963 = vsel %vm3446, %v9939, %v9941
      %v9964 = vsel %vm3446, %v9941, %v9943
      %v9965 = vsel %vm3446, %v9943, %v9945
      %v9986 = vadd.f32 %v9838, %v9946
      %v9987 = vadd.f32 %v9839, %v9947
      %v9988 = vadd.f32 %v9840, %v9948
      %v9989 = vadd.f32 %v9841, %v9949
      %v9990 = vadd.f32 %v9842, %v9950
      %v9991 = vadd.f32 %v9843, %v9951
      %v9992 = vadd.f32 %v9844, %v9952
      %v9993 = vadd.f32 %v9845, %v9953
      %v9994 = vadd.f32 %v9846, %v9954
      %v9995 = vadd.f32 %v9847, %v9955
      %v9996 = vadd.f32 %v9848, %v9956
      %v9997 = vadd.f32 %v9849, %v9957
      %v9998 = vadd.f32 %v9850, %v9958
      %v9999 = vadd.f32 %v9851, %v9959
      %v10000 = vadd.f32 %v9852, %v9960
      %v10001 = vadd.f32 %v9853, %v9961
      %v10002 = vadd.f32 %v9854, %v9962
      %v10003 = vadd.f32 %v9855, %v9963
      %v10004 = vadd.f32 %v9856, %v9964
      %v10005 = vadd.f32 %v9857, %v9965
      %s10006 = scalar_lea.vmem %s4, 32
      %v10007 = vld [vmem:[%s10006] sm:$0xff]
      %v10008 = vld [vmem:[%s10006 + $0x8] sm:$0xff]
      %10010 = vset.pattern.permute.xlu0 0
      %10011 = vperm.xlu0 %10010, %v10007
      %v10012 = vpop.permute.xlu0 %10011
      %10015 = vset.pattern.permute.xlu0 0
      %10016 = vperm.xlu0 %10015, %v10008
      %v10017 = vpop.permute.xlu0 %10016
      %v10019 = vadd.f32 %v9986, %v10012
      %v10020 = vadd.f32 %v9987, %v10012
      %v10021 = vadd.f32 %v9988, %v10012
      %v10022 = vadd.f32 %v9989, %v10012
      %v10023 = vadd.f32 %v9990, %v10012
      %v10024 = vadd.f32 %v9991, %v10012
      %v10025 = vadd.f32 %v9992, %v10012
      %v10026 = vadd.f32 %v9993, %v10012
      %v10027 = vadd.f32 %v9994, %v10012
      %v10028 = vadd.f32 %v9995, %v10012
      %v10029 = vadd.f32 %v9996, %v10017
      %v10030 = vadd.f32 %v9997, %v10017
      %v10031 = vadd.f32 %v9998, %v10017
      %v10032 = vadd.f32 %v9999, %v10017
      %v10033 = vadd.f32 %v10000, %v10017
      %v10034 = vadd.f32 %v10001, %v10017
      %v10035 = vadd.f32 %v10002, %v10017
      %v10036 = vadd.f32 %v10003, %v10017
      %v10037 = vadd.f32 %v10004, %v10017
      %v10038 = vadd.f32 %v10005, %v10017
      %v10039 = vmax.f32 %v10019, 0.0
      %v10040 = vmax.f32 %v10020, 0.0
      %v10041 = vmax.f32 %v10021, 0.0
      %v10042 = vmax.f32 %v10022, 0.0
      %v10043 = vmax.f32 %v10023, 0.0
      %v10044 = vmax.f32 %v10024, 0.0
      %v10045 = vmax.f32 %v10025, 0.0
      %v10046 = vmax.f32 %v10026, 0.0
      %v10047 = vmax.f32 %v10027, 0.0
      %v10048 = vmax.f32 %v10028, 0.0
      %v10049 = vmax.f32 %v10029, 0.0
      %v10050 = vmax.f32 %v10030, 0.0
      %v10051 = vmax.f32 %v10031, 0.0
      %v10052 = vmax.f32 %v10032, 0.0
      %v10053 = vmax.f32 %v10033, 0.0
      %v10054 = vmax.f32 %v10034, 0.0
      %v10055 = vmax.f32 %v10035, 0.0
      %v10056 = vmax.f32 %v10036, 0.0
      %v10057 = vmax.f32 %v10037, 0.0
      %v10058 = vmax.f32 %v10038, 0.0
      %v10059 = vadd.f32 %v7747, %v10039
      %v10060 = vadd.f32 %v7748, %v10040
      %v10061 = vadd.f32 %v7749, %v10041
      %v10062 = vadd.f32 %v7750, %v10042
      %v10063 = vadd.f32 %v7751, %v10043
      %v10064 = vadd.f32 %v7752, %v10044
      %v10065 = vadd.f32 %v7753, %v10045
      %v10066 = vadd.f32 %v7754, %v10046
      %v10067 = vadd.f32 %v7755, %v10047
      %v10068 = vadd.f32 %v7756, %v10048
      %v10069 = vadd.f32 %v7757, %v10049
      %v10070 = vadd.f32 %v7758, %v10050
      %v10071 = vadd.f32 %v7759, %v10051
      %v10072 = vadd.f32 %v7760, %v10052
      %v10073 = vadd.f32 %v7761, %v10053
      %v10074 = vadd.f32 %v7762, %v10054
      %v10075 = vadd.f32 %v7763, %v10055
      %v10076 = vadd.f32 %v7764, %v10056
      %v10077 = vadd.f32 %v7765, %v10057
      %v10078 = vadd.f32 %v7766, %v10058
      %10079 = vst [vmem:[%s291] sm:$0xff] %v10059
      %10080 = vst [vmem:[%s291 + $0x8] sm:$0xff] %v10060
      %10081 = vst [vmem:[%s291 + $0x10] sm:$0xff] %v10061
      %10082 = vst [vmem:[%s291 + $0x18] sm:$0xff] %v10062
      %10083 = vst [vmem:[%s291 + $0x20] sm:$0xff] %v10063
      %10084 = vst [vmem:[%s291 + $0x28] sm:$0xff] %v10064
      %10085 = vst [vmem:[%s291 + $0x30] sm:$0xff] %v10065
      %10086 = vst [vmem:[%s291 + $0x38] sm:$0xff] %v10066
      %10087 = vst [vmem:[%s291 + $0x40] sm:$0xff] %v10067
      %vm10088 = vcmask 523264
      %10089 = vst.msk [vmem:[%s291 + $0x48] sm:$0xff] %vm10088, %v10068
      %10090 = vst [vmem:[%s291 + $0x50] sm:$0xff] %v10069
      %10091 = vst [vmem:[%s291 + $0x58] sm:$0xff] %v10070
      %10092 = vst [vmem:[%s291 + $0x60] sm:$0xff] %v10071
      %10093 = vst [vmem:[%s291 + $0x68] sm:$0xff] %v10072
      %10094 = vst [vmem:[%s291 + $0x70] sm:$0xff] %v10073
      %10095 = vst [vmem:[%s291 + $0x78] sm:$0xff] %v10074
      %10096 = vst [vmem:[%s291 + $0x80] sm:$0xff] %v10075
      %10097 = vst [vmem:[%s291 + $0x88] sm:$0xff] %v10076
      %10098 = vst [vmem:[%s291 + $0x90] sm:$0xff] %v10077
      %10099 = vst.msk [vmem:[%s291 + $0x98] sm:$0xff] %vm10088, %v10078
      %p10100 = scmp.lt.s32.totalorder %s17, 1
      %s10101 = scalar_select %p10100, %s17, 1
      %s10102 = smul.addr %s10101, 20
      %s10103 = smul.addr %s10102, 8
      %s10104 = scalar_lea.vmem %s6, %s10103
      // Predicated region
      $region45: #{model_forward.1} parent=43 // pred_check
        %p10105 = pneg %p176
      $region46: #{model_forward.1} parent=43 // pred_check_branch
        %10107 = sbr.rel (%p10105) target = $region48
      $region47: #{model_forward.1} parent=43 // pred_region
        _
      $region48: #{model_forward.1} parent=43 // pred_fallthru
        _
    $region44: #{model_forward.1} parent=5 // pred_fallthru
      _
    %p10108 = scmp.le.s32.totalorder 2, %s12
    // Predicated region
    $region49: #{model_forward.1} parent=5 // pred_check
      %p10109 = pneg %p10108
    $region50: #{model_forward.1} parent=5 // pred_check_branch
      %10111 = sbr.rel (%p10109) target = $region52
    $region51: #{model_forward.1} parent=5 // pred_region
      %s10112 = ssub.s32 %s12, 2
      // Predicated region
      $region53: #{model_forward.1} parent=51 // pred_check
        %p10113 = pneg %p182
      $region54: #{model_forward.1} parent=51 // pred_check_branch
        %10115 = sbr.rel (%p10113) target = $region56
      $region55: #{model_forward.1} parent=51 // pred_region
        %p10116 = scmp.lt.s32.totalorder %s18, 1
        %s10117 = scalar_select %p10116, %s18, 1
        %s10118 = smul.addr %s10117, 20
        %s10119 = smul.addr %s10118, 8
        %s10120 = scalar_lea.vmem %s6, %s10119
      $region56: #{model_forward.1} parent=51 // pred_fallthru
        _
    $region52: #{model_forward.1} parent=5 // pred_fallthru
      _
  $region6: #{model_forward.1} parent=0 // loop_footer
    %s16 = sadd.s32 1, %s12
  $region7: #{model_forward.1} parent=0 // loop_footer_branch
    %11 = sbr.rel target = $region3
  $region8: #{model_forward.1} parent=0 // loop_exit
    _

</llo_original>
